<compile_context>
chip_gen: v7x
topology: tpu7x:2x2x1
jax: 0.10.0
libtpu: 0.0.40
codegen_flags: <defaults>
</compile_context>

<pallas_src>
import jax
import jax.numpy as jnp
from jax.experimental import pallas as pl
from jax.experimental.pallas import tpu as pltpu

# ----------------------------------------------------------------------------
# Fixed superparams (all modes 'dmitry')
# ----------------------------------------------------------------------------
DOWN = {"d1": 8, "d2": 16}      # down_layers_kernels, kernel 3, stride 2
UP = {"u2": 16, "u1": 8}        # up_layers_kernels,   kernel 3, stride 1 + up
SKIP = {"s1": 4, "s2": 4}       # skip_layers_kernels, kernel 1, stride 1
CH_IN, CH_OUT = 3, 3

EPS = 1e-5       # nn.BatchNorm2d default (training-mode batch statistics)
SLOPE = 0.01     # nn.LeakyReLU default negative slope


# ----------------------------------------------------------------------------
# Host-side constants: 3x3-tap validity masks, stride-2 decimation selectors,
# and 2x bilinear (align_corners=False) interpolation matrices.  These make
# every spatial re-arrangement inside the kernel a roll / matmul (no gathers).
# ----------------------------------------------------------------------------
def _tap_masks(N, H, W):
    """(9, 1, M) f32 zero-padding masks for the 3x3 taps, flat (n,h,w) order."""
    M = N * H * W
    pos = jnp.arange(M)
    hh, ww = (pos // W) % H, pos % W
    rows = []
    for di in range(3):
        for dj in range(3):
            oh, ow = di - 1, dj - 1
            ok = (hh + oh >= 0) & (hh + oh < H) & (ww + ow >= 0) & (ww + ow < W)
            rows.append(ok)
    return jnp.stack(rows).astype(jnp.float32).reshape(9, 1, M)


def _tap_select_mats(N, H, W):
    """(9, M, M) bf16 0/1 selectors (shift + zero-pad) for geometries whose
    flattened length is not a multiple of the 128-lane width (here 2*4*4=32)."""
    M = N * H * W
    pos = jnp.arange(M)
    n = pos // (H * W)
    hh, ww = (pos // W) % H, pos % W
    mats = []
    for di in range(3):
        for dj in range(3):
            oh, ow = di - 1, dj - 1
            h2, w2 = hh + oh, ww + ow
            ok = (h2 >= 0) & (h2 < H) & (w2 >= 0) & (w2 < W)
            src = (n * H + jnp.clip(h2, 0, H - 1)) * W + jnp.clip(w2, 0, W - 1)
            mats.append((jnp.arange(M)[:, None] == src[None, :]) & ok[None, :])
    return jnp.stack(mats).astype(jnp.bfloat16)


def _decim_mat(N, H, W):
    """(M, M/4) bf16 selector implementing stride-2 decimation (even h, w)."""
    Ho, Wo = H // 2, W // 2
    q = jnp.arange(N * Ho * Wo)
    n, a, b = q // (Ho * Wo), (q // Wo) % Ho, q % Wo
    src = (n * H + 2 * a) * W + 2 * b
    return (jnp.arange(N * H * W)[:, None] == src[None, :]).astype(jnp.bfloat16)


def _upsample_mat(N, H, W):
    """(M, 4M) bf16 2x bilinear (align_corners=False); weights are multiples
    of 1/16, hence exact in bf16."""
    def axis_mat(n_in):
        n_out = 2 * n_in
        i = jnp.arange(n_out, dtype=jnp.float32)
        src = jnp.maximum((i + 0.5) * 0.5 - 0.5, 0.0)
        i0 = jnp.minimum(jnp.floor(src).astype(jnp.int32), n_in - 1)
        i1 = jnp.minimum(i0 + 1, n_in - 1)
        w1 = src - i0.astype(jnp.float32)
        r = jnp.arange(n_in)[:, None]
        return ((r == i0[None, :]).astype(jnp.float32) * (1.0 - w1)[None, :]
                + (r == i1[None, :]).astype(jnp.float32) * w1[None, :])
    rh, rw = axis_mat(H), axis_mat(W)
    u = jnp.einsum("hi,wj->hwij", rh, rw).reshape(H * W, 4 * H * W)
    return jnp.kron(jnp.eye(N, dtype=jnp.float32), u).astype(jnp.bfloat16)


def build_consts(N, H, W, n_levels):
    consts = {"geo": {}, "dec": {}, "up": {}}
    for lvl in range(n_levels + 1):
        h, w = H >> lvl, W >> lvl
        m = N * h * w
        if m % 128 == 0:
            consts["geo"][str(lvl)] = {"mask": _tap_masks(N, h, w)}
        else:
            consts["geo"][str(lvl)] = {"tap": _tap_select_mats(N, h, w)}
        if lvl < n_levels:
            consts["dec"][str(lvl)] = _decim_mat(N, h, w)
        if lvl > 0:
            consts["up"][str(lvl)] = _upsample_mat(N, h, w)
    return consts


# ----------------------------------------------------------------------------
# Deterministic synthetic parameters (no conv biases: they are exactly
# cancelled by the mean subtraction of the train-mode BatchNorm that follows
# every conv, including the sigmoid output layer).
# ----------------------------------------------------------------------------
def build_params(key, ch_in, ch_out, down, up, skip):
    keys = iter(jax.random.split(key, 64))

    def conv_w(n_taps, cin, cout):
        w = jax.random.normal(next(keys), (n_taps, cout, cin), jnp.float32)
        return (w / jnp.sqrt(float(n_taps * cin))).astype(jnp.bfloat16)

    def bn_p(c):
        return jnp.ones((c, 1), jnp.float32), jnp.zeros((c, 1), jnp.float32)

    params = {}
    ch_pre = ch_in
    for name, c in down.items():
        g1, b1 = bn_p(c)
        g2, b2 = bn_p(c)
        params[name] = {"w1": conv_w(9, ch_pre, c), "g1": g1, "b1": b1,
                        "w2": conv_w(9, c, c), "g2": g2, "b2": b2}
        ch_pre = c
    for name, c in up.items():
        s = skip["s" + name[-1]]
        pg, pb = bn_p(ch_pre + s)
        g1, b1 = bn_p(c)
        g2, b2 = bn_p(c)
        d = {"pre_g": pg, "pre_b": pb,
             "w1m": conv_w(9, ch_pre, c), "g1": g1, "b1": b1,
             "w2": conv_w(1, c, c)[0], "g2": g2, "b2": b2}
        if s != 0:
            d["w1s"] = conv_w(9, s, c)   # weight slice for the skip channels
        params[name] = d
        ch_pre = c
    go, bo = bn_p(ch_out)
    params["out"] = {"w": conv_w(9, ch_pre, ch_out), "g": go, "b": bo}
    for name, c in skip.items():
        if c != 0:
            gs, bs = bn_p(c)
            params[name] = {"w": conv_w(1, down["d" + name[-1]], c)[0],
                            "g": gs, "b": bs}
    return params


# ----------------------------------------------------------------------------
# Single fused forward pass (one pallas_call for the whole network)
# ----------------------------------------------------------------------------
@jax.jit
def hourglass_forward(params, consts, x_nchw):
    N, ci, H, W = x_nchw.shape
    n_levels = len(DOWN)
    M0 = N * H * W
    cout = params["out"]["w"].shape[1]
    # NCHW -> lane-dense (C, N*H*W)
    x2d = x_nchw.transpose(1, 0, 2, 3).reshape(ci, M0)

    leaves, treedef = jax.tree_util.tree_flatten((consts, params))

    def kernel(*refs):
        x_ref, o_ref = refs[0], refs[-1]
        C, P = jax.tree_util.tree_unflatten(treedef, refs[1:-1])

        # ---- per-level 3x3 tap extraction (im2col fused in VMEM) -----------
        def make_tap(lvl):
            Hg, Wg = H >> lvl, W >> lvl
            Mg = N * Hg * Wg
            geo = C["geo"][str(lvl)]
            if "mask" in geo:
                mref = geo["mask"]

                def tap(x, t):
                    oh, ow = t // 3 - 1, t % 3 - 1
                    s = oh * Wg + ow
                    if s == 0:
                        return x
                    # tap[:, m] = x[:, m + s]   (zero-padded via the mask)
                    return pltpu.roll(x, shift=(-s) % Mg, axis=1) * mref[t]
                return tap

            tref = geo["tap"]

            def tap(x, t):
                if t == 4:          # centre tap = identity
                    return x
                return jnp.dot(x.astype(jnp.bfloat16), tref[t],
                               preferred_element_type=jnp.float32)
            return tap

        taps = [make_tap(lvl) for lvl in range(n_levels + 1)]

        # ---- fused building blocks -----------------------------------------
        def bn(y, gamma, beta):            # training-mode BatchNorm2d (biased var)
            inv_m = 1.0 / y.shape[1]
            mu = jnp.sum(y, axis=1, keepdims=True) * inv_m
            c = y - mu
            var = jnp.sum(c * c, axis=1, keepdims=True) * inv_m
            return c * jax.lax.rsqrt(var + EPS) * gamma + beta

        def leaky(y):
            return jnp.where(y >= 0.0, y, SLOPE * y)

        def conv3x3(pieces, w_refs, tap):  # stride-1, pad-1 (full resolution)
            Mg = pieces[0].shape[1]
            co = w_refs[0].shape[1]
            acc = jnp.zeros((co, Mg), jnp.float32)
            for t in range(9):
                for xv, wr in zip(pieces, w_refs):
                    acc = acc + jnp.dot(wr[t], tap(xv, t).astype(jnp.bfloat16),
                                        preferred_element_type=jnp.float32)
            return acc

        def conv1x1(x, wr):
            return jnp.dot(wr[...], x.astype(jnp.bfloat16),
                           preferred_element_type=jnp.float32)

        def resample(x, mref):             # stride-2 decimation / bilinear x2
            return jnp.dot(x.astype(jnp.bfloat16), mref[...],
                           preferred_element_type=jnp.float32)

        # ---- forward (mirrors hourglassNetwork.forward) ---------------------
        feat = {}
        h = x_ref[...]
        lvl = 0
        for name in DOWN:                  # conv(s2)+BN+LReLU, conv(s1)+BN+LReLU
            pr = P[name]
            h = conv3x3([h], [pr["w1"]], taps[lvl])
            h = resample(h, C["dec"][str(lvl)])     # stride-2
            lvl += 1
            h = leaky(bn(h, pr["g1"][...], pr["b1"][...]))
            h = conv3x3([h], [pr["w2"]], taps[lvl])
            h = leaky(bn(h, pr["g2"][...], pr["b2"][...]))
            feat[name] = h
        for name in SKIP:                  # 1x1 conv + BN + LReLU
            if SKIP[name] != 0:
                pr = P[name]
                y = conv1x1(feat["d" + name[-1]], pr["w"])
                feat[name] = leaky(bn(y, pr["g"][...], pr["b"][...]))
        prev = feat[list(DOWN)[-1]]
        for name in UP:                    # pre-BN, conv3x3, conv1x1, upsample x2
            pr = P[name]
            sk = "s" + name[-1]
            if SKIP[sk] != 0:
                # BN of the channel-concat == per-piece BN (channels independent);
                # the conv over concat channels = sum of the two weight slices.
                cp = prev.shape[0]
                pg, pb = pr["pre_g"][...], pr["pre_b"][...]
                pieces = [bn(prev, pg[:cp], pb[:cp]),
                          bn(feat[sk], pg[cp:], pb[cp:])]
                wlist = [pr["w1m"], pr["w1s"]]
            else:
                pieces = [bn(prev, pr["pre_g"][...], pr["pre_b"][...])]
                wlist = [pr["w1m"]]
            h = conv3x3(pieces, wlist, taps[lvl])
            h = leaky(bn(h, pr["g1"][...], pr["b1"][...]))
            h = conv1x1(h, pr["w2"])
            h = leaky(bn(h, pr["g2"][...], pr["b2"][...]))
            h = resample(h, C["up"][str(lvl)])      # fused 2x bilinear upsample
            lvl -= 1
            prev = h
        h = conv3x3([prev], [P["out"]["w"]], taps[0])
        h = bn(h, P["out"]["g"][...], P["out"]["b"][...])
        # sigmoid: exp + approximate reciprocal (both ride the EUP slot)
        o_ref[...] = pl.reciprocal(1.0 + jnp.exp(-h), approx=True)

    out2d = pl.pallas_call(
        kernel,
        out_shape=jax.ShapeDtypeStruct((cout, M0), jnp.float32),
    )(x2d, *leaves)
    return out2d.reshape(cout, N, H, W).transpose(1, 0, 2, 3)


if __name__ == "__main__":
    N, H, W = 2, 16, 16
    key = jax.random.PRNGKey(0)
    kx, kp = jax.random.split(key)
    x = jax.random.normal(kx, (N, CH_IN, H, W), jnp.float32)   # NCHW input
    params = build_params(kp, CH_IN, CH_OUT, DOWN, UP, SKIP)
    consts = build_consts(N, H, W, len(DOWN))

    out = jax.block_until_ready(hourglass_forward(params, consts, x))
    assert out.shape == (N, CH_OUT, H, W), out.shape
    assert bool(jnp.all(jnp.isfinite(out)))
    print("KERNEL_OK")
</pallas_src>

<mosaic_0001>
module attributes {stable_mosaic.version = 11 : i64} {
  func.func @kernel(%arg0: memref<3x512xf32, #tpu.memory_space<vmem>>, %arg1: memref<512x128xbf16, #tpu.memory_space<vmem>>, %arg2: memref<128x32xbf16, #tpu.memory_space<vmem>>, %arg3: memref<9x1x512xf32, #tpu.memory_space<vmem>>, %arg4: memref<9x1x128xf32, #tpu.memory_space<vmem>>, %arg5: memref<9x32x32xbf16, #tpu.memory_space<vmem>>, %arg6: memref<128x512xbf16, #tpu.memory_space<vmem>>, %arg7: memref<32x128xbf16, #tpu.memory_space<vmem>>, %arg8: memref<8x1xf32, #tpu.memory_space<vmem>>, %arg9: memref<8x1xf32, #tpu.memory_space<vmem>>, %arg10: memref<8x1xf32, #tpu.memory_space<vmem>>, %arg11: memref<8x1xf32, #tpu.memory_space<vmem>>, %arg12: memref<9x8x3xbf16, #tpu.memory_space<vmem>>, %arg13: memref<9x8x8xbf16, #tpu.memory_space<vmem>>, %arg14: memref<16x1xf32, #tpu.memory_space<vmem>>, %arg15: memref<16x1xf32, #tpu.memory_space<vmem>>, %arg16: memref<16x1xf32, #tpu.memory_space<vmem>>, %arg17: memref<16x1xf32, #tpu.memory_space<vmem>>, %arg18: memref<9x16x8xbf16, #tpu.memory_space<vmem>>, %arg19: memref<9x16x16xbf16, #tpu.memory_space<vmem>>, %arg20: memref<3x1xf32, #tpu.memory_space<vmem>>, %arg21: memref<3x1xf32, #tpu.memory_space<vmem>>, %arg22: memref<9x3x8xbf16, #tpu.memory_space<vmem>>, %arg23: memref<4x1xf32, #tpu.memory_space<vmem>>, %arg24: memref<4x1xf32, #tpu.memory_space<vmem>>, %arg25: memref<4x8xbf16, #tpu.memory_space<vmem>>, %arg26: memref<4x1xf32, #tpu.memory_space<vmem>>, %arg27: memref<4x1xf32, #tpu.memory_space<vmem>>, %arg28: memref<4x16xbf16, #tpu.memory_space<vmem>>, %arg29: memref<8x1xf32, #tpu.memory_space<vmem>>, %arg30: memref<8x1xf32, #tpu.memory_space<vmem>>, %arg31: memref<8x1xf32, #tpu.memory_space<vmem>>, %arg32: memref<8x1xf32, #tpu.memory_space<vmem>>, %arg33: memref<20x1xf32, #tpu.memory_space<vmem>>, %arg34: memref<20x1xf32, #tpu.memory_space<vmem>>, %arg35: memref<9x8x16xbf16, #tpu.memory_space<vmem>>, %arg36: memref<9x8x4xbf16, #tpu.memory_space<vmem>>, %arg37: memref<8x8xbf16, #tpu.memory_space<vmem>>, %arg38: memref<16x1xf32, #tpu.memory_space<vmem>>, %arg39: memref<16x1xf32, #tpu.memory_space<vmem>>, %arg40: memref<16x1xf32, #tpu.memory_space<vmem>>, %arg41: memref<16x1xf32, #tpu.memory_space<vmem>>, %arg42: memref<20x1xf32, #tpu.memory_space<vmem>>, %arg43: memref<20x1xf32, #tpu.memory_space<vmem>>, %arg44: memref<9x16x16xbf16, #tpu.memory_space<vmem>>, %arg45: memref<9x16x4xbf16, #tpu.memory_space<vmem>>, %arg46: memref<16x16xbf16, #tpu.memory_space<vmem>>, %arg47: memref<3x512xf32, #tpu.memory_space<vmem>>) attributes {dimension_semantics = [], scalar_prefetch = 0 : i64, scratch_operands = 0 : i64, tpu.core_type = #tpu.core_type<tc>} {
    %c0 = arith.constant 0 : index
    %c0_0 = arith.constant 0 : index
    %0 = vector.load %arg0[%c0, %c0_0] : memref<3x512xf32, #tpu.memory_space<vmem>>, vector<3x512xf32>
    %cst = arith.constant 0.000000e+00 : f32
    %1 = vector.broadcast %cst : f32 to vector<8x512xf32>
    %c0_1 = arith.constant 0 : index
    %c0_2 = arith.constant 0 : index
    %c0_3 = arith.constant 0 : index
    %2 = vector.load %arg12[%c0_1, %c0_2, %c0_3] : memref<9x8x3xbf16, #tpu.memory_space<vmem>>, vector<1x8x3xbf16>
    %3 = vector.shape_cast %2 : vector<1x8x3xbf16> to vector<8x3xbf16>
    %c17_i32 = arith.constant 17 : i32
    %4 = tpu.dynamic_rotate %0 by %c17_i32 dim 1 : vector<3x512xf32>, i32 -> vector<3x512xf32>
    %c0_4 = arith.constant 0 : index
    %c0_5 = arith.constant 0 : index
    %c0_6 = arith.constant 0 : index
    %5 = vector.load %arg3[%c0_4, %c0_5, %c0_6] : memref<9x1x512xf32, #tpu.memory_space<vmem>>, vector<1x1x512xf32>
    %6 = vector.shape_cast %5 : vector<1x1x512xf32> to vector<1x512xf32>
    %7 = vector.broadcast %6 : vector<1x512xf32> to vector<3x512xf32>
    %8 = arith.mulf %4, %7 : vector<3x512xf32>
    %9 = arith.truncf %8 : vector<3x512xf32> to vector<3x512xbf16>
    %cst_7 = arith.constant dense<0.000000e+00> : vector<8x512xf32>
    %10 = tpu.matmul %3, %9, %cst_7 {dimension_numbers = #tpu.dot_dimension_numbers<[1], [0], [0], [1], [0, 0, 1, 1], [], []>} : vector<8x3xbf16>, vector<3x512xbf16>, vector<8x512xf32> -> vector<8x512xf32>
    %11 = arith.addf %1, %10 : vector<8x512xf32>
    %c1 = arith.constant 1 : index
    %c0_8 = arith.constant 0 : index
    %c0_9 = arith.constant 0 : index
    %12 = vector.load %arg12[%c1, %c0_8, %c0_9] : memref<9x8x3xbf16, #tpu.memory_space<vmem>>, vector<1x8x3xbf16>
    %13 = vector.shape_cast %12 : vector<1x8x3xbf16> to vector<8x3xbf16>
    %c16_i32 = arith.constant 16 : i32
    %14 = tpu.dynamic_rotate %0 by %c16_i32 dim 1 : vector<3x512xf32>, i32 -> vector<3x512xf32>
    %c1_10 = arith.constant 1 : index
    %c0_11 = arith.constant 0 : index
    %c0_12 = arith.constant 0 : index
    %15 = vector.load %arg3[%c1_10, %c0_11, %c0_12] : memref<9x1x512xf32, #tpu.memory_space<vmem>>, vector<1x1x512xf32>
    %16 = vector.shape_cast %15 : vector<1x1x512xf32> to vector<1x512xf32>
    %17 = vector.broadcast %16 : vector<1x512xf32> to vector<3x512xf32>
    %18 = arith.mulf %14, %17 : vector<3x512xf32>
    %19 = arith.truncf %18 : vector<3x512xf32> to vector<3x512xbf16>
    %cst_13 = arith.constant dense<0.000000e+00> : vector<8x512xf32>
    %20 = tpu.matmul %13, %19, %cst_13 {dimension_numbers = #tpu.dot_dimension_numbers<[1], [0], [0], [1], [0, 0, 1, 1], [], []>} : vector<8x3xbf16>, vector<3x512xbf16>, vector<8x512xf32> -> vector<8x512xf32>
    %21 = arith.addf %11, %20 : vector<8x512xf32>
    %c2 = arith.constant 2 : index
    %c0_14 = arith.constant 0 : index
    %c0_15 = arith.constant 0 : index
    %22 = vector.load %arg12[%c2, %c0_14, %c0_15] : memref<9x8x3xbf16, #tpu.memory_space<vmem>>, vector<1x8x3xbf16>
    %23 = vector.shape_cast %22 : vector<1x8x3xbf16> to vector<8x3xbf16>
    %c15_i32 = arith.constant 15 : i32
    %24 = tpu.dynamic_rotate %0 by %c15_i32 dim 1 : vector<3x512xf32>, i32 -> vector<3x512xf32>
    %c2_16 = arith.constant 2 : index
    %c0_17 = arith.constant 0 : index
    %c0_18 = arith.constant 0 : index
    %25 = vector.load %arg3[%c2_16, %c0_17, %c0_18] : memref<9x1x512xf32, #tpu.memory_space<vmem>>, vector<1x1x512xf32>
    %26 = vector.shape_cast %25 : vector<1x1x512xf32> to vector<1x512xf32>
    %27 = vector.broadcast %26 : vector<1x512xf32> to vector<3x512xf32>
    %28 = arith.mulf %24, %27 : vector<3x512xf32>
    %29 = arith.truncf %28 : vector<3x512xf32> to vector<3x512xbf16>
    %cst_19 = arith.constant dense<0.000000e+00> : vector<8x512xf32>
    %30 = tpu.matmul %23, %29, %cst_19 {dimension_numbers = #tpu.dot_dimension_numbers<[1], [0], [0], [1], [0, 0, 1, 1], [], []>} : vector<8x3xbf16>, vector<3x512xbf16>, vector<8x512xf32> -> vector<8x512xf32>
    %31 = arith.addf %21, %30 : vector<8x512xf32>
    %c3 = arith.constant 3 : index
    %c0_20 = arith.constant 0 : index
    %c0_21 = arith.constant 0 : index
    %32 = vector.load %arg12[%c3, %c0_20, %c0_21] : memref<9x8x3xbf16, #tpu.memory_space<vmem>>, vector<1x8x3xbf16>
    %33 = vector.shape_cast %32 : vector<1x8x3xbf16> to vector<8x3xbf16>
    %c1_i32 = arith.constant 1 : i32
    %34 = tpu.dynamic_rotate %0 by %c1_i32 dim 1 : vector<3x512xf32>, i32 -> vector<3x512xf32>
    %c3_22 = arith.constant 3 : index
    %c0_23 = arith.constant 0 : index
    %c0_24 = arith.constant 0 : index
    %35 = vector.load %arg3[%c3_22, %c0_23, %c0_24] : memref<9x1x512xf32, #tpu.memory_space<vmem>>, vector<1x1x512xf32>
    %36 = vector.shape_cast %35 : vector<1x1x512xf32> to vector<1x512xf32>
    %37 = vector.broadcast %36 : vector<1x512xf32> to vector<3x512xf32>
    %38 = arith.mulf %34, %37 : vector<3x512xf32>
    %39 = arith.truncf %38 : vector<3x512xf32> to vector<3x512xbf16>
    %cst_25 = arith.constant dense<0.000000e+00> : vector<8x512xf32>
    %40 = tpu.matmul %33, %39, %cst_25 {dimension_numbers = #tpu.dot_dimension_numbers<[1], [0], [0], [1], [0, 0, 1, 1], [], []>} : vector<8x3xbf16>, vector<3x512xbf16>, vector<8x512xf32> -> vector<8x512xf32>
    %41 = arith.addf %31, %40 : vector<8x512xf32>
    %c4 = arith.constant 4 : index
    %c0_26 = arith.constant 0 : index
    %c0_27 = arith.constant 0 : index
    %42 = vector.load %arg12[%c4, %c0_26, %c0_27] : memref<9x8x3xbf16, #tpu.memory_space<vmem>>, vector<1x8x3xbf16>
    %43 = vector.shape_cast %42 : vector<1x8x3xbf16> to vector<8x3xbf16>
    %44 = arith.truncf %0 : vector<3x512xf32> to vector<3x512xbf16>
    %cst_28 = arith.constant dense<0.000000e+00> : vector<8x512xf32>
    %45 = tpu.matmul %43, %44, %cst_28 {dimension_numbers = #tpu.dot_dimension_numbers<[1], [0], [0], [1], [0, 0, 1, 1], [], []>} : vector<8x3xbf16>, vector<3x512xbf16>, vector<8x512xf32> -> vector<8x512xf32>
    %46 = arith.addf %41, %45 : vector<8x512xf32>
    %c5 = arith.constant 5 : index
    %c0_29 = arith.constant 0 : index
    %c0_30 = arith.constant 0 : index
    %47 = vector.load %arg12[%c5, %c0_29, %c0_30] : memref<9x8x3xbf16, #tpu.memory_space<vmem>>, vector<1x8x3xbf16>
    %48 = vector.shape_cast %47 : vector<1x8x3xbf16> to vector<8x3xbf16>
    %c511_i32 = arith.constant 511 : i32
    %49 = tpu.dynamic_rotate %0 by %c511_i32 dim 1 : vector<3x512xf32>, i32 -> vector<3x512xf32>
    %c5_31 = arith.constant 5 : index
    %c0_32 = arith.constant 0 : index
    %c0_33 = arith.constant 0 : index
    %50 = vector.load %arg3[%c5_31, %c0_32, %c0_33] : memref<9x1x512xf32, #tpu.memory_space<vmem>>, vector<1x1x512xf32>
    %51 = vector.shape_cast %50 : vector<1x1x512xf32> to vector<1x512xf32>
    %52 = vector.broadcast %51 : vector<1x512xf32> to vector<3x512xf32>
    %53 = arith.mulf %49, %52 : vector<3x512xf32>
    %54 = arith.truncf %53 : vector<3x512xf32> to vector<3x512xbf16>
    %cst_34 = arith.constant dense<0.000000e+00> : vector<8x512xf32>
    %55 = tpu.matmul %48, %54, %cst_34 {dimension_numbers = #tpu.dot_dimension_numbers<[1], [0], [0], [1], [0, 0, 1, 1], [], []>} : vector<8x3xbf16>, vector<3x512xbf16>, vector<8x512xf32> -> vector<8x512xf32>
    %56 = arith.addf %46, %55 : vector<8x512xf32>
    %c6 = arith.constant 6 : index
    %c0_35 = arith.constant 0 : index
    %c0_36 = arith.constant 0 : index
    %57 = vector.load %arg12[%c6, %c0_35, %c0_36] : memref<9x8x3xbf16, #tpu.memory_space<vmem>>, vector<1x8x3xbf16>
    %58 = vector.shape_cast %57 : vector<1x8x3xbf16> to vector<8x3xbf16>
    %c497_i32 = arith.constant 497 : i32
    %59 = tpu.dynamic_rotate %0 by %c497_i32 dim 1 : vector<3x512xf32>, i32 -> vector<3x512xf32>
    %c6_37 = arith.constant 6 : index
    %c0_38 = arith.constant 0 : index
    %c0_39 = arith.constant 0 : index
    %60 = vector.load %arg3[%c6_37, %c0_38, %c0_39] : memref<9x1x512xf32, #tpu.memory_space<vmem>>, vector<1x1x512xf32>
    %61 = vector.shape_cast %60 : vector<1x1x512xf32> to vector<1x512xf32>
    %62 = vector.broadcast %61 : vector<1x512xf32> to vector<3x512xf32>
    %63 = arith.mulf %59, %62 : vector<3x512xf32>
    %64 = arith.truncf %63 : vector<3x512xf32> to vector<3x512xbf16>
    %cst_40 = arith.constant dense<0.000000e+00> : vector<8x512xf32>
    %65 = tpu.matmul %58, %64, %cst_40 {dimension_numbers = #tpu.dot_dimension_numbers<[1], [0], [0], [1], [0, 0, 1, 1], [], []>} : vector<8x3xbf16>, vector<3x512xbf16>, vector<8x512xf32> -> vector<8x512xf32>
    %66 = arith.addf %56, %65 : vector<8x512xf32>
    %c7 = arith.constant 7 : index
    %c0_41 = arith.constant 0 : index
    %c0_42 = arith.constant 0 : index
    %67 = vector.load %arg12[%c7, %c0_41, %c0_42] : memref<9x8x3xbf16, #tpu.memory_space<vmem>>, vector<1x8x3xbf16>
    %68 = vector.shape_cast %67 : vector<1x8x3xbf16> to vector<8x3xbf16>
    %c496_i32 = arith.constant 496 : i32
    %69 = tpu.dynamic_rotate %0 by %c496_i32 dim 1 : vector<3x512xf32>, i32 -> vector<3x512xf32>
    %c7_43 = arith.constant 7 : index
    %c0_44 = arith.constant 0 : index
    %c0_45 = arith.constant 0 : index
    %70 = vector.load %arg3[%c7_43, %c0_44, %c0_45] : memref<9x1x512xf32, #tpu.memory_space<vmem>>, vector<1x1x512xf32>
    %71 = vector.shape_cast %70 : vector<1x1x512xf32> to vector<1x512xf32>
    %72 = vector.broadcast %71 : vector<1x512xf32> to vector<3x512xf32>
    %73 = arith.mulf %69, %72 : vector<3x512xf32>
    %74 = arith.truncf %73 : vector<3x512xf32> to vector<3x512xbf16>
    %cst_46 = arith.constant dense<0.000000e+00> : vector<8x512xf32>
    %75 = tpu.matmul %68, %74, %cst_46 {dimension_numbers = #tpu.dot_dimension_numbers<[1], [0], [0], [1], [0, 0, 1, 1], [], []>} : vector<8x3xbf16>, vector<3x512xbf16>, vector<8x512xf32> -> vector<8x512xf32>
    %76 = arith.addf %66, %75 : vector<8x512xf32>
    %c8 = arith.constant 8 : index
    %c0_47 = arith.constant 0 : index
    %c0_48 = arith.constant 0 : index
    %77 = vector.load %arg12[%c8, %c0_47, %c0_48] : memref<9x8x3xbf16, #tpu.memory_space<vmem>>, vector<1x8x3xbf16>
    %78 = vector.shape_cast %77 : vector<1x8x3xbf16> to vector<8x3xbf16>
    %c495_i32 = arith.constant 495 : i32
    %79 = tpu.dynamic_rotate %0 by %c495_i32 dim 1 : vector<3x512xf32>, i32 -> vector<3x512xf32>
    %c8_49 = arith.constant 8 : index
    %c0_50 = arith.constant 0 : index
    %c0_51 = arith.constant 0 : index
    %80 = vector.load %arg3[%c8_49, %c0_50, %c0_51] : memref<9x1x512xf32, #tpu.memory_space<vmem>>, vector<1x1x512xf32>
    %81 = vector.shape_cast %80 : vector<1x1x512xf32> to vector<1x512xf32>
    %82 = vector.broadcast %81 : vector<1x512xf32> to vector<3x512xf32>
    %83 = arith.mulf %79, %82 : vector<3x512xf32>
    %84 = arith.truncf %83 : vector<3x512xf32> to vector<3x512xbf16>
    %cst_52 = arith.constant dense<0.000000e+00> : vector<8x512xf32>
    %85 = tpu.matmul %78, %84, %cst_52 {dimension_numbers = #tpu.dot_dimension_numbers<[1], [0], [0], [1], [0, 0, 1, 1], [], []>} : vector<8x3xbf16>, vector<3x512xbf16>, vector<8x512xf32> -> vector<8x512xf32>
    %86 = arith.addf %76, %85 : vector<8x512xf32>
    %87 = arith.truncf %86 : vector<8x512xf32> to vector<8x512xbf16>
    %c0_53 = arith.constant 0 : index
    %c0_54 = arith.constant 0 : index
    %88 = vector.load %arg1[%c0_53, %c0_54] : memref<512x128xbf16, #tpu.memory_space<vmem>>, vector<512x128xbf16>
    %cst_55 = arith.constant dense<0.000000e+00> : vector<8x128xf32>
    %89 = tpu.matmul %87, %88, %cst_55 {dimension_numbers = #tpu.dot_dimension_numbers<[1], [0], [0], [1], [0, 0, 1, 1], [], []>} : vector<8x512xbf16>, vector<512x128xbf16>, vector<8x128xf32> -> vector<8x128xf32>
    %c0_56 = arith.constant 0 : index
    %c0_57 = arith.constant 0 : index
    %90 = vector.load %arg10[%c0_56, %c0_57] : memref<8x1xf32, #tpu.memory_space<vmem>>, vector<8x1xf32>
    %c0_58 = arith.constant 0 : index
    %c0_59 = arith.constant 0 : index
    %91 = vector.load %arg8[%c0_58, %c0_59] : memref<8x1xf32, #tpu.memory_space<vmem>>, vector<8x1xf32>
    %cst_60 = arith.constant dense<0.000000e+00> : vector<8xf32>
    %92 = vector.multi_reduction <add>, %89, %cst_60 [1] : vector<8x128xf32> to vector<8xf32>
    %93 = vector.shape_cast %92 : vector<8xf32> to vector<8x1xf32>
    %cst_61 = arith.constant 7.812500e-03 : f32
    %94 = vector.broadcast %cst_61 : f32 to vector<8x1xf32>
    %95 = arith.mulf %93, %94 : vector<8x1xf32>
    %96 = vector.broadcast %95 : vector<8x1xf32> to vector<8x128xf32>
    %97 = arith.subf %89, %96 : vector<8x128xf32>
    %98 = arith.mulf %97, %97 : vector<8x128xf32>
    %cst_62 = arith.constant dense<0.000000e+00> : vector<8xf32>
    %99 = vector.multi_reduction <add>, %98, %cst_62 [1] : vector<8x128xf32> to vector<8xf32>
    %100 = vector.shape_cast %99 : vector<8xf32> to vector<8x1xf32>
    %cst_63 = arith.constant 7.812500e-03 : f32
    %101 = vector.broadcast %cst_63 : f32 to vector<8x1xf32>
    %102 = arith.mulf %100, %101 : vector<8x1xf32>
    %cst_64 = arith.constant 9.99999974E-6 : f32
    %103 = vector.broadcast %cst_64 : f32 to vector<8x1xf32>
    %104 = arith.addf %102, %103 : vector<8x1xf32>
    %105 = math.rsqrt %104 : vector<8x1xf32>
    %106 = vector.broadcast %105 : vector<8x1xf32> to vector<8x128xf32>
    %107 = arith.mulf %97, %106 : vector<8x128xf32>
    %108 = vector.broadcast %90 : vector<8x1xf32> to vector<8x128xf32>
    %109 = arith.mulf %107, %108 : vector<8x128xf32>
    %110 = vector.broadcast %91 : vector<8x1xf32> to vector<8x128xf32>
    %111 = arith.addf %109, %110 : vector<8x128xf32>
    %cst_65 = arith.constant 0.000000e+00 : f32
    %112 = vector.broadcast %cst_65 : f32 to vector<8x128xf32>
    %113 = arith.cmpf oge, %111, %112 : vector<8x128xf32>
    %cst_66 = arith.constant 0.00999999977 : f32
    %114 = vector.broadcast %cst_66 : f32 to vector<8x128xf32>
    %115 = arith.mulf %114, %111 : vector<8x128xf32>
    %116 = arith.select %113, %111, %115 : vector<8x128xi1>, vector<8x128xf32>
    %cst_67 = arith.constant 0.000000e+00 : f32
    %117 = vector.broadcast %cst_67 : f32 to vector<8x128xf32>
    %c0_68 = arith.constant 0 : index
    %c0_69 = arith.constant 0 : index
    %c0_70 = arith.constant 0 : index
    %118 = vector.load %arg13[%c0_68, %c0_69, %c0_70] : memref<9x8x8xbf16, #tpu.memory_space<vmem>>, vector<1x8x8xbf16>
    %119 = vector.shape_cast %118 : vector<1x8x8xbf16> to vector<8x8xbf16>
    %c9_i32 = arith.constant 9 : i32
    %120 = tpu.dynamic_rotate %116 by %c9_i32 dim 1 : vector<8x128xf32>, i32 -> vector<8x128xf32>
    %c0_71 = arith.constant 0 : index
    %c0_72 = arith.constant 0 : index
    %c0_73 = arith.constant 0 : index
    %121 = vector.load %arg4[%c0_71, %c0_72, %c0_73] : memref<9x1x128xf32, #tpu.memory_space<vmem>>, vector<1x1x128xf32>
    %122 = vector.shape_cast %121 : vector<1x1x128xf32> to vector<1x128xf32>
    %123 = vector.broadcast %122 : vector<1x128xf32> to vector<8x128xf32>
    %124 = arith.mulf %120, %123 : vector<8x128xf32>
    %125 = arith.truncf %124 : vector<8x128xf32> to vector<8x128xbf16>
    %cst_74 = arith.constant dense<0.000000e+00> : vector<8x128xf32>
    %126 = tpu.matmul %119, %125, %cst_74 {dimension_numbers = #tpu.dot_dimension_numbers<[1], [0], [0], [1], [0, 0, 1, 1], [], []>} : vector<8x8xbf16>, vector<8x128xbf16>, vector<8x128xf32> -> vector<8x128xf32>
    %127 = arith.addf %117, %126 : vector<8x128xf32>
    %c1_75 = arith.constant 1 : index
    %c0_76 = arith.constant 0 : index
    %c0_77 = arith.constant 0 : index
    %128 = vector.load %arg13[%c1_75, %c0_76, %c0_77] : memref<9x8x8xbf16, #tpu.memory_space<vmem>>, vector<1x8x8xbf16>
    %129 = vector.shape_cast %128 : vector<1x8x8xbf16> to vector<8x8xbf16>
    %c8_i32 = arith.constant 8 : i32
    %130 = tpu.dynamic_rotate %116 by %c8_i32 dim 1 : vector<8x128xf32>, i32 -> vector<8x128xf32>
    %c1_78 = arith.constant 1 : index
    %c0_79 = arith.constant 0 : index
    %c0_80 = arith.constant 0 : index
    %131 = vector.load %arg4[%c1_78, %c0_79, %c0_80] : memref<9x1x128xf32, #tpu.memory_space<vmem>>, vector<1x1x128xf32>
    %132 = vector.shape_cast %131 : vector<1x1x128xf32> to vector<1x128xf32>
    %133 = vector.broadcast %132 : vector<1x128xf32> to vector<8x128xf32>
    %134 = arith.mulf %130, %133 : vector<8x128xf32>
    %135 = arith.truncf %134 : vector<8x128xf32> to vector<8x128xbf16>
    %cst_81 = arith.constant dense<0.000000e+00> : vector<8x128xf32>
    %136 = tpu.matmul %129, %135, %cst_81 {dimension_numbers = #tpu.dot_dimension_numbers<[1], [0], [0], [1], [0, 0, 1, 1], [], []>} : vector<8x8xbf16>, vector<8x128xbf16>, vector<8x128xf32> -> vector<8x128xf32>
    %137 = arith.addf %127, %136 : vector<8x128xf32>
    %c2_82 = arith.constant 2 : index
    %c0_83 = arith.constant 0 : index
    %c0_84 = arith.constant 0 : index
    %138 = vector.load %arg13[%c2_82, %c0_83, %c0_84] : memref<9x8x8xbf16, #tpu.memory_space<vmem>>, vector<1x8x8xbf16>
    %139 = vector.shape_cast %138 : vector<1x8x8xbf16> to vector<8x8xbf16>
    %c7_i32 = arith.constant 7 : i32
    %140 = tpu.dynamic_rotate %116 by %c7_i32 dim 1 : vector<8x128xf32>, i32 -> vector<8x128xf32>
    %c2_85 = arith.constant 2 : index
    %c0_86 = arith.constant 0 : index
    %c0_87 = arith.constant 0 : index
    %141 = vector.load %arg4[%c2_85, %c0_86, %c0_87] : memref<9x1x128xf32, #tpu.memory_space<vmem>>, vector<1x1x128xf32>
    %142 = vector.shape_cast %141 : vector<1x1x128xf32> to vector<1x128xf32>
    %143 = vector.broadcast %142 : vector<1x128xf32> to vector<8x128xf32>
    %144 = arith.mulf %140, %143 : vector<8x128xf32>
    %145 = arith.truncf %144 : vector<8x128xf32> to vector<8x128xbf16>
    %cst_88 = arith.constant dense<0.000000e+00> : vector<8x128xf32>
    %146 = tpu.matmul %139, %145, %cst_88 {dimension_numbers = #tpu.dot_dimension_numbers<[1], [0], [0], [1], [0, 0, 1, 1], [], []>} : vector<8x8xbf16>, vector<8x128xbf16>, vector<8x128xf32> -> vector<8x128xf32>
    %147 = arith.addf %137, %146 : vector<8x128xf32>
    %c3_89 = arith.constant 3 : index
    %c0_90 = arith.constant 0 : index
    %c0_91 = arith.constant 0 : index
    %148 = vector.load %arg13[%c3_89, %c0_90, %c0_91] : memref<9x8x8xbf16, #tpu.memory_space<vmem>>, vector<1x8x8xbf16>
    %149 = vector.shape_cast %148 : vector<1x8x8xbf16> to vector<8x8xbf16>
    %c1_i32_92 = arith.constant 1 : i32
    %150 = tpu.dynamic_rotate %116 by %c1_i32_92 dim 1 : vector<8x128xf32>, i32 -> vector<8x128xf32>
    %c3_93 = arith.constant 3 : index
    %c0_94 = arith.constant 0 : index
    %c0_95 = arith.constant 0 : index
    %151 = vector.load %arg4[%c3_93, %c0_94, %c0_95] : memref<9x1x128xf32, #tpu.memory_space<vmem>>, vector<1x1x128xf32>
    %152 = vector.shape_cast %151 : vector<1x1x128xf32> to vector<1x128xf32>
    %153 = vector.broadcast %152 : vector<1x128xf32> to vector<8x128xf32>
    %154 = arith.mulf %150, %153 : vector<8x128xf32>
    %155 = arith.truncf %154 : vector<8x128xf32> to vector<8x128xbf16>
    %cst_96 = arith.constant dense<0.000000e+00> : vector<8x128xf32>
    %156 = tpu.matmul %149, %155, %cst_96 {dimension_numbers = #tpu.dot_dimension_numbers<[1], [0], [0], [1], [0, 0, 1, 1], [], []>} : vector<8x8xbf16>, vector<8x128xbf16>, vector<8x128xf32> -> vector<8x128xf32>
    %157 = arith.addf %147, %156 : vector<8x128xf32>
    %c4_97 = arith.constant 4 : index
    %c0_98 = arith.constant 0 : index
    %c0_99 = arith.constant 0 : index
    %158 = vector.load %arg13[%c4_97, %c0_98, %c0_99] : memref<9x8x8xbf16, #tpu.memory_space<vmem>>, vector<1x8x8xbf16>
    %159 = vector.shape_cast %158 : vector<1x8x8xbf16> to vector<8x8xbf16>
    %160 = arith.truncf %116 : vector<8x128xf32> to vector<8x128xbf16>
    %cst_100 = arith.constant dense<0.000000e+00> : vector<8x128xf32>
    %161 = tpu.matmul %159, %160, %cst_100 {dimension_numbers = #tpu.dot_dimension_numbers<[1], [0], [0], [1], [0, 0, 1, 1], [], []>} : vector<8x8xbf16>, vector<8x128xbf16>, vector<8x128xf32> -> vector<8x128xf32>
    %162 = arith.addf %157, %161 : vector<8x128xf32>
    %c5_101 = arith.constant 5 : index
    %c0_102 = arith.constant 0 : index
    %c0_103 = arith.constant 0 : index
    %163 = vector.load %arg13[%c5_101, %c0_102, %c0_103] : memref<9x8x8xbf16, #tpu.memory_space<vmem>>, vector<1x8x8xbf16>
    %164 = vector.shape_cast %163 : vector<1x8x8xbf16> to vector<8x8xbf16>
    %c127_i32 = arith.constant 127 : i32
    %165 = tpu.dynamic_rotate %116 by %c127_i32 dim 1 : vector<8x128xf32>, i32 -> vector<8x128xf32>
    %c5_104 = arith.constant 5 : index
    %c0_105 = arith.constant 0 : index
    %c0_106 = arith.constant 0 : index
    %166 = vector.load %arg4[%c5_104, %c0_105, %c0_106] : memref<9x1x128xf32, #tpu.memory_space<vmem>>, vector<1x1x128xf32>
    %167 = vector.shape_cast %166 : vector<1x1x128xf32> to vector<1x128xf32>
    %168 = vector.broadcast %167 : vector<1x128xf32> to vector<8x128xf32>
    %169 = arith.mulf %165, %168 : vector<8x128xf32>
    %170 = arith.truncf %169 : vector<8x128xf32> to vector<8x128xbf16>
    %cst_107 = arith.constant dense<0.000000e+00> : vector<8x128xf32>
    %171 = tpu.matmul %164, %170, %cst_107 {dimension_numbers = #tpu.dot_dimension_numbers<[1], [0], [0], [1], [0, 0, 1, 1], [], []>} : vector<8x8xbf16>, vector<8x128xbf16>, vector<8x128xf32> -> vector<8x128xf32>
    %172 = arith.addf %162, %171 : vector<8x128xf32>
    %c6_108 = arith.constant 6 : index
    %c0_109 = arith.constant 0 : index
    %c0_110 = arith.constant 0 : index
    %173 = vector.load %arg13[%c6_108, %c0_109, %c0_110] : memref<9x8x8xbf16, #tpu.memory_space<vmem>>, vector<1x8x8xbf16>
    %174 = vector.shape_cast %173 : vector<1x8x8xbf16> to vector<8x8xbf16>
    %c121_i32 = arith.constant 121 : i32
    %175 = tpu.dynamic_rotate %116 by %c121_i32 dim 1 : vector<8x128xf32>, i32 -> vector<8x128xf32>
    %c6_111 = arith.constant 6 : index
    %c0_112 = arith.constant 0 : index
    %c0_113 = arith.constant 0 : index
    %176 = vector.load %arg4[%c6_111, %c0_112, %c0_113] : memref<9x1x128xf32, #tpu.memory_space<vmem>>, vector<1x1x128xf32>
    %177 = vector.shape_cast %176 : vector<1x1x128xf32> to vector<1x128xf32>
    %178 = vector.broadcast %177 : vector<1x128xf32> to vector<8x128xf32>
    %179 = arith.mulf %175, %178 : vector<8x128xf32>
    %180 = arith.truncf %179 : vector<8x128xf32> to vector<8x128xbf16>
    %cst_114 = arith.constant dense<0.000000e+00> : vector<8x128xf32>
    %181 = tpu.matmul %174, %180, %cst_114 {dimension_numbers = #tpu.dot_dimension_numbers<[1], [0], [0], [1], [0, 0, 1, 1], [], []>} : vector<8x8xbf16>, vector<8x128xbf16>, vector<8x128xf32> -> vector<8x128xf32>
    %182 = arith.addf %172, %181 : vector<8x128xf32>
    %c7_115 = arith.constant 7 : index
    %c0_116 = arith.constant 0 : index
    %c0_117 = arith.constant 0 : index
    %183 = vector.load %arg13[%c7_115, %c0_116, %c0_117] : memref<9x8x8xbf16, #tpu.memory_space<vmem>>, vector<1x8x8xbf16>
    %184 = vector.shape_cast %183 : vector<1x8x8xbf16> to vector<8x8xbf16>
    %c120_i32 = arith.constant 120 : i32
    %185 = tpu.dynamic_rotate %116 by %c120_i32 dim 1 : vector<8x128xf32>, i32 -> vector<8x128xf32>
    %c7_118 = arith.constant 7 : index
    %c0_119 = arith.constant 0 : index
    %c0_120 = arith.constant 0 : index
    %186 = vector.load %arg4[%c7_118, %c0_119, %c0_120] : memref<9x1x128xf32, #tpu.memory_space<vmem>>, vector<1x1x128xf32>
    %187 = vector.shape_cast %186 : vector<1x1x128xf32> to vector<1x128xf32>
    %188 = vector.broadcast %187 : vector<1x128xf32> to vector<8x128xf32>
    %189 = arith.mulf %185, %188 : vector<8x128xf32>
    %190 = arith.truncf %189 : vector<8x128xf32> to vector<8x128xbf16>
    %cst_121 = arith.constant dense<0.000000e+00> : vector<8x128xf32>
    %191 = tpu.matmul %184, %190, %cst_121 {dimension_numbers = #tpu.dot_dimension_numbers<[1], [0], [0], [1], [0, 0, 1, 1], [], []>} : vector<8x8xbf16>, vector<8x128xbf16>, vector<8x128xf32> -> vector<8x128xf32>
    %192 = arith.addf %182, %191 : vector<8x128xf32>
    %c8_122 = arith.constant 8 : index
    %c0_123 = arith.constant 0 : index
    %c0_124 = arith.constant 0 : index
    %193 = vector.load %arg13[%c8_122, %c0_123, %c0_124] : memref<9x8x8xbf16, #tpu.memory_space<vmem>>, vector<1x8x8xbf16>
    %194 = vector.shape_cast %193 : vector<1x8x8xbf16> to vector<8x8xbf16>
    %c119_i32 = arith.constant 119 : i32
    %195 = tpu.dynamic_rotate %116 by %c119_i32 dim 1 : vector<8x128xf32>, i32 -> vector<8x128xf32>
    %c8_125 = arith.constant 8 : index
    %c0_126 = arith.constant 0 : index
    %c0_127 = arith.constant 0 : index
    %196 = vector.load %arg4[%c8_125, %c0_126, %c0_127] : memref<9x1x128xf32, #tpu.memory_space<vmem>>, vector<1x1x128xf32>
    %197 = vector.shape_cast %196 : vector<1x1x128xf32> to vector<1x128xf32>
    %198 = vector.broadcast %197 : vector<1x128xf32> to vector<8x128xf32>
    %199 = arith.mulf %195, %198 : vector<8x128xf32>
    %200 = arith.truncf %199 : vector<8x128xf32> to vector<8x128xbf16>
    %cst_128 = arith.constant dense<0.000000e+00> : vector<8x128xf32>
    %201 = tpu.matmul %194, %200, %cst_128 {dimension_numbers = #tpu.dot_dimension_numbers<[1], [0], [0], [1], [0, 0, 1, 1], [], []>} : vector<8x8xbf16>, vector<8x128xbf16>, vector<8x128xf32> -> vector<8x128xf32>
    %202 = arith.addf %192, %201 : vector<8x128xf32>
    %c0_129 = arith.constant 0 : index
    %c0_130 = arith.constant 0 : index
    %203 = vector.load %arg11[%c0_129, %c0_130] : memref<8x1xf32, #tpu.memory_space<vmem>>, vector<8x1xf32>
    %c0_131 = arith.constant 0 : index
    %c0_132 = arith.constant 0 : index
    %204 = vector.load %arg9[%c0_131, %c0_132] : memref<8x1xf32, #tpu.memory_space<vmem>>, vector<8x1xf32>
    %cst_133 = arith.constant dense<0.000000e+00> : vector<8xf32>
    %205 = vector.multi_reduction <add>, %202, %cst_133 [1] : vector<8x128xf32> to vector<8xf32>
    %206 = vector.shape_cast %205 : vector<8xf32> to vector<8x1xf32>
    %cst_134 = arith.constant 7.812500e-03 : f32
    %207 = vector.broadcast %cst_134 : f32 to vector<8x1xf32>
    %208 = arith.mulf %206, %207 : vector<8x1xf32>
    %209 = vector.broadcast %208 : vector<8x1xf32> to vector<8x128xf32>
    %210 = arith.subf %202, %209 : vector<8x128xf32>
    %211 = arith.mulf %210, %210 : vector<8x128xf32>
    %cst_135 = arith.constant dense<0.000000e+00> : vector<8xf32>
    %212 = vector.multi_reduction <add>, %211, %cst_135 [1] : vector<8x128xf32> to vector<8xf32>
    %213 = vector.shape_cast %212 : vector<8xf32> to vector<8x1xf32>
    %cst_136 = arith.constant 7.812500e-03 : f32
    %214 = vector.broadcast %cst_136 : f32 to vector<8x1xf32>
    %215 = arith.mulf %213, %214 : vector<8x1xf32>
    %cst_137 = arith.constant 9.99999974E-6 : f32
    %216 = vector.broadcast %cst_137 : f32 to vector<8x1xf32>
    %217 = arith.addf %215, %216 : vector<8x1xf32>
    %218 = math.rsqrt %217 : vector<8x1xf32>
    %219 = vector.broadcast %218 : vector<8x1xf32> to vector<8x128xf32>
    %220 = arith.mulf %210, %219 : vector<8x128xf32>
    %221 = vector.broadcast %203 : vector<8x1xf32> to vector<8x128xf32>
    %222 = arith.mulf %220, %221 : vector<8x128xf32>
    %223 = vector.broadcast %204 : vector<8x1xf32> to vector<8x128xf32>
    %224 = arith.addf %222, %223 : vector<8x128xf32>
    %cst_138 = arith.constant 0.000000e+00 : f32
    %225 = vector.broadcast %cst_138 : f32 to vector<8x128xf32>
    %226 = arith.cmpf oge, %224, %225 : vector<8x128xf32>
    %cst_139 = arith.constant 0.00999999977 : f32
    %227 = vector.broadcast %cst_139 : f32 to vector<8x128xf32>
    %228 = arith.mulf %227, %224 : vector<8x128xf32>
    %229 = arith.select %226, %224, %228 : vector<8x128xi1>, vector<8x128xf32>
    %cst_140 = arith.constant 0.000000e+00 : f32
    %230 = vector.broadcast %cst_140 : f32 to vector<16x128xf32>
    %c0_141 = arith.constant 0 : index
    %c0_142 = arith.constant 0 : index
    %c0_143 = arith.constant 0 : index
    %231 = vector.load %arg18[%c0_141, %c0_142, %c0_143] : memref<9x16x8xbf16, #tpu.memory_space<vmem>>, vector<1x16x8xbf16>
    %232 = vector.shape_cast %231 : vector<1x16x8xbf16> to vector<16x8xbf16>
    %c9_i32_144 = arith.constant 9 : i32
    %233 = tpu.dynamic_rotate %229 by %c9_i32_144 dim 1 : vector<8x128xf32>, i32 -> vector<8x128xf32>
    %c0_145 = arith.constant 0 : index
    %c0_146 = arith.constant 0 : index
    %c0_147 = arith.constant 0 : index
    %234 = vector.load %arg4[%c0_145, %c0_146, %c0_147] : memref<9x1x128xf32, #tpu.memory_space<vmem>>, vector<1x1x128xf32>
    %235 = vector.shape_cast %234 : vector<1x1x128xf32> to vector<1x128xf32>
    %236 = vector.broadcast %235 : vector<1x128xf32> to vector<8x128xf32>
    %237 = arith.mulf %233, %236 : vector<8x128xf32>
    %238 = arith.truncf %237 : vector<8x128xf32> to vector<8x128xbf16>
    %cst_148 = arith.constant dense<0.000000e+00> : vector<16x128xf32>
    %239 = tpu.matmul %232, %238, %cst_148 {dimension_numbers = #tpu.dot_dimension_numbers<[1], [0], [0], [1], [0, 0, 1, 1], [], []>} : vector<16x8xbf16>, vector<8x128xbf16>, vector<16x128xf32> -> vector<16x128xf32>
    %240 = arith.addf %230, %239 : vector<16x128xf32>
    %c1_149 = arith.constant 1 : index
    %c0_150 = arith.constant 0 : index
    %c0_151 = arith.constant 0 : index
    %241 = vector.load %arg18[%c1_149, %c0_150, %c0_151] : memref<9x16x8xbf16, #tpu.memory_space<vmem>>, vector<1x16x8xbf16>
    %242 = vector.shape_cast %241 : vector<1x16x8xbf16> to vector<16x8xbf16>
    %c8_i32_152 = arith.constant 8 : i32
    %243 = tpu.dynamic_rotate %229 by %c8_i32_152 dim 1 : vector<8x128xf32>, i32 -> vector<8x128xf32>
    %c1_153 = arith.constant 1 : index
    %c0_154 = arith.constant 0 : index
    %c0_155 = arith.constant 0 : index
    %244 = vector.load %arg4[%c1_153, %c0_154, %c0_155] : memref<9x1x128xf32, #tpu.memory_space<vmem>>, vector<1x1x128xf32>
    %245 = vector.shape_cast %244 : vector<1x1x128xf32> to vector<1x128xf32>
    %246 = vector.broadcast %245 : vector<1x128xf32> to vector<8x128xf32>
    %247 = arith.mulf %243, %246 : vector<8x128xf32>
    %248 = arith.truncf %247 : vector<8x128xf32> to vector<8x128xbf16>
    %cst_156 = arith.constant dense<0.000000e+00> : vector<16x128xf32>
    %249 = tpu.matmul %242, %248, %cst_156 {dimension_numbers = #tpu.dot_dimension_numbers<[1], [0], [0], [1], [0, 0, 1, 1], [], []>} : vector<16x8xbf16>, vector<8x128xbf16>, vector<16x128xf32> -> vector<16x128xf32>
    %250 = arith.addf %240, %249 : vector<16x128xf32>
    %c2_157 = arith.constant 2 : index
    %c0_158 = arith.constant 0 : index
    %c0_159 = arith.constant 0 : index
    %251 = vector.load %arg18[%c2_157, %c0_158, %c0_159] : memref<9x16x8xbf16, #tpu.memory_space<vmem>>, vector<1x16x8xbf16>
    %252 = vector.shape_cast %251 : vector<1x16x8xbf16> to vector<16x8xbf16>
    %c7_i32_160 = arith.constant 7 : i32
    %253 = tpu.dynamic_rotate %229 by %c7_i32_160 dim 1 : vector<8x128xf32>, i32 -> vector<8x128xf32>
    %c2_161 = arith.constant 2 : index
    %c0_162 = arith.constant 0 : index
    %c0_163 = arith.constant 0 : index
    %254 = vector.load %arg4[%c2_161, %c0_162, %c0_163] : memref<9x1x128xf32, #tpu.memory_space<vmem>>, vector<1x1x128xf32>
    %255 = vector.shape_cast %254 : vector<1x1x128xf32> to vector<1x128xf32>
    %256 = vector.broadcast %255 : vector<1x128xf32> to vector<8x128xf32>
    %257 = arith.mulf %253, %256 : vector<8x128xf32>
    %258 = arith.truncf %257 : vector<8x128xf32> to vector<8x128xbf16>
    %cst_164 = arith.constant dense<0.000000e+00> : vector<16x128xf32>
    %259 = tpu.matmul %252, %258, %cst_164 {dimension_numbers = #tpu.dot_dimension_numbers<[1], [0], [0], [1], [0, 0, 1, 1], [], []>} : vector<16x8xbf16>, vector<8x128xbf16>, vector<16x128xf32> -> vector<16x128xf32>
    %260 = arith.addf %250, %259 : vector<16x128xf32>
    %c3_165 = arith.constant 3 : index
    %c0_166 = arith.constant 0 : index
    %c0_167 = arith.constant 0 : index
    %261 = vector.load %arg18[%c3_165, %c0_166, %c0_167] : memref<9x16x8xbf16, #tpu.memory_space<vmem>>, vector<1x16x8xbf16>
    %262 = vector.shape_cast %261 : vector<1x16x8xbf16> to vector<16x8xbf16>
    %c1_i32_168 = arith.constant 1 : i32
    %263 = tpu.dynamic_rotate %229 by %c1_i32_168 dim 1 : vector<8x128xf32>, i32 -> vector<8x128xf32>
    %c3_169 = arith.constant 3 : index
    %c0_170 = arith.constant 0 : index
    %c0_171 = arith.constant 0 : index
    %264 = vector.load %arg4[%c3_169, %c0_170, %c0_171] : memref<9x1x128xf32, #tpu.memory_space<vmem>>, vector<1x1x128xf32>
    %265 = vector.shape_cast %264 : vector<1x1x128xf32> to vector<1x128xf32>
    %266 = vector.broadcast %265 : vector<1x128xf32> to vector<8x128xf32>
    %267 = arith.mulf %263, %266 : vector<8x128xf32>
    %268 = arith.truncf %267 : vector<8x128xf32> to vector<8x128xbf16>
    %cst_172 = arith.constant dense<0.000000e+00> : vector<16x128xf32>
    %269 = tpu.matmul %262, %268, %cst_172 {dimension_numbers = #tpu.dot_dimension_numbers<[1], [0], [0], [1], [0, 0, 1, 1], [], []>} : vector<16x8xbf16>, vector<8x128xbf16>, vector<16x128xf32> -> vector<16x128xf32>
    %270 = arith.addf %260, %269 : vector<16x128xf32>
    %c4_173 = arith.constant 4 : index
    %c0_174 = arith.constant 0 : index
    %c0_175 = arith.constant 0 : index
    %271 = vector.load %arg18[%c4_173, %c0_174, %c0_175] : memref<9x16x8xbf16, #tpu.memory_space<vmem>>, vector<1x16x8xbf16>
    %272 = vector.shape_cast %271 : vector<1x16x8xbf16> to vector<16x8xbf16>
    %273 = arith.truncf %229 : vector<8x128xf32> to vector<8x128xbf16>
    %cst_176 = arith.constant dense<0.000000e+00> : vector<16x128xf32>
    %274 = tpu.matmul %272, %273, %cst_176 {dimension_numbers = #tpu.dot_dimension_numbers<[1], [0], [0], [1], [0, 0, 1, 1], [], []>} : vector<16x8xbf16>, vector<8x128xbf16>, vector<16x128xf32> -> vector<16x128xf32>
    %275 = arith.addf %270, %274 : vector<16x128xf32>
    %c5_177 = arith.constant 5 : index
    %c0_178 = arith.constant 0 : index
    %c0_179 = arith.constant 0 : index
    %276 = vector.load %arg18[%c5_177, %c0_178, %c0_179] : memref<9x16x8xbf16, #tpu.memory_space<vmem>>, vector<1x16x8xbf16>
    %277 = vector.shape_cast %276 : vector<1x16x8xbf16> to vector<16x8xbf16>
    %c127_i32_180 = arith.constant 127 : i32
    %278 = tpu.dynamic_rotate %229 by %c127_i32_180 dim 1 : vector<8x128xf32>, i32 -> vector<8x128xf32>
    %c5_181 = arith.constant 5 : index
    %c0_182 = arith.constant 0 : index
    %c0_183 = arith.constant 0 : index
    %279 = vector.load %arg4[%c5_181, %c0_182, %c0_183] : memref<9x1x128xf32, #tpu.memory_space<vmem>>, vector<1x1x128xf32>
    %280 = vector.shape_cast %279 : vector<1x1x128xf32> to vector<1x128xf32>
    %281 = vector.broadcast %280 : vector<1x128xf32> to vector<8x128xf32>
    %282 = arith.mulf %278, %281 : vector<8x128xf32>
    %283 = arith.truncf %282 : vector<8x128xf32> to vector<8x128xbf16>
    %cst_184 = arith.constant dense<0.000000e+00> : vector<16x128xf32>
    %284 = tpu.matmul %277, %283, %cst_184 {dimension_numbers = #tpu.dot_dimension_numbers<[1], [0], [0], [1], [0, 0, 1, 1], [], []>} : vector<16x8xbf16>, vector<8x128xbf16>, vector<16x128xf32> -> vector<16x128xf32>
    %285 = arith.addf %275, %284 : vector<16x128xf32>
    %c6_185 = arith.constant 6 : index
    %c0_186 = arith.constant 0 : index
    %c0_187 = arith.constant 0 : index
    %286 = vector.load %arg18[%c6_185, %c0_186, %c0_187] : memref<9x16x8xbf16, #tpu.memory_space<vmem>>, vector<1x16x8xbf16>
    %287 = vector.shape_cast %286 : vector<1x16x8xbf16> to vector<16x8xbf16>
    %c121_i32_188 = arith.constant 121 : i32
    %288 = tpu.dynamic_rotate %229 by %c121_i32_188 dim 1 : vector<8x128xf32>, i32 -> vector<8x128xf32>
    %c6_189 = arith.constant 6 : index
    %c0_190 = arith.constant 0 : index
    %c0_191 = arith.constant 0 : index
    %289 = vector.load %arg4[%c6_189, %c0_190, %c0_191] : memref<9x1x128xf32, #tpu.memory_space<vmem>>, vector<1x1x128xf32>
    %290 = vector.shape_cast %289 : vector<1x1x128xf32> to vector<1x128xf32>
    %291 = vector.broadcast %290 : vector<1x128xf32> to vector<8x128xf32>
    %292 = arith.mulf %288, %291 : vector<8x128xf32>
    %293 = arith.truncf %292 : vector<8x128xf32> to vector<8x128xbf16>
    %cst_192 = arith.constant dense<0.000000e+00> : vector<16x128xf32>
    %294 = tpu.matmul %287, %293, %cst_192 {dimension_numbers = #tpu.dot_dimension_numbers<[1], [0], [0], [1], [0, 0, 1, 1], [], []>} : vector<16x8xbf16>, vector<8x128xbf16>, vector<16x128xf32> -> vector<16x128xf32>
    %295 = arith.addf %285, %294 : vector<16x128xf32>
    %c7_193 = arith.constant 7 : index
    %c0_194 = arith.constant 0 : index
    %c0_195 = arith.constant 0 : index
    %296 = vector.load %arg18[%c7_193, %c0_194, %c0_195] : memref<9x16x8xbf16, #tpu.memory_space<vmem>>, vector<1x16x8xbf16>
    %297 = vector.shape_cast %296 : vector<1x16x8xbf16> to vector<16x8xbf16>
    %c120_i32_196 = arith.constant 120 : i32
    %298 = tpu.dynamic_rotate %229 by %c120_i32_196 dim 1 : vector<8x128xf32>, i32 -> vector<8x128xf32>
    %c7_197 = arith.constant 7 : index
    %c0_198 = arith.constant 0 : index
    %c0_199 = arith.constant 0 : index
    %299 = vector.load %arg4[%c7_197, %c0_198, %c0_199] : memref<9x1x128xf32, #tpu.memory_space<vmem>>, vector<1x1x128xf32>
    %300 = vector.shape_cast %299 : vector<1x1x128xf32> to vector<1x128xf32>
    %301 = vector.broadcast %300 : vector<1x128xf32> to vector<8x128xf32>
    %302 = arith.mulf %298, %301 : vector<8x128xf32>
    %303 = arith.truncf %302 : vector<8x128xf32> to vector<8x128xbf16>
    %cst_200 = arith.constant dense<0.000000e+00> : vector<16x128xf32>
    %304 = tpu.matmul %297, %303, %cst_200 {dimension_numbers = #tpu.dot_dimension_numbers<[1], [0], [0], [1], [0, 0, 1, 1], [], []>} : vector<16x8xbf16>, vector<8x128xbf16>, vector<16x128xf32> -> vector<16x128xf32>
    %305 = arith.addf %295, %304 : vector<16x128xf32>
    %c8_201 = arith.constant 8 : index
    %c0_202 = arith.constant 0 : index
    %c0_203 = arith.constant 0 : index
    %306 = vector.load %arg18[%c8_201, %c0_202, %c0_203] : memref<9x16x8xbf16, #tpu.memory_space<vmem>>, vector<1x16x8xbf16>
    %307 = vector.shape_cast %306 : vector<1x16x8xbf16> to vector<16x8xbf16>
    %c119_i32_204 = arith.constant 119 : i32
    %308 = tpu.dynamic_rotate %229 by %c119_i32_204 dim 1 : vector<8x128xf32>, i32 -> vector<8x128xf32>
    %c8_205 = arith.constant 8 : index
    %c0_206 = arith.constant 0 : index
    %c0_207 = arith.constant 0 : index
    %309 = vector.load %arg4[%c8_205, %c0_206, %c0_207] : memref<9x1x128xf32, #tpu.memory_space<vmem>>, vector<1x1x128xf32>
    %310 = vector.shape_cast %309 : vector<1x1x128xf32> to vector<1x128xf32>
    %311 = vector.broadcast %310 : vector<1x128xf32> to vector<8x128xf32>
    %312 = arith.mulf %308, %311 : vector<8x128xf32>
    %313 = arith.truncf %312 : vector<8x128xf32> to vector<8x128xbf16>
    %cst_208 = arith.constant dense<0.000000e+00> : vector<16x128xf32>
    %314 = tpu.matmul %307, %313, %cst_208 {dimension_numbers = #tpu.dot_dimension_numbers<[1], [0], [0], [1], [0, 0, 1, 1], [], []>} : vector<16x8xbf16>, vector<8x128xbf16>, vector<16x128xf32> -> vector<16x128xf32>
    %315 = arith.addf %305, %314 : vector<16x128xf32>
    %316 = arith.truncf %315 : vector<16x128xf32> to vector<16x128xbf16>
    %c0_209 = arith.constant 0 : index
    %c0_210 = arith.constant 0 : index
    %317 = vector.load %arg2[%c0_209, %c0_210] : memref<128x32xbf16, #tpu.memory_space<vmem>>, vector<128x32xbf16>
    %cst_211 = arith.constant dense<0.000000e+00> : vector<16x32xf32>
    %318 = tpu.matmul %316, %317, %cst_211 {dimension_numbers = #tpu.dot_dimension_numbers<[1], [0], [0], [1], [0, 0, 1, 1], [], []>} : vector<16x128xbf16>, vector<128x32xbf16>, vector<16x32xf32> -> vector<16x32xf32>
    %c0_212 = arith.constant 0 : index
    %c0_213 = arith.constant 0 : index
    %319 = vector.load %arg16[%c0_212, %c0_213] : memref<16x1xf32, #tpu.memory_space<vmem>>, vector<16x1xf32>
    %c0_214 = arith.constant 0 : index
    %c0_215 = arith.constant 0 : index
    %320 = vector.load %arg14[%c0_214, %c0_215] : memref<16x1xf32, #tpu.memory_space<vmem>>, vector<16x1xf32>
    %cst_216 = arith.constant dense<0.000000e+00> : vector<16xf32>
    %321 = vector.multi_reduction <add>, %318, %cst_216 [1] : vector<16x32xf32> to vector<16xf32>
    %322 = vector.shape_cast %321 : vector<16xf32> to vector<16x1xf32>
    %cst_217 = arith.constant 3.125000e-02 : f32
    %323 = vector.broadcast %cst_217 : f32 to vector<16x1xf32>
    %324 = arith.mulf %322, %323 : vector<16x1xf32>
    %325 = vector.broadcast %324 : vector<16x1xf32> to vector<16x32xf32>
    %326 = arith.subf %318, %325 : vector<16x32xf32>
    %327 = arith.mulf %326, %326 : vector<16x32xf32>
    %cst_218 = arith.constant dense<0.000000e+00> : vector<16xf32>
    %328 = vector.multi_reduction <add>, %327, %cst_218 [1] : vector<16x32xf32> to vector<16xf32>
    %329 = vector.shape_cast %328 : vector<16xf32> to vector<16x1xf32>
    %cst_219 = arith.constant 3.125000e-02 : f32
    %330 = vector.broadcast %cst_219 : f32 to vector<16x1xf32>
    %331 = arith.mulf %329, %330 : vector<16x1xf32>
    %cst_220 = arith.constant 9.99999974E-6 : f32
    %332 = vector.broadcast %cst_220 : f32 to vector<16x1xf32>
    %333 = arith.addf %331, %332 : vector<16x1xf32>
    %334 = math.rsqrt %333 : vector<16x1xf32>
    %335 = vector.broadcast %334 : vector<16x1xf32> to vector<16x32xf32>
    %336 = arith.mulf %326, %335 : vector<16x32xf32>
    %337 = vector.broadcast %319 : vector<16x1xf32> to vector<16x32xf32>
    %338 = arith.mulf %336, %337 : vector<16x32xf32>
    %339 = vector.broadcast %320 : vector<16x1xf32> to vector<16x32xf32>
    %340 = arith.addf %338, %339 : vector<16x32xf32>
    %cst_221 = arith.constant 0.000000e+00 : f32
    %341 = vector.broadcast %cst_221 : f32 to vector<16x32xf32>
    %342 = arith.cmpf oge, %340, %341 : vector<16x32xf32>
    %cst_222 = arith.constant 0.00999999977 : f32
    %343 = vector.broadcast %cst_222 : f32 to vector<16x32xf32>
    %344 = arith.mulf %343, %340 : vector<16x32xf32>
    %345 = arith.select %342, %340, %344 : vector<16x32xi1>, vector<16x32xf32>
    %cst_223 = arith.constant 0.000000e+00 : f32
    %346 = vector.broadcast %cst_223 : f32 to vector<16x32xf32>
    %c0_224 = arith.constant 0 : index
    %c0_225 = arith.constant 0 : index
    %c0_226 = arith.constant 0 : index
    %347 = vector.load %arg19[%c0_224, %c0_225, %c0_226] : memref<9x16x16xbf16, #tpu.memory_space<vmem>>, vector<1x16x16xbf16>
    %348 = vector.shape_cast %347 : vector<1x16x16xbf16> to vector<16x16xbf16>
    %349 = arith.truncf %345 : vector<16x32xf32> to vector<16x32xbf16>
    %c0_227 = arith.constant 0 : index
    %c0_228 = arith.constant 0 : index
    %c0_229 = arith.constant 0 : index
    %350 = vector.load %arg5[%c0_227, %c0_228, %c0_229] : memref<9x32x32xbf16, #tpu.memory_space<vmem>>, vector<1x32x32xbf16>
    %351 = vector.shape_cast %350 : vector<1x32x32xbf16> to vector<32x32xbf16>
    %cst_230 = arith.constant dense<0.000000e+00> : vector<16x32xf32>
    %352 = tpu.matmul %349, %351, %cst_230 {dimension_numbers = #tpu.dot_dimension_numbers<[1], [0], [0], [1], [0, 0, 1, 1], [], []>} : vector<16x32xbf16>, vector<32x32xbf16>, vector<16x32xf32> -> vector<16x32xf32>
    %353 = arith.truncf %352 : vector<16x32xf32> to vector<16x32xbf16>
    %cst_231 = arith.constant dense<0.000000e+00> : vector<16x32xf32>
    %354 = tpu.matmul %348, %353, %cst_231 {dimension_numbers = #tpu.dot_dimension_numbers<[1], [0], [0], [1], [0, 0, 1, 1], [], []>} : vector<16x16xbf16>, vector<16x32xbf16>, vector<16x32xf32> -> vector<16x32xf32>
    %355 = arith.addf %346, %354 : vector<16x32xf32>
    %c1_232 = arith.constant 1 : index
    %c0_233 = arith.constant 0 : index
    %c0_234 = arith.constant 0 : index
    %356 = vector.load %arg19[%c1_232, %c0_233, %c0_234] : memref<9x16x16xbf16, #tpu.memory_space<vmem>>, vector<1x16x16xbf16>
    %357 = vector.shape_cast %356 : vector<1x16x16xbf16> to vector<16x16xbf16>
    %358 = arith.truncf %345 : vector<16x32xf32> to vector<16x32xbf16>
    %c1_235 = arith.constant 1 : index
    %c0_236 = arith.constant 0 : index
    %c0_237 = arith.constant 0 : index
    %359 = vector.load %arg5[%c1_235, %c0_236, %c0_237] : memref<9x32x32xbf16, #tpu.memory_space<vmem>>, vector<1x32x32xbf16>
    %360 = vector.shape_cast %359 : vector<1x32x32xbf16> to vector<32x32xbf16>
    %cst_238 = arith.constant dense<0.000000e+00> : vector<16x32xf32>
    %361 = tpu.matmul %358, %360, %cst_238 {dimension_numbers = #tpu.dot_dimension_numbers<[1], [0], [0], [1], [0, 0, 1, 1], [], []>} : vector<16x32xbf16>, vector<32x32xbf16>, vector<16x32xf32> -> vector<16x32xf32>
    %362 = arith.truncf %361 : vector<16x32xf32> to vector<16x32xbf16>
    %cst_239 = arith.constant dense<0.000000e+00> : vector<16x32xf32>
    %363 = tpu.matmul %357, %362, %cst_239 {dimension_numbers = #tpu.dot_dimension_numbers<[1], [0], [0], [1], [0, 0, 1, 1], [], []>} : vector<16x16xbf16>, vector<16x32xbf16>, vector<16x32xf32> -> vector<16x32xf32>
    %364 = arith.addf %355, %363 : vector<16x32xf32>
    %c2_240 = arith.constant 2 : index
    %c0_241 = arith.constant 0 : index
    %c0_242 = arith.constant 0 : index
    %365 = vector.load %arg19[%c2_240, %c0_241, %c0_242] : memref<9x16x16xbf16, #tpu.memory_space<vmem>>, vector<1x16x16xbf16>
    %366 = vector.shape_cast %365 : vector<1x16x16xbf16> to vector<16x16xbf16>
    %367 = arith.truncf %345 : vector<16x32xf32> to vector<16x32xbf16>
    %c2_243 = arith.constant 2 : index
    %c0_244 = arith.constant 0 : index
    %c0_245 = arith.constant 0 : index
    %368 = vector.load %arg5[%c2_243, %c0_244, %c0_245] : memref<9x32x32xbf16, #tpu.memory_space<vmem>>, vector<1x32x32xbf16>
    %369 = vector.shape_cast %368 : vector<1x32x32xbf16> to vector<32x32xbf16>
    %cst_246 = arith.constant dense<0.000000e+00> : vector<16x32xf32>
    %370 = tpu.matmul %367, %369, %cst_246 {dimension_numbers = #tpu.dot_dimension_numbers<[1], [0], [0], [1], [0, 0, 1, 1], [], []>} : vector<16x32xbf16>, vector<32x32xbf16>, vector<16x32xf32> -> vector<16x32xf32>
    %371 = arith.truncf %370 : vector<16x32xf32> to vector<16x32xbf16>
    %cst_247 = arith.constant dense<0.000000e+00> : vector<16x32xf32>
    %372 = tpu.matmul %366, %371, %cst_247 {dimension_numbers = #tpu.dot_dimension_numbers<[1], [0], [0], [1], [0, 0, 1, 1], [], []>} : vector<16x16xbf16>, vector<16x32xbf16>, vector<16x32xf32> -> vector<16x32xf32>
    %373 = arith.addf %364, %372 : vector<16x32xf32>
    %c3_248 = arith.constant 3 : index
    %c0_249 = arith.constant 0 : index
    %c0_250 = arith.constant 0 : index
    %374 = vector.load %arg19[%c3_248, %c0_249, %c0_250] : memref<9x16x16xbf16, #tpu.memory_space<vmem>>, vector<1x16x16xbf16>
    %375 = vector.shape_cast %374 : vector<1x16x16xbf16> to vector<16x16xbf16>
    %376 = arith.truncf %345 : vector<16x32xf32> to vector<16x32xbf16>
    %c3_251 = arith.constant 3 : index
    %c0_252 = arith.constant 0 : index
    %c0_253 = arith.constant 0 : index
    %377 = vector.load %arg5[%c3_251, %c0_252, %c0_253] : memref<9x32x32xbf16, #tpu.memory_space<vmem>>, vector<1x32x32xbf16>
    %378 = vector.shape_cast %377 : vector<1x32x32xbf16> to vector<32x32xbf16>
    %cst_254 = arith.constant dense<0.000000e+00> : vector<16x32xf32>
    %379 = tpu.matmul %376, %378, %cst_254 {dimension_numbers = #tpu.dot_dimension_numbers<[1], [0], [0], [1], [0, 0, 1, 1], [], []>} : vector<16x32xbf16>, vector<32x32xbf16>, vector<16x32xf32> -> vector<16x32xf32>
    %380 = arith.truncf %379 : vector<16x32xf32> to vector<16x32xbf16>
    %cst_255 = arith.constant dense<0.000000e+00> : vector<16x32xf32>
    %381 = tpu.matmul %375, %380, %cst_255 {dimension_numbers = #tpu.dot_dimension_numbers<[1], [0], [0], [1], [0, 0, 1, 1], [], []>} : vector<16x16xbf16>, vector<16x32xbf16>, vector<16x32xf32> -> vector<16x32xf32>
    %382 = arith.addf %373, %381 : vector<16x32xf32>
    %c4_256 = arith.constant 4 : index
    %c0_257 = arith.constant 0 : index
    %c0_258 = arith.constant 0 : index
    %383 = vector.load %arg19[%c4_256, %c0_257, %c0_258] : memref<9x16x16xbf16, #tpu.memory_space<vmem>>, vector<1x16x16xbf16>
    %384 = vector.shape_cast %383 : vector<1x16x16xbf16> to vector<16x16xbf16>
    %385 = arith.truncf %345 : vector<16x32xf32> to vector<16x32xbf16>
    %cst_259 = arith.constant dense<0.000000e+00> : vector<16x32xf32>
    %386 = tpu.matmul %384, %385, %cst_259 {dimension_numbers = #tpu.dot_dimension_numbers<[1], [0], [0], [1], [0, 0, 1, 1], [], []>} : vector<16x16xbf16>, vector<16x32xbf16>, vector<16x32xf32> -> vector<16x32xf32>
    %387 = arith.addf %382, %386 : vector<16x32xf32>
    %c5_260 = arith.constant 5 : index
    %c0_261 = arith.constant 0 : index
    %c0_262 = arith.constant 0 : index
    %388 = vector.load %arg19[%c5_260, %c0_261, %c0_262] : memref<9x16x16xbf16, #tpu.memory_space<vmem>>, vector<1x16x16xbf16>
    %389 = vector.shape_cast %388 : vector<1x16x16xbf16> to vector<16x16xbf16>
    %390 = arith.truncf %345 : vector<16x32xf32> to vector<16x32xbf16>
    %c5_263 = arith.constant 5 : index
    %c0_264 = arith.constant 0 : index
    %c0_265 = arith.constant 0 : index
    %391 = vector.load %arg5[%c5_263, %c0_264, %c0_265] : memref<9x32x32xbf16, #tpu.memory_space<vmem>>, vector<1x32x32xbf16>
    %392 = vector.shape_cast %391 : vector<1x32x32xbf16> to vector<32x32xbf16>
    %cst_266 = arith.constant dense<0.000000e+00> : vector<16x32xf32>
    %393 = tpu.matmul %390, %392, %cst_266 {dimension_numbers = #tpu.dot_dimension_numbers<[1], [0], [0], [1], [0, 0, 1, 1], [], []>} : vector<16x32xbf16>, vector<32x32xbf16>, vector<16x32xf32> -> vector<16x32xf32>
    %394 = arith.truncf %393 : vector<16x32xf32> to vector<16x32xbf16>
    %cst_267 = arith.constant dense<0.000000e+00> : vector<16x32xf32>
    %395 = tpu.matmul %389, %394, %cst_267 {dimension_numbers = #tpu.dot_dimension_numbers<[1], [0], [0], [1], [0, 0, 1, 1], [], []>} : vector<16x16xbf16>, vector<16x32xbf16>, vector<16x32xf32> -> vector<16x32xf32>
    %396 = arith.addf %387, %395 : vector<16x32xf32>
    %c6_268 = arith.constant 6 : index
    %c0_269 = arith.constant 0 : index
    %c0_270 = arith.constant 0 : index
    %397 = vector.load %arg19[%c6_268, %c0_269, %c0_270] : memref<9x16x16xbf16, #tpu.memory_space<vmem>>, vector<1x16x16xbf16>
    %398 = vector.shape_cast %397 : vector<1x16x16xbf16> to vector<16x16xbf16>
    %399 = arith.truncf %345 : vector<16x32xf32> to vector<16x32xbf16>
    %c6_271 = arith.constant 6 : index
    %c0_272 = arith.constant 0 : index
    %c0_273 = arith.constant 0 : index
    %400 = vector.load %arg5[%c6_271, %c0_272, %c0_273] : memref<9x32x32xbf16, #tpu.memory_space<vmem>>, vector<1x32x32xbf16>
    %401 = vector.shape_cast %400 : vector<1x32x32xbf16> to vector<32x32xbf16>
    %cst_274 = arith.constant dense<0.000000e+00> : vector<16x32xf32>
    %402 = tpu.matmul %399, %401, %cst_274 {dimension_numbers = #tpu.dot_dimension_numbers<[1], [0], [0], [1], [0, 0, 1, 1], [], []>} : vector<16x32xbf16>, vector<32x32xbf16>, vector<16x32xf32> -> vector<16x32xf32>
    %403 = arith.truncf %402 : vector<16x32xf32> to vector<16x32xbf16>
    %cst_275 = arith.constant dense<0.000000e+00> : vector<16x32xf32>
    %404 = tpu.matmul %398, %403, %cst_275 {dimension_numbers = #tpu.dot_dimension_numbers<[1], [0], [0], [1], [0, 0, 1, 1], [], []>} : vector<16x16xbf16>, vector<16x32xbf16>, vector<16x32xf32> -> vector<16x32xf32>
    %405 = arith.addf %396, %404 : vector<16x32xf32>
    %c7_276 = arith.constant 7 : index
    %c0_277 = arith.constant 0 : index
    %c0_278 = arith.constant 0 : index
    %406 = vector.load %arg19[%c7_276, %c0_277, %c0_278] : memref<9x16x16xbf16, #tpu.memory_space<vmem>>, vector<1x16x16xbf16>
    %407 = vector.shape_cast %406 : vector<1x16x16xbf16> to vector<16x16xbf16>
    %408 = arith.truncf %345 : vector<16x32xf32> to vector<16x32xbf16>
    %c7_279 = arith.constant 7 : index
    %c0_280 = arith.constant 0 : index
    %c0_281 = arith.constant 0 : index
    %409 = vector.load %arg5[%c7_279, %c0_280, %c0_281] : memref<9x32x32xbf16, #tpu.memory_space<vmem>>, vector<1x32x32xbf16>
    %410 = vector.shape_cast %409 : vector<1x32x32xbf16> to vector<32x32xbf16>
    %cst_282 = arith.constant dense<0.000000e+00> : vector<16x32xf32>
    %411 = tpu.matmul %408, %410, %cst_282 {dimension_numbers = #tpu.dot_dimension_numbers<[1], [0], [0], [1], [0, 0, 1, 1], [], []>} : vector<16x32xbf16>, vector<32x32xbf16>, vector<16x32xf32> -> vector<16x32xf32>
    %412 = arith.truncf %411 : vector<16x32xf32> to vector<16x32xbf16>
    %cst_283 = arith.constant dense<0.000000e+00> : vector<16x32xf32>
    %413 = tpu.matmul %407, %412, %cst_283 {dimension_numbers = #tpu.dot_dimension_numbers<[1], [0], [0], [1], [0, 0, 1, 1], [], []>} : vector<16x16xbf16>, vector<16x32xbf16>, vector<16x32xf32> -> vector<16x32xf32>
    %414 = arith.addf %405, %413 : vector<16x32xf32>
    %c8_284 = arith.constant 8 : index
    %c0_285 = arith.constant 0 : index
    %c0_286 = arith.constant 0 : index
    %415 = vector.load %arg19[%c8_284, %c0_285, %c0_286] : memref<9x16x16xbf16, #tpu.memory_space<vmem>>, vector<1x16x16xbf16>
    %416 = vector.shape_cast %415 : vector<1x16x16xbf16> to vector<16x16xbf16>
    %417 = arith.truncf %345 : vector<16x32xf32> to vector<16x32xbf16>
    %c8_287 = arith.constant 8 : index
    %c0_288 = arith.constant 0 : index
    %c0_289 = arith.constant 0 : index
    %418 = vector.load %arg5[%c8_287, %c0_288, %c0_289] : memref<9x32x32xbf16, #tpu.memory_space<vmem>>, vector<1x32x32xbf16>
    %419 = vector.shape_cast %418 : vector<1x32x32xbf16> to vector<32x32xbf16>
    %cst_290 = arith.constant dense<0.000000e+00> : vector<16x32xf32>
    %420 = tpu.matmul %417, %419, %cst_290 {dimension_numbers = #tpu.dot_dimension_numbers<[1], [0], [0], [1], [0, 0, 1, 1], [], []>} : vector<16x32xbf16>, vector<32x32xbf16>, vector<16x32xf32> -> vector<16x32xf32>
    %421 = arith.truncf %420 : vector<16x32xf32> to vector<16x32xbf16>
    %cst_291 = arith.constant dense<0.000000e+00> : vector<16x32xf32>
    %422 = tpu.matmul %416, %421, %cst_291 {dimension_numbers = #tpu.dot_dimension_numbers<[1], [0], [0], [1], [0, 0, 1, 1], [], []>} : vector<16x16xbf16>, vector<16x32xbf16>, vector<16x32xf32> -> vector<16x32xf32>
    %423 = arith.addf %414, %422 : vector<16x32xf32>
    %c0_292 = arith.constant 0 : index
    %c0_293 = arith.constant 0 : index
    %424 = vector.load %arg17[%c0_292, %c0_293] : memref<16x1xf32, #tpu.memory_space<vmem>>, vector<16x1xf32>
    %c0_294 = arith.constant 0 : index
    %c0_295 = arith.constant 0 : index
    %425 = vector.load %arg15[%c0_294, %c0_295] : memref<16x1xf32, #tpu.memory_space<vmem>>, vector<16x1xf32>
    %cst_296 = arith.constant dense<0.000000e+00> : vector<16xf32>
    %426 = vector.multi_reduction <add>, %423, %cst_296 [1] : vector<16x32xf32> to vector<16xf32>
    %427 = vector.shape_cast %426 : vector<16xf32> to vector<16x1xf32>
    %cst_297 = arith.constant 3.125000e-02 : f32
    %428 = vector.broadcast %cst_297 : f32 to vector<16x1xf32>
    %429 = arith.mulf %427, %428 : vector<16x1xf32>
    %430 = vector.broadcast %429 : vector<16x1xf32> to vector<16x32xf32>
    %431 = arith.subf %423, %430 : vector<16x32xf32>
    %432 = arith.mulf %431, %431 : vector<16x32xf32>
    %cst_298 = arith.constant dense<0.000000e+00> : vector<16xf32>
    %433 = vector.multi_reduction <add>, %432, %cst_298 [1] : vector<16x32xf32> to vector<16xf32>
    %434 = vector.shape_cast %433 : vector<16xf32> to vector<16x1xf32>
    %cst_299 = arith.constant 3.125000e-02 : f32
    %435 = vector.broadcast %cst_299 : f32 to vector<16x1xf32>
    %436 = arith.mulf %434, %435 : vector<16x1xf32>
    %cst_300 = arith.constant 9.99999974E-6 : f32
    %437 = vector.broadcast %cst_300 : f32 to vector<16x1xf32>
    %438 = arith.addf %436, %437 : vector<16x1xf32>
    %439 = math.rsqrt %438 : vector<16x1xf32>
    %440 = vector.broadcast %439 : vector<16x1xf32> to vector<16x32xf32>
    %441 = arith.mulf %431, %440 : vector<16x32xf32>
    %442 = vector.broadcast %424 : vector<16x1xf32> to vector<16x32xf32>
    %443 = arith.mulf %441, %442 : vector<16x32xf32>
    %444 = vector.broadcast %425 : vector<16x1xf32> to vector<16x32xf32>
    %445 = arith.addf %443, %444 : vector<16x32xf32>
    %cst_301 = arith.constant 0.000000e+00 : f32
    %446 = vector.broadcast %cst_301 : f32 to vector<16x32xf32>
    %447 = arith.cmpf oge, %445, %446 : vector<16x32xf32>
    %cst_302 = arith.constant 0.00999999977 : f32
    %448 = vector.broadcast %cst_302 : f32 to vector<16x32xf32>
    %449 = arith.mulf %448, %445 : vector<16x32xf32>
    %450 = arith.select %447, %445, %449 : vector<16x32xi1>, vector<16x32xf32>
    %c0_303 = arith.constant 0 : index
    %c0_304 = arith.constant 0 : index
    %451 = vector.load %arg25[%c0_303, %c0_304] : memref<4x8xbf16, #tpu.memory_space<vmem>>, vector<4x8xbf16>
    %452 = arith.truncf %229 : vector<8x128xf32> to vector<8x128xbf16>
    %cst_305 = arith.constant dense<0.000000e+00> : vector<4x128xf32>
    %453 = tpu.matmul %451, %452, %cst_305 {dimension_numbers = #tpu.dot_dimension_numbers<[1], [0], [0], [1], [0, 0, 1, 1], [], []>} : vector<4x8xbf16>, vector<8x128xbf16>, vector<4x128xf32> -> vector<4x128xf32>
    %c0_306 = arith.constant 0 : index
    %c0_307 = arith.constant 0 : index
    %454 = vector.load %arg24[%c0_306, %c0_307] : memref<4x1xf32, #tpu.memory_space<vmem>>, vector<4x1xf32>
    %c0_308 = arith.constant 0 : index
    %c0_309 = arith.constant 0 : index
    %455 = vector.load %arg23[%c0_308, %c0_309] : memref<4x1xf32, #tpu.memory_space<vmem>>, vector<4x1xf32>
    %cst_310 = arith.constant dense<0.000000e+00> : vector<4xf32>
    %456 = vector.multi_reduction <add>, %453, %cst_310 [1] : vector<4x128xf32> to vector<4xf32>
    %457 = vector.shape_cast %456 : vector<4xf32> to vector<4x1xf32>
    %cst_311 = arith.constant 7.812500e-03 : f32
    %458 = vector.broadcast %cst_311 : f32 to vector<4x1xf32>
    %459 = arith.mulf %457, %458 : vector<4x1xf32>
    %460 = vector.broadcast %459 : vector<4x1xf32> to vector<4x128xf32>
    %461 = arith.subf %453, %460 : vector<4x128xf32>
    %462 = arith.mulf %461, %461 : vector<4x128xf32>
    %cst_312 = arith.constant dense<0.000000e+00> : vector<4xf32>
    %463 = vector.multi_reduction <add>, %462, %cst_312 [1] : vector<4x128xf32> to vector<4xf32>
    %464 = vector.shape_cast %463 : vector<4xf32> to vector<4x1xf32>
    %cst_313 = arith.constant 7.812500e-03 : f32
    %465 = vector.broadcast %cst_313 : f32 to vector<4x1xf32>
    %466 = arith.mulf %464, %465 : vector<4x1xf32>
    %cst_314 = arith.constant 9.99999974E-6 : f32
    %467 = vector.broadcast %cst_314 : f32 to vector<4x1xf32>
    %468 = arith.addf %466, %467 : vector<4x1xf32>
    %469 = math.rsqrt %468 : vector<4x1xf32>
    %470 = vector.broadcast %469 : vector<4x1xf32> to vector<4x128xf32>
    %471 = arith.mulf %461, %470 : vector<4x128xf32>
    %472 = vector.broadcast %454 : vector<4x1xf32> to vector<4x128xf32>
    %473 = arith.mulf %471, %472 : vector<4x128xf32>
    %474 = vector.broadcast %455 : vector<4x1xf32> to vector<4x128xf32>
    %475 = arith.addf %473, %474 : vector<4x128xf32>
    %cst_315 = arith.constant 0.000000e+00 : f32
    %476 = vector.broadcast %cst_315 : f32 to vector<4x128xf32>
    %477 = arith.cmpf oge, %475, %476 : vector<4x128xf32>
    %cst_316 = arith.constant 0.00999999977 : f32
    %478 = vector.broadcast %cst_316 : f32 to vector<4x128xf32>
    %479 = arith.mulf %478, %475 : vector<4x128xf32>
    %480 = arith.select %477, %475, %479 : vector<4x128xi1>, vector<4x128xf32>
    %c0_317 = arith.constant 0 : index
    %c0_318 = arith.constant 0 : index
    %481 = vector.load %arg28[%c0_317, %c0_318] : memref<4x16xbf16, #tpu.memory_space<vmem>>, vector<4x16xbf16>
    %482 = arith.truncf %450 : vector<16x32xf32> to vector<16x32xbf16>
    %cst_319 = arith.constant dense<0.000000e+00> : vector<4x32xf32>
    %483 = tpu.matmul %481, %482, %cst_319 {dimension_numbers = #tpu.dot_dimension_numbers<[1], [0], [0], [1], [0, 0, 1, 1], [], []>} : vector<4x16xbf16>, vector<16x32xbf16>, vector<4x32xf32> -> vector<4x32xf32>
    %c0_320 = arith.constant 0 : index
    %c0_321 = arith.constant 0 : index
    %484 = vector.load %arg27[%c0_320, %c0_321] : memref<4x1xf32, #tpu.memory_space<vmem>>, vector<4x1xf32>
    %c0_322 = arith.constant 0 : index
    %c0_323 = arith.constant 0 : index
    %485 = vector.load %arg26[%c0_322, %c0_323] : memref<4x1xf32, #tpu.memory_space<vmem>>, vector<4x1xf32>
    %cst_324 = arith.constant dense<0.000000e+00> : vector<4xf32>
    %486 = vector.multi_reduction <add>, %483, %cst_324 [1] : vector<4x32xf32> to vector<4xf32>
    %487 = vector.shape_cast %486 : vector<4xf32> to vector<4x1xf32>
    %cst_325 = arith.constant 3.125000e-02 : f32
    %488 = vector.broadcast %cst_325 : f32 to vector<4x1xf32>
    %489 = arith.mulf %487, %488 : vector<4x1xf32>
    %490 = vector.broadcast %489 : vector<4x1xf32> to vector<4x32xf32>
    %491 = arith.subf %483, %490 : vector<4x32xf32>
    %492 = arith.mulf %491, %491 : vector<4x32xf32>
    %cst_326 = arith.constant dense<0.000000e+00> : vector<4xf32>
    %493 = vector.multi_reduction <add>, %492, %cst_326 [1] : vector<4x32xf32> to vector<4xf32>
    %494 = vector.shape_cast %493 : vector<4xf32> to vector<4x1xf32>
    %cst_327 = arith.constant 3.125000e-02 : f32
    %495 = vector.broadcast %cst_327 : f32 to vector<4x1xf32>
    %496 = arith.mulf %494, %495 : vector<4x1xf32>
    %cst_328 = arith.constant 9.99999974E-6 : f32
    %497 = vector.broadcast %cst_328 : f32 to vector<4x1xf32>
    %498 = arith.addf %496, %497 : vector<4x1xf32>
    %499 = math.rsqrt %498 : vector<4x1xf32>
    %500 = vector.broadcast %499 : vector<4x1xf32> to vector<4x32xf32>
    %501 = arith.mulf %491, %500 : vector<4x32xf32>
    %502 = vector.broadcast %484 : vector<4x1xf32> to vector<4x32xf32>
    %503 = arith.mulf %501, %502 : vector<4x32xf32>
    %504 = vector.broadcast %485 : vector<4x1xf32> to vector<4x32xf32>
    %505 = arith.addf %503, %504 : vector<4x32xf32>
    %cst_329 = arith.constant 0.000000e+00 : f32
    %506 = vector.broadcast %cst_329 : f32 to vector<4x32xf32>
    %507 = arith.cmpf oge, %505, %506 : vector<4x32xf32>
    %cst_330 = arith.constant 0.00999999977 : f32
    %508 = vector.broadcast %cst_330 : f32 to vector<4x32xf32>
    %509 = arith.mulf %508, %505 : vector<4x32xf32>
    %510 = arith.select %507, %505, %509 : vector<4x32xi1>, vector<4x32xf32>
    %c0_331 = arith.constant 0 : index
    %c0_332 = arith.constant 0 : index
    %511 = vector.load %arg43[%c0_331, %c0_332] : memref<20x1xf32, #tpu.memory_space<vmem>>, vector<20x1xf32>
    %c0_333 = arith.constant 0 : index
    %c0_334 = arith.constant 0 : index
    %512 = vector.load %arg42[%c0_333, %c0_334] : memref<20x1xf32, #tpu.memory_space<vmem>>, vector<20x1xf32>
    %513 = vector.extract_strided_slice %511 {offsets = [0, 0], sizes = [16, 1], strides = [1, 1]} : vector<20x1xf32> to vector<16x1xf32>
    %514 = vector.extract_strided_slice %512 {offsets = [0, 0], sizes = [16, 1], strides = [1, 1]} : vector<20x1xf32> to vector<16x1xf32>
    %cst_335 = arith.constant dense<0.000000e+00> : vector<16xf32>
    %515 = vector.multi_reduction <add>, %450, %cst_335 [1] : vector<16x32xf32> to vector<16xf32>
    %516 = vector.shape_cast %515 : vector<16xf32> to vector<16x1xf32>
    %cst_336 = arith.constant 3.125000e-02 : f32
    %517 = vector.broadcast %cst_336 : f32 to vector<16x1xf32>
    %518 = arith.mulf %516, %517 : vector<16x1xf32>
    %519 = vector.broadcast %518 : vector<16x1xf32> to vector<16x32xf32>
    %520 = arith.subf %450, %519 : vector<16x32xf32>
    %521 = arith.mulf %520, %520 : vector<16x32xf32>
    %cst_337 = arith.constant dense<0.000000e+00> : vector<16xf32>
    %522 = vector.multi_reduction <add>, %521, %cst_337 [1] : vector<16x32xf32> to vector<16xf32>
    %523 = vector.shape_cast %522 : vector<16xf32> to vector<16x1xf32>
    %cst_338 = arith.constant 3.125000e-02 : f32
    %524 = vector.broadcast %cst_338 : f32 to vector<16x1xf32>
    %525 = arith.mulf %523, %524 : vector<16x1xf32>
    %cst_339 = arith.constant 9.99999974E-6 : f32
    %526 = vector.broadcast %cst_339 : f32 to vector<16x1xf32>
    %527 = arith.addf %525, %526 : vector<16x1xf32>
    %528 = math.rsqrt %527 : vector<16x1xf32>
    %529 = vector.broadcast %528 : vector<16x1xf32> to vector<16x32xf32>
    %530 = arith.mulf %520, %529 : vector<16x32xf32>
    %531 = vector.broadcast %513 : vector<16x1xf32> to vector<16x32xf32>
    %532 = arith.mulf %530, %531 : vector<16x32xf32>
    %533 = vector.broadcast %514 : vector<16x1xf32> to vector<16x32xf32>
    %534 = arith.addf %532, %533 : vector<16x32xf32>
    %535 = vector.extract_strided_slice %511 {offsets = [16, 0], sizes = [4, 1], strides = [1, 1]} : vector<20x1xf32> to vector<4x1xf32>
    %536 = vector.extract_strided_slice %512 {offsets = [16, 0], sizes = [4, 1], strides = [1, 1]} : vector<20x1xf32> to vector<4x1xf32>
    %cst_340 = arith.constant dense<0.000000e+00> : vector<4xf32>
    %537 = vector.multi_reduction <add>, %510, %cst_340 [1] : vector<4x32xf32> to vector<4xf32>
    %538 = vector.shape_cast %537 : vector<4xf32> to vector<4x1xf32>
    %cst_341 = arith.constant 3.125000e-02 : f32
    %539 = vector.broadcast %cst_341 : f32 to vector<4x1xf32>
    %540 = arith.mulf %538, %539 : vector<4x1xf32>
    %541 = vector.broadcast %540 : vector<4x1xf32> to vector<4x32xf32>
    %542 = arith.subf %510, %541 : vector<4x32xf32>
    %543 = arith.mulf %542, %542 : vector<4x32xf32>
    %cst_342 = arith.constant dense<0.000000e+00> : vector<4xf32>
    %544 = vector.multi_reduction <add>, %543, %cst_342 [1] : vector<4x32xf32> to vector<4xf32>
    %545 = vector.shape_cast %544 : vector<4xf32> to vector<4x1xf32>
    %cst_343 = arith.constant 3.125000e-02 : f32
    %546 = vector.broadcast %cst_343 : f32 to vector<4x1xf32>
    %547 = arith.mulf %545, %546 : vector<4x1xf32>
    %cst_344 = arith.constant 9.99999974E-6 : f32
    %548 = vector.broadcast %cst_344 : f32 to vector<4x1xf32>
    %549 = arith.addf %547, %548 : vector<4x1xf32>
    %550 = math.rsqrt %549 : vector<4x1xf32>
    %551 = vector.broadcast %550 : vector<4x1xf32> to vector<4x32xf32>
    %552 = arith.mulf %542, %551 : vector<4x32xf32>
    %553 = vector.broadcast %535 : vector<4x1xf32> to vector<4x32xf32>
    %554 = arith.mulf %552, %553 : vector<4x32xf32>
    %555 = vector.broadcast %536 : vector<4x1xf32> to vector<4x32xf32>
    %556 = arith.addf %554, %555 : vector<4x32xf32>
    %cst_345 = arith.constant 0.000000e+00 : f32
    %557 = vector.broadcast %cst_345 : f32 to vector<16x32xf32>
    %c0_346 = arith.constant 0 : index
    %c0_347 = arith.constant 0 : index
    %c0_348 = arith.constant 0 : index
    %558 = vector.load %arg44[%c0_346, %c0_347, %c0_348] : memref<9x16x16xbf16, #tpu.memory_space<vmem>>, vector<1x16x16xbf16>
    %559 = vector.shape_cast %558 : vector<1x16x16xbf16> to vector<16x16xbf16>
    %560 = arith.truncf %534 : vector<16x32xf32> to vector<16x32xbf16>
    %c0_349 = arith.constant 0 : index
    %c0_350 = arith.constant 0 : index
    %c0_351 = arith.constant 0 : index
    %561 = vector.load %arg5[%c0_349, %c0_350, %c0_351] : memref<9x32x32xbf16, #tpu.memory_space<vmem>>, vector<1x32x32xbf16>
    %562 = vector.shape_cast %561 : vector<1x32x32xbf16> to vector<32x32xbf16>
    %cst_352 = arith.constant dense<0.000000e+00> : vector<16x32xf32>
    %563 = tpu.matmul %560, %562, %cst_352 {dimension_numbers = #tpu.dot_dimension_numbers<[1], [0], [0], [1], [0, 0, 1, 1], [], []>} : vector<16x32xbf16>, vector<32x32xbf16>, vector<16x32xf32> -> vector<16x32xf32>
    %564 = arith.truncf %563 : vector<16x32xf32> to vector<16x32xbf16>
    %cst_353 = arith.constant dense<0.000000e+00> : vector<16x32xf32>
    %565 = tpu.matmul %559, %564, %cst_353 {dimension_numbers = #tpu.dot_dimension_numbers<[1], [0], [0], [1], [0, 0, 1, 1], [], []>} : vector<16x16xbf16>, vector<16x32xbf16>, vector<16x32xf32> -> vector<16x32xf32>
    %566 = arith.addf %557, %565 : vector<16x32xf32>
    %c0_354 = arith.constant 0 : index
    %c0_355 = arith.constant 0 : index
    %c0_356 = arith.constant 0 : index
    %567 = vector.load %arg45[%c0_354, %c0_355, %c0_356] : memref<9x16x4xbf16, #tpu.memory_space<vmem>>, vector<1x16x4xbf16>
    %568 = vector.shape_cast %567 : vector<1x16x4xbf16> to vector<16x4xbf16>
    %569 = arith.truncf %556 : vector<4x32xf32> to vector<4x32xbf16>
    %c0_357 = arith.constant 0 : index
    %c0_358 = arith.constant 0 : index
    %c0_359 = arith.constant 0 : index
    %570 = vector.load %arg5[%c0_357, %c0_358, %c0_359] : memref<9x32x32xbf16, #tpu.memory_space<vmem>>, vector<1x32x32xbf16>
    %571 = vector.shape_cast %570 : vector<1x32x32xbf16> to vector<32x32xbf16>
    %cst_360 = arith.constant dense<0.000000e+00> : vector<4x32xf32>
    %572 = tpu.matmul %569, %571, %cst_360 {dimension_numbers = #tpu.dot_dimension_numbers<[1], [0], [0], [1], [0, 0, 1, 1], [], []>} : vector<4x32xbf16>, vector<32x32xbf16>, vector<4x32xf32> -> vector<4x32xf32>
    %573 = arith.truncf %572 : vector<4x32xf32> to vector<4x32xbf16>
    %cst_361 = arith.constant dense<0.000000e+00> : vector<16x32xf32>
    %574 = tpu.matmul %568, %573, %cst_361 {dimension_numbers = #tpu.dot_dimension_numbers<[1], [0], [0], [1], [0, 0, 1, 1], [], []>} : vector<16x4xbf16>, vector<4x32xbf16>, vector<16x32xf32> -> vector<16x32xf32>
    %575 = arith.addf %566, %574 : vector<16x32xf32>
    %c1_362 = arith.constant 1 : index
    %c0_363 = arith.constant 0 : index
    %c0_364 = arith.constant 0 : index
    %576 = vector.load %arg44[%c1_362, %c0_363, %c0_364] : memref<9x16x16xbf16, #tpu.memory_space<vmem>>, vector<1x16x16xbf16>
    %577 = vector.shape_cast %576 : vector<1x16x16xbf16> to vector<16x16xbf16>
    %578 = arith.truncf %534 : vector<16x32xf32> to vector<16x32xbf16>
    %c1_365 = arith.constant 1 : index
    %c0_366 = arith.constant 0 : index
    %c0_367 = arith.constant 0 : index
    %579 = vector.load %arg5[%c1_365, %c0_366, %c0_367] : memref<9x32x32xbf16, #tpu.memory_space<vmem>>, vector<1x32x32xbf16>
    %580 = vector.shape_cast %579 : vector<1x32x32xbf16> to vector<32x32xbf16>
    %cst_368 = arith.constant dense<0.000000e+00> : vector<16x32xf32>
    %581 = tpu.matmul %578, %580, %cst_368 {dimension_numbers = #tpu.dot_dimension_numbers<[1], [0], [0], [1], [0, 0, 1, 1], [], []>} : vector<16x32xbf16>, vector<32x32xbf16>, vector<16x32xf32> -> vector<16x32xf32>
    %582 = arith.truncf %581 : vector<16x32xf32> to vector<16x32xbf16>
    %cst_369 = arith.constant dense<0.000000e+00> : vector<16x32xf32>
    %583 = tpu.matmul %577, %582, %cst_369 {dimension_numbers = #tpu.dot_dimension_numbers<[1], [0], [0], [1], [0, 0, 1, 1], [], []>} : vector<16x16xbf16>, vector<16x32xbf16>, vector<16x32xf32> -> vector<16x32xf32>
    %584 = arith.addf %575, %583 : vector<16x32xf32>
    %c1_370 = arith.constant 1 : index
    %c0_371 = arith.constant 0 : index
    %c0_372 = arith.constant 0 : index
    %585 = vector.load %arg45[%c1_370, %c0_371, %c0_372] : memref<9x16x4xbf16, #tpu.memory_space<vmem>>, vector<1x16x4xbf16>
    %586 = vector.shape_cast %585 : vector<1x16x4xbf16> to vector<16x4xbf16>
    %587 = arith.truncf %556 : vector<4x32xf32> to vector<4x32xbf16>
    %c1_373 = arith.constant 1 : index
    %c0_374 = arith.constant 0 : index
    %c0_375 = arith.constant 0 : index
    %588 = vector.load %arg5[%c1_373, %c0_374, %c0_375] : memref<9x32x32xbf16, #tpu.memory_space<vmem>>, vector<1x32x32xbf16>
    %589 = vector.shape_cast %588 : vector<1x32x32xbf16> to vector<32x32xbf16>
    %cst_376 = arith.constant dense<0.000000e+00> : vector<4x32xf32>
    %590 = tpu.matmul %587, %589, %cst_376 {dimension_numbers = #tpu.dot_dimension_numbers<[1], [0], [0], [1], [0, 0, 1, 1], [], []>} : vector<4x32xbf16>, vector<32x32xbf16>, vector<4x32xf32> -> vector<4x32xf32>
    %591 = arith.truncf %590 : vector<4x32xf32> to vector<4x32xbf16>
    %cst_377 = arith.constant dense<0.000000e+00> : vector<16x32xf32>
    %592 = tpu.matmul %586, %591, %cst_377 {dimension_numbers = #tpu.dot_dimension_numbers<[1], [0], [0], [1], [0, 0, 1, 1], [], []>} : vector<16x4xbf16>, vector<4x32xbf16>, vector<16x32xf32> -> vector<16x32xf32>
    %593 = arith.addf %584, %592 : vector<16x32xf32>
    %c2_378 = arith.constant 2 : index
    %c0_379 = arith.constant 0 : index
    %c0_380 = arith.constant 0 : index
    %594 = vector.load %arg44[%c2_378, %c0_379, %c0_380] : memref<9x16x16xbf16, #tpu.memory_space<vmem>>, vector<1x16x16xbf16>
    %595 = vector.shape_cast %594 : vector<1x16x16xbf16> to vector<16x16xbf16>
    %596 = arith.truncf %534 : vector<16x32xf32> to vector<16x32xbf16>
    %c2_381 = arith.constant 2 : index
    %c0_382 = arith.constant 0 : index
    %c0_383 = arith.constant 0 : index
    %597 = vector.load %arg5[%c2_381, %c0_382, %c0_383] : memref<9x32x32xbf16, #tpu.memory_space<vmem>>, vector<1x32x32xbf16>
    %598 = vector.shape_cast %597 : vector<1x32x32xbf16> to vector<32x32xbf16>
    %cst_384 = arith.constant dense<0.000000e+00> : vector<16x32xf32>
    %599 = tpu.matmul %596, %598, %cst_384 {dimension_numbers = #tpu.dot_dimension_numbers<[1], [0], [0], [1], [0, 0, 1, 1], [], []>} : vector<16x32xbf16>, vector<32x32xbf16>, vector<16x32xf32> -> vector<16x32xf32>
    %600 = arith.truncf %599 : vector<16x32xf32> to vector<16x32xbf16>
    %cst_385 = arith.constant dense<0.000000e+00> : vector<16x32xf32>
    %601 = tpu.matmul %595, %600, %cst_385 {dimension_numbers = #tpu.dot_dimension_numbers<[1], [0], [0], [1], [0, 0, 1, 1], [], []>} : vector<16x16xbf16>, vector<16x32xbf16>, vector<16x32xf32> -> vector<16x32xf32>
    %602 = arith.addf %593, %601 : vector<16x32xf32>
    %c2_386 = arith.constant 2 : index
    %c0_387 = arith.constant 0 : index
    %c0_388 = arith.constant 0 : index
    %603 = vector.load %arg45[%c2_386, %c0_387, %c0_388] : memref<9x16x4xbf16, #tpu.memory_space<vmem>>, vector<1x16x4xbf16>
    %604 = vector.shape_cast %603 : vector<1x16x4xbf16> to vector<16x4xbf16>
    %605 = arith.truncf %556 : vector<4x32xf32> to vector<4x32xbf16>
    %c2_389 = arith.constant 2 : index
    %c0_390 = arith.constant 0 : index
    %c0_391 = arith.constant 0 : index
    %606 = vector.load %arg5[%c2_389, %c0_390, %c0_391] : memref<9x32x32xbf16, #tpu.memory_space<vmem>>, vector<1x32x32xbf16>
    %607 = vector.shape_cast %606 : vector<1x32x32xbf16> to vector<32x32xbf16>
    %cst_392 = arith.constant dense<0.000000e+00> : vector<4x32xf32>
    %608 = tpu.matmul %605, %607, %cst_392 {dimension_numbers = #tpu.dot_dimension_numbers<[1], [0], [0], [1], [0, 0, 1, 1], [], []>} : vector<4x32xbf16>, vector<32x32xbf16>, vector<4x32xf32> -> vector<4x32xf32>
    %609 = arith.truncf %608 : vector<4x32xf32> to vector<4x32xbf16>
    %cst_393 = arith.constant dense<0.000000e+00> : vector<16x32xf32>
    %610 = tpu.matmul %604, %609, %cst_393 {dimension_numbers = #tpu.dot_dimension_numbers<[1], [0], [0], [1], [0, 0, 1, 1], [], []>} : vector<16x4xbf16>, vector<4x32xbf16>, vector<16x32xf32> -> vector<16x32xf32>
    %611 = arith.addf %602, %610 : vector<16x32xf32>
    %c3_394 = arith.constant 3 : index
    %c0_395 = arith.constant 0 : index
    %c0_396 = arith.constant 0 : index
    %612 = vector.load %arg44[%c3_394, %c0_395, %c0_396] : memref<9x16x16xbf16, #tpu.memory_space<vmem>>, vector<1x16x16xbf16>
    %613 = vector.shape_cast %612 : vector<1x16x16xbf16> to vector<16x16xbf16>
    %614 = arith.truncf %534 : vector<16x32xf32> to vector<16x32xbf16>
    %c3_397 = arith.constant 3 : index
    %c0_398 = arith.constant 0 : index
    %c0_399 = arith.constant 0 : index
    %615 = vector.load %arg5[%c3_397, %c0_398, %c0_399] : memref<9x32x32xbf16, #tpu.memory_space<vmem>>, vector<1x32x32xbf16>
    %616 = vector.shape_cast %615 : vector<1x32x32xbf16> to vector<32x32xbf16>
    %cst_400 = arith.constant dense<0.000000e+00> : vector<16x32xf32>
    %617 = tpu.matmul %614, %616, %cst_400 {dimension_numbers = #tpu.dot_dimension_numbers<[1], [0], [0], [1], [0, 0, 1, 1], [], []>} : vector<16x32xbf16>, vector<32x32xbf16>, vector<16x32xf32> -> vector<16x32xf32>
    %618 = arith.truncf %617 : vector<16x32xf32> to vector<16x32xbf16>
    %cst_401 = arith.constant dense<0.000000e+00> : vector<16x32xf32>
    %619 = tpu.matmul %613, %618, %cst_401 {dimension_numbers = #tpu.dot_dimension_numbers<[1], [0], [0], [1], [0, 0, 1, 1], [], []>} : vector<16x16xbf16>, vector<16x32xbf16>, vector<16x32xf32> -> vector<16x32xf32>
    %620 = arith.addf %611, %619 : vector<16x32xf32>
    %c3_402 = arith.constant 3 : index
    %c0_403 = arith.constant 0 : index
    %c0_404 = arith.constant 0 : index
    %621 = vector.load %arg45[%c3_402, %c0_403, %c0_404] : memref<9x16x4xbf16, #tpu.memory_space<vmem>>, vector<1x16x4xbf16>
    %622 = vector.shape_cast %621 : vector<1x16x4xbf16> to vector<16x4xbf16>
    %623 = arith.truncf %556 : vector<4x32xf32> to vector<4x32xbf16>
    %c3_405 = arith.constant 3 : index
    %c0_406 = arith.constant 0 : index
    %c0_407 = arith.constant 0 : index
    %624 = vector.load %arg5[%c3_405, %c0_406, %c0_407] : memref<9x32x32xbf16, #tpu.memory_space<vmem>>, vector<1x32x32xbf16>
    %625 = vector.shape_cast %624 : vector<1x32x32xbf16> to vector<32x32xbf16>
    %cst_408 = arith.constant dense<0.000000e+00> : vector<4x32xf32>
    %626 = tpu.matmul %623, %625, %cst_408 {dimension_numbers = #tpu.dot_dimension_numbers<[1], [0], [0], [1], [0, 0, 1, 1], [], []>} : vector<4x32xbf16>, vector<32x32xbf16>, vector<4x32xf32> -> vector<4x32xf32>
    %627 = arith.truncf %626 : vector<4x32xf32> to vector<4x32xbf16>
    %cst_409 = arith.constant dense<0.000000e+00> : vector<16x32xf32>
    %628 = tpu.matmul %622, %627, %cst_409 {dimension_numbers = #tpu.dot_dimension_numbers<[1], [0], [0], [1], [0, 0, 1, 1], [], []>} : vector<16x4xbf16>, vector<4x32xbf16>, vector<16x32xf32> -> vector<16x32xf32>
    %629 = arith.addf %620, %628 : vector<16x32xf32>
    %c4_410 = arith.constant 4 : index
    %c0_411 = arith.constant 0 : index
    %c0_412 = arith.constant 0 : index
    %630 = vector.load %arg44[%c4_410, %c0_411, %c0_412] : memref<9x16x16xbf16, #tpu.memory_space<vmem>>, vector<1x16x16xbf16>
    %631 = vector.shape_cast %630 : vector<1x16x16xbf16> to vector<16x16xbf16>
    %632 = arith.truncf %534 : vector<16x32xf32> to vector<16x32xbf16>
    %cst_413 = arith.constant dense<0.000000e+00> : vector<16x32xf32>
    %633 = tpu.matmul %631, %632, %cst_413 {dimension_numbers = #tpu.dot_dimension_numbers<[1], [0], [0], [1], [0, 0, 1, 1], [], []>} : vector<16x16xbf16>, vector<16x32xbf16>, vector<16x32xf32> -> vector<16x32xf32>
    %634 = arith.addf %629, %633 : vector<16x32xf32>
    %c4_414 = arith.constant 4 : index
    %c0_415 = arith.constant 0 : index
    %c0_416 = arith.constant 0 : index
    %635 = vector.load %arg45[%c4_414, %c0_415, %c0_416] : memref<9x16x4xbf16, #tpu.memory_space<vmem>>, vector<1x16x4xbf16>
    %636 = vector.shape_cast %635 : vector<1x16x4xbf16> to vector<16x4xbf16>
    %637 = arith.truncf %556 : vector<4x32xf32> to vector<4x32xbf16>
    %cst_417 = arith.constant dense<0.000000e+00> : vector<16x32xf32>
    %638 = tpu.matmul %636, %637, %cst_417 {dimension_numbers = #tpu.dot_dimension_numbers<[1], [0], [0], [1], [0, 0, 1, 1], [], []>} : vector<16x4xbf16>, vector<4x32xbf16>, vector<16x32xf32> -> vector<16x32xf32>
    %639 = arith.addf %634, %638 : vector<16x32xf32>
    %c5_418 = arith.constant 5 : index
    %c0_419 = arith.constant 0 : index
    %c0_420 = arith.constant 0 : index
    %640 = vector.load %arg44[%c5_418, %c0_419, %c0_420] : memref<9x16x16xbf16, #tpu.memory_space<vmem>>, vector<1x16x16xbf16>
    %641 = vector.shape_cast %640 : vector<1x16x16xbf16> to vector<16x16xbf16>
    %642 = arith.truncf %534 : vector<16x32xf32> to vector<16x32xbf16>
    %c5_421 = arith.constant 5 : index
    %c0_422 = arith.constant 0 : index
    %c0_423 = arith.constant 0 : index
    %643 = vector.load %arg5[%c5_421, %c0_422, %c0_423] : memref<9x32x32xbf16, #tpu.memory_space<vmem>>, vector<1x32x32xbf16>
    %644 = vector.shape_cast %643 : vector<1x32x32xbf16> to vector<32x32xbf16>
    %cst_424 = arith.constant dense<0.000000e+00> : vector<16x32xf32>
    %645 = tpu.matmul %642, %644, %cst_424 {dimension_numbers = #tpu.dot_dimension_numbers<[1], [0], [0], [1], [0, 0, 1, 1], [], []>} : vector<16x32xbf16>, vector<32x32xbf16>, vector<16x32xf32> -> vector<16x32xf32>
    %646 = arith.truncf %645 : vector<16x32xf32> to vector<16x32xbf16>
    %cst_425 = arith.constant dense<0.000000e+00> : vector<16x32xf32>
    %647 = tpu.matmul %641, %646, %cst_425 {dimension_numbers = #tpu.dot_dimension_numbers<[1], [0], [0], [1], [0, 0, 1, 1], [], []>} : vector<16x16xbf16>, vector<16x32xbf16>, vector<16x32xf32> -> vector<16x32xf32>
    %648 = arith.addf %639, %647 : vector<16x32xf32>
    %c5_426 = arith.constant 5 : index
    %c0_427 = arith.constant 0 : index
    %c0_428 = arith.constant 0 : index
    %649 = vector.load %arg45[%c5_426, %c0_427, %c0_428] : memref<9x16x4xbf16, #tpu.memory_space<vmem>>, vector<1x16x4xbf16>
    %650 = vector.shape_cast %649 : vector<1x16x4xbf16> to vector<16x4xbf16>
    %651 = arith.truncf %556 : vector<4x32xf32> to vector<4x32xbf16>
    %c5_429 = arith.constant 5 : index
    %c0_430 = arith.constant 0 : index
    %c0_431 = arith.constant 0 : index
    %652 = vector.load %arg5[%c5_429, %c0_430, %c0_431] : memref<9x32x32xbf16, #tpu.memory_space<vmem>>, vector<1x32x32xbf16>
    %653 = vector.shape_cast %652 : vector<1x32x32xbf16> to vector<32x32xbf16>
    %cst_432 = arith.constant dense<0.000000e+00> : vector<4x32xf32>
    %654 = tpu.matmul %651, %653, %cst_432 {dimension_numbers = #tpu.dot_dimension_numbers<[1], [0], [0], [1], [0, 0, 1, 1], [], []>} : vector<4x32xbf16>, vector<32x32xbf16>, vector<4x32xf32> -> vector<4x32xf32>
    %655 = arith.truncf %654 : vector<4x32xf32> to vector<4x32xbf16>
    %cst_433 = arith.constant dense<0.000000e+00> : vector<16x32xf32>
    %656 = tpu.matmul %650, %655, %cst_433 {dimension_numbers = #tpu.dot_dimension_numbers<[1], [0], [0], [1], [0, 0, 1, 1], [], []>} : vector<16x4xbf16>, vector<4x32xbf16>, vector<16x32xf32> -> vector<16x32xf32>
    %657 = arith.addf %648, %656 : vector<16x32xf32>
    %c6_434 = arith.constant 6 : index
    %c0_435 = arith.constant 0 : index
    %c0_436 = arith.constant 0 : index
    %658 = vector.load %arg44[%c6_434, %c0_435, %c0_436] : memref<9x16x16xbf16, #tpu.memory_space<vmem>>, vector<1x16x16xbf16>
    %659 = vector.shape_cast %658 : vector<1x16x16xbf16> to vector<16x16xbf16>
    %660 = arith.truncf %534 : vector<16x32xf32> to vector<16x32xbf16>
    %c6_437 = arith.constant 6 : index
    %c0_438 = arith.constant 0 : index
    %c0_439 = arith.constant 0 : index
    %661 = vector.load %arg5[%c6_437, %c0_438, %c0_439] : memref<9x32x32xbf16, #tpu.memory_space<vmem>>, vector<1x32x32xbf16>
    %662 = vector.shape_cast %661 : vector<1x32x32xbf16> to vector<32x32xbf16>
    %cst_440 = arith.constant dense<0.000000e+00> : vector<16x32xf32>
    %663 = tpu.matmul %660, %662, %cst_440 {dimension_numbers = #tpu.dot_dimension_numbers<[1], [0], [0], [1], [0, 0, 1, 1], [], []>} : vector<16x32xbf16>, vector<32x32xbf16>, vector<16x32xf32> -> vector<16x32xf32>
    %664 = arith.truncf %663 : vector<16x32xf32> to vector<16x32xbf16>
    %cst_441 = arith.constant dense<0.000000e+00> : vector<16x32xf32>
    %665 = tpu.matmul %659, %664, %cst_441 {dimension_numbers = #tpu.dot_dimension_numbers<[1], [0], [0], [1], [0, 0, 1, 1], [], []>} : vector<16x16xbf16>, vector<16x32xbf16>, vector<16x32xf32> -> vector<16x32xf32>
    %666 = arith.addf %657, %665 : vector<16x32xf32>
    %c6_442 = arith.constant 6 : index
    %c0_443 = arith.constant 0 : index
    %c0_444 = arith.constant 0 : index
    %667 = vector.load %arg45[%c6_442, %c0_443, %c0_444] : memref<9x16x4xbf16, #tpu.memory_space<vmem>>, vector<1x16x4xbf16>
    %668 = vector.shape_cast %667 : vector<1x16x4xbf16> to vector<16x4xbf16>
    %669 = arith.truncf %556 : vector<4x32xf32> to vector<4x32xbf16>
    %c6_445 = arith.constant 6 : index
    %c0_446 = arith.constant 0 : index
    %c0_447 = arith.constant 0 : index
    %670 = vector.load %arg5[%c6_445, %c0_446, %c0_447] : memref<9x32x32xbf16, #tpu.memory_space<vmem>>, vector<1x32x32xbf16>
    %671 = vector.shape_cast %670 : vector<1x32x32xbf16> to vector<32x32xbf16>
    %cst_448 = arith.constant dense<0.000000e+00> : vector<4x32xf32>
    %672 = tpu.matmul %669, %671, %cst_448 {dimension_numbers = #tpu.dot_dimension_numbers<[1], [0], [0], [1], [0, 0, 1, 1], [], []>} : vector<4x32xbf16>, vector<32x32xbf16>, vector<4x32xf32> -> vector<4x32xf32>
    %673 = arith.truncf %672 : vector<4x32xf32> to vector<4x32xbf16>
    %cst_449 = arith.constant dense<0.000000e+00> : vector<16x32xf32>
    %674 = tpu.matmul %668, %673, %cst_449 {dimension_numbers = #tpu.dot_dimension_numbers<[1], [0], [0], [1], [0, 0, 1, 1], [], []>} : vector<16x4xbf16>, vector<4x32xbf16>, vector<16x32xf32> -> vector<16x32xf32>
    %675 = arith.addf %666, %674 : vector<16x32xf32>
    %c7_450 = arith.constant 7 : index
    %c0_451 = arith.constant 0 : index
    %c0_452 = arith.constant 0 : index
    %676 = vector.load %arg44[%c7_450, %c0_451, %c0_452] : memref<9x16x16xbf16, #tpu.memory_space<vmem>>, vector<1x16x16xbf16>
    %677 = vector.shape_cast %676 : vector<1x16x16xbf16> to vector<16x16xbf16>
    %678 = arith.truncf %534 : vector<16x32xf32> to vector<16x32xbf16>
    %c7_453 = arith.constant 7 : index
    %c0_454 = arith.constant 0 : index
    %c0_455 = arith.constant 0 : index
    %679 = vector.load %arg5[%c7_453, %c0_454, %c0_455] : memref<9x32x32xbf16, #tpu.memory_space<vmem>>, vector<1x32x32xbf16>
    %680 = vector.shape_cast %679 : vector<1x32x32xbf16> to vector<32x32xbf16>
    %cst_456 = arith.constant dense<0.000000e+00> : vector<16x32xf32>
    %681 = tpu.matmul %678, %680, %cst_456 {dimension_numbers = #tpu.dot_dimension_numbers<[1], [0], [0], [1], [0, 0, 1, 1], [], []>} : vector<16x32xbf16>, vector<32x32xbf16>, vector<16x32xf32> -> vector<16x32xf32>
    %682 = arith.truncf %681 : vector<16x32xf32> to vector<16x32xbf16>
    %cst_457 = arith.constant dense<0.000000e+00> : vector<16x32xf32>
    %683 = tpu.matmul %677, %682, %cst_457 {dimension_numbers = #tpu.dot_dimension_numbers<[1], [0], [0], [1], [0, 0, 1, 1], [], []>} : vector<16x16xbf16>, vector<16x32xbf16>, vector<16x32xf32> -> vector<16x32xf32>
    %684 = arith.addf %675, %683 : vector<16x32xf32>
    %c7_458 = arith.constant 7 : index
    %c0_459 = arith.constant 0 : index
    %c0_460 = arith.constant 0 : index
    %685 = vector.load %arg45[%c7_458, %c0_459, %c0_460] : memref<9x16x4xbf16, #tpu.memory_space<vmem>>, vector<1x16x4xbf16>
    %686 = vector.shape_cast %685 : vector<1x16x4xbf16> to vector<16x4xbf16>
    %687 = arith.truncf %556 : vector<4x32xf32> to vector<4x32xbf16>
    %c7_461 = arith.constant 7 : index
    %c0_462 = arith.constant 0 : index
    %c0_463 = arith.constant 0 : index
    %688 = vector.load %arg5[%c7_461, %c0_462, %c0_463] : memref<9x32x32xbf16, #tpu.memory_space<vmem>>, vector<1x32x32xbf16>
    %689 = vector.shape_cast %688 : vector<1x32x32xbf16> to vector<32x32xbf16>
    %cst_464 = arith.constant dense<0.000000e+00> : vector<4x32xf32>
    %690 = tpu.matmul %687, %689, %cst_464 {dimension_numbers = #tpu.dot_dimension_numbers<[1], [0], [0], [1], [0, 0, 1, 1], [], []>} : vector<4x32xbf16>, vector<32x32xbf16>, vector<4x32xf32> -> vector<4x32xf32>
    %691 = arith.truncf %690 : vector<4x32xf32> to vector<4x32xbf16>
    %cst_465 = arith.constant dense<0.000000e+00> : vector<16x32xf32>
    %692 = tpu.matmul %686, %691, %cst_465 {dimension_numbers = #tpu.dot_dimension_numbers<[1], [0], [0], [1], [0, 0, 1, 1], [], []>} : vector<16x4xbf16>, vector<4x32xbf16>, vector<16x32xf32> -> vector<16x32xf32>
    %693 = arith.addf %684, %692 : vector<16x32xf32>
    %c8_466 = arith.constant 8 : index
    %c0_467 = arith.constant 0 : index
    %c0_468 = arith.constant 0 : index
    %694 = vector.load %arg44[%c8_466, %c0_467, %c0_468] : memref<9x16x16xbf16, #tpu.memory_space<vmem>>, vector<1x16x16xbf16>
    %695 = vector.shape_cast %694 : vector<1x16x16xbf16> to vector<16x16xbf16>
    %696 = arith.truncf %534 : vector<16x32xf32> to vector<16x32xbf16>
    %c8_469 = arith.constant 8 : index
    %c0_470 = arith.constant 0 : index
    %c0_471 = arith.constant 0 : index
    %697 = vector.load %arg5[%c8_469, %c0_470, %c0_471] : memref<9x32x32xbf16, #tpu.memory_space<vmem>>, vector<1x32x32xbf16>
    %698 = vector.shape_cast %697 : vector<1x32x32xbf16> to vector<32x32xbf16>
    %cst_472 = arith.constant dense<0.000000e+00> : vector<16x32xf32>
    %699 = tpu.matmul %696, %698, %cst_472 {dimension_numbers = #tpu.dot_dimension_numbers<[1], [0], [0], [1], [0, 0, 1, 1], [], []>} : vector<16x32xbf16>, vector<32x32xbf16>, vector<16x32xf32> -> vector<16x32xf32>
    %700 = arith.truncf %699 : vector<16x32xf32> to vector<16x32xbf16>
    %cst_473 = arith.constant dense<0.000000e+00> : vector<16x32xf32>
    %701 = tpu.matmul %695, %700, %cst_473 {dimension_numbers = #tpu.dot_dimension_numbers<[1], [0], [0], [1], [0, 0, 1, 1], [], []>} : vector<16x16xbf16>, vector<16x32xbf16>, vector<16x32xf32> -> vector<16x32xf32>
    %702 = arith.addf %693, %701 : vector<16x32xf32>
    %c8_474 = arith.constant 8 : index
    %c0_475 = arith.constant 0 : index
    %c0_476 = arith.constant 0 : index
    %703 = vector.load %arg45[%c8_474, %c0_475, %c0_476] : memref<9x16x4xbf16, #tpu.memory_space<vmem>>, vector<1x16x4xbf16>
    %704 = vector.shape_cast %703 : vector<1x16x4xbf16> to vector<16x4xbf16>
    %705 = arith.truncf %556 : vector<4x32xf32> to vector<4x32xbf16>
    %c8_477 = arith.constant 8 : index
    %c0_478 = arith.constant 0 : index
    %c0_479 = arith.constant 0 : index
    %706 = vector.load %arg5[%c8_477, %c0_478, %c0_479] : memref<9x32x32xbf16, #tpu.memory_space<vmem>>, vector<1x32x32xbf16>
    %707 = vector.shape_cast %706 : vector<1x32x32xbf16> to vector<32x32xbf16>
    %cst_480 = arith.constant dense<0.000000e+00> : vector<4x32xf32>
    %708 = tpu.matmul %705, %707, %cst_480 {dimension_numbers = #tpu.dot_dimension_numbers<[1], [0], [0], [1], [0, 0, 1, 1], [], []>} : vector<4x32xbf16>, vector<32x32xbf16>, vector<4x32xf32> -> vector<4x32xf32>
    %709 = arith.truncf %708 : vector<4x32xf32> to vector<4x32xbf16>
    %cst_481 = arith.constant dense<0.000000e+00> : vector<16x32xf32>
    %710 = tpu.matmul %704, %709, %cst_481 {dimension_numbers = #tpu.dot_dimension_numbers<[1], [0], [0], [1], [0, 0, 1, 1], [], []>} : vector<16x4xbf16>, vector<4x32xbf16>, vector<16x32xf32> -> vector<16x32xf32>
    %711 = arith.addf %702, %710 : vector<16x32xf32>
    %c0_482 = arith.constant 0 : index
    %c0_483 = arith.constant 0 : index
    %712 = vector.load %arg40[%c0_482, %c0_483] : memref<16x1xf32, #tpu.memory_space<vmem>>, vector<16x1xf32>
    %c0_484 = arith.constant 0 : index
    %c0_485 = arith.constant 0 : index
    %713 = vector.load %arg38[%c0_484, %c0_485] : memref<16x1xf32, #tpu.memory_space<vmem>>, vector<16x1xf32>
    %cst_486 = arith.constant dense<0.000000e+00> : vector<16xf32>
    %714 = vector.multi_reduction <add>, %711, %cst_486 [1] : vector<16x32xf32> to vector<16xf32>
    %715 = vector.shape_cast %714 : vector<16xf32> to vector<16x1xf32>
    %cst_487 = arith.constant 3.125000e-02 : f32
    %716 = vector.broadcast %cst_487 : f32 to vector<16x1xf32>
    %717 = arith.mulf %715, %716 : vector<16x1xf32>
    %718 = vector.broadcast %717 : vector<16x1xf32> to vector<16x32xf32>
    %719 = arith.subf %711, %718 : vector<16x32xf32>
    %720 = arith.mulf %719, %719 : vector<16x32xf32>
    %cst_488 = arith.constant dense<0.000000e+00> : vector<16xf32>
    %721 = vector.multi_reduction <add>, %720, %cst_488 [1] : vector<16x32xf32> to vector<16xf32>
    %722 = vector.shape_cast %721 : vector<16xf32> to vector<16x1xf32>
    %cst_489 = arith.constant 3.125000e-02 : f32
    %723 = vector.broadcast %cst_489 : f32 to vector<16x1xf32>
    %724 = arith.mulf %722, %723 : vector<16x1xf32>
    %cst_490 = arith.constant 9.99999974E-6 : f32
    %725 = vector.broadcast %cst_490 : f32 to vector<16x1xf32>
    %726 = arith.addf %724, %725 : vector<16x1xf32>
    %727 = math.rsqrt %726 : vector<16x1xf32>
    %728 = vector.broadcast %727 : vector<16x1xf32> to vector<16x32xf32>
    %729 = arith.mulf %719, %728 : vector<16x32xf32>
    %730 = vector.broadcast %712 : vector<16x1xf32> to vector<16x32xf32>
    %731 = arith.mulf %729, %730 : vector<16x32xf32>
    %732 = vector.broadcast %713 : vector<16x1xf32> to vector<16x32xf32>
    %733 = arith.addf %731, %732 : vector<16x32xf32>
    %cst_491 = arith.constant 0.000000e+00 : f32
    %734 = vector.broadcast %cst_491 : f32 to vector<16x32xf32>
    %735 = arith.cmpf oge, %733, %734 : vector<16x32xf32>
    %cst_492 = arith.constant 0.00999999977 : f32
    %736 = vector.broadcast %cst_492 : f32 to vector<16x32xf32>
    %737 = arith.mulf %736, %733 : vector<16x32xf32>
    %738 = arith.select %735, %733, %737 : vector<16x32xi1>, vector<16x32xf32>
    %c0_493 = arith.constant 0 : index
    %c0_494 = arith.constant 0 : index
    %739 = vector.load %arg46[%c0_493, %c0_494] : memref<16x16xbf16, #tpu.memory_space<vmem>>, vector<16x16xbf16>
    %740 = arith.truncf %738 : vector<16x32xf32> to vector<16x32xbf16>
    %cst_495 = arith.constant dense<0.000000e+00> : vector<16x32xf32>
    %741 = tpu.matmul %739, %740, %cst_495 {dimension_numbers = #tpu.dot_dimension_numbers<[1], [0], [0], [1], [0, 0, 1, 1], [], []>} : vector<16x16xbf16>, vector<16x32xbf16>, vector<16x32xf32> -> vector<16x32xf32>
    %c0_496 = arith.constant 0 : index
    %c0_497 = arith.constant 0 : index
    %742 = vector.load %arg41[%c0_496, %c0_497] : memref<16x1xf32, #tpu.memory_space<vmem>>, vector<16x1xf32>
    %c0_498 = arith.constant 0 : index
    %c0_499 = arith.constant 0 : index
    %743 = vector.load %arg39[%c0_498, %c0_499] : memref<16x1xf32, #tpu.memory_space<vmem>>, vector<16x1xf32>
    %cst_500 = arith.constant dense<0.000000e+00> : vector<16xf32>
    %744 = vector.multi_reduction <add>, %741, %cst_500 [1] : vector<16x32xf32> to vector<16xf32>
    %745 = vector.shape_cast %744 : vector<16xf32> to vector<16x1xf32>
    %cst_501 = arith.constant 3.125000e-02 : f32
    %746 = vector.broadcast %cst_501 : f32 to vector<16x1xf32>
    %747 = arith.mulf %745, %746 : vector<16x1xf32>
    %748 = vector.broadcast %747 : vector<16x1xf32> to vector<16x32xf32>
    %749 = arith.subf %741, %748 : vector<16x32xf32>
    %750 = arith.mulf %749, %749 : vector<16x32xf32>
    %cst_502 = arith.constant dense<0.000000e+00> : vector<16xf32>
    %751 = vector.multi_reduction <add>, %750, %cst_502 [1] : vector<16x32xf32> to vector<16xf32>
    %752 = vector.shape_cast %751 : vector<16xf32> to vector<16x1xf32>
    %cst_503 = arith.constant 3.125000e-02 : f32
    %753 = vector.broadcast %cst_503 : f32 to vector<16x1xf32>
    %754 = arith.mulf %752, %753 : vector<16x1xf32>
    %cst_504 = arith.constant 9.99999974E-6 : f32
    %755 = vector.broadcast %cst_504 : f32 to vector<16x1xf32>
    %756 = arith.addf %754, %755 : vector<16x1xf32>
    %757 = math.rsqrt %756 : vector<16x1xf32>
    %758 = vector.broadcast %757 : vector<16x1xf32> to vector<16x32xf32>
    %759 = arith.mulf %749, %758 : vector<16x32xf32>
    %760 = vector.broadcast %742 : vector<16x1xf32> to vector<16x32xf32>
    %761 = arith.mulf %759, %760 : vector<16x32xf32>
    %762 = vector.broadcast %743 : vector<16x1xf32> to vector<16x32xf32>
    %763 = arith.addf %761, %762 : vector<16x32xf32>
    %cst_505 = arith.constant 0.000000e+00 : f32
    %764 = vector.broadcast %cst_505 : f32 to vector<16x32xf32>
    %765 = arith.cmpf oge, %763, %764 : vector<16x32xf32>
    %cst_506 = arith.constant 0.00999999977 : f32
    %766 = vector.broadcast %cst_506 : f32 to vector<16x32xf32>
    %767 = arith.mulf %766, %763 : vector<16x32xf32>
    %768 = arith.select %765, %763, %767 : vector<16x32xi1>, vector<16x32xf32>
    %769 = arith.truncf %768 : vector<16x32xf32> to vector<16x32xbf16>
    %c0_507 = arith.constant 0 : index
    %c0_508 = arith.constant 0 : index
    %770 = vector.load %arg7[%c0_507, %c0_508] : memref<32x128xbf16, #tpu.memory_space<vmem>>, vector<32x128xbf16>
    %cst_509 = arith.constant dense<0.000000e+00> : vector<16x128xf32>
    %771 = tpu.matmul %769, %770, %cst_509 {dimension_numbers = #tpu.dot_dimension_numbers<[1], [0], [0], [1], [0, 0, 1, 1], [], []>} : vector<16x32xbf16>, vector<32x128xbf16>, vector<16x128xf32> -> vector<16x128xf32>
    %c0_510 = arith.constant 0 : index
    %c0_511 = arith.constant 0 : index
    %772 = vector.load %arg34[%c0_510, %c0_511] : memref<20x1xf32, #tpu.memory_space<vmem>>, vector<20x1xf32>
    %c0_512 = arith.constant 0 : index
    %c0_513 = arith.constant 0 : index
    %773 = vector.load %arg33[%c0_512, %c0_513] : memref<20x1xf32, #tpu.memory_space<vmem>>, vector<20x1xf32>
    %774 = vector.extract_strided_slice %772 {offsets = [0, 0], sizes = [16, 1], strides = [1, 1]} : vector<20x1xf32> to vector<16x1xf32>
    %775 = vector.extract_strided_slice %773 {offsets = [0, 0], sizes = [16, 1], strides = [1, 1]} : vector<20x1xf32> to vector<16x1xf32>
    %cst_514 = arith.constant dense<0.000000e+00> : vector<16xf32>
    %776 = vector.multi_reduction <add>, %771, %cst_514 [1] : vector<16x128xf32> to vector<16xf32>
    %777 = vector.shape_cast %776 : vector<16xf32> to vector<16x1xf32>
    %cst_515 = arith.constant 7.812500e-03 : f32
    %778 = vector.broadcast %cst_515 : f32 to vector<16x1xf32>
    %779 = arith.mulf %777, %778 : vector<16x1xf32>
    %780 = vector.broadcast %779 : vector<16x1xf32> to vector<16x128xf32>
    %781 = arith.subf %771, %780 : vector<16x128xf32>
    %782 = arith.mulf %781, %781 : vector<16x128xf32>
    %cst_516 = arith.constant dense<0.000000e+00> : vector<16xf32>
    %783 = vector.multi_reduction <add>, %782, %cst_516 [1] : vector<16x128xf32> to vector<16xf32>
    %784 = vector.shape_cast %783 : vector<16xf32> to vector<16x1xf32>
    %cst_517 = arith.constant 7.812500e-03 : f32
    %785 = vector.broadcast %cst_517 : f32 to vector<16x1xf32>
    %786 = arith.mulf %784, %785 : vector<16x1xf32>
    %cst_518 = arith.constant 9.99999974E-6 : f32
    %787 = vector.broadcast %cst_518 : f32 to vector<16x1xf32>
    %788 = arith.addf %786, %787 : vector<16x1xf32>
    %789 = math.rsqrt %788 : vector<16x1xf32>
    %790 = vector.broadcast %789 : vector<16x1xf32> to vector<16x128xf32>
    %791 = arith.mulf %781, %790 : vector<16x128xf32>
    %792 = vector.broadcast %774 : vector<16x1xf32> to vector<16x128xf32>
    %793 = arith.mulf %791, %792 : vector<16x128xf32>
    %794 = vector.broadcast %775 : vector<16x1xf32> to vector<16x128xf32>
    %795 = arith.addf %793, %794 : vector<16x128xf32>
    %796 = vector.extract_strided_slice %772 {offsets = [16, 0], sizes = [4, 1], strides = [1, 1]} : vector<20x1xf32> to vector<4x1xf32>
    %797 = vector.extract_strided_slice %773 {offsets = [16, 0], sizes = [4, 1], strides = [1, 1]} : vector<20x1xf32> to vector<4x1xf32>
    %cst_519 = arith.constant dense<0.000000e+00> : vector<4xf32>
    %798 = vector.multi_reduction <add>, %480, %cst_519 [1] : vector<4x128xf32> to vector<4xf32>
    %799 = vector.shape_cast %798 : vector<4xf32> to vector<4x1xf32>
    %cst_520 = arith.constant 7.812500e-03 : f32
    %800 = vector.broadcast %cst_520 : f32 to vector<4x1xf32>
    %801 = arith.mulf %799, %800 : vector<4x1xf32>
    %802 = vector.broadcast %801 : vector<4x1xf32> to vector<4x128xf32>
    %803 = arith.subf %480, %802 : vector<4x128xf32>
    %804 = arith.mulf %803, %803 : vector<4x128xf32>
    %cst_521 = arith.constant dense<0.000000e+00> : vector<4xf32>
    %805 = vector.multi_reduction <add>, %804, %cst_521 [1] : vector<4x128xf32> to vector<4xf32>
    %806 = vector.shape_cast %805 : vector<4xf32> to vector<4x1xf32>
    %cst_522 = arith.constant 7.812500e-03 : f32
    %807 = vector.broadcast %cst_522 : f32 to vector<4x1xf32>
    %808 = arith.mulf %806, %807 : vector<4x1xf32>
    %cst_523 = arith.constant 9.99999974E-6 : f32
    %809 = vector.broadcast %cst_523 : f32 to vector<4x1xf32>
    %810 = arith.addf %808, %809 : vector<4x1xf32>
    %811 = math.rsqrt %810 : vector<4x1xf32>
    %812 = vector.broadcast %811 : vector<4x1xf32> to vector<4x128xf32>
    %813 = arith.mulf %803, %812 : vector<4x128xf32>
    %814 = vector.broadcast %796 : vector<4x1xf32> to vector<4x128xf32>
    %815 = arith.mulf %813, %814 : vector<4x128xf32>
    %816 = vector.broadcast %797 : vector<4x1xf32> to vector<4x128xf32>
    %817 = arith.addf %815, %816 : vector<4x128xf32>
    %cst_524 = arith.constant 0.000000e+00 : f32
    %818 = vector.broadcast %cst_524 : f32 to vector<8x128xf32>
    %c0_525 = arith.constant 0 : index
    %c0_526 = arith.constant 0 : index
    %c0_527 = arith.constant 0 : index
    %819 = vector.load %arg35[%c0_525, %c0_526, %c0_527] : memref<9x8x16xbf16, #tpu.memory_space<vmem>>, vector<1x8x16xbf16>
    %820 = vector.shape_cast %819 : vector<1x8x16xbf16> to vector<8x16xbf16>
    %c9_i32_528 = arith.constant 9 : i32
    %821 = tpu.dynamic_rotate %795 by %c9_i32_528 dim 1 : vector<16x128xf32>, i32 -> vector<16x128xf32>
    %c0_529 = arith.constant 0 : index
    %c0_530 = arith.constant 0 : index
    %c0_531 = arith.constant 0 : index
    %822 = vector.load %arg4[%c0_529, %c0_530, %c0_531] : memref<9x1x128xf32, #tpu.memory_space<vmem>>, vector<1x1x128xf32>
    %823 = vector.shape_cast %822 : vector<1x1x128xf32> to vector<1x128xf32>
    %824 = vector.broadcast %823 : vector<1x128xf32> to vector<16x128xf32>
    %825 = arith.mulf %821, %824 : vector<16x128xf32>
    %826 = arith.truncf %825 : vector<16x128xf32> to vector<16x128xbf16>
    %cst_532 = arith.constant dense<0.000000e+00> : vector<8x128xf32>
    %827 = tpu.matmul %820, %826, %cst_532 {dimension_numbers = #tpu.dot_dimension_numbers<[1], [0], [0], [1], [0, 0, 1, 1], [], []>} : vector<8x16xbf16>, vector<16x128xbf16>, vector<8x128xf32> -> vector<8x128xf32>
    %828 = arith.addf %818, %827 : vector<8x128xf32>
    %c0_533 = arith.constant 0 : index
    %c0_534 = arith.constant 0 : index
    %c0_535 = arith.constant 0 : index
    %829 = vector.load %arg36[%c0_533, %c0_534, %c0_535] : memref<9x8x4xbf16, #tpu.memory_space<vmem>>, vector<1x8x4xbf16>
    %830 = vector.shape_cast %829 : vector<1x8x4xbf16> to vector<8x4xbf16>
    %c9_i32_536 = arith.constant 9 : i32
    %831 = tpu.dynamic_rotate %817 by %c9_i32_536 dim 1 : vector<4x128xf32>, i32 -> vector<4x128xf32>
    %c0_537 = arith.constant 0 : index
    %c0_538 = arith.constant 0 : index
    %c0_539 = arith.constant 0 : index
    %832 = vector.load %arg4[%c0_537, %c0_538, %c0_539] : memref<9x1x128xf32, #tpu.memory_space<vmem>>, vector<1x1x128xf32>
    %833 = vector.shape_cast %832 : vector<1x1x128xf32> to vector<1x128xf32>
    %834 = vector.broadcast %833 : vector<1x128xf32> to vector<4x128xf32>
    %835 = arith.mulf %831, %834 : vector<4x128xf32>
    %836 = arith.truncf %835 : vector<4x128xf32> to vector<4x128xbf16>
    %cst_540 = arith.constant dense<0.000000e+00> : vector<8x128xf32>
    %837 = tpu.matmul %830, %836, %cst_540 {dimension_numbers = #tpu.dot_dimension_numbers<[1], [0], [0], [1], [0, 0, 1, 1], [], []>} : vector<8x4xbf16>, vector<4x128xbf16>, vector<8x128xf32> -> vector<8x128xf32>
    %838 = arith.addf %828, %837 : vector<8x128xf32>
    %c1_541 = arith.constant 1 : index
    %c0_542 = arith.constant 0 : index
    %c0_543 = arith.constant 0 : index
    %839 = vector.load %arg35[%c1_541, %c0_542, %c0_543] : memref<9x8x16xbf16, #tpu.memory_space<vmem>>, vector<1x8x16xbf16>
    %840 = vector.shape_cast %839 : vector<1x8x16xbf16> to vector<8x16xbf16>
    %c8_i32_544 = arith.constant 8 : i32
    %841 = tpu.dynamic_rotate %795 by %c8_i32_544 dim 1 : vector<16x128xf32>, i32 -> vector<16x128xf32>
    %c1_545 = arith.constant 1 : index
    %c0_546 = arith.constant 0 : index
    %c0_547 = arith.constant 0 : index
    %842 = vector.load %arg4[%c1_545, %c0_546, %c0_547] : memref<9x1x128xf32, #tpu.memory_space<vmem>>, vector<1x1x128xf32>
    %843 = vector.shape_cast %842 : vector<1x1x128xf32> to vector<1x128xf32>
    %844 = vector.broadcast %843 : vector<1x128xf32> to vector<16x128xf32>
    %845 = arith.mulf %841, %844 : vector<16x128xf32>
    %846 = arith.truncf %845 : vector<16x128xf32> to vector<16x128xbf16>
    %cst_548 = arith.constant dense<0.000000e+00> : vector<8x128xf32>
    %847 = tpu.matmul %840, %846, %cst_548 {dimension_numbers = #tpu.dot_dimension_numbers<[1], [0], [0], [1], [0, 0, 1, 1], [], []>} : vector<8x16xbf16>, vector<16x128xbf16>, vector<8x128xf32> -> vector<8x128xf32>
    %848 = arith.addf %838, %847 : vector<8x128xf32>
    %c1_549 = arith.constant 1 : index
    %c0_550 = arith.constant 0 : index
    %c0_551 = arith.constant 0 : index
    %849 = vector.load %arg36[%c1_549, %c0_550, %c0_551] : memref<9x8x4xbf16, #tpu.memory_space<vmem>>, vector<1x8x4xbf16>
    %850 = vector.shape_cast %849 : vector<1x8x4xbf16> to vector<8x4xbf16>
    %c8_i32_552 = arith.constant 8 : i32
    %851 = tpu.dynamic_rotate %817 by %c8_i32_552 dim 1 : vector<4x128xf32>, i32 -> vector<4x128xf32>
    %c1_553 = arith.constant 1 : index
    %c0_554 = arith.constant 0 : index
    %c0_555 = arith.constant 0 : index
    %852 = vector.load %arg4[%c1_553, %c0_554, %c0_555] : memref<9x1x128xf32, #tpu.memory_space<vmem>>, vector<1x1x128xf32>
    %853 = vector.shape_cast %852 : vector<1x1x128xf32> to vector<1x128xf32>
    %854 = vector.broadcast %853 : vector<1x128xf32> to vector<4x128xf32>
    %855 = arith.mulf %851, %854 : vector<4x128xf32>
    %856 = arith.truncf %855 : vector<4x128xf32> to vector<4x128xbf16>
    %cst_556 = arith.constant dense<0.000000e+00> : vector<8x128xf32>
    %857 = tpu.matmul %850, %856, %cst_556 {dimension_numbers = #tpu.dot_dimension_numbers<[1], [0], [0], [1], [0, 0, 1, 1], [], []>} : vector<8x4xbf16>, vector<4x128xbf16>, vector<8x128xf32> -> vector<8x128xf32>
    %858 = arith.addf %848, %857 : vector<8x128xf32>
    %c2_557 = arith.constant 2 : index
    %c0_558 = arith.constant 0 : index
    %c0_559 = arith.constant 0 : index
    %859 = vector.load %arg35[%c2_557, %c0_558, %c0_559] : memref<9x8x16xbf16, #tpu.memory_space<vmem>>, vector<1x8x16xbf16>
    %860 = vector.shape_cast %859 : vector<1x8x16xbf16> to vector<8x16xbf16>
    %c7_i32_560 = arith.constant 7 : i32
    %861 = tpu.dynamic_rotate %795 by %c7_i32_560 dim 1 : vector<16x128xf32>, i32 -> vector<16x128xf32>
    %c2_561 = arith.constant 2 : index
    %c0_562 = arith.constant 0 : index
    %c0_563 = arith.constant 0 : index
    %862 = vector.load %arg4[%c2_561, %c0_562, %c0_563] : memref<9x1x128xf32, #tpu.memory_space<vmem>>, vector<1x1x128xf32>
    %863 = vector.shape_cast %862 : vector<1x1x128xf32> to vector<1x128xf32>
    %864 = vector.broadcast %863 : vector<1x128xf32> to vector<16x128xf32>
    %865 = arith.mulf %861, %864 : vector<16x128xf32>
    %866 = arith.truncf %865 : vector<16x128xf32> to vector<16x128xbf16>
    %cst_564 = arith.constant dense<0.000000e+00> : vector<8x128xf32>
    %867 = tpu.matmul %860, %866, %cst_564 {dimension_numbers = #tpu.dot_dimension_numbers<[1], [0], [0], [1], [0, 0, 1, 1], [], []>} : vector<8x16xbf16>, vector<16x128xbf16>, vector<8x128xf32> -> vector<8x128xf32>
    %868 = arith.addf %858, %867 : vector<8x128xf32>
    %c2_565 = arith.constant 2 : index
    %c0_566 = arith.constant 0 : index
    %c0_567 = arith.constant 0 : index
    %869 = vector.load %arg36[%c2_565, %c0_566, %c0_567] : memref<9x8x4xbf16, #tpu.memory_space<vmem>>, vector<1x8x4xbf16>
    %870 = vector.shape_cast %869 : vector<1x8x4xbf16> to vector<8x4xbf16>
    %c7_i32_568 = arith.constant 7 : i32
    %871 = tpu.dynamic_rotate %817 by %c7_i32_568 dim 1 : vector<4x128xf32>, i32 -> vector<4x128xf32>
    %c2_569 = arith.constant 2 : index
    %c0_570 = arith.constant 0 : index
    %c0_571 = arith.constant 0 : index
    %872 = vector.load %arg4[%c2_569, %c0_570, %c0_571] : memref<9x1x128xf32, #tpu.memory_space<vmem>>, vector<1x1x128xf32>
    %873 = vector.shape_cast %872 : vector<1x1x128xf32> to vector<1x128xf32>
    %874 = vector.broadcast %873 : vector<1x128xf32> to vector<4x128xf32>
    %875 = arith.mulf %871, %874 : vector<4x128xf32>
    %876 = arith.truncf %875 : vector<4x128xf32> to vector<4x128xbf16>
    %cst_572 = arith.constant dense<0.000000e+00> : vector<8x128xf32>
    %877 = tpu.matmul %870, %876, %cst_572 {dimension_numbers = #tpu.dot_dimension_numbers<[1], [0], [0], [1], [0, 0, 1, 1], [], []>} : vector<8x4xbf16>, vector<4x128xbf16>, vector<8x128xf32> -> vector<8x128xf32>
    %878 = arith.addf %868, %877 : vector<8x128xf32>
    %c3_573 = arith.constant 3 : index
    %c0_574 = arith.constant 0 : index
    %c0_575 = arith.constant 0 : index
    %879 = vector.load %arg35[%c3_573, %c0_574, %c0_575] : memref<9x8x16xbf16, #tpu.memory_space<vmem>>, vector<1x8x16xbf16>
    %880 = vector.shape_cast %879 : vector<1x8x16xbf16> to vector<8x16xbf16>
    %c1_i32_576 = arith.constant 1 : i32
    %881 = tpu.dynamic_rotate %795 by %c1_i32_576 dim 1 : vector<16x128xf32>, i32 -> vector<16x128xf32>
    %c3_577 = arith.constant 3 : index
    %c0_578 = arith.constant 0 : index
    %c0_579 = arith.constant 0 : index
    %882 = vector.load %arg4[%c3_577, %c0_578, %c0_579] : memref<9x1x128xf32, #tpu.memory_space<vmem>>, vector<1x1x128xf32>
    %883 = vector.shape_cast %882 : vector<1x1x128xf32> to vector<1x128xf32>
    %884 = vector.broadcast %883 : vector<1x128xf32> to vector<16x128xf32>
    %885 = arith.mulf %881, %884 : vector<16x128xf32>
    %886 = arith.truncf %885 : vector<16x128xf32> to vector<16x128xbf16>
    %cst_580 = arith.constant dense<0.000000e+00> : vector<8x128xf32>
    %887 = tpu.matmul %880, %886, %cst_580 {dimension_numbers = #tpu.dot_dimension_numbers<[1], [0], [0], [1], [0, 0, 1, 1], [], []>} : vector<8x16xbf16>, vector<16x128xbf16>, vector<8x128xf32> -> vector<8x128xf32>
    %888 = arith.addf %878, %887 : vector<8x128xf32>
    %c3_581 = arith.constant 3 : index
    %c0_582 = arith.constant 0 : index
    %c0_583 = arith.constant 0 : index
    %889 = vector.load %arg36[%c3_581, %c0_582, %c0_583] : memref<9x8x4xbf16, #tpu.memory_space<vmem>>, vector<1x8x4xbf16>
    %890 = vector.shape_cast %889 : vector<1x8x4xbf16> to vector<8x4xbf16>
    %c1_i32_584 = arith.constant 1 : i32
    %891 = tpu.dynamic_rotate %817 by %c1_i32_584 dim 1 : vector<4x128xf32>, i32 -> vector<4x128xf32>
    %c3_585 = arith.constant 3 : index
    %c0_586 = arith.constant 0 : index
    %c0_587 = arith.constant 0 : index
    %892 = vector.load %arg4[%c3_585, %c0_586, %c0_587] : memref<9x1x128xf32, #tpu.memory_space<vmem>>, vector<1x1x128xf32>
    %893 = vector.shape_cast %892 : vector<1x1x128xf32> to vector<1x128xf32>
    %894 = vector.broadcast %893 : vector<1x128xf32> to vector<4x128xf32>
    %895 = arith.mulf %891, %894 : vector<4x128xf32>
    %896 = arith.truncf %895 : vector<4x128xf32> to vector<4x128xbf16>
    %cst_588 = arith.constant dense<0.000000e+00> : vector<8x128xf32>
    %897 = tpu.matmul %890, %896, %cst_588 {dimension_numbers = #tpu.dot_dimension_numbers<[1], [0], [0], [1], [0, 0, 1, 1], [], []>} : vector<8x4xbf16>, vector<4x128xbf16>, vector<8x128xf32> -> vector<8x128xf32>
    %898 = arith.addf %888, %897 : vector<8x128xf32>
    %c4_589 = arith.constant 4 : index
    %c0_590 = arith.constant 0 : index
    %c0_591 = arith.constant 0 : index
    %899 = vector.load %arg35[%c4_589, %c0_590, %c0_591] : memref<9x8x16xbf16, #tpu.memory_space<vmem>>, vector<1x8x16xbf16>
    %900 = vector.shape_cast %899 : vector<1x8x16xbf16> to vector<8x16xbf16>
    %901 = arith.truncf %795 : vector<16x128xf32> to vector<16x128xbf16>
    %cst_592 = arith.constant dense<0.000000e+00> : vector<8x128xf32>
    %902 = tpu.matmul %900, %901, %cst_592 {dimension_numbers = #tpu.dot_dimension_numbers<[1], [0], [0], [1], [0, 0, 1, 1], [], []>} : vector<8x16xbf16>, vector<16x128xbf16>, vector<8x128xf32> -> vector<8x128xf32>
    %903 = arith.addf %898, %902 : vector<8x128xf32>
    %c4_593 = arith.constant 4 : index
    %c0_594 = arith.constant 0 : index
    %c0_595 = arith.constant 0 : index
    %904 = vector.load %arg36[%c4_593, %c0_594, %c0_595] : memref<9x8x4xbf16, #tpu.memory_space<vmem>>, vector<1x8x4xbf16>
    %905 = vector.shape_cast %904 : vector<1x8x4xbf16> to vector<8x4xbf16>
    %906 = arith.truncf %817 : vector<4x128xf32> to vector<4x128xbf16>
    %cst_596 = arith.constant dense<0.000000e+00> : vector<8x128xf32>
    %907 = tpu.matmul %905, %906, %cst_596 {dimension_numbers = #tpu.dot_dimension_numbers<[1], [0], [0], [1], [0, 0, 1, 1], [], []>} : vector<8x4xbf16>, vector<4x128xbf16>, vector<8x128xf32> -> vector<8x128xf32>
    %908 = arith.addf %903, %907 : vector<8x128xf32>
    %c5_597 = arith.constant 5 : index
    %c0_598 = arith.constant 0 : index
    %c0_599 = arith.constant 0 : index
    %909 = vector.load %arg35[%c5_597, %c0_598, %c0_599] : memref<9x8x16xbf16, #tpu.memory_space<vmem>>, vector<1x8x16xbf16>
    %910 = vector.shape_cast %909 : vector<1x8x16xbf16> to vector<8x16xbf16>
    %c127_i32_600 = arith.constant 127 : i32
    %911 = tpu.dynamic_rotate %795 by %c127_i32_600 dim 1 : vector<16x128xf32>, i32 -> vector<16x128xf32>
    %c5_601 = arith.constant 5 : index
    %c0_602 = arith.constant 0 : index
    %c0_603 = arith.constant 0 : index
    %912 = vector.load %arg4[%c5_601, %c0_602, %c0_603] : memref<9x1x128xf32, #tpu.memory_space<vmem>>, vector<1x1x128xf32>
    %913 = vector.shape_cast %912 : vector<1x1x128xf32> to vector<1x128xf32>
    %914 = vector.broadcast %913 : vector<1x128xf32> to vector<16x128xf32>
    %915 = arith.mulf %911, %914 : vector<16x128xf32>
    %916 = arith.truncf %915 : vector<16x128xf32> to vector<16x128xbf16>
    %cst_604 = arith.constant dense<0.000000e+00> : vector<8x128xf32>
    %917 = tpu.matmul %910, %916, %cst_604 {dimension_numbers = #tpu.dot_dimension_numbers<[1], [0], [0], [1], [0, 0, 1, 1], [], []>} : vector<8x16xbf16>, vector<16x128xbf16>, vector<8x128xf32> -> vector<8x128xf32>
    %918 = arith.addf %908, %917 : vector<8x128xf32>
    %c5_605 = arith.constant 5 : index
    %c0_606 = arith.constant 0 : index
    %c0_607 = arith.constant 0 : index
    %919 = vector.load %arg36[%c5_605, %c0_606, %c0_607] : memref<9x8x4xbf16, #tpu.memory_space<vmem>>, vector<1x8x4xbf16>
    %920 = vector.shape_cast %919 : vector<1x8x4xbf16> to vector<8x4xbf16>
    %c127_i32_608 = arith.constant 127 : i32
    %921 = tpu.dynamic_rotate %817 by %c127_i32_608 dim 1 : vector<4x128xf32>, i32 -> vector<4x128xf32>
    %c5_609 = arith.constant 5 : index
    %c0_610 = arith.constant 0 : index
    %c0_611 = arith.constant 0 : index
    %922 = vector.load %arg4[%c5_609, %c0_610, %c0_611] : memref<9x1x128xf32, #tpu.memory_space<vmem>>, vector<1x1x128xf32>
    %923 = vector.shape_cast %922 : vector<1x1x128xf32> to vector<1x128xf32>
    %924 = vector.broadcast %923 : vector<1x128xf32> to vector<4x128xf32>
    %925 = arith.mulf %921, %924 : vector<4x128xf32>
    %926 = arith.truncf %925 : vector<4x128xf32> to vector<4x128xbf16>
    %cst_612 = arith.constant dense<0.000000e+00> : vector<8x128xf32>
    %927 = tpu.matmul %920, %926, %cst_612 {dimension_numbers = #tpu.dot_dimension_numbers<[1], [0], [0], [1], [0, 0, 1, 1], [], []>} : vector<8x4xbf16>, vector<4x128xbf16>, vector<8x128xf32> -> vector<8x128xf32>
    %928 = arith.addf %918, %927 : vector<8x128xf32>
    %c6_613 = arith.constant 6 : index
    %c0_614 = arith.constant 0 : index
    %c0_615 = arith.constant 0 : index
    %929 = vector.load %arg35[%c6_613, %c0_614, %c0_615] : memref<9x8x16xbf16, #tpu.memory_space<vmem>>, vector<1x8x16xbf16>
    %930 = vector.shape_cast %929 : vector<1x8x16xbf16> to vector<8x16xbf16>
    %c121_i32_616 = arith.constant 121 : i32
    %931 = tpu.dynamic_rotate %795 by %c121_i32_616 dim 1 : vector<16x128xf32>, i32 -> vector<16x128xf32>
    %c6_617 = arith.constant 6 : index
    %c0_618 = arith.constant 0 : index
    %c0_619 = arith.constant 0 : index
    %932 = vector.load %arg4[%c6_617, %c0_618, %c0_619] : memref<9x1x128xf32, #tpu.memory_space<vmem>>, vector<1x1x128xf32>
    %933 = vector.shape_cast %932 : vector<1x1x128xf32> to vector<1x128xf32>
    %934 = vector.broadcast %933 : vector<1x128xf32> to vector<16x128xf32>
    %935 = arith.mulf %931, %934 : vector<16x128xf32>
    %936 = arith.truncf %935 : vector<16x128xf32> to vector<16x128xbf16>
    %cst_620 = arith.constant dense<0.000000e+00> : vector<8x128xf32>
    %937 = tpu.matmul %930, %936, %cst_620 {dimension_numbers = #tpu.dot_dimension_numbers<[1], [0], [0], [1], [0, 0, 1, 1], [], []>} : vector<8x16xbf16>, vector<16x128xbf16>, vector<8x128xf32> -> vector<8x128xf32>
    %938 = arith.addf %928, %937 : vector<8x128xf32>
    %c6_621 = arith.constant 6 : index
    %c0_622 = arith.constant 0 : index
    %c0_623 = arith.constant 0 : index
    %939 = vector.load %arg36[%c6_621, %c0_622, %c0_623] : memref<9x8x4xbf16, #tpu.memory_space<vmem>>, vector<1x8x4xbf16>
    %940 = vector.shape_cast %939 : vector<1x8x4xbf16> to vector<8x4xbf16>
    %c121_i32_624 = arith.constant 121 : i32
    %941 = tpu.dynamic_rotate %817 by %c121_i32_624 dim 1 : vector<4x128xf32>, i32 -> vector<4x128xf32>
    %c6_625 = arith.constant 6 : index
    %c0_626 = arith.constant 0 : index
    %c0_627 = arith.constant 0 : index
    %942 = vector.load %arg4[%c6_625, %c0_626, %c0_627] : memref<9x1x128xf32, #tpu.memory_space<vmem>>, vector<1x1x128xf32>
    %943 = vector.shape_cast %942 : vector<1x1x128xf32> to vector<1x128xf32>
    %944 = vector.broadcast %943 : vector<1x128xf32> to vector<4x128xf32>
    %945 = arith.mulf %941, %944 : vector<4x128xf32>
    %946 = arith.truncf %945 : vector<4x128xf32> to vector<4x128xbf16>
    %cst_628 = arith.constant dense<0.000000e+00> : vector<8x128xf32>
    %947 = tpu.matmul %940, %946, %cst_628 {dimension_numbers = #tpu.dot_dimension_numbers<[1], [0], [0], [1], [0, 0, 1, 1], [], []>} : vector<8x4xbf16>, vector<4x128xbf16>, vector<8x128xf32> -> vector<8x128xf32>
    %948 = arith.addf %938, %947 : vector<8x128xf32>
    %c7_629 = arith.constant 7 : index
    %c0_630 = arith.constant 0 : index
    %c0_631 = arith.constant 0 : index
    %949 = vector.load %arg35[%c7_629, %c0_630, %c0_631] : memref<9x8x16xbf16, #tpu.memory_space<vmem>>, vector<1x8x16xbf16>
    %950 = vector.shape_cast %949 : vector<1x8x16xbf16> to vector<8x16xbf16>
    %c120_i32_632 = arith.constant 120 : i32
    %951 = tpu.dynamic_rotate %795 by %c120_i32_632 dim 1 : vector<16x128xf32>, i32 -> vector<16x128xf32>
    %c7_633 = arith.constant 7 : index
    %c0_634 = arith.constant 0 : index
    %c0_635 = arith.constant 0 : index
    %952 = vector.load %arg4[%c7_633, %c0_634, %c0_635] : memref<9x1x128xf32, #tpu.memory_space<vmem>>, vector<1x1x128xf32>
    %953 = vector.shape_cast %952 : vector<1x1x128xf32> to vector<1x128xf32>
    %954 = vector.broadcast %953 : vector<1x128xf32> to vector<16x128xf32>
    %955 = arith.mulf %951, %954 : vector<16x128xf32>
    %956 = arith.truncf %955 : vector<16x128xf32> to vector<16x128xbf16>
    %cst_636 = arith.constant dense<0.000000e+00> : vector<8x128xf32>
    %957 = tpu.matmul %950, %956, %cst_636 {dimension_numbers = #tpu.dot_dimension_numbers<[1], [0], [0], [1], [0, 0, 1, 1], [], []>} : vector<8x16xbf16>, vector<16x128xbf16>, vector<8x128xf32> -> vector<8x128xf32>
    %958 = arith.addf %948, %957 : vector<8x128xf32>
    %c7_637 = arith.constant 7 : index
    %c0_638 = arith.constant 0 : index
    %c0_639 = arith.constant 0 : index
    %959 = vector.load %arg36[%c7_637, %c0_638, %c0_639] : memref<9x8x4xbf16, #tpu.memory_space<vmem>>, vector<1x8x4xbf16>
    %960 = vector.shape_cast %959 : vector<1x8x4xbf16> to vector<8x4xbf16>
    %c120_i32_640 = arith.constant 120 : i32
    %961 = tpu.dynamic_rotate %817 by %c120_i32_640 dim 1 : vector<4x128xf32>, i32 -> vector<4x128xf32>
    %c7_641 = arith.constant 7 : index
    %c0_642 = arith.constant 0 : index
    %c0_643 = arith.constant 0 : index
    %962 = vector.load %arg4[%c7_641, %c0_642, %c0_643] : memref<9x1x128xf32, #tpu.memory_space<vmem>>, vector<1x1x128xf32>
    %963 = vector.shape_cast %962 : vector<1x1x128xf32> to vector<1x128xf32>
    %964 = vector.broadcast %963 : vector<1x128xf32> to vector<4x128xf32>
    %965 = arith.mulf %961, %964 : vector<4x128xf32>
    %966 = arith.truncf %965 : vector<4x128xf32> to vector<4x128xbf16>
    %cst_644 = arith.constant dense<0.000000e+00> : vector<8x128xf32>
    %967 = tpu.matmul %960, %966, %cst_644 {dimension_numbers = #tpu.dot_dimension_numbers<[1], [0], [0], [1], [0, 0, 1, 1], [], []>} : vector<8x4xbf16>, vector<4x128xbf16>, vector<8x128xf32> -> vector<8x128xf32>
    %968 = arith.addf %958, %967 : vector<8x128xf32>
    %c8_645 = arith.constant 8 : index
    %c0_646 = arith.constant 0 : index
    %c0_647 = arith.constant 0 : index
    %969 = vector.load %arg35[%c8_645, %c0_646, %c0_647] : memref<9x8x16xbf16, #tpu.memory_space<vmem>>, vector<1x8x16xbf16>
    %970 = vector.shape_cast %969 : vector<1x8x16xbf16> to vector<8x16xbf16>
    %c119_i32_648 = arith.constant 119 : i32
    %971 = tpu.dynamic_rotate %795 by %c119_i32_648 dim 1 : vector<16x128xf32>, i32 -> vector<16x128xf32>
    %c8_649 = arith.constant 8 : index
    %c0_650 = arith.constant 0 : index
    %c0_651 = arith.constant 0 : index
    %972 = vector.load %arg4[%c8_649, %c0_650, %c0_651] : memref<9x1x128xf32, #tpu.memory_space<vmem>>, vector<1x1x128xf32>
    %973 = vector.shape_cast %972 : vector<1x1x128xf32> to vector<1x128xf32>
    %974 = vector.broadcast %973 : vector<1x128xf32> to vector<16x128xf32>
    %975 = arith.mulf %971, %974 : vector<16x128xf32>
    %976 = arith.truncf %975 : vector<16x128xf32> to vector<16x128xbf16>
    %cst_652 = arith.constant dense<0.000000e+00> : vector<8x128xf32>
    %977 = tpu.matmul %970, %976, %cst_652 {dimension_numbers = #tpu.dot_dimension_numbers<[1], [0], [0], [1], [0, 0, 1, 1], [], []>} : vector<8x16xbf16>, vector<16x128xbf16>, vector<8x128xf32> -> vector<8x128xf32>
    %978 = arith.addf %968, %977 : vector<8x128xf32>
    %c8_653 = arith.constant 8 : index
    %c0_654 = arith.constant 0 : index
    %c0_655 = arith.constant 0 : index
    %979 = vector.load %arg36[%c8_653, %c0_654, %c0_655] : memref<9x8x4xbf16, #tpu.memory_space<vmem>>, vector<1x8x4xbf16>
    %980 = vector.shape_cast %979 : vector<1x8x4xbf16> to vector<8x4xbf16>
    %c119_i32_656 = arith.constant 119 : i32
    %981 = tpu.dynamic_rotate %817 by %c119_i32_656 dim 1 : vector<4x128xf32>, i32 -> vector<4x128xf32>
    %c8_657 = arith.constant 8 : index
    %c0_658 = arith.constant 0 : index
    %c0_659 = arith.constant 0 : index
    %982 = vector.load %arg4[%c8_657, %c0_658, %c0_659] : memref<9x1x128xf32, #tpu.memory_space<vmem>>, vector<1x1x128xf32>
    %983 = vector.shape_cast %982 : vector<1x1x128xf32> to vector<1x128xf32>
    %984 = vector.broadcast %983 : vector<1x128xf32> to vector<4x128xf32>
    %985 = arith.mulf %981, %984 : vector<4x128xf32>
    %986 = arith.truncf %985 : vector<4x128xf32> to vector<4x128xbf16>
    %cst_660 = arith.constant dense<0.000000e+00> : vector<8x128xf32>
    %987 = tpu.matmul %980, %986, %cst_660 {dimension_numbers = #tpu.dot_dimension_numbers<[1], [0], [0], [1], [0, 0, 1, 1], [], []>} : vector<8x4xbf16>, vector<4x128xbf16>, vector<8x128xf32> -> vector<8x128xf32>
    %988 = arith.addf %978, %987 : vector<8x128xf32>
    %c0_661 = arith.constant 0 : index
    %c0_662 = arith.constant 0 : index
    %989 = vector.load %arg31[%c0_661, %c0_662] : memref<8x1xf32, #tpu.memory_space<vmem>>, vector<8x1xf32>
    %c0_663 = arith.constant 0 : index
    %c0_664 = arith.constant 0 : index
    %990 = vector.load %arg29[%c0_663, %c0_664] : memref<8x1xf32, #tpu.memory_space<vmem>>, vector<8x1xf32>
    %cst_665 = arith.constant dense<0.000000e+00> : vector<8xf32>
    %991 = vector.multi_reduction <add>, %988, %cst_665 [1] : vector<8x128xf32> to vector<8xf32>
    %992 = vector.shape_cast %991 : vector<8xf32> to vector<8x1xf32>
    %cst_666 = arith.constant 7.812500e-03 : f32
    %993 = vector.broadcast %cst_666 : f32 to vector<8x1xf32>
    %994 = arith.mulf %992, %993 : vector<8x1xf32>
    %995 = vector.broadcast %994 : vector<8x1xf32> to vector<8x128xf32>
    %996 = arith.subf %988, %995 : vector<8x128xf32>
    %997 = arith.mulf %996, %996 : vector<8x128xf32>
    %cst_667 = arith.constant dense<0.000000e+00> : vector<8xf32>
    %998 = vector.multi_reduction <add>, %997, %cst_667 [1] : vector<8x128xf32> to vector<8xf32>
    %999 = vector.shape_cast %998 : vector<8xf32> to vector<8x1xf32>
    %cst_668 = arith.constant 7.812500e-03 : f32
    %1000 = vector.broadcast %cst_668 : f32 to vector<8x1xf32>
    %1001 = arith.mulf %999, %1000 : vector<8x1xf32>
    %cst_669 = arith.constant 9.99999974E-6 : f32
    %1002 = vector.broadcast %cst_669 : f32 to vector<8x1xf32>
    %1003 = arith.addf %1001, %1002 : vector<8x1xf32>
    %1004 = math.rsqrt %1003 : vector<8x1xf32>
    %1005 = vector.broadcast %1004 : vector<8x1xf32> to vector<8x128xf32>
    %1006 = arith.mulf %996, %1005 : vector<8x128xf32>
    %1007 = vector.broadcast %989 : vector<8x1xf32> to vector<8x128xf32>
    %1008 = arith.mulf %1006, %1007 : vector<8x128xf32>
    %1009 = vector.broadcast %990 : vector<8x1xf32> to vector<8x128xf32>
    %1010 = arith.addf %1008, %1009 : vector<8x128xf32>
    %cst_670 = arith.constant 0.000000e+00 : f32
    %1011 = vector.broadcast %cst_670 : f32 to vector<8x128xf32>
    %1012 = arith.cmpf oge, %1010, %1011 : vector<8x128xf32>
    %cst_671 = arith.constant 0.00999999977 : f32
    %1013 = vector.broadcast %cst_671 : f32 to vector<8x128xf32>
    %1014 = arith.mulf %1013, %1010 : vector<8x128xf32>
    %1015 = arith.select %1012, %1010, %1014 : vector<8x128xi1>, vector<8x128xf32>
    %c0_672 = arith.constant 0 : index
    %c0_673 = arith.constant 0 : index
    %1016 = vector.load %arg37[%c0_672, %c0_673] : memref<8x8xbf16, #tpu.memory_space<vmem>>, vector<8x8xbf16>
    %1017 = arith.truncf %1015 : vector<8x128xf32> to vector<8x128xbf16>
    %cst_674 = arith.constant dense<0.000000e+00> : vector<8x128xf32>
    %1018 = tpu.matmul %1016, %1017, %cst_674 {dimension_numbers = #tpu.dot_dimension_numbers<[1], [0], [0], [1], [0, 0, 1, 1], [], []>} : vector<8x8xbf16>, vector<8x128xbf16>, vector<8x128xf32> -> vector<8x128xf32>
    %c0_675 = arith.constant 0 : index
    %c0_676 = arith.constant 0 : index
    %1019 = vector.load %arg32[%c0_675, %c0_676] : memref<8x1xf32, #tpu.memory_space<vmem>>, vector<8x1xf32>
    %c0_677 = arith.constant 0 : index
    %c0_678 = arith.constant 0 : index
    %1020 = vector.load %arg30[%c0_677, %c0_678] : memref<8x1xf32, #tpu.memory_space<vmem>>, vector<8x1xf32>
    %cst_679 = arith.constant dense<0.000000e+00> : vector<8xf32>
    %1021 = vector.multi_reduction <add>, %1018, %cst_679 [1] : vector<8x128xf32> to vector<8xf32>
    %1022 = vector.shape_cast %1021 : vector<8xf32> to vector<8x1xf32>
    %cst_680 = arith.constant 7.812500e-03 : f32
    %1023 = vector.broadcast %cst_680 : f32 to vector<8x1xf32>
    %1024 = arith.mulf %1022, %1023 : vector<8x1xf32>
    %1025 = vector.broadcast %1024 : vector<8x1xf32> to vector<8x128xf32>
    %1026 = arith.subf %1018, %1025 : vector<8x128xf32>
    %1027 = arith.mulf %1026, %1026 : vector<8x128xf32>
    %cst_681 = arith.constant dense<0.000000e+00> : vector<8xf32>
    %1028 = vector.multi_reduction <add>, %1027, %cst_681 [1] : vector<8x128xf32> to vector<8xf32>
    %1029 = vector.shape_cast %1028 : vector<8xf32> to vector<8x1xf32>
    %cst_682 = arith.constant 7.812500e-03 : f32
    %1030 = vector.broadcast %cst_682 : f32 to vector<8x1xf32>
    %1031 = arith.mulf %1029, %1030 : vector<8x1xf32>
    %cst_683 = arith.constant 9.99999974E-6 : f32
    %1032 = vector.broadcast %cst_683 : f32 to vector<8x1xf32>
    %1033 = arith.addf %1031, %1032 : vector<8x1xf32>
    %1034 = math.rsqrt %1033 : vector<8x1xf32>
    %1035 = vector.broadcast %1034 : vector<8x1xf32> to vector<8x128xf32>
    %1036 = arith.mulf %1026, %1035 : vector<8x128xf32>
    %1037 = vector.broadcast %1019 : vector<8x1xf32> to vector<8x128xf32>
    %1038 = arith.mulf %1036, %1037 : vector<8x128xf32>
    %1039 = vector.broadcast %1020 : vector<8x1xf32> to vector<8x128xf32>
    %1040 = arith.addf %1038, %1039 : vector<8x128xf32>
    %cst_684 = arith.constant 0.000000e+00 : f32
    %1041 = vector.broadcast %cst_684 : f32 to vector<8x128xf32>
    %1042 = arith.cmpf oge, %1040, %1041 : vector<8x128xf32>
    %cst_685 = arith.constant 0.00999999977 : f32
    %1043 = vector.broadcast %cst_685 : f32 to vector<8x128xf32>
    %1044 = arith.mulf %1043, %1040 : vector<8x128xf32>
    %1045 = arith.select %1042, %1040, %1044 : vector<8x128xi1>, vector<8x128xf32>
    %1046 = arith.truncf %1045 : vector<8x128xf32> to vector<8x128xbf16>
    %c0_686 = arith.constant 0 : index
    %c0_687 = arith.constant 0 : index
    %1047 = vector.load %arg6[%c0_686, %c0_687] : memref<128x512xbf16, #tpu.memory_space<vmem>>, vector<128x512xbf16>
    %cst_688 = arith.constant dense<0.000000e+00> : vector<8x512xf32>
    %1048 = tpu.matmul %1046, %1047, %cst_688 {dimension_numbers = #tpu.dot_dimension_numbers<[1], [0], [0], [1], [0, 0, 1, 1], [], []>} : vector<8x128xbf16>, vector<128x512xbf16>, vector<8x512xf32> -> vector<8x512xf32>
    %cst_689 = arith.constant 0.000000e+00 : f32
    %1049 = vector.broadcast %cst_689 : f32 to vector<3x512xf32>
    %c0_690 = arith.constant 0 : index
    %c0_691 = arith.constant 0 : index
    %c0_692 = arith.constant 0 : index
    %1050 = vector.load %arg22[%c0_690, %c0_691, %c0_692] : memref<9x3x8xbf16, #tpu.memory_space<vmem>>, vector<1x3x8xbf16>
    %1051 = vector.shape_cast %1050 : vector<1x3x8xbf16> to vector<3x8xbf16>
    %c17_i32_693 = arith.constant 17 : i32
    %1052 = tpu.dynamic_rotate %1048 by %c17_i32_693 dim 1 : vector<8x512xf32>, i32 -> vector<8x512xf32>
    %c0_694 = arith.constant 0 : index
    %c0_695 = arith.constant 0 : index
    %c0_696 = arith.constant 0 : index
    %1053 = vector.load %arg3[%c0_694, %c0_695, %c0_696] : memref<9x1x512xf32, #tpu.memory_space<vmem>>, vector<1x1x512xf32>
    %1054 = vector.shape_cast %1053 : vector<1x1x512xf32> to vector<1x512xf32>
    %1055 = vector.broadcast %1054 : vector<1x512xf32> to vector<8x512xf32>
    %1056 = arith.mulf %1052, %1055 : vector<8x512xf32>
    %1057 = arith.truncf %1056 : vector<8x512xf32> to vector<8x512xbf16>
    %cst_697 = arith.constant dense<0.000000e+00> : vector<3x512xf32>
    %1058 = tpu.matmul %1051, %1057, %cst_697 {dimension_numbers = #tpu.dot_dimension_numbers<[1], [0], [0], [1], [0, 0, 1, 1], [], []>} : vector<3x8xbf16>, vector<8x512xbf16>, vector<3x512xf32> -> vector<3x512xf32>
    %1059 = arith.addf %1049, %1058 : vector<3x512xf32>
    %c1_698 = arith.constant 1 : index
    %c0_699 = arith.constant 0 : index
    %c0_700 = arith.constant 0 : index
    %1060 = vector.load %arg22[%c1_698, %c0_699, %c0_700] : memref<9x3x8xbf16, #tpu.memory_space<vmem>>, vector<1x3x8xbf16>
    %1061 = vector.shape_cast %1060 : vector<1x3x8xbf16> to vector<3x8xbf16>
    %c16_i32_701 = arith.constant 16 : i32
    %1062 = tpu.dynamic_rotate %1048 by %c16_i32_701 dim 1 : vector<8x512xf32>, i32 -> vector<8x512xf32>
    %c1_702 = arith.constant 1 : index
    %c0_703 = arith.constant 0 : index
    %c0_704 = arith.constant 0 : index
    %1063 = vector.load %arg3[%c1_702, %c0_703, %c0_704] : memref<9x1x512xf32, #tpu.memory_space<vmem>>, vector<1x1x512xf32>
    %1064 = vector.shape_cast %1063 : vector<1x1x512xf32> to vector<1x512xf32>
    %1065 = vector.broadcast %1064 : vector<1x512xf32> to vector<8x512xf32>
    %1066 = arith.mulf %1062, %1065 : vector<8x512xf32>
    %1067 = arith.truncf %1066 : vector<8x512xf32> to vector<8x512xbf16>
    %cst_705 = arith.constant dense<0.000000e+00> : vector<3x512xf32>
    %1068 = tpu.matmul %1061, %1067, %cst_705 {dimension_numbers = #tpu.dot_dimension_numbers<[1], [0], [0], [1], [0, 0, 1, 1], [], []>} : vector<3x8xbf16>, vector<8x512xbf16>, vector<3x512xf32> -> vector<3x512xf32>
    %1069 = arith.addf %1059, %1068 : vector<3x512xf32>
    %c2_706 = arith.constant 2 : index
    %c0_707 = arith.constant 0 : index
    %c0_708 = arith.constant 0 : index
    %1070 = vector.load %arg22[%c2_706, %c0_707, %c0_708] : memref<9x3x8xbf16, #tpu.memory_space<vmem>>, vector<1x3x8xbf16>
    %1071 = vector.shape_cast %1070 : vector<1x3x8xbf16> to vector<3x8xbf16>
    %c15_i32_709 = arith.constant 15 : i32
    %1072 = tpu.dynamic_rotate %1048 by %c15_i32_709 dim 1 : vector<8x512xf32>, i32 -> vector<8x512xf32>
    %c2_710 = arith.constant 2 : index
    %c0_711 = arith.constant 0 : index
    %c0_712 = arith.constant 0 : index
    %1073 = vector.load %arg3[%c2_710, %c0_711, %c0_712] : memref<9x1x512xf32, #tpu.memory_space<vmem>>, vector<1x1x512xf32>
    %1074 = vector.shape_cast %1073 : vector<1x1x512xf32> to vector<1x512xf32>
    %1075 = vector.broadcast %1074 : vector<1x512xf32> to vector<8x512xf32>
    %1076 = arith.mulf %1072, %1075 : vector<8x512xf32>
    %1077 = arith.truncf %1076 : vector<8x512xf32> to vector<8x512xbf16>
    %cst_713 = arith.constant dense<0.000000e+00> : vector<3x512xf32>
    %1078 = tpu.matmul %1071, %1077, %cst_713 {dimension_numbers = #tpu.dot_dimension_numbers<[1], [0], [0], [1], [0, 0, 1, 1], [], []>} : vector<3x8xbf16>, vector<8x512xbf16>, vector<3x512xf32> -> vector<3x512xf32>
    %1079 = arith.addf %1069, %1078 : vector<3x512xf32>
    %c3_714 = arith.constant 3 : index
    %c0_715 = arith.constant 0 : index
    %c0_716 = arith.constant 0 : index
    %1080 = vector.load %arg22[%c3_714, %c0_715, %c0_716] : memref<9x3x8xbf16, #tpu.memory_space<vmem>>, vector<1x3x8xbf16>
    %1081 = vector.shape_cast %1080 : vector<1x3x8xbf16> to vector<3x8xbf16>
    %c1_i32_717 = arith.constant 1 : i32
    %1082 = tpu.dynamic_rotate %1048 by %c1_i32_717 dim 1 : vector<8x512xf32>, i32 -> vector<8x512xf32>
    %c3_718 = arith.constant 3 : index
    %c0_719 = arith.constant 0 : index
    %c0_720 = arith.constant 0 : index
    %1083 = vector.load %arg3[%c3_718, %c0_719, %c0_720] : memref<9x1x512xf32, #tpu.memory_space<vmem>>, vector<1x1x512xf32>
    %1084 = vector.shape_cast %1083 : vector<1x1x512xf32> to vector<1x512xf32>
    %1085 = vector.broadcast %1084 : vector<1x512xf32> to vector<8x512xf32>
    %1086 = arith.mulf %1082, %1085 : vector<8x512xf32>
    %1087 = arith.truncf %1086 : vector<8x512xf32> to vector<8x512xbf16>
    %cst_721 = arith.constant dense<0.000000e+00> : vector<3x512xf32>
    %1088 = tpu.matmul %1081, %1087, %cst_721 {dimension_numbers = #tpu.dot_dimension_numbers<[1], [0], [0], [1], [0, 0, 1, 1], [], []>} : vector<3x8xbf16>, vector<8x512xbf16>, vector<3x512xf32> -> vector<3x512xf32>
    %1089 = arith.addf %1079, %1088 : vector<3x512xf32>
    %c4_722 = arith.constant 4 : index
    %c0_723 = arith.constant 0 : index
    %c0_724 = arith.constant 0 : index
    %1090 = vector.load %arg22[%c4_722, %c0_723, %c0_724] : memref<9x3x8xbf16, #tpu.memory_space<vmem>>, vector<1x3x8xbf16>
    %1091 = vector.shape_cast %1090 : vector<1x3x8xbf16> to vector<3x8xbf16>
    %1092 = arith.truncf %1048 : vector<8x512xf32> to vector<8x512xbf16>
    %cst_725 = arith.constant dense<0.000000e+00> : vector<3x512xf32>
    %1093 = tpu.matmul %1091, %1092, %cst_725 {dimension_numbers = #tpu.dot_dimension_numbers<[1], [0], [0], [1], [0, 0, 1, 1], [], []>} : vector<3x8xbf16>, vector<8x512xbf16>, vector<3x512xf32> -> vector<3x512xf32>
    %1094 = arith.addf %1089, %1093 : vector<3x512xf32>
    %c5_726 = arith.constant 5 : index
    %c0_727 = arith.constant 0 : index
    %c0_728 = arith.constant 0 : index
    %1095 = vector.load %arg22[%c5_726, %c0_727, %c0_728] : memref<9x3x8xbf16, #tpu.memory_space<vmem>>, vector<1x3x8xbf16>
    %1096 = vector.shape_cast %1095 : vector<1x3x8xbf16> to vector<3x8xbf16>
    %c511_i32_729 = arith.constant 511 : i32
    %1097 = tpu.dynamic_rotate %1048 by %c511_i32_729 dim 1 : vector<8x512xf32>, i32 -> vector<8x512xf32>
    %c5_730 = arith.constant 5 : index
    %c0_731 = arith.constant 0 : index
    %c0_732 = arith.constant 0 : index
    %1098 = vector.load %arg3[%c5_730, %c0_731, %c0_732] : memref<9x1x512xf32, #tpu.memory_space<vmem>>, vector<1x1x512xf32>
    %1099 = vector.shape_cast %1098 : vector<1x1x512xf32> to vector<1x512xf32>
    %1100 = vector.broadcast %1099 : vector<1x512xf32> to vector<8x512xf32>
    %1101 = arith.mulf %1097, %1100 : vector<8x512xf32>
    %1102 = arith.truncf %1101 : vector<8x512xf32> to vector<8x512xbf16>
    %cst_733 = arith.constant dense<0.000000e+00> : vector<3x512xf32>
    %1103 = tpu.matmul %1096, %1102, %cst_733 {dimension_numbers = #tpu.dot_dimension_numbers<[1], [0], [0], [1], [0, 0, 1, 1], [], []>} : vector<3x8xbf16>, vector<8x512xbf16>, vector<3x512xf32> -> vector<3x512xf32>
    %1104 = arith.addf %1094, %1103 : vector<3x512xf32>
    %c6_734 = arith.constant 6 : index
    %c0_735 = arith.constant 0 : index
    %c0_736 = arith.constant 0 : index
    %1105 = vector.load %arg22[%c6_734, %c0_735, %c0_736] : memref<9x3x8xbf16, #tpu.memory_space<vmem>>, vector<1x3x8xbf16>
    %1106 = vector.shape_cast %1105 : vector<1x3x8xbf16> to vector<3x8xbf16>
    %c497_i32_737 = arith.constant 497 : i32
    %1107 = tpu.dynamic_rotate %1048 by %c497_i32_737 dim 1 : vector<8x512xf32>, i32 -> vector<8x512xf32>
    %c6_738 = arith.constant 6 : index
    %c0_739 = arith.constant 0 : index
    %c0_740 = arith.constant 0 : index
    %1108 = vector.load %arg3[%c6_738, %c0_739, %c0_740] : memref<9x1x512xf32, #tpu.memory_space<vmem>>, vector<1x1x512xf32>
    %1109 = vector.shape_cast %1108 : vector<1x1x512xf32> to vector<1x512xf32>
    %1110 = vector.broadcast %1109 : vector<1x512xf32> to vector<8x512xf32>
    %1111 = arith.mulf %1107, %1110 : vector<8x512xf32>
    %1112 = arith.truncf %1111 : vector<8x512xf32> to vector<8x512xbf16>
    %cst_741 = arith.constant dense<0.000000e+00> : vector<3x512xf32>
    %1113 = tpu.matmul %1106, %1112, %cst_741 {dimension_numbers = #tpu.dot_dimension_numbers<[1], [0], [0], [1], [0, 0, 1, 1], [], []>} : vector<3x8xbf16>, vector<8x512xbf16>, vector<3x512xf32> -> vector<3x512xf32>
    %1114 = arith.addf %1104, %1113 : vector<3x512xf32>
    %c7_742 = arith.constant 7 : index
    %c0_743 = arith.constant 0 : index
    %c0_744 = arith.constant 0 : index
    %1115 = vector.load %arg22[%c7_742, %c0_743, %c0_744] : memref<9x3x8xbf16, #tpu.memory_space<vmem>>, vector<1x3x8xbf16>
    %1116 = vector.shape_cast %1115 : vector<1x3x8xbf16> to vector<3x8xbf16>
    %c496_i32_745 = arith.constant 496 : i32
    %1117 = tpu.dynamic_rotate %1048 by %c496_i32_745 dim 1 : vector<8x512xf32>, i32 -> vector<8x512xf32>
    %c7_746 = arith.constant 7 : index
    %c0_747 = arith.constant 0 : index
    %c0_748 = arith.constant 0 : index
    %1118 = vector.load %arg3[%c7_746, %c0_747, %c0_748] : memref<9x1x512xf32, #tpu.memory_space<vmem>>, vector<1x1x512xf32>
    %1119 = vector.shape_cast %1118 : vector<1x1x512xf32> to vector<1x512xf32>
    %1120 = vector.broadcast %1119 : vector<1x512xf32> to vector<8x512xf32>
    %1121 = arith.mulf %1117, %1120 : vector<8x512xf32>
    %1122 = arith.truncf %1121 : vector<8x512xf32> to vector<8x512xbf16>
    %cst_749 = arith.constant dense<0.000000e+00> : vector<3x512xf32>
    %1123 = tpu.matmul %1116, %1122, %cst_749 {dimension_numbers = #tpu.dot_dimension_numbers<[1], [0], [0], [1], [0, 0, 1, 1], [], []>} : vector<3x8xbf16>, vector<8x512xbf16>, vector<3x512xf32> -> vector<3x512xf32>
    %1124 = arith.addf %1114, %1123 : vector<3x512xf32>
    %c8_750 = arith.constant 8 : index
    %c0_751 = arith.constant 0 : index
    %c0_752 = arith.constant 0 : index
    %1125 = vector.load %arg22[%c8_750, %c0_751, %c0_752] : memref<9x3x8xbf16, #tpu.memory_space<vmem>>, vector<1x3x8xbf16>
    %1126 = vector.shape_cast %1125 : vector<1x3x8xbf16> to vector<3x8xbf16>
    %c495_i32_753 = arith.constant 495 : i32
    %1127 = tpu.dynamic_rotate %1048 by %c495_i32_753 dim 1 : vector<8x512xf32>, i32 -> vector<8x512xf32>
    %c8_754 = arith.constant 8 : index
    %c0_755 = arith.constant 0 : index
    %c0_756 = arith.constant 0 : index
    %1128 = vector.load %arg3[%c8_754, %c0_755, %c0_756] : memref<9x1x512xf32, #tpu.memory_space<vmem>>, vector<1x1x512xf32>
    %1129 = vector.shape_cast %1128 : vector<1x1x512xf32> to vector<1x512xf32>
    %1130 = vector.broadcast %1129 : vector<1x512xf32> to vector<8x512xf32>
    %1131 = arith.mulf %1127, %1130 : vector<8x512xf32>
    %1132 = arith.truncf %1131 : vector<8x512xf32> to vector<8x512xbf16>
    %cst_757 = arith.constant dense<0.000000e+00> : vector<3x512xf32>
    %1133 = tpu.matmul %1126, %1132, %cst_757 {dimension_numbers = #tpu.dot_dimension_numbers<[1], [0], [0], [1], [0, 0, 1, 1], [], []>} : vector<3x8xbf16>, vector<8x512xbf16>, vector<3x512xf32> -> vector<3x512xf32>
    %1134 = arith.addf %1124, %1133 : vector<3x512xf32>
    %c0_758 = arith.constant 0 : index
    %c0_759 = arith.constant 0 : index
    %1135 = vector.load %arg21[%c0_758, %c0_759] : memref<3x1xf32, #tpu.memory_space<vmem>>, vector<3x1xf32>
    %c0_760 = arith.constant 0 : index
    %c0_761 = arith.constant 0 : index
    %1136 = vector.load %arg20[%c0_760, %c0_761] : memref<3x1xf32, #tpu.memory_space<vmem>>, vector<3x1xf32>
    %cst_762 = arith.constant dense<0.000000e+00> : vector<3xf32>
    %1137 = vector.multi_reduction <add>, %1134, %cst_762 [1] : vector<3x512xf32> to vector<3xf32>
    %1138 = vector.shape_cast %1137 : vector<3xf32> to vector<3x1xf32>
    %cst_763 = arith.constant 0.001953125 : f32
    %1139 = vector.broadcast %cst_763 : f32 to vector<3x1xf32>
    %1140 = arith.mulf %1138, %1139 : vector<3x1xf32>
    %1141 = vector.broadcast %1140 : vector<3x1xf32> to vector<3x512xf32>
    %1142 = arith.subf %1134, %1141 : vector<3x512xf32>
    %1143 = arith.mulf %1142, %1142 : vector<3x512xf32>
    %cst_764 = arith.constant dense<0.000000e+00> : vector<3xf32>
    %1144 = vector.multi_reduction <add>, %1143, %cst_764 [1] : vector<3x512xf32> to vector<3xf32>
    %1145 = vector.shape_cast %1144 : vector<3xf32> to vector<3x1xf32>
    %cst_765 = arith.constant 0.001953125 : f32
    %1146 = vector.broadcast %cst_765 : f32 to vector<3x1xf32>
    %1147 = arith.mulf %1145, %1146 : vector<3x1xf32>
    %cst_766 = arith.constant 9.99999974E-6 : f32
    %1148 = vector.broadcast %cst_766 : f32 to vector<3x1xf32>
    %1149 = arith.addf %1147, %1148 : vector<3x1xf32>
    %1150 = math.rsqrt %1149 : vector<3x1xf32>
    %1151 = vector.broadcast %1150 : vector<3x1xf32> to vector<3x512xf32>
    %1152 = arith.mulf %1142, %1151 : vector<3x512xf32>
    %1153 = vector.broadcast %1135 : vector<3x1xf32> to vector<3x512xf32>
    %1154 = arith.mulf %1152, %1153 : vector<3x512xf32>
    %1155 = vector.broadcast %1136 : vector<3x1xf32> to vector<3x512xf32>
    %1156 = arith.addf %1154, %1155 : vector<3x512xf32>
    %cst_767 = arith.constant 0.000000e+00 : f32
    %1157 = vector.broadcast %cst_767 : f32 to vector<3x512xf32>
    %1158 = arith.subf %1157, %1156 : vector<3x512xf32>
    %1159 = math.exp %1158 : vector<3x512xf32>
    %cst_768 = arith.constant 1.000000e+00 : f32
    %1160 = vector.broadcast %cst_768 : f32 to vector<3x512xf32>
    %1161 = arith.addf %1160, %1159 : vector<3x512xf32>
    %1162 = tpu.reciprocal %1161 {approx = true} : vector<3x512xf32> -> vector<3x512xf32>
    %c0_769 = arith.constant 0 : index
    %c0_770 = arith.constant 0 : index
    %1163 = vector.load %arg47[%c0_769, %c0_770] : memref<3x512xf32, #tpu.memory_space<vmem>>, vector<3x512xf32>
    tpu.vector_store %arg47[%c0_769, %c0_770], %1162 {strides = array<i32>} : memref<3x512xf32, #tpu.memory_space<vmem>>, vector<3x512xf32>,
    return
  }
}

</mosaic_0001>

<llo_original>
// kernel: hourglass_forward.1
$region0: #{hourglass_forward.1}
  #allocation0 [shape = 'u32[]', space=smem, size = 0x4, offset = 0x4, fixed_abs, tag = 'smem constant byte address 0x4 - core index']
  #allocation1 [shape = 'u32[144,128]{1,0:T(1,128)}', space=vmem, size = 0x12000, scoped, tag = 'internal scratch']
  %s0 = inlined_call_operand.smem [shape: u32[48], index: -1, kind: input, shape index: {}]
  %s1 = sld [smem:[%s0]]
  %s2 = scalar_lea.smem %s0, 1
  %s3 = sld [smem:[%s2]]
  %s4 = scalar_lea.smem %s0, 2
  %s5 = sld [smem:[%s4]]
  %s6 = scalar_lea.smem %s0, 3
  %s7 = sld [smem:[%s6]]
  %s8 = scalar_lea.smem %s0, 4
  %s9 = sld [smem:[%s8]]
  %s10 = scalar_lea.smem %s0, 5
  %s11 = sld [smem:[%s10]]
  %s12 = scalar_lea.smem %s0, 6
  %s13 = sld [smem:[%s12]]
  %s14 = scalar_lea.smem %s0, 7
  %s15 = sld [smem:[%s14]]
  %s16 = scalar_lea.smem %s0, 8
  %s17 = sld [smem:[%s16]]
  %s18 = scalar_lea.smem %s0, 9
  %s19 = sld [smem:[%s18]]
  %s20 = scalar_lea.smem %s0, 10
  %s21 = sld [smem:[%s20]]
  %s22 = scalar_lea.smem %s0, 11
  %s23 = sld [smem:[%s22]]
  %s24 = scalar_lea.smem %s0, 12
  %s25 = sld [smem:[%s24]]
  %s26 = scalar_lea.smem %s0, 13
  %s27 = sld [smem:[%s26]]
  %s28 = scalar_lea.smem %s0, 14
  %s29 = sld [smem:[%s28]]
  %s30 = scalar_lea.smem %s0, 15
  %s31 = sld [smem:[%s30]]
  %s32 = scalar_lea.smem %s0, 16
  %s33 = sld [smem:[%s32]]
  %s34 = scalar_lea.smem %s0, 17
  %s35 = sld [smem:[%s34]]
  %s36 = scalar_lea.smem %s0, 18
  %s37 = sld [smem:[%s36]]
  %s38 = scalar_lea.smem %s0, 19
  %s39 = sld [smem:[%s38]]
  %s40 = scalar_lea.smem %s0, 20
  %s41 = sld [smem:[%s40]]
  %s42 = scalar_lea.smem %s0, 21
  %s43 = sld [smem:[%s42]]
  %s44 = scalar_lea.smem %s0, 22
  %s45 = sld [smem:[%s44]]
  %s46 = scalar_lea.smem %s0, 23
  %s47 = sld [smem:[%s46]]
  %s48 = scalar_lea.smem %s0, 24
  %s49 = sld [smem:[%s48]]
  %s50 = scalar_lea.smem %s0, 25
  %s51 = sld [smem:[%s50]]
  %s52 = scalar_lea.smem %s0, 26
  %s53 = sld [smem:[%s52]]
  %s54 = scalar_lea.smem %s0, 27
  %s55 = sld [smem:[%s54]]
  %s56 = scalar_lea.smem %s0, 28
  %s57 = sld [smem:[%s56]]
  %s58 = scalar_lea.smem %s0, 29
  %s59 = sld [smem:[%s58]]
  %s60 = scalar_lea.smem %s0, 30
  %s61 = sld [smem:[%s60]]
  %s62 = scalar_lea.smem %s0, 31
  %s63 = sld [smem:[%s62]]
  %s64 = scalar_lea.smem %s0, 32
  %s65 = sld [smem:[%s64]]
  %s66 = scalar_lea.smem %s0, 33
  %s67 = sld [smem:[%s66]]
  %s68 = scalar_lea.smem %s0, 34
  %s69 = sld [smem:[%s68]]
  %s70 = scalar_lea.smem %s0, 35
  %s71 = sld [smem:[%s70]]
  %s72 = scalar_lea.smem %s0, 36
  %s73 = sld [smem:[%s72]]
  %s74 = scalar_lea.smem %s0, 37
  %s75 = sld [smem:[%s74]]
  %s76 = scalar_lea.smem %s0, 38
  %s77 = sld [smem:[%s76]]
  %s78 = scalar_lea.smem %s0, 39
  %s79 = sld [smem:[%s78]]
  %s80 = scalar_lea.smem %s0, 40
  %s81 = sld [smem:[%s80]]
  %s82 = scalar_lea.smem %s0, 41
  %s83 = sld [smem:[%s82]]
  %s84 = scalar_lea.smem %s0, 42
  %s85 = sld [smem:[%s84]]
  %s86 = scalar_lea.smem %s0, 43
  %s87 = sld [smem:[%s86]]
  %s88 = scalar_lea.smem %s0, 44
  %s89 = sld [smem:[%s88]]
  %s90 = scalar_lea.smem %s0, 45
  %s91 = sld [smem:[%s90]]
  %s92 = scalar_lea.smem %s0, 46
  %s93 = sld [smem:[%s92]]
  %s94 = scalar_lea.smem %s0, 47
  %s95 = sld [smem:[%s94]]
  %s96 = sld [smem:[#allocation0]]
  $region198: #{hourglass_forward.1} parent=0
    _
  %s98 = ssub.s32 1, %s96
  %s99 = scalar_select 0, %s98, %s96
  // Predicated region
  $region2: #{hourglass_forward.1} parent=0 // pred_check
    _
  $region3: #{hourglass_forward.1} parent=0 // pred_check_branch
    %101 = sbr.rel (0) target = $region5
  $region4: #{hourglass_forward.1} parent=0 // pred_region
    _
  $region5: #{hourglass_forward.1} parent=0 // pred_fallthru
    _
  // Predicated region
  $region6: #{hourglass_forward.1} parent=0 // pred_check
    _
  $region7: #{hourglass_forward.1} parent=0 // pred_check_branch
    %103 = sbr.rel (0) target = $region9
  $region8: #{hourglass_forward.1} parent=0 // pred_region
    _
  $region9: #{hourglass_forward.1} parent=0 // pred_fallthru
    _
  // Predicated region
  $region10: #{hourglass_forward.1} parent=0 // pred_check
    _
  $region11: #{hourglass_forward.1} parent=0 // pred_check_branch
    %105 = sbr.rel (0) target = $region13
  $region12: #{hourglass_forward.1} parent=0 // pred_region
    _
  $region13: #{hourglass_forward.1} parent=0 // pred_fallthru
    _
  // Predicated region
  $region14: #{hourglass_forward.1} parent=0 // pred_check
    _
  $region15: #{hourglass_forward.1} parent=0 // pred_check_branch
    %107 = sbr.rel (0) target = $region17
  $region16: #{hourglass_forward.1} parent=0 // pred_region
    _
  $region17: #{hourglass_forward.1} parent=0 // pred_fallthru
    _
  // Predicated region
  $region18: #{hourglass_forward.1} parent=0 // pred_check
    _
  $region19: #{hourglass_forward.1} parent=0 // pred_check_branch
    %109 = sbr.rel (0) target = $region21
  $region20: #{hourglass_forward.1} parent=0 // pred_region
    _
  $region21: #{hourglass_forward.1} parent=0 // pred_fallthru
    _
  // Predicated region
  $region22: #{hourglass_forward.1} parent=0 // pred_check
    _
  $region23: #{hourglass_forward.1} parent=0 // pred_check_branch
    %111 = sbr.rel (0) target = $region25
  $region24: #{hourglass_forward.1} parent=0 // pred_region
    _
  $region25: #{hourglass_forward.1} parent=0 // pred_fallthru
    _
  // Predicated region
  $region26: #{hourglass_forward.1} parent=0 // pred_check
    _
  $region27: #{hourglass_forward.1} parent=0 // pred_check_branch
    %113 = sbr.rel (0) target = $region29
  $region28: #{hourglass_forward.1} parent=0 // pred_region
    _
  $region29: #{hourglass_forward.1} parent=0 // pred_fallthru
    _
  // Predicated region
  $region30: #{hourglass_forward.1} parent=0 // pred_check
    _
  $region31: #{hourglass_forward.1} parent=0 // pred_check_branch
    %115 = sbr.rel (0) target = $region33
  $region32: #{hourglass_forward.1} parent=0 // pred_region
    _
  $region33: #{hourglass_forward.1} parent=0 // pred_fallthru
    _
  // Predicated region
  $region34: #{hourglass_forward.1} parent=0 // pred_check
    _
  $region35: #{hourglass_forward.1} parent=0 // pred_check_branch
    %117 = sbr.rel (0) target = $region37
  $region36: #{hourglass_forward.1} parent=0 // pred_region
    _
  $region37: #{hourglass_forward.1} parent=0 // pred_fallthru
    _
  // Predicated region
  $region38: #{hourglass_forward.1} parent=0 // pred_check
    _
  $region39: #{hourglass_forward.1} parent=0 // pred_check_branch
    %119 = sbr.rel (0) target = $region41
  $region40: #{hourglass_forward.1} parent=0 // pred_region
    _
  $region41: #{hourglass_forward.1} parent=0 // pred_fallthru
    _
  // Predicated region
  $region42: #{hourglass_forward.1} parent=0 // pred_check
    _
  $region43: #{hourglass_forward.1} parent=0 // pred_check_branch
    %121 = sbr.rel (0) target = $region45
  $region44: #{hourglass_forward.1} parent=0 // pred_region
    _
  $region45: #{hourglass_forward.1} parent=0 // pred_fallthru
    _
  // Predicated region
  $region46: #{hourglass_forward.1} parent=0 // pred_check
    _
  $region47: #{hourglass_forward.1} parent=0 // pred_check_branch
    %123 = sbr.rel (0) target = $region49
  $region48: #{hourglass_forward.1} parent=0 // pred_region
    _
  $region49: #{hourglass_forward.1} parent=0 // pred_fallthru
    _
  // Predicated region
  $region50: #{hourglass_forward.1} parent=0 // pred_check
    _
  $region51: #{hourglass_forward.1} parent=0 // pred_check_branch
    %125 = sbr.rel (0) target = $region53
  $region52: #{hourglass_forward.1} parent=0 // pred_region
    _
  $region53: #{hourglass_forward.1} parent=0 // pred_fallthru
    _
  // Predicated region
  $region54: #{hourglass_forward.1} parent=0 // pred_check
    _
  $region55: #{hourglass_forward.1} parent=0 // pred_check_branch
    %127 = sbr.rel (0) target = $region57
  $region56: #{hourglass_forward.1} parent=0 // pred_region
    _
  $region57: #{hourglass_forward.1} parent=0 // pred_fallthru
    _
  // Predicated region
  $region58: #{hourglass_forward.1} parent=0 // pred_check
    _
  $region59: #{hourglass_forward.1} parent=0 // pred_check_branch
    %129 = sbr.rel (0) target = $region61
  $region60: #{hourglass_forward.1} parent=0 // pred_region
    _
  $region61: #{hourglass_forward.1} parent=0 // pred_fallthru
    _
  // Predicated region
  $region62: #{hourglass_forward.1} parent=0 // pred_check
    _
  $region63: #{hourglass_forward.1} parent=0 // pred_check_branch
    %131 = sbr.rel (0) target = $region65
  $region64: #{hourglass_forward.1} parent=0 // pred_region
    _
  $region65: #{hourglass_forward.1} parent=0 // pred_fallthru
    _
  // Predicated region
  $region66: #{hourglass_forward.1} parent=0 // pred_check
    _
  $region67: #{hourglass_forward.1} parent=0 // pred_check_branch
    %133 = sbr.rel (0) target = $region69
  $region68: #{hourglass_forward.1} parent=0 // pred_region
    _
  $region69: #{hourglass_forward.1} parent=0 // pred_fallthru
    _
  // Predicated region
  $region70: #{hourglass_forward.1} parent=0 // pred_check
    _
  $region71: #{hourglass_forward.1} parent=0 // pred_check_branch
    %135 = sbr.rel (0) target = $region73
  $region72: #{hourglass_forward.1} parent=0 // pred_region
    _
  $region73: #{hourglass_forward.1} parent=0 // pred_fallthru
    _
  // Predicated region
  $region74: #{hourglass_forward.1} parent=0 // pred_check
    _
  $region75: #{hourglass_forward.1} parent=0 // pred_check_branch
    %137 = sbr.rel (0) target = $region77
  $region76: #{hourglass_forward.1} parent=0 // pred_region
    _
  $region77: #{hourglass_forward.1} parent=0 // pred_fallthru
    _
  // Predicated region
  $region78: #{hourglass_forward.1} parent=0 // pred_check
    _
  $region79: #{hourglass_forward.1} parent=0 // pred_check_branch
    %139 = sbr.rel (0) target = $region81
  $region80: #{hourglass_forward.1} parent=0 // pred_region
    _
  $region81: #{hourglass_forward.1} parent=0 // pred_fallthru
    _
  // Predicated region
  $region82: #{hourglass_forward.1} parent=0 // pred_check
    _
  $region83: #{hourglass_forward.1} parent=0 // pred_check_branch
    %141 = sbr.rel (0) target = $region85
  $region84: #{hourglass_forward.1} parent=0 // pred_region
    _
  $region85: #{hourglass_forward.1} parent=0 // pred_fallthru
    _
  // Predicated region
  $region86: #{hourglass_forward.1} parent=0 // pred_check
    _
  $region87: #{hourglass_forward.1} parent=0 // pred_check_branch
    %143 = sbr.rel (0) target = $region89
  $region88: #{hourglass_forward.1} parent=0 // pred_region
    _
  $region89: #{hourglass_forward.1} parent=0 // pred_fallthru
    _
  // Predicated region
  $region90: #{hourglass_forward.1} parent=0 // pred_check
    _
  $region91: #{hourglass_forward.1} parent=0 // pred_check_branch
    %145 = sbr.rel (0) target = $region93
  $region92: #{hourglass_forward.1} parent=0 // pred_region
    _
  $region93: #{hourglass_forward.1} parent=0 // pred_fallthru
    _
  // Predicated region
  $region94: #{hourglass_forward.1} parent=0 // pred_check
    _
  $region95: #{hourglass_forward.1} parent=0 // pred_check_branch
    %147 = sbr.rel (0) target = $region97
  $region96: #{hourglass_forward.1} parent=0 // pred_region
    _
  $region97: #{hourglass_forward.1} parent=0 // pred_fallthru
    _
  // Predicated region
  $region98: #{hourglass_forward.1} parent=0 // pred_check
    _
  $region99: #{hourglass_forward.1} parent=0 // pred_check_branch
    %149 = sbr.rel (0) target = $region101
  $region100: #{hourglass_forward.1} parent=0 // pred_region
    _
  $region101: #{hourglass_forward.1} parent=0 // pred_fallthru
    _
  // Predicated region
  $region102: #{hourglass_forward.1} parent=0 // pred_check
    _
  $region103: #{hourglass_forward.1} parent=0 // pred_check_branch
    %151 = sbr.rel (0) target = $region105
  $region104: #{hourglass_forward.1} parent=0 // pred_region
    _
  $region105: #{hourglass_forward.1} parent=0 // pred_fallthru
    _
  // Predicated region
  $region106: #{hourglass_forward.1} parent=0 // pred_check
    _
  $region107: #{hourglass_forward.1} parent=0 // pred_check_branch
    %153 = sbr.rel (0) target = $region109
  $region108: #{hourglass_forward.1} parent=0 // pred_region
    _
  $region109: #{hourglass_forward.1} parent=0 // pred_fallthru
    _
  // Predicated region
  $region110: #{hourglass_forward.1} parent=0 // pred_check
    _
  $region111: #{hourglass_forward.1} parent=0 // pred_check_branch
    %155 = sbr.rel (0) target = $region113
  $region112: #{hourglass_forward.1} parent=0 // pred_region
    _
  $region113: #{hourglass_forward.1} parent=0 // pred_fallthru
    _
  // Predicated region
  $region114: #{hourglass_forward.1} parent=0 // pred_check
    _
  $region115: #{hourglass_forward.1} parent=0 // pred_check_branch
    %157 = sbr.rel (0) target = $region117
  $region116: #{hourglass_forward.1} parent=0 // pred_region
    _
  $region117: #{hourglass_forward.1} parent=0 // pred_fallthru
    _
  // Predicated region
  $region118: #{hourglass_forward.1} parent=0 // pred_check
    _
  $region119: #{hourglass_forward.1} parent=0 // pred_check_branch
    %159 = sbr.rel (0) target = $region121
  $region120: #{hourglass_forward.1} parent=0 // pred_region
    _
  $region121: #{hourglass_forward.1} parent=0 // pred_fallthru
    _
  // Predicated region
  $region122: #{hourglass_forward.1} parent=0 // pred_check
    _
  $region123: #{hourglass_forward.1} parent=0 // pred_check_branch
    %161 = sbr.rel (0) target = $region125
  $region124: #{hourglass_forward.1} parent=0 // pred_region
    _
  $region125: #{hourglass_forward.1} parent=0 // pred_fallthru
    _
  // Predicated region
  $region126: #{hourglass_forward.1} parent=0 // pred_check
    _
  $region127: #{hourglass_forward.1} parent=0 // pred_check_branch
    %163 = sbr.rel (0) target = $region129
  $region128: #{hourglass_forward.1} parent=0 // pred_region
    _
  $region129: #{hourglass_forward.1} parent=0 // pred_fallthru
    _
  // Predicated region
  $region130: #{hourglass_forward.1} parent=0 // pred_check
    _
  $region131: #{hourglass_forward.1} parent=0 // pred_check_branch
    %165 = sbr.rel (0) target = $region133
  $region132: #{hourglass_forward.1} parent=0 // pred_region
    _
  $region133: #{hourglass_forward.1} parent=0 // pred_fallthru
    _
  // Predicated region
  $region134: #{hourglass_forward.1} parent=0 // pred_check
    _
  $region135: #{hourglass_forward.1} parent=0 // pred_check_branch
    %167 = sbr.rel (0) target = $region137
  $region136: #{hourglass_forward.1} parent=0 // pred_region
    _
  $region137: #{hourglass_forward.1} parent=0 // pred_fallthru
    _
  // Predicated region
  $region138: #{hourglass_forward.1} parent=0 // pred_check
    _
  $region139: #{hourglass_forward.1} parent=0 // pred_check_branch
    %169 = sbr.rel (0) target = $region141
  $region140: #{hourglass_forward.1} parent=0 // pred_region
    _
  $region141: #{hourglass_forward.1} parent=0 // pred_fallthru
    _
  // Predicated region
  $region142: #{hourglass_forward.1} parent=0 // pred_check
    _
  $region143: #{hourglass_forward.1} parent=0 // pred_check_branch
    %171 = sbr.rel (0) target = $region145
  $region144: #{hourglass_forward.1} parent=0 // pred_region
    _
  $region145: #{hourglass_forward.1} parent=0 // pred_fallthru
    _
  // Predicated region
  $region146: #{hourglass_forward.1} parent=0 // pred_check
    _
  $region147: #{hourglass_forward.1} parent=0 // pred_check_branch
    %173 = sbr.rel (0) target = $region149
  $region148: #{hourglass_forward.1} parent=0 // pred_region
    _
  $region149: #{hourglass_forward.1} parent=0 // pred_fallthru
    _
  // Predicated region
  $region150: #{hourglass_forward.1} parent=0 // pred_check
    _
  $region151: #{hourglass_forward.1} parent=0 // pred_check_branch
    %175 = sbr.rel (0) target = $region153
  $region152: #{hourglass_forward.1} parent=0 // pred_region
    _
  $region153: #{hourglass_forward.1} parent=0 // pred_fallthru
    _
  // Predicated region
  $region154: #{hourglass_forward.1} parent=0 // pred_check
    _
  $region155: #{hourglass_forward.1} parent=0 // pred_check_branch
    %177 = sbr.rel (0) target = $region157
  $region156: #{hourglass_forward.1} parent=0 // pred_region
    _
  $region157: #{hourglass_forward.1} parent=0 // pred_fallthru
    _
  // Predicated region
  $region158: #{hourglass_forward.1} parent=0 // pred_check
    _
  $region159: #{hourglass_forward.1} parent=0 // pred_check_branch
    %179 = sbr.rel (0) target = $region161
  $region160: #{hourglass_forward.1} parent=0 // pred_region
    _
  $region161: #{hourglass_forward.1} parent=0 // pred_fallthru
    _
  // Predicated region
  $region162: #{hourglass_forward.1} parent=0 // pred_check
    _
  $region163: #{hourglass_forward.1} parent=0 // pred_check_branch
    %181 = sbr.rel (0) target = $region165
  $region164: #{hourglass_forward.1} parent=0 // pred_region
    _
  $region165: #{hourglass_forward.1} parent=0 // pred_fallthru
    _
  // Predicated region
  $region166: #{hourglass_forward.1} parent=0 // pred_check
    _
  $region167: #{hourglass_forward.1} parent=0 // pred_check_branch
    %183 = sbr.rel (0) target = $region169
  $region168: #{hourglass_forward.1} parent=0 // pred_region
    _
  $region169: #{hourglass_forward.1} parent=0 // pred_fallthru
    _
  // Predicated region
  $region170: #{hourglass_forward.1} parent=0 // pred_check
    _
  $region171: #{hourglass_forward.1} parent=0 // pred_check_branch
    %185 = sbr.rel (0) target = $region173
  $region172: #{hourglass_forward.1} parent=0 // pred_region
    _
  $region173: #{hourglass_forward.1} parent=0 // pred_fallthru
    _
  // Predicated region
  $region174: #{hourglass_forward.1} parent=0 // pred_check
    _
  $region175: #{hourglass_forward.1} parent=0 // pred_check_branch
    %187 = sbr.rel (0) target = $region177
  $region176: #{hourglass_forward.1} parent=0 // pred_region
    _
  $region177: #{hourglass_forward.1} parent=0 // pred_fallthru
    _
  // Predicated region
  $region178: #{hourglass_forward.1} parent=0 // pred_check
    _
  $region179: #{hourglass_forward.1} parent=0 // pred_check_branch
    %189 = sbr.rel (0) target = $region181
  $region180: #{hourglass_forward.1} parent=0 // pred_region
    _
  $region181: #{hourglass_forward.1} parent=0 // pred_fallthru
    _
  // Predicated region
  $region182: #{hourglass_forward.1} parent=0 // pred_check
    _
  $region183: #{hourglass_forward.1} parent=0 // pred_check_branch
    %191 = sbr.rel (0) target = $region185
  $region184: #{hourglass_forward.1} parent=0 // pred_region
    _
  $region185: #{hourglass_forward.1} parent=0 // pred_fallthru
    _
  // Predicated region
  $region186: #{hourglass_forward.1} parent=0 // pred_check
    _
  $region187: #{hourglass_forward.1} parent=0 // pred_check_branch
    %193 = sbr.rel (0) target = $region189
  $region188: #{hourglass_forward.1} parent=0 // pred_region
    _
  $region189: #{hourglass_forward.1} parent=0 // pred_fallthru
    _
  %v195 = vld [vmem:[%s1] sm:$0x77]
  %v196 = vld [vmem:[%s1 + $0x8] sm:$0x77]
  %v197 = vld [vmem:[%s25] sm:$0xf]
  %v200 = vcombine.high %v195, %v195
  %v201 = vcombine.high %v196, %v196
  %204 = vrot.lane.b32.xlu0 %v195, 17
  %v205 = vpop.permute.xlu0 %204
  %206 = vrot.lane.b32.xlu0 %v200, 17
  %v207 = vpop.permute.xlu0 %206
  %208 = vrot.lane.b32.xlu0 %v196, 17
  %v209 = vpop.permute.xlu0 %208
  %210 = vrot.lane.b32.xlu0 %v201, 17
  %v211 = vpop.permute.xlu0 %210
  %v212 = vlaneseq
  %v213 = vand.u32 %v212, 127
  %vm214 = vcmp.lt.s32.totalorder %v213, 17
  %v215 = vsel %vm214, %v209, %v211
  %v216 = vsel %vm214, %v207, %v209
  %v217 = vsel %vm214, %v205, %v207
  %v218 = vsel %vm214, %v211, %v205
  %v219 = vld [vmem:[%s7] sm:$0xf]
  %v221 = vlaneseq
  %v222 = vshrl.u32 %v221, 7
  %v223 = vsub.s32 0, %v222
  %v224 = vrot.slane %v219, %v223
  %v225 = vlaneseq
  %v226 = vshrl.u32 %v225, 7
  %v227 = vsub.s32 1, %v226
  %v228 = vrot.slane %v219, %v227
  %v229 = vlaneseq
  %v230 = vshrl.u32 %v229, 7
  %v231 = vsub.s32 2, %v230
  %v232 = vrot.slane %v219, %v231
  %v233 = vlaneseq
  %v234 = vshrl.u32 %v233, 7
  %v235 = vsub.s32 3, %v234
  %v236 = vrot.slane %v219, %v235
  %v241 = vmul.f32 %v218, %v224
  %v242 = vmul.f32 %v217, %v228
  %v243 = vmul.f32 %v216, %v232
  %v244 = vmul.f32 %v215, %v236
  %v245 = vpack.c.bf16 %v241, %v241
  %v246 = vpack.c.bf16 %v242, %v242
  %v247 = vpack.c.bf16 %v243, %v243
  %v248 = vpack.c.bf16 %v244, %v244
  %s249 = scalar_lea.vmem %s25, 4
  %v250 = vld [vmem:[%s249] sm:$0xf]
  %251 = vrot.lane.b32.xlu0 %v195, 16
  %v252 = vpop.permute.xlu0 %251
  %253 = vrot.lane.b32.xlu0 %v200, 16
  %v254 = vpop.permute.xlu0 %253
  %255 = vrot.lane.b32.xlu0 %v196, 16
  %v256 = vpop.permute.xlu0 %255
  %257 = vrot.lane.b32.xlu0 %v201, 16
  %v258 = vpop.permute.xlu0 %257
  %vm259 = vcmp.lt.s32.totalorder %v213, 16
  %v260 = vsel %vm259, %v256, %v258
  %v261 = vsel %vm259, %v254, %v256
  %v262 = vsel %vm259, %v252, %v254
  %v263 = vsel %vm259, %v258, %v252
  %s264 = scalar_lea.vmem %s7, 4
  %v265 = vld [vmem:[%s264] sm:$0xf]
  %v267 = vlaneseq
  %v268 = vshrl.u32 %v267, 7
  %v269 = vsub.s32 0, %v268
  %v270 = vrot.slane %v265, %v269
  %v271 = vlaneseq
  %v272 = vshrl.u32 %v271, 7
  %v273 = vsub.s32 1, %v272
  %v274 = vrot.slane %v265, %v273
  %v275 = vlaneseq
  %v276 = vshrl.u32 %v275, 7
  %v277 = vsub.s32 2, %v276
  %v278 = vrot.slane %v265, %v277
  %v279 = vlaneseq
  %v280 = vshrl.u32 %v279, 7
  %v281 = vsub.s32 3, %v280
  %v282 = vrot.slane %v265, %v281
  %v287 = vmul.f32 %v263, %v270
  %v288 = vmul.f32 %v262, %v274
  %v289 = vmul.f32 %v261, %v278
  %v290 = vmul.f32 %v260, %v282
  %v291 = vpack.c.bf16 %v287, %v287
  %v292 = vpack.c.bf16 %v288, %v288
  %v293 = vpack.c.bf16 %v289, %v289
  %v294 = vpack.c.bf16 %v290, %v290
  %vm295 = vcmask 23552
  %v297 = vsel %vm295, %v250, 0
  %vm299 = vcmask 1040384
  %vm300 = vcmask 1041408
  %v301 = vsel %vm299, 4294967295, 65535
  %v302 = vsel %vm300, %v301, 0
  %v304 = vand.u32 %v291, %v302
  %v307 = vand.u32 %v292, %v302
  %v310 = vand.u32 %v293, %v302
  %v313 = vand.u32 %v294, %v302
  %315 = vmatprep.subr.bf16.mxu0 %v307
  %316 = vmatpush1.bf16.msra.mxu0 %v304
  %317 = vmatprep.subr.bf16.mxu0 0
  %318 = vmatpush1.bf16.msra.mxu0 0
  %319 = vmatprep.subr.bf16.mxu0 0
  %320 = vmatpush1.bf16.msra.mxu0 0
  %321 = vmatprep.subr.bf16.mxu0 0
  %322 = vmatpush1.bf16.msra.mxu0 0
  %323 = vmatprep.subr.bf16.mxu0 0
  %324 = vmatpush1.bf16.msra.mxu0 0
  %325 = vmatprep.subr.bf16.mxu0 0
  %326 = vmatpush1.bf16.msra.mxu0 0
  %327 = vmatprep.subr.bf16.mxu0 0
  %328 = vmatpush1.bf16.msra.mxu0 0
  %329 = vmatprep.subr.bf16.mxu0 0
  %330 = vmatpush1.bf16.msra.mxu0 0
  %331 = vmatprep.subr.bf16.mxu0 0
  %332 = vmatpush1.bf16.msra.mxu0 0
  %333 = vmatprep.subr.bf16.mxu0 0
  %334 = vmatpush1.bf16.msra.mxu0 0
  %335 = vmatprep.subr.bf16.mxu0 0
  %336 = vmatpush1.bf16.msra.mxu0 0
  %337 = vmatprep.subr.bf16.mxu0 0
  %338 = vmatpush1.bf16.msra.mxu0 0
  %339 = vmatprep.subr.bf16.mxu0 0
  %340 = vmatpush1.bf16.msra.mxu0 0
  %341 = vmatprep.subr.bf16.mxu0 0
  %342 = vmatpush1.bf16.msra.mxu0 0
  %343 = vmatprep.subr.bf16.mxu0 0
  %344 = vmatpush1.bf16.msra.mxu0 0
  %345 = vmatprep.subr.bf16.mxu0 0
  %346 = vmatpush1.bf16.msra.mxu0 0
  %347 = vmatprep.mubr.bf16.mxu0 0
  %348 = vmatmul.mubr.bf16.gmra.mrb[0].mxu0 %v297
  %v349 = vpop.f32.mrb[0].mxu0
  %v350 = vadd.f32 0.0, %v349
  %v351 = vpop.f32.mrb[0].mxu0
  %v352 = vadd.f32 0.0, %v351
  %v353 = vpop.f32.mrb[0].mxu0
  %v354 = vpop.f32.mrb[0].mxu0
  %355 = vdwg.mxu0
  %356 = vmatprep.subr.bf16.mxu0 %v313
  %357 = vmatpush1.bf16.msra.mxu0 %v310
  %358 = vmatprep.subr.bf16.mxu0 0
  %359 = vmatpush1.bf16.msra.mxu0 0
  %360 = vmatprep.subr.bf16.mxu0 0
  %361 = vmatpush1.bf16.msra.mxu0 0
  %362 = vmatprep.subr.bf16.mxu0 0
  %363 = vmatpush1.bf16.msra.mxu0 0
  %364 = vmatprep.subr.bf16.mxu0 0
  %365 = vmatpush1.bf16.msra.mxu0 0
  %366 = vmatprep.subr.bf16.mxu0 0
  %367 = vmatpush1.bf16.msra.mxu0 0
  %368 = vmatprep.subr.bf16.mxu0 0
  %369 = vmatpush1.bf16.msra.mxu0 0
  %370 = vmatprep.subr.bf16.mxu0 0
  %371 = vmatpush1.bf16.msra.mxu0 0
  %372 = vmatprep.subr.bf16.mxu0 0
  %373 = vmatpush1.bf16.msra.mxu0 0
  %374 = vmatprep.subr.bf16.mxu0 0
  %375 = vmatpush1.bf16.msra.mxu0 0
  %376 = vmatprep.subr.bf16.mxu0 0
  %377 = vmatpush1.bf16.msra.mxu0 0
  %378 = vmatprep.subr.bf16.mxu0 0
  %379 = vmatpush1.bf16.msra.mxu0 0
  %380 = vmatprep.subr.bf16.mxu0 0
  %381 = vmatpush1.bf16.msra.mxu0 0
  %382 = vmatprep.subr.bf16.mxu0 0
  %383 = vmatpush1.bf16.msra.mxu0 0
  %384 = vmatprep.subr.bf16.mxu0 0
  %385 = vmatpush1.bf16.msra.mxu0 0
  %386 = vmatprep.subr.bf16.mxu0 0
  %387 = vmatpush1.bf16.msra.mxu0 0
  %388 = vmatprep.mubr.bf16.mxu0 0
  %389 = vmatmul.mubr.bf16.gmra.mrb[0].mxu0 %v297
  %v390 = vpop.f32.mrb[0].mxu0
  %v391 = vadd.f32 0.0, %v390
  %v392 = vpop.f32.mrb[0].mxu0
  %v393 = vadd.f32 0.0, %v392
  %v394 = vpop.f32.mrb[0].mxu0
  %v395 = vpop.f32.mrb[0].mxu0
  %396 = vdwg.mxu0
  %v398 = vsel %vm295, %v197, 0
  %v401 = vand.u32 %v245, %v302
  %v404 = vand.u32 %v246, %v302
  %v407 = vand.u32 %v247, %v302
  %v410 = vand.u32 %v248, %v302
  %412 = vmatprep.subr.bf16.mxu0 %v404
  %413 = vmatpush1.bf16.msra.mxu0 %v401
  %414 = vmatprep.subr.bf16.mxu0 0
  %415 = vmatpush1.bf16.msra.mxu0 0
  %416 = vmatprep.subr.bf16.mxu0 0
  %417 = vmatpush1.bf16.msra.mxu0 0
  %418 = vmatprep.subr.bf16.mxu0 0
  %419 = vmatpush1.bf16.msra.mxu0 0
  %420 = vmatprep.subr.bf16.mxu0 0
  %421 = vmatpush1.bf16.msra.mxu0 0
  %422 = vmatprep.subr.bf16.mxu0 0
  %423 = vmatpush1.bf16.msra.mxu0 0
  %424 = vmatprep.subr.bf16.mxu0 0
  %425 = vmatpush1.bf16.msra.mxu0 0
  %426 = vmatprep.subr.bf16.mxu0 0
  %427 = vmatpush1.bf16.msra.mxu0 0
  %428 = vmatprep.subr.bf16.mxu0 0
  %429 = vmatpush1.bf16.msra.mxu0 0
  %430 = vmatprep.subr.bf16.mxu0 0
  %431 = vmatpush1.bf16.msra.mxu0 0
  %432 = vmatprep.subr.bf16.mxu0 0
  %433 = vmatpush1.bf16.msra.mxu0 0
  %434 = vmatprep.subr.bf16.mxu0 0
  %435 = vmatpush1.bf16.msra.mxu0 0
  %436 = vmatprep.subr.bf16.mxu0 0
  %437 = vmatpush1.bf16.msra.mxu0 0
  %438 = vmatprep.subr.bf16.mxu0 0
  %439 = vmatpush1.bf16.msra.mxu0 0
  %440 = vmatprep.subr.bf16.mxu0 0
  %441 = vmatpush1.bf16.msra.mxu0 0
  %442 = vmatprep.subr.bf16.mxu0 0
  %443 = vmatpush1.bf16.msra.mxu0 0
  %444 = vmatprep.mubr.bf16.mxu0 0
  %445 = vmatmul.mubr.bf16.gmra.mrb[0].mxu0 %v398
  %v446 = vpop.f32.mrb[0].mxu0
  %v447 = vadd.f32 %v350, %v446
  %v448 = vpop.f32.mrb[0].mxu0
  %v449 = vadd.f32 %v352, %v448
  %v450 = vpop.f32.mrb[0].mxu0
  %v451 = vpop.f32.mrb[0].mxu0
  %452 = vdwg.mxu0
  %453 = vmatprep.subr.bf16.mxu0 %v410
  %454 = vmatpush1.bf16.msra.mxu0 %v407
  %455 = vmatprep.subr.bf16.mxu0 0
  %456 = vmatpush1.bf16.msra.mxu0 0
  %457 = vmatprep.subr.bf16.mxu0 0
  %458 = vmatpush1.bf16.msra.mxu0 0
  %459 = vmatprep.subr.bf16.mxu0 0
  %460 = vmatpush1.bf16.msra.mxu0 0
  %461 = vmatprep.subr.bf16.mxu0 0
  %462 = vmatpush1.bf16.msra.mxu0 0
  %463 = vmatprep.subr.bf16.mxu0 0
  %464 = vmatpush1.bf16.msra.mxu0 0
  %465 = vmatprep.subr.bf16.mxu0 0
  %466 = vmatpush1.bf16.msra.mxu0 0
  %467 = vmatprep.subr.bf16.mxu0 0
  %468 = vmatpush1.bf16.msra.mxu0 0
  %469 = vmatprep.subr.bf16.mxu0 0
  %470 = vmatpush1.bf16.msra.mxu0 0
  %471 = vmatprep.subr.bf16.mxu0 0
  %472 = vmatpush1.bf16.msra.mxu0 0
  %473 = vmatprep.subr.bf16.mxu0 0
  %474 = vmatpush1.bf16.msra.mxu0 0
  %475 = vmatprep.subr.bf16.mxu0 0
  %476 = vmatpush1.bf16.msra.mxu0 0
  %477 = vmatprep.subr.bf16.mxu0 0
  %478 = vmatpush1.bf16.msra.mxu0 0
  %479 = vmatprep.subr.bf16.mxu0 0
  %480 = vmatpush1.bf16.msra.mxu0 0
  %481 = vmatprep.subr.bf16.mxu0 0
  %482 = vmatpush1.bf16.msra.mxu0 0
  %483 = vmatprep.subr.bf16.mxu0 0
  %484 = vmatpush1.bf16.msra.mxu0 0
  %485 = vmatprep.mubr.bf16.mxu0 0
  %486 = vmatmul.mubr.bf16.gmra.mrb[0].mxu0 %v398
  %v487 = vpop.f32.mrb[0].mxu0
  %v488 = vadd.f32 %v391, %v487
  %v489 = vpop.f32.mrb[0].mxu0
  %v490 = vadd.f32 %v393, %v489
  %v491 = vpop.f32.mrb[0].mxu0
  %v492 = vpop.f32.mrb[0].mxu0
  %493 = vdwg.mxu0
  %s494 = scalar_lea.vmem %s25, 8
  %v495 = vld [vmem:[%s494] sm:$0xf]
  %496 = vrot.lane.b32.xlu0 %v195, 15
  %v497 = vpop.permute.xlu0 %496
  %498 = vrot.lane.b32.xlu0 %v200, 15
  %v499 = vpop.permute.xlu0 %498
  %500 = vrot.lane.b32.xlu0 %v196, 15
  %v501 = vpop.permute.xlu0 %500
  %502 = vrot.lane.b32.xlu0 %v201, 15
  %v503 = vpop.permute.xlu0 %502
  %vm504 = vcmp.lt.s32.totalorder %v213, 15
  %v505 = vsel %vm504, %v501, %v503
  %v506 = vsel %vm504, %v499, %v501
  %v507 = vsel %vm504, %v497, %v499
  %v508 = vsel %vm504, %v503, %v497
  %s509 = scalar_lea.vmem %s7, 8
  %v510 = vld [vmem:[%s509] sm:$0xf]
  %v512 = vlaneseq
  %v513 = vshrl.u32 %v512, 7
  %v514 = vsub.s32 0, %v513
  %v515 = vrot.slane %v510, %v514
  %v516 = vlaneseq
  %v517 = vshrl.u32 %v516, 7
  %v518 = vsub.s32 1, %v517
  %v519 = vrot.slane %v510, %v518
  %v520 = vlaneseq
  %v521 = vshrl.u32 %v520, 7
  %v522 = vsub.s32 2, %v521
  %v523 = vrot.slane %v510, %v522
  %v524 = vlaneseq
  %v525 = vshrl.u32 %v524, 7
  %v526 = vsub.s32 3, %v525
  %v527 = vrot.slane %v510, %v526
  %v532 = vmul.f32 %v508, %v515
  %v533 = vmul.f32 %v507, %v519
  %v534 = vmul.f32 %v506, %v523
  %v535 = vmul.f32 %v505, %v527
  %v536 = vpack.c.bf16 %v532, %v532
  %v537 = vpack.c.bf16 %v533, %v533
  %v538 = vpack.c.bf16 %v534, %v534
  %v539 = vpack.c.bf16 %v535, %v535
  %v541 = vsel %vm295, %v495, 0
  %v544 = vand.u32 %v536, %v302
  %v547 = vand.u32 %v537, %v302
  %v550 = vand.u32 %v538, %v302
  %v553 = vand.u32 %v539, %v302
  %555 = vmatprep.subr.bf16.mxu0 %v547
  %556 = vmatpush1.bf16.msra.mxu0 %v544
  %557 = vmatprep.subr.bf16.mxu0 0
  %558 = vmatpush1.bf16.msra.mxu0 0
  %559 = vmatprep.subr.bf16.mxu0 0
  %560 = vmatpush1.bf16.msra.mxu0 0
  %561 = vmatprep.subr.bf16.mxu0 0
  %562 = vmatpush1.bf16.msra.mxu0 0
  %563 = vmatprep.subr.bf16.mxu0 0
  %564 = vmatpush1.bf16.msra.mxu0 0
  %565 = vmatprep.subr.bf16.mxu0 0
  %566 = vmatpush1.bf16.msra.mxu0 0
  %567 = vmatprep.subr.bf16.mxu0 0
  %568 = vmatpush1.bf16.msra.mxu0 0
  %569 = vmatprep.subr.bf16.mxu0 0
  %570 = vmatpush1.bf16.msra.mxu0 0
  %571 = vmatprep.subr.bf16.mxu0 0
  %572 = vmatpush1.bf16.msra.mxu0 0
  %573 = vmatprep.subr.bf16.mxu0 0
  %574 = vmatpush1.bf16.msra.mxu0 0
  %575 = vmatprep.subr.bf16.mxu0 0
  %576 = vmatpush1.bf16.msra.mxu0 0
  %577 = vmatprep.subr.bf16.mxu0 0
  %578 = vmatpush1.bf16.msra.mxu0 0
  %579 = vmatprep.subr.bf16.mxu0 0
  %580 = vmatpush1.bf16.msra.mxu0 0
  %581 = vmatprep.subr.bf16.mxu0 0
  %582 = vmatpush1.bf16.msra.mxu0 0
  %583 = vmatprep.subr.bf16.mxu0 0
  %584 = vmatpush1.bf16.msra.mxu0 0
  %585 = vmatprep.subr.bf16.mxu0 0
  %586 = vmatpush1.bf16.msra.mxu0 0
  %587 = vmatprep.mubr.bf16.mxu0 0
  %588 = vmatmul.mubr.bf16.gmra.mrb[0].mxu0 %v541
  %v589 = vpop.f32.mrb[0].mxu0
  %v590 = vadd.f32 0.0, %v589
  %v591 = vpop.f32.mrb[0].mxu0
  %v592 = vadd.f32 0.0, %v591
  %v593 = vpop.f32.mrb[0].mxu0
  %v594 = vpop.f32.mrb[0].mxu0
  %595 = vdwg.mxu0
  %596 = vmatprep.subr.bf16.mxu0 %v553
  %597 = vmatpush1.bf16.msra.mxu0 %v550
  %598 = vmatprep.subr.bf16.mxu0 0
  %599 = vmatpush1.bf16.msra.mxu0 0
  %600 = vmatprep.subr.bf16.mxu0 0
  %601 = vmatpush1.bf16.msra.mxu0 0
  %602 = vmatprep.subr.bf16.mxu0 0
  %603 = vmatpush1.bf16.msra.mxu0 0
  %604 = vmatprep.subr.bf16.mxu0 0
  %605 = vmatpush1.bf16.msra.mxu0 0
  %606 = vmatprep.subr.bf16.mxu0 0
  %607 = vmatpush1.bf16.msra.mxu0 0
  %608 = vmatprep.subr.bf16.mxu0 0
  %609 = vmatpush1.bf16.msra.mxu0 0
  %610 = vmatprep.subr.bf16.mxu0 0
  %611 = vmatpush1.bf16.msra.mxu0 0
  %612 = vmatprep.subr.bf16.mxu0 0
  %613 = vmatpush1.bf16.msra.mxu0 0
  %614 = vmatprep.subr.bf16.mxu0 0
  %615 = vmatpush1.bf16.msra.mxu0 0
  %616 = vmatprep.subr.bf16.mxu0 0
  %617 = vmatpush1.bf16.msra.mxu0 0
  %618 = vmatprep.subr.bf16.mxu0 0
  %619 = vmatpush1.bf16.msra.mxu0 0
  %620 = vmatprep.subr.bf16.mxu0 0
  %621 = vmatpush1.bf16.msra.mxu0 0
  %622 = vmatprep.subr.bf16.mxu0 0
  %623 = vmatpush1.bf16.msra.mxu0 0
  %624 = vmatprep.subr.bf16.mxu0 0
  %625 = vmatpush1.bf16.msra.mxu0 0
  %626 = vmatprep.subr.bf16.mxu0 0
  %627 = vmatpush1.bf16.msra.mxu0 0
  %628 = vmatprep.mubr.bf16.mxu0 0
  %629 = vmatmul.mubr.bf16.gmra.mrb[0].mxu0 %v541
  %v630 = vpop.f32.mrb[0].mxu0
  %v631 = vadd.f32 0.0, %v630
  %v632 = vpop.f32.mrb[0].mxu0
  %v633 = vadd.f32 0.0, %v632
  %v634 = vpop.f32.mrb[0].mxu0
  %v635 = vpop.f32.mrb[0].mxu0
  %636 = vdwg.mxu0
  %v637 = vadd.f32 %v447, %v590
  %v638 = vadd.f32 %v449, %v592
  %v639 = vadd.f32 %v488, %v631
  %v640 = vadd.f32 %v490, %v633
  %s641 = scalar_lea.vmem %s25, 12
  %v642 = vld [vmem:[%s641] sm:$0xf]
  %643 = vrot.lane.b32.xlu0 %v195, 1
  %v644 = vpop.permute.xlu0 %643
  %645 = vrot.lane.b32.xlu0 %v200, 1
  %v646 = vpop.permute.xlu0 %645
  %647 = vrot.lane.b32.xlu0 %v196, 1
  %v648 = vpop.permute.xlu0 %647
  %649 = vrot.lane.b32.xlu0 %v201, 1
  %v650 = vpop.permute.xlu0 %649
  %vm651 = vcmp.lt.s32.totalorder %v213, 1
  %v652 = vsel %vm651, %v648, %v650
  %v653 = vsel %vm651, %v646, %v648
  %v654 = vsel %vm651, %v644, %v646
  %v655 = vsel %vm651, %v650, %v644
  %s656 = scalar_lea.vmem %s7, 12
  %v657 = vld [vmem:[%s656] sm:$0xf]
  %v659 = vlaneseq
  %v660 = vshrl.u32 %v659, 7
  %v661 = vsub.s32 0, %v660
  %v662 = vrot.slane %v657, %v661
  %v663 = vlaneseq
  %v664 = vshrl.u32 %v663, 7
  %v665 = vsub.s32 1, %v664
  %v666 = vrot.slane %v657, %v665
  %v667 = vlaneseq
  %v668 = vshrl.u32 %v667, 7
  %v669 = vsub.s32 2, %v668
  %v670 = vrot.slane %v657, %v669
  %v671 = vlaneseq
  %v672 = vshrl.u32 %v671, 7
  %v673 = vsub.s32 3, %v672
  %v674 = vrot.slane %v657, %v673
  %v679 = vmul.f32 %v655, %v662
  %v680 = vmul.f32 %v654, %v666
  %v681 = vmul.f32 %v653, %v670
  %v682 = vmul.f32 %v652, %v674
  %v683 = vpack.c.bf16 %v679, %v679
  %v684 = vpack.c.bf16 %v680, %v680
  %v685 = vpack.c.bf16 %v681, %v681
  %v686 = vpack.c.bf16 %v682, %v682
  %v688 = vsel %vm295, %v642, 0
  %v691 = vand.u32 %v683, %v302
  %v694 = vand.u32 %v684, %v302
  %v697 = vand.u32 %v685, %v302
  %v700 = vand.u32 %v686, %v302
  %702 = vmatprep.subr.bf16.mxu0 %v694
  %703 = vmatpush1.bf16.msra.mxu0 %v691
  %704 = vmatprep.subr.bf16.mxu0 0
  %705 = vmatpush1.bf16.msra.mxu0 0
  %706 = vmatprep.subr.bf16.mxu0 0
  %707 = vmatpush1.bf16.msra.mxu0 0
  %708 = vmatprep.subr.bf16.mxu0 0
  %709 = vmatpush1.bf16.msra.mxu0 0
  %710 = vmatprep.subr.bf16.mxu0 0
  %711 = vmatpush1.bf16.msra.mxu0 0
  %712 = vmatprep.subr.bf16.mxu0 0
  %713 = vmatpush1.bf16.msra.mxu0 0
  %714 = vmatprep.subr.bf16.mxu0 0
  %715 = vmatpush1.bf16.msra.mxu0 0
  %716 = vmatprep.subr.bf16.mxu0 0
  %717 = vmatpush1.bf16.msra.mxu0 0
  %718 = vmatprep.subr.bf16.mxu0 0
  %719 = vmatpush1.bf16.msra.mxu0 0
  %720 = vmatprep.subr.bf16.mxu0 0
  %721 = vmatpush1.bf16.msra.mxu0 0
  %722 = vmatprep.subr.bf16.mxu0 0
  %723 = vmatpush1.bf16.msra.mxu0 0
  %724 = vmatprep.subr.bf16.mxu0 0
  %725 = vmatpush1.bf16.msra.mxu0 0
  %726 = vmatprep.subr.bf16.mxu0 0
  %727 = vmatpush1.bf16.msra.mxu0 0
  %728 = vmatprep.subr.bf16.mxu0 0
  %729 = vmatpush1.bf16.msra.mxu0 0
  %730 = vmatprep.subr.bf16.mxu0 0
  %731 = vmatpush1.bf16.msra.mxu0 0
  %732 = vmatprep.subr.bf16.mxu0 0
  %733 = vmatpush1.bf16.msra.mxu0 0
  %734 = vmatprep.mubr.bf16.mxu0 0
  %735 = vmatmul.mubr.bf16.gmra.mrb[0].mxu0 %v688
  %v736 = vpop.f32.mrb[0].mxu0
  %v737 = vadd.f32 0.0, %v736
  %v738 = vpop.f32.mrb[0].mxu0
  %v739 = vadd.f32 0.0, %v738
  %v740 = vpop.f32.mrb[0].mxu0
  %v741 = vpop.f32.mrb[0].mxu0
  %742 = vdwg.mxu0
  %743 = vmatprep.subr.bf16.mxu0 %v700
  %744 = vmatpush1.bf16.msra.mxu0 %v697
  %745 = vmatprep.subr.bf16.mxu0 0
  %746 = vmatpush1.bf16.msra.mxu0 0
  %747 = vmatprep.subr.bf16.mxu0 0
  %748 = vmatpush1.bf16.msra.mxu0 0
  %749 = vmatprep.subr.bf16.mxu0 0
  %750 = vmatpush1.bf16.msra.mxu0 0
  %751 = vmatprep.subr.bf16.mxu0 0
  %752 = vmatpush1.bf16.msra.mxu0 0
  %753 = vmatprep.subr.bf16.mxu0 0
  %754 = vmatpush1.bf16.msra.mxu0 0
  %755 = vmatprep.subr.bf16.mxu0 0
  %756 = vmatpush1.bf16.msra.mxu0 0
  %757 = vmatprep.subr.bf16.mxu0 0
  %758 = vmatpush1.bf16.msra.mxu0 0
  %759 = vmatprep.subr.bf16.mxu0 0
  %760 = vmatpush1.bf16.msra.mxu0 0
  %761 = vmatprep.subr.bf16.mxu0 0
  %762 = vmatpush1.bf16.msra.mxu0 0
  %763 = vmatprep.subr.bf16.mxu0 0
  %764 = vmatpush1.bf16.msra.mxu0 0
  %765 = vmatprep.subr.bf16.mxu0 0
  %766 = vmatpush1.bf16.msra.mxu0 0
  %767 = vmatprep.subr.bf16.mxu0 0
  %768 = vmatpush1.bf16.msra.mxu0 0
  %769 = vmatprep.subr.bf16.mxu0 0
  %770 = vmatpush1.bf16.msra.mxu0 0
  %771 = vmatprep.subr.bf16.mxu0 0
  %772 = vmatpush1.bf16.msra.mxu0 0
  %773 = vmatprep.subr.bf16.mxu0 0
  %774 = vmatpush1.bf16.msra.mxu0 0
  %775 = vmatprep.mubr.bf16.mxu0 0
  %776 = vmatmul.mubr.bf16.gmra.mrb[0].mxu0 %v688
  %v777 = vpop.f32.mrb[0].mxu0
  %v778 = vadd.f32 0.0, %v777
  %v779 = vpop.f32.mrb[0].mxu0
  %v780 = vadd.f32 0.0, %v779
  %v781 = vpop.f32.mrb[0].mxu0
  %v782 = vpop.f32.mrb[0].mxu0
  %783 = vdwg.mxu0
  %v784 = vadd.f32 %v637, %v737
  %v785 = vadd.f32 %v638, %v739
  %v786 = vadd.f32 %v639, %v778
  %v787 = vadd.f32 %v640, %v780
  %s788 = scalar_lea.vmem %s25, 16
  %v789 = vld [vmem:[%s788] sm:$0xf]
  %v790 = vpack.c.bf16 %v195, %v195
  %v791 = vpack.c.bf16 %v200, %v200
  %v792 = vpack.c.bf16 %v196, %v196
  %v793 = vpack.c.bf16 %v201, %v201
  %v795 = vsel %vm295, %v789, 0
  %v798 = vand.u32 %v790, %v302
  %v801 = vand.u32 %v791, %v302
  %v804 = vand.u32 %v792, %v302
  %v807 = vand.u32 %v793, %v302
  %809 = vmatprep.subr.bf16.mxu0 %v801
  %810 = vmatpush1.bf16.msra.mxu0 %v798
  %811 = vmatprep.subr.bf16.mxu0 0
  %812 = vmatpush1.bf16.msra.mxu0 0
  %813 = vmatprep.subr.bf16.mxu0 0
  %814 = vmatpush1.bf16.msra.mxu0 0
  %815 = vmatprep.subr.bf16.mxu0 0
  %816 = vmatpush1.bf16.msra.mxu0 0
  %817 = vmatprep.subr.bf16.mxu0 0
  %818 = vmatpush1.bf16.msra.mxu0 0
  %819 = vmatprep.subr.bf16.mxu0 0
  %820 = vmatpush1.bf16.msra.mxu0 0
  %821 = vmatprep.subr.bf16.mxu0 0
  %822 = vmatpush1.bf16.msra.mxu0 0
  %823 = vmatprep.subr.bf16.mxu0 0
  %824 = vmatpush1.bf16.msra.mxu0 0
  %825 = vmatprep.subr.bf16.mxu0 0
  %826 = vmatpush1.bf16.msra.mxu0 0
  %827 = vmatprep.subr.bf16.mxu0 0
  %828 = vmatpush1.bf16.msra.mxu0 0
  %829 = vmatprep.subr.bf16.mxu0 0
  %830 = vmatpush1.bf16.msra.mxu0 0
  %831 = vmatprep.subr.bf16.mxu0 0
  %832 = vmatpush1.bf16.msra.mxu0 0
  %833 = vmatprep.subr.bf16.mxu0 0
  %834 = vmatpush1.bf16.msra.mxu0 0
  %835 = vmatprep.subr.bf16.mxu0 0
  %836 = vmatpush1.bf16.msra.mxu0 0
  %837 = vmatprep.subr.bf16.mxu0 0
  %838 = vmatpush1.bf16.msra.mxu0 0
  %839 = vmatprep.subr.bf16.mxu0 0
  %840 = vmatpush1.bf16.msra.mxu0 0
  %841 = vmatprep.mubr.bf16.mxu0 0
  %842 = vmatmul.mubr.bf16.gmra.mrb[0].mxu0 %v795
  %v843 = vpop.f32.mrb[0].mxu0
  %v844 = vadd.f32 0.0, %v843
  %v845 = vpop.f32.mrb[0].mxu0
  %v846 = vadd.f32 0.0, %v845
  %v847 = vpop.f32.mrb[0].mxu0
  %v848 = vpop.f32.mrb[0].mxu0
  %849 = vdwg.mxu0
  %850 = vmatprep.subr.bf16.mxu0 %v807
  %851 = vmatpush1.bf16.msra.mxu0 %v804
  %852 = vmatprep.subr.bf16.mxu0 0
  %853 = vmatpush1.bf16.msra.mxu0 0
  %854 = vmatprep.subr.bf16.mxu0 0
  %855 = vmatpush1.bf16.msra.mxu0 0
  %856 = vmatprep.subr.bf16.mxu0 0
  %857 = vmatpush1.bf16.msra.mxu0 0
  %858 = vmatprep.subr.bf16.mxu0 0
  %859 = vmatpush1.bf16.msra.mxu0 0
  %860 = vmatprep.subr.bf16.mxu0 0
  %861 = vmatpush1.bf16.msra.mxu0 0
  %862 = vmatprep.subr.bf16.mxu0 0
  %863 = vmatpush1.bf16.msra.mxu0 0
  %864 = vmatprep.subr.bf16.mxu0 0
  %865 = vmatpush1.bf16.msra.mxu0 0
  %866 = vmatprep.subr.bf16.mxu0 0
  %867 = vmatpush1.bf16.msra.mxu0 0
  %868 = vmatprep.subr.bf16.mxu0 0
  %869 = vmatpush1.bf16.msra.mxu0 0
  %870 = vmatprep.subr.bf16.mxu0 0
  %871 = vmatpush1.bf16.msra.mxu0 0
  %872 = vmatprep.subr.bf16.mxu0 0
  %873 = vmatpush1.bf16.msra.mxu0 0
  %874 = vmatprep.subr.bf16.mxu0 0
  %875 = vmatpush1.bf16.msra.mxu0 0
  %876 = vmatprep.subr.bf16.mxu0 0
  %877 = vmatpush1.bf16.msra.mxu0 0
  %878 = vmatprep.subr.bf16.mxu0 0
  %879 = vmatpush1.bf16.msra.mxu0 0
  %880 = vmatprep.subr.bf16.mxu0 0
  %881 = vmatpush1.bf16.msra.mxu0 0
  %882 = vmatprep.mubr.bf16.mxu0 0
  %883 = vmatmul.mubr.bf16.gmra.mrb[0].mxu0 %v795
  %v884 = vpop.f32.mrb[0].mxu0
  %v885 = vadd.f32 0.0, %v884
  %v886 = vpop.f32.mrb[0].mxu0
  %v887 = vadd.f32 0.0, %v886
  %v888 = vpop.f32.mrb[0].mxu0
  %v889 = vpop.f32.mrb[0].mxu0
  %890 = vdwg.mxu0
  %v891 = vadd.f32 %v784, %v844
  %v892 = vadd.f32 %v785, %v846
  %v893 = vadd.f32 %v786, %v885
  %v894 = vadd.f32 %v787, %v887
  %s895 = scalar_lea.vmem %s25, 20
  %v896 = vld [vmem:[%s895] sm:$0xf]
  %897 = vrot.lane.b32.xlu0 %v195, 127
  %v898 = vpop.permute.xlu0 %897
  %899 = vrot.lane.b32.xlu0 %v200, 127
  %v900 = vpop.permute.xlu0 %899
  %901 = vrot.lane.b32.xlu0 %v196, 127
  %v902 = vpop.permute.xlu0 %901
  %903 = vrot.lane.b32.xlu0 %v201, 127
  %v904 = vpop.permute.xlu0 %903
  %vm905 = vcmp.lt.s32.totalorder %v213, 127
  %v906 = vsel %vm905, %v902, %v904
  %v907 = vsel %vm905, %v900, %v902
  %v908 = vsel %vm905, %v898, %v900
  %v909 = vsel %vm905, %v904, %v898
  %s910 = scalar_lea.vmem %s7, 20
  %v911 = vld [vmem:[%s910] sm:$0xf]
  %v913 = vlaneseq
  %v914 = vshrl.u32 %v913, 7
  %v915 = vsub.s32 0, %v914
  %v916 = vrot.slane %v911, %v915
  %v917 = vlaneseq
  %v918 = vshrl.u32 %v917, 7
  %v919 = vsub.s32 1, %v918
  %v920 = vrot.slane %v911, %v919
  %v921 = vlaneseq
  %v922 = vshrl.u32 %v921, 7
  %v923 = vsub.s32 2, %v922
  %v924 = vrot.slane %v911, %v923
  %v925 = vlaneseq
  %v926 = vshrl.u32 %v925, 7
  %v927 = vsub.s32 3, %v926
  %v928 = vrot.slane %v911, %v927
  %v933 = vmul.f32 %v908, %v916
  %v934 = vmul.f32 %v907, %v920
  %v935 = vmul.f32 %v906, %v924
  %v936 = vmul.f32 %v909, %v928
  %v937 = vpack.c.bf16 %v933, %v933
  %v938 = vpack.c.bf16 %v934, %v934
  %v939 = vpack.c.bf16 %v935, %v935
  %v940 = vpack.c.bf16 %v936, %v936
  %v942 = vsel %vm295, %v896, 0
  %v945 = vand.u32 %v937, %v302
  %v948 = vand.u32 %v938, %v302
  %v951 = vand.u32 %v939, %v302
  %v954 = vand.u32 %v940, %v302
  %956 = vmatprep.subr.bf16.mxu0 %v948
  %957 = vmatpush1.bf16.msra.mxu0 %v945
  %958 = vmatprep.subr.bf16.mxu0 0
  %959 = vmatpush1.bf16.msra.mxu0 0
  %960 = vmatprep.subr.bf16.mxu0 0
  %961 = vmatpush1.bf16.msra.mxu0 0
  %962 = vmatprep.subr.bf16.mxu0 0
  %963 = vmatpush1.bf16.msra.mxu0 0
  %964 = vmatprep.subr.bf16.mxu0 0
  %965 = vmatpush1.bf16.msra.mxu0 0
  %966 = vmatprep.subr.bf16.mxu0 0
  %967 = vmatpush1.bf16.msra.mxu0 0
  %968 = vmatprep.subr.bf16.mxu0 0
  %969 = vmatpush1.bf16.msra.mxu0 0
  %970 = vmatprep.subr.bf16.mxu0 0
  %971 = vmatpush1.bf16.msra.mxu0 0
  %972 = vmatprep.subr.bf16.mxu0 0
  %973 = vmatpush1.bf16.msra.mxu0 0
  %974 = vmatprep.subr.bf16.mxu0 0
  %975 = vmatpush1.bf16.msra.mxu0 0
  %976 = vmatprep.subr.bf16.mxu0 0
  %977 = vmatpush1.bf16.msra.mxu0 0
  %978 = vmatprep.subr.bf16.mxu0 0
  %979 = vmatpush1.bf16.msra.mxu0 0
  %980 = vmatprep.subr.bf16.mxu0 0
  %981 = vmatpush1.bf16.msra.mxu0 0
  %982 = vmatprep.subr.bf16.mxu0 0
  %983 = vmatpush1.bf16.msra.mxu0 0
  %984 = vmatprep.subr.bf16.mxu0 0
  %985 = vmatpush1.bf16.msra.mxu0 0
  %986 = vmatprep.subr.bf16.mxu0 0
  %987 = vmatpush1.bf16.msra.mxu0 0
  %988 = vmatprep.mubr.bf16.mxu0 0
  %989 = vmatmul.mubr.bf16.gmra.mrb[0].mxu0 %v942
  %v990 = vpop.f32.mrb[0].mxu0
  %v991 = vadd.f32 0.0, %v990
  %v992 = vpop.f32.mrb[0].mxu0
  %v993 = vadd.f32 0.0, %v992
  %v994 = vpop.f32.mrb[0].mxu0
  %v995 = vpop.f32.mrb[0].mxu0
  %996 = vdwg.mxu0
  %997 = vmatprep.subr.bf16.mxu0 %v954
  %998 = vmatpush1.bf16.msra.mxu0 %v951
  %999 = vmatprep.subr.bf16.mxu0 0
  %1000 = vmatpush1.bf16.msra.mxu0 0
  %1001 = vmatprep.subr.bf16.mxu0 0
  %1002 = vmatpush1.bf16.msra.mxu0 0
  %1003 = vmatprep.subr.bf16.mxu0 0
  %1004 = vmatpush1.bf16.msra.mxu0 0
  %1005 = vmatprep.subr.bf16.mxu0 0
  %1006 = vmatpush1.bf16.msra.mxu0 0
  %1007 = vmatprep.subr.bf16.mxu0 0
  %1008 = vmatpush1.bf16.msra.mxu0 0
  %1009 = vmatprep.subr.bf16.mxu0 0
  %1010 = vmatpush1.bf16.msra.mxu0 0
  %1011 = vmatprep.subr.bf16.mxu0 0
  %1012 = vmatpush1.bf16.msra.mxu0 0
  %1013 = vmatprep.subr.bf16.mxu0 0
  %1014 = vmatpush1.bf16.msra.mxu0 0
  %1015 = vmatprep.subr.bf16.mxu0 0
  %1016 = vmatpush1.bf16.msra.mxu0 0
  %1017 = vmatprep.subr.bf16.mxu0 0
  %1018 = vmatpush1.bf16.msra.mxu0 0
  %1019 = vmatprep.subr.bf16.mxu0 0
  %1020 = vmatpush1.bf16.msra.mxu0 0
  %1021 = vmatprep.subr.bf16.mxu0 0
  %1022 = vmatpush1.bf16.msra.mxu0 0
  %1023 = vmatprep.subr.bf16.mxu0 0
  %1024 = vmatpush1.bf16.msra.mxu0 0
  %1025 = vmatprep.subr.bf16.mxu0 0
  %1026 = vmatpush1.bf16.msra.mxu0 0
  %1027 = vmatprep.subr.bf16.mxu0 0
  %1028 = vmatpush1.bf16.msra.mxu0 0
  %1029 = vmatprep.mubr.bf16.mxu0 0
  %1030 = vmatmul.mubr.bf16.gmra.mrb[0].mxu0 %v942
  %v1031 = vpop.f32.mrb[0].mxu0
  %v1032 = vadd.f32 0.0, %v1031
  %v1033 = vpop.f32.mrb[0].mxu0
  %v1034 = vadd.f32 0.0, %v1033
  %v1035 = vpop.f32.mrb[0].mxu0
  %v1036 = vpop.f32.mrb[0].mxu0
  %1037 = vdwg.mxu0
  %v1038 = vadd.f32 %v891, %v991
  %v1039 = vadd.f32 %v892, %v993
  %v1040 = vadd.f32 %v893, %v1032
  %v1041 = vadd.f32 %v894, %v1034
  %s1042 = scalar_lea.vmem %s25, 24
  %v1043 = vld [vmem:[%s1042] sm:$0xf]
  %1044 = vrot.lane.b32.xlu0 %v195, 113
  %v1045 = vpop.permute.xlu0 %1044
  %1046 = vrot.lane.b32.xlu0 %v200, 113
  %v1047 = vpop.permute.xlu0 %1046
  %1048 = vrot.lane.b32.xlu0 %v196, 113
  %v1049 = vpop.permute.xlu0 %1048
  %1050 = vrot.lane.b32.xlu0 %v201, 113
  %v1051 = vpop.permute.xlu0 %1050
  %vm1052 = vcmp.lt.s32.totalorder %v213, 113
  %v1053 = vsel %vm1052, %v1049, %v1051
  %v1054 = vsel %vm1052, %v1047, %v1049
  %v1055 = vsel %vm1052, %v1045, %v1047
  %v1056 = vsel %vm1052, %v1051, %v1045
  %s1057 = scalar_lea.vmem %s7, 24
  %v1058 = vld [vmem:[%s1057] sm:$0xf]
  %v1060 = vlaneseq
  %v1061 = vshrl.u32 %v1060, 7
  %v1062 = vsub.s32 0, %v1061
  %v1063 = vrot.slane %v1058, %v1062
  %v1064 = vlaneseq
  %v1065 = vshrl.u32 %v1064, 7
  %v1066 = vsub.s32 1, %v1065
  %v1067 = vrot.slane %v1058, %v1066
  %v1068 = vlaneseq
  %v1069 = vshrl.u32 %v1068, 7
  %v1070 = vsub.s32 2, %v1069
  %v1071 = vrot.slane %v1058, %v1070
  %v1072 = vlaneseq
  %v1073 = vshrl.u32 %v1072, 7
  %v1074 = vsub.s32 3, %v1073
  %v1075 = vrot.slane %v1058, %v1074
  %v1080 = vmul.f32 %v1055, %v1063
  %v1081 = vmul.f32 %v1054, %v1067
  %v1082 = vmul.f32 %v1053, %v1071
  %v1083 = vmul.f32 %v1056, %v1075
  %v1084 = vpack.c.bf16 %v1080, %v1080
  %v1085 = vpack.c.bf16 %v1081, %v1081
  %v1086 = vpack.c.bf16 %v1082, %v1082
  %v1087 = vpack.c.bf16 %v1083, %v1083
  %v1089 = vsel %vm295, %v1043, 0
  %v1092 = vand.u32 %v1084, %v302
  %v1095 = vand.u32 %v1085, %v302
  %v1098 = vand.u32 %v1086, %v302
  %v1101 = vand.u32 %v1087, %v302
  %1103 = vmatprep.subr.bf16.mxu0 %v1095
  %1104 = vmatpush1.bf16.msra.mxu0 %v1092
  %1105 = vmatprep.subr.bf16.mxu0 0
  %1106 = vmatpush1.bf16.msra.mxu0 0
  %1107 = vmatprep.subr.bf16.mxu0 0
  %1108 = vmatpush1.bf16.msra.mxu0 0
  %1109 = vmatprep.subr.bf16.mxu0 0
  %1110 = vmatpush1.bf16.msra.mxu0 0
  %1111 = vmatprep.subr.bf16.mxu0 0
  %1112 = vmatpush1.bf16.msra.mxu0 0
  %1113 = vmatprep.subr.bf16.mxu0 0
  %1114 = vmatpush1.bf16.msra.mxu0 0
  %1115 = vmatprep.subr.bf16.mxu0 0
  %1116 = vmatpush1.bf16.msra.mxu0 0
  %1117 = vmatprep.subr.bf16.mxu0 0
  %1118 = vmatpush1.bf16.msra.mxu0 0
  %1119 = vmatprep.subr.bf16.mxu0 0
  %1120 = vmatpush1.bf16.msra.mxu0 0
  %1121 = vmatprep.subr.bf16.mxu0 0
  %1122 = vmatpush1.bf16.msra.mxu0 0
  %1123 = vmatprep.subr.bf16.mxu0 0
  %1124 = vmatpush1.bf16.msra.mxu0 0
  %1125 = vmatprep.subr.bf16.mxu0 0
  %1126 = vmatpush1.bf16.msra.mxu0 0
  %1127 = vmatprep.subr.bf16.mxu0 0
  %1128 = vmatpush1.bf16.msra.mxu0 0
  %1129 = vmatprep.subr.bf16.mxu0 0
  %1130 = vmatpush1.bf16.msra.mxu0 0
  %1131 = vmatprep.subr.bf16.mxu0 0
  %1132 = vmatpush1.bf16.msra.mxu0 0
  %1133 = vmatprep.subr.bf16.mxu0 0
  %1134 = vmatpush1.bf16.msra.mxu0 0
  %1135 = vmatprep.mubr.bf16.mxu0 0
  %1136 = vmatmul.mubr.bf16.gmra.mrb[0].mxu0 %v1089
  %v1137 = vpop.f32.mrb[0].mxu0
  %v1138 = vadd.f32 0.0, %v1137
  %v1139 = vpop.f32.mrb[0].mxu0
  %v1140 = vadd.f32 0.0, %v1139
  %v1141 = vpop.f32.mrb[0].mxu0
  %v1142 = vpop.f32.mrb[0].mxu0
  %1143 = vdwg.mxu0
  %1144 = vmatprep.subr.bf16.mxu0 %v1101
  %1145 = vmatpush1.bf16.msra.mxu0 %v1098
  %1146 = vmatprep.subr.bf16.mxu0 0
  %1147 = vmatpush1.bf16.msra.mxu0 0
  %1148 = vmatprep.subr.bf16.mxu0 0
  %1149 = vmatpush1.bf16.msra.mxu0 0
  %1150 = vmatprep.subr.bf16.mxu0 0
  %1151 = vmatpush1.bf16.msra.mxu0 0
  %1152 = vmatprep.subr.bf16.mxu0 0
  %1153 = vmatpush1.bf16.msra.mxu0 0
  %1154 = vmatprep.subr.bf16.mxu0 0
  %1155 = vmatpush1.bf16.msra.mxu0 0
  %1156 = vmatprep.subr.bf16.mxu0 0
  %1157 = vmatpush1.bf16.msra.mxu0 0
  %1158 = vmatprep.subr.bf16.mxu0 0
  %1159 = vmatpush1.bf16.msra.mxu0 0
  %1160 = vmatprep.subr.bf16.mxu0 0
  %1161 = vmatpush1.bf16.msra.mxu0 0
  %1162 = vmatprep.subr.bf16.mxu0 0
  %1163 = vmatpush1.bf16.msra.mxu0 0
  %1164 = vmatprep.subr.bf16.mxu0 0
  %1165 = vmatpush1.bf16.msra.mxu0 0
  %1166 = vmatprep.subr.bf16.mxu0 0
  %1167 = vmatpush1.bf16.msra.mxu0 0
  %1168 = vmatprep.subr.bf16.mxu0 0
  %1169 = vmatpush1.bf16.msra.mxu0 0
  %1170 = vmatprep.subr.bf16.mxu0 0
  %1171 = vmatpush1.bf16.msra.mxu0 0
  %1172 = vmatprep.subr.bf16.mxu0 0
  %1173 = vmatpush1.bf16.msra.mxu0 0
  %1174 = vmatprep.subr.bf16.mxu0 0
  %1175 = vmatpush1.bf16.msra.mxu0 0
  %1176 = vmatprep.mubr.bf16.mxu0 0
  %1177 = vmatmul.mubr.bf16.gmra.mrb[0].mxu0 %v1089
  %v1178 = vpop.f32.mrb[0].mxu0
  %v1179 = vadd.f32 0.0, %v1178
  %v1180 = vpop.f32.mrb[0].mxu0
  %v1181 = vadd.f32 0.0, %v1180
  %v1182 = vpop.f32.mrb[0].mxu0
  %v1183 = vpop.f32.mrb[0].mxu0
  %1184 = vdwg.mxu0
  %v1185 = vadd.f32 %v1038, %v1138
  %v1186 = vadd.f32 %v1039, %v1140
  %v1187 = vadd.f32 %v1040, %v1179
  %v1188 = vadd.f32 %v1041, %v1181
  %s1189 = scalar_lea.vmem %s25, 28
  %v1190 = vld [vmem:[%s1189] sm:$0xf]
  %1191 = vrot.lane.b32.xlu0 %v195, 112
  %v1192 = vpop.permute.xlu0 %1191
  %1193 = vrot.lane.b32.xlu0 %v200, 112
  %v1194 = vpop.permute.xlu0 %1193
  %1195 = vrot.lane.b32.xlu0 %v196, 112
  %v1196 = vpop.permute.xlu0 %1195
  %1197 = vrot.lane.b32.xlu0 %v201, 112
  %v1198 = vpop.permute.xlu0 %1197
  %vm1199 = vcmp.lt.s32.totalorder %v213, 112
  %v1200 = vsel %vm1199, %v1196, %v1198
  %v1201 = vsel %vm1199, %v1194, %v1196
  %v1202 = vsel %vm1199, %v1192, %v1194
  %v1203 = vsel %vm1199, %v1198, %v1192
  %s1204 = scalar_lea.vmem %s7, 28
  %v1205 = vld [vmem:[%s1204] sm:$0xf]
  %v1207 = vlaneseq
  %v1208 = vshrl.u32 %v1207, 7
  %v1209 = vsub.s32 0, %v1208
  %v1210 = vrot.slane %v1205, %v1209
  %v1211 = vlaneseq
  %v1212 = vshrl.u32 %v1211, 7
  %v1213 = vsub.s32 1, %v1212
  %v1214 = vrot.slane %v1205, %v1213
  %v1215 = vlaneseq
  %v1216 = vshrl.u32 %v1215, 7
  %v1217 = vsub.s32 2, %v1216
  %v1218 = vrot.slane %v1205, %v1217
  %v1219 = vlaneseq
  %v1220 = vshrl.u32 %v1219, 7
  %v1221 = vsub.s32 3, %v1220
  %v1222 = vrot.slane %v1205, %v1221
  %v1227 = vmul.f32 %v1202, %v1210
  %v1228 = vmul.f32 %v1201, %v1214
  %v1229 = vmul.f32 %v1200, %v1218
  %v1230 = vmul.f32 %v1203, %v1222
  %v1231 = vpack.c.bf16 %v1227, %v1227
  %v1232 = vpack.c.bf16 %v1228, %v1228
  %v1233 = vpack.c.bf16 %v1229, %v1229
  %v1234 = vpack.c.bf16 %v1230, %v1230
  %v1236 = vsel %vm295, %v1190, 0
  %v1239 = vand.u32 %v1231, %v302
  %v1242 = vand.u32 %v1232, %v302
  %v1245 = vand.u32 %v1233, %v302
  %v1248 = vand.u32 %v1234, %v302
  %1250 = vmatprep.subr.bf16.mxu0 %v1242
  %1251 = vmatpush1.bf16.msra.mxu0 %v1239
  %1252 = vmatprep.subr.bf16.mxu0 0
  %1253 = vmatpush1.bf16.msra.mxu0 0
  %1254 = vmatprep.subr.bf16.mxu0 0
  %1255 = vmatpush1.bf16.msra.mxu0 0
  %1256 = vmatprep.subr.bf16.mxu0 0
  %1257 = vmatpush1.bf16.msra.mxu0 0
  %1258 = vmatprep.subr.bf16.mxu0 0
  %1259 = vmatpush1.bf16.msra.mxu0 0
  %1260 = vmatprep.subr.bf16.mxu0 0
  %1261 = vmatpush1.bf16.msra.mxu0 0
  %1262 = vmatprep.subr.bf16.mxu0 0
  %1263 = vmatpush1.bf16.msra.mxu0 0
  %1264 = vmatprep.subr.bf16.mxu0 0
  %1265 = vmatpush1.bf16.msra.mxu0 0
  %1266 = vmatprep.subr.bf16.mxu0 0
  %1267 = vmatpush1.bf16.msra.mxu0 0
  %1268 = vmatprep.subr.bf16.mxu0 0
  %1269 = vmatpush1.bf16.msra.mxu0 0
  %1270 = vmatprep.subr.bf16.mxu0 0
  %1271 = vmatpush1.bf16.msra.mxu0 0
  %1272 = vmatprep.subr.bf16.mxu0 0
  %1273 = vmatpush1.bf16.msra.mxu0 0
  %1274 = vmatprep.subr.bf16.mxu0 0
  %1275 = vmatpush1.bf16.msra.mxu0 0
  %1276 = vmatprep.subr.bf16.mxu0 0
  %1277 = vmatpush1.bf16.msra.mxu0 0
  %1278 = vmatprep.subr.bf16.mxu0 0
  %1279 = vmatpush1.bf16.msra.mxu0 0
  %1280 = vmatprep.subr.bf16.mxu0 0
  %1281 = vmatpush1.bf16.msra.mxu0 0
  %1282 = vmatprep.mubr.bf16.mxu0 0
  %1283 = vmatmul.mubr.bf16.gmra.mrb[0].mxu0 %v1236
  %v1284 = vpop.f32.mrb[0].mxu0
  %v1285 = vadd.f32 0.0, %v1284
  %v1286 = vpop.f32.mrb[0].mxu0
  %v1287 = vadd.f32 0.0, %v1286
  %v1288 = vpop.f32.mrb[0].mxu0
  %v1289 = vpop.f32.mrb[0].mxu0
  %1290 = vdwg.mxu0
  %1291 = vmatprep.subr.bf16.mxu0 %v1248
  %1292 = vmatpush1.bf16.msra.mxu0 %v1245
  %1293 = vmatprep.subr.bf16.mxu0 0
  %1294 = vmatpush1.bf16.msra.mxu0 0
  %1295 = vmatprep.subr.bf16.mxu0 0
  %1296 = vmatpush1.bf16.msra.mxu0 0
  %1297 = vmatprep.subr.bf16.mxu0 0
  %1298 = vmatpush1.bf16.msra.mxu0 0
  %1299 = vmatprep.subr.bf16.mxu0 0
  %1300 = vmatpush1.bf16.msra.mxu0 0
  %1301 = vmatprep.subr.bf16.mxu0 0
  %1302 = vmatpush1.bf16.msra.mxu0 0
  %1303 = vmatprep.subr.bf16.mxu0 0
  %1304 = vmatpush1.bf16.msra.mxu0 0
  %1305 = vmatprep.subr.bf16.mxu0 0
  %1306 = vmatpush1.bf16.msra.mxu0 0
  %1307 = vmatprep.subr.bf16.mxu0 0
  %1308 = vmatpush1.bf16.msra.mxu0 0
  %1309 = vmatprep.subr.bf16.mxu0 0
  %1310 = vmatpush1.bf16.msra.mxu0 0
  %1311 = vmatprep.subr.bf16.mxu0 0
  %1312 = vmatpush1.bf16.msra.mxu0 0
  %1313 = vmatprep.subr.bf16.mxu0 0
  %1314 = vmatpush1.bf16.msra.mxu0 0
  %1315 = vmatprep.subr.bf16.mxu0 0
  %1316 = vmatpush1.bf16.msra.mxu0 0
  %1317 = vmatprep.subr.bf16.mxu0 0
  %1318 = vmatpush1.bf16.msra.mxu0 0
  %1319 = vmatprep.subr.bf16.mxu0 0
  %1320 = vmatpush1.bf16.msra.mxu0 0
  %1321 = vmatprep.subr.bf16.mxu0 0
  %1322 = vmatpush1.bf16.msra.mxu0 0
  %1323 = vmatprep.mubr.bf16.mxu0 0
  %1324 = vmatmul.mubr.bf16.gmra.mrb[0].mxu0 %v1236
  %v1325 = vpop.f32.mrb[0].mxu0
  %v1326 = vadd.f32 0.0, %v1325
  %v1327 = vpop.f32.mrb[0].mxu0
  %v1328 = vadd.f32 0.0, %v1327
  %v1329 = vpop.f32.mrb[0].mxu0
  %v1330 = vpop.f32.mrb[0].mxu0
  %1331 = vdwg.mxu0
  %v1332 = vadd.f32 %v1185, %v1285
  %v1333 = vadd.f32 %v1186, %v1287
  %v1334 = vadd.f32 %v1187, %v1326
  %v1335 = vadd.f32 %v1188, %v1328
  %s1336 = scalar_lea.vmem %s25, 32
  %v1337 = vld [vmem:[%s1336] sm:$0xf]
  %1338 = vrot.lane.b32.xlu0 %v195, 111
  %v1339 = vpop.permute.xlu0 %1338
  %1340 = vrot.lane.b32.xlu0 %v200, 111
  %v1341 = vpop.permute.xlu0 %1340
  %1342 = vrot.lane.b32.xlu0 %v196, 111
  %v1343 = vpop.permute.xlu0 %1342
  %1344 = vrot.lane.b32.xlu0 %v201, 111
  %v1345 = vpop.permute.xlu0 %1344
  %vm1346 = vcmp.lt.s32.totalorder %v213, 111
  %v1347 = vsel %vm1346, %v1343, %v1345
  %v1348 = vsel %vm1346, %v1341, %v1343
  %v1349 = vsel %vm1346, %v1339, %v1341
  %v1350 = vsel %vm1346, %v1345, %v1339
  %s1351 = scalar_lea.vmem %s7, 32
  %v1352 = vld [vmem:[%s1351] sm:$0xf]
  %v1354 = vlaneseq
  %v1355 = vshrl.u32 %v1354, 7
  %v1356 = vsub.s32 0, %v1355
  %v1357 = vrot.slane %v1352, %v1356
  %v1358 = vlaneseq
  %v1359 = vshrl.u32 %v1358, 7
  %v1360 = vsub.s32 1, %v1359
  %v1361 = vrot.slane %v1352, %v1360
  %v1362 = vlaneseq
  %v1363 = vshrl.u32 %v1362, 7
  %v1364 = vsub.s32 2, %v1363
  %v1365 = vrot.slane %v1352, %v1364
  %v1366 = vlaneseq
  %v1367 = vshrl.u32 %v1366, 7
  %v1368 = vsub.s32 3, %v1367
  %v1369 = vrot.slane %v1352, %v1368
  %v1374 = vmul.f32 %v1349, %v1357
  %v1375 = vmul.f32 %v1348, %v1361
  %v1376 = vmul.f32 %v1347, %v1365
  %v1377 = vmul.f32 %v1350, %v1369
  %v1378 = vpack.c.bf16 %v1374, %v1374
  %v1379 = vpack.c.bf16 %v1375, %v1375
  %v1380 = vpack.c.bf16 %v1376, %v1376
  %v1381 = vpack.c.bf16 %v1377, %v1377
  %v1383 = vsel %vm295, %v1337, 0
  %v1386 = vand.u32 %v1378, %v302
  %v1389 = vand.u32 %v1379, %v302
  %v1392 = vand.u32 %v1380, %v302
  %v1395 = vand.u32 %v1381, %v302
  %1397 = vmatprep.subr.bf16.mxu0 %v1389
  %1398 = vmatpush1.bf16.msra.mxu0 %v1386
  %1399 = vmatprep.subr.bf16.mxu0 0
  %1400 = vmatpush1.bf16.msra.mxu0 0
  %1401 = vmatprep.subr.bf16.mxu0 0
  %1402 = vmatpush1.bf16.msra.mxu0 0
  %1403 = vmatprep.subr.bf16.mxu0 0
  %1404 = vmatpush1.bf16.msra.mxu0 0
  %1405 = vmatprep.subr.bf16.mxu0 0
  %1406 = vmatpush1.bf16.msra.mxu0 0
  %1407 = vmatprep.subr.bf16.mxu0 0
  %1408 = vmatpush1.bf16.msra.mxu0 0
  %1409 = vmatprep.subr.bf16.mxu0 0
  %1410 = vmatpush1.bf16.msra.mxu0 0
  %1411 = vmatprep.subr.bf16.mxu0 0
  %1412 = vmatpush1.bf16.msra.mxu0 0
  %1413 = vmatprep.subr.bf16.mxu0 0
  %1414 = vmatpush1.bf16.msra.mxu0 0
  %1415 = vmatprep.subr.bf16.mxu0 0
  %1416 = vmatpush1.bf16.msra.mxu0 0
  %1417 = vmatprep.subr.bf16.mxu0 0
  %1418 = vmatpush1.bf16.msra.mxu0 0
  %1419 = vmatprep.subr.bf16.mxu0 0
  %1420 = vmatpush1.bf16.msra.mxu0 0
  %1421 = vmatprep.subr.bf16.mxu0 0
  %1422 = vmatpush1.bf16.msra.mxu0 0
  %1423 = vmatprep.subr.bf16.mxu0 0
  %1424 = vmatpush1.bf16.msra.mxu0 0
  %1425 = vmatprep.subr.bf16.mxu0 0
  %1426 = vmatpush1.bf16.msra.mxu0 0
  %1427 = vmatprep.subr.bf16.mxu0 0
  %1428 = vmatpush1.bf16.msra.mxu0 0
  %1429 = vmatprep.mubr.bf16.mxu0 0
  %1430 = vmatmul.mubr.bf16.gmra.mrb[0].mxu0 %v1383
  %v1431 = vpop.f32.mrb[0].mxu0
  %v1432 = vadd.f32 0.0, %v1431
  %v1433 = vpop.f32.mrb[0].mxu0
  %v1434 = vadd.f32 0.0, %v1433
  %v1435 = vpop.f32.mrb[0].mxu0
  %v1436 = vpop.f32.mrb[0].mxu0
  %1437 = vdwg.mxu0
  %1438 = vmatprep.subr.bf16.mxu0 %v1395
  %1439 = vmatpush1.bf16.msra.mxu0 %v1392
  %1440 = vmatprep.subr.bf16.mxu0 0
  %1441 = vmatpush1.bf16.msra.mxu0 0
  %1442 = vmatprep.subr.bf16.mxu0 0
  %1443 = vmatpush1.bf16.msra.mxu0 0
  %1444 = vmatprep.subr.bf16.mxu0 0
  %1445 = vmatpush1.bf16.msra.mxu0 0
  %1446 = vmatprep.subr.bf16.mxu0 0
  %1447 = vmatpush1.bf16.msra.mxu0 0
  %1448 = vmatprep.subr.bf16.mxu0 0
  %1449 = vmatpush1.bf16.msra.mxu0 0
  %1450 = vmatprep.subr.bf16.mxu0 0
  %1451 = vmatpush1.bf16.msra.mxu0 0
  %1452 = vmatprep.subr.bf16.mxu0 0
  %1453 = vmatpush1.bf16.msra.mxu0 0
  %1454 = vmatprep.subr.bf16.mxu0 0
  %1455 = vmatpush1.bf16.msra.mxu0 0
  %1456 = vmatprep.subr.bf16.mxu0 0
  %1457 = vmatpush1.bf16.msra.mxu0 0
  %1458 = vmatprep.subr.bf16.mxu0 0
  %1459 = vmatpush1.bf16.msra.mxu0 0
  %1460 = vmatprep.subr.bf16.mxu0 0
  %1461 = vmatpush1.bf16.msra.mxu0 0
  %1462 = vmatprep.subr.bf16.mxu0 0
  %1463 = vmatpush1.bf16.msra.mxu0 0
  %1464 = vmatprep.subr.bf16.mxu0 0
  %1465 = vmatpush1.bf16.msra.mxu0 0
  %1466 = vmatprep.subr.bf16.mxu0 0
  %1467 = vmatpush1.bf16.msra.mxu0 0
  %1468 = vmatprep.subr.bf16.mxu0 0
  %1469 = vmatpush1.bf16.msra.mxu0 0
  %1470 = vmatprep.mubr.bf16.mxu0 0
  %1471 = vmatmul.mubr.bf16.gmra.mrb[0].mxu0 %v1383
  %v1472 = vpop.f32.mrb[0].mxu0
  %v1473 = vadd.f32 0.0, %v1472
  %v1474 = vpop.f32.mrb[0].mxu0
  %v1475 = vadd.f32 0.0, %v1474
  %v1476 = vpop.f32.mrb[0].mxu0
  %v1477 = vpop.f32.mrb[0].mxu0
  %1478 = vdwg.mxu0
  %v1479 = vadd.f32 %v1332, %v1432
  %v1480 = vadd.f32 %v1333, %v1434
  %v1481 = vadd.f32 %v1334, %v1473
  %v1482 = vadd.f32 %v1335, %v1475
  %v1483 = vpack.c.bf16 %v1479, %v1479
  %v1484 = vpack.c.bf16 %v1480, %v1480
  %v1485 = vpack.c.bf16 %v1481, %v1481
  %v1486 = vpack.c.bf16 %v1482, %v1482
  %v1487 = vld [vmem:[%s3] sm:$0xf]
  %v1488 = vld [vmem:[%s3 + $0x4] sm:$0xf]
  %v1489 = vld [vmem:[%s3 + $0x8] sm:$0xf]
  %v1490 = vld [vmem:[%s3 + $0xc] sm:$0xf]
  %v1491 = vld [vmem:[%s3 + $0x10] sm:$0xf]
  %v1492 = vld [vmem:[%s3 + $0x14] sm:$0xf]
  %v1493 = vld [vmem:[%s3 + $0x18] sm:$0xf]
  %v1494 = vld [vmem:[%s3 + $0x1c] sm:$0xf]
  %v1495 = vld [vmem:[%s3 + $0x20] sm:$0xf]
  %v1496 = vld [vmem:[%s3 + $0x24] sm:$0xf]
  %v1497 = vld [vmem:[%s3 + $0x28] sm:$0xf]
  %v1498 = vld [vmem:[%s3 + $0x2c] sm:$0xf]
  %v1499 = vld [vmem:[%s3 + $0x30] sm:$0xf]
  %v1500 = vld [vmem:[%s3 + $0x34] sm:$0xf]
  %v1501 = vld [vmem:[%s3 + $0x38] sm:$0xf]
  %v1502 = vld [vmem:[%s3 + $0x3c] sm:$0xf]
  %v1503 = vld [vmem:[%s3 + $0x40] sm:$0xf]
  %v1504 = vld [vmem:[%s3 + $0x44] sm:$0xf]
  %v1505 = vld [vmem:[%s3 + $0x48] sm:$0xf]
  %v1506 = vld [vmem:[%s3 + $0x4c] sm:$0xf]
  %v1507 = vld [vmem:[%s3 + $0x50] sm:$0xf]
  %v1508 = vld [vmem:[%s3 + $0x54] sm:$0xf]
  %v1509 = vld [vmem:[%s3 + $0x58] sm:$0xf]
  %v1510 = vld [vmem:[%s3 + $0x5c] sm:$0xf]
  %v1511 = vld [vmem:[%s3 + $0x60] sm:$0xf]
  %v1512 = vld [vmem:[%s3 + $0x64] sm:$0xf]
  %v1513 = vld [vmem:[%s3 + $0x68] sm:$0xf]
  %v1514 = vld [vmem:[%s3 + $0x6c] sm:$0xf]
  %v1515 = vld [vmem:[%s3 + $0x70] sm:$0xf]
  %v1516 = vld [vmem:[%s3 + $0x74] sm:$0xf]
  %v1517 = vld [vmem:[%s3 + $0x78] sm:$0xf]
  %v1518 = vld [vmem:[%s3 + $0x7c] sm:$0xf]
  %v1519 = vld [vmem:[%s3 + $0x80] sm:$0xf]
  %v1520 = vld [vmem:[%s3 + $0x84] sm:$0xf]
  %v1521 = vld [vmem:[%s3 + $0x88] sm:$0xf]
  %v1522 = vld [vmem:[%s3 + $0x8c] sm:$0xf]
  %v1523 = vld [vmem:[%s3 + $0x90] sm:$0xf]
  %v1524 = vld [vmem:[%s3 + $0x94] sm:$0xf]
  %v1525 = vld [vmem:[%s3 + $0x98] sm:$0xf]
  %v1526 = vld [vmem:[%s3 + $0x9c] sm:$0xf]
  %v1527 = vld [vmem:[%s3 + $0xa0] sm:$0xf]
  %v1528 = vld [vmem:[%s3 + $0xa4] sm:$0xf]
  %v1529 = vld [vmem:[%s3 + $0xa8] sm:$0xf]
  %v1530 = vld [vmem:[%s3 + $0xac] sm:$0xf]
  %v1531 = vld [vmem:[%s3 + $0xb0] sm:$0xf]
  %v1532 = vld [vmem:[%s3 + $0xb4] sm:$0xf]
  %v1533 = vld [vmem:[%s3 + $0xb8] sm:$0xf]
  %v1534 = vld [vmem:[%s3 + $0xbc] sm:$0xf]
  %v1535 = vld [vmem:[%s3 + $0xc0] sm:$0xf]
  %v1536 = vld [vmem:[%s3 + $0xc4] sm:$0xf]
  %v1537 = vld [vmem:[%s3 + $0xc8] sm:$0xf]
  %v1538 = vld [vmem:[%s3 + $0xcc] sm:$0xf]
  %v1539 = vld [vmem:[%s3 + $0xd0] sm:$0xf]
  %v1540 = vld [vmem:[%s3 + $0xd4] sm:$0xf]
  %v1541 = vld [vmem:[%s3 + $0xd8] sm:$0xf]
  %v1542 = vld [vmem:[%s3 + $0xdc] sm:$0xf]
  %v1543 = vld [vmem:[%s3 + $0xe0] sm:$0xf]
  %v1544 = vld [vmem:[%s3 + $0xe4] sm:$0xf]
  %v1545 = vld [vmem:[%s3 + $0xe8] sm:$0xf]
  %v1546 = vld [vmem:[%s3 + $0xec] sm:$0xf]
  %v1547 = vld [vmem:[%s3 + $0xf0] sm:$0xf]
  %v1548 = vld [vmem:[%s3 + $0xf4] sm:$0xf]
  %v1549 = vld [vmem:[%s3 + $0xf8] sm:$0xf]
  %v1550 = vld [vmem:[%s3 + $0xfc] sm:$0xf]
  %v1615 = vunpack.c.l.b16 %v1487
  %v1616 = vunpack.c.l.b16 %v1488
  %v1617 = vunpack.c.l.b16 %v1489
  %v1618 = vunpack.c.l.b16 %v1490
  %v1619 = vunpack.c.l.b16 %v1491
  %v1620 = vunpack.c.l.b16 %v1492
  %v1621 = vunpack.c.l.b16 %v1493
  %v1622 = vunpack.c.l.b16 %v1494
  %v1623 = vunpack.c.l.b16 %v1495
  %v1624 = vunpack.c.l.b16 %v1496
  %v1625 = vunpack.c.l.b16 %v1497
  %v1626 = vunpack.c.l.b16 %v1498
  %v1627 = vunpack.c.l.b16 %v1499
  %v1628 = vunpack.c.l.b16 %v1500
  %v1629 = vunpack.c.l.b16 %v1501
  %v1630 = vunpack.c.l.b16 %v1502
  %v1631 = vunpack.c.l.b16 %v1503
  %v1632 = vunpack.c.l.b16 %v1504
  %v1633 = vunpack.c.l.b16 %v1505
  %v1634 = vunpack.c.l.b16 %v1506
  %v1635 = vunpack.c.l.b16 %v1507
  %v1636 = vunpack.c.l.b16 %v1508
  %v1637 = vunpack.c.l.b16 %v1509
  %v1638 = vunpack.c.l.b16 %v1510
  %v1639 = vunpack.c.l.b16 %v1511
  %v1640 = vunpack.c.l.b16 %v1512
  %v1641 = vunpack.c.l.b16 %v1513
  %v1642 = vunpack.c.l.b16 %v1514
  %v1643 = vunpack.c.l.b16 %v1515
  %v1644 = vunpack.c.l.b16 %v1516
  %v1645 = vunpack.c.l.b16 %v1517
  %v1646 = vunpack.c.l.b16 %v1518
  %v1647 = vunpack.c.l.b16 %v1519
  %v1648 = vunpack.c.l.b16 %v1520
  %v1649 = vunpack.c.l.b16 %v1521
  %v1650 = vunpack.c.l.b16 %v1522
  %v1651 = vunpack.c.l.b16 %v1523
  %v1652 = vunpack.c.l.b16 %v1524
  %v1653 = vunpack.c.l.b16 %v1525
  %v1654 = vunpack.c.l.b16 %v1526
  %v1655 = vunpack.c.l.b16 %v1527
  %v1656 = vunpack.c.l.b16 %v1528
  %v1657 = vunpack.c.l.b16 %v1529
  %v1658 = vunpack.c.l.b16 %v1530
  %v1659 = vunpack.c.l.b16 %v1531
  %v1660 = vunpack.c.l.b16 %v1532
  %v1661 = vunpack.c.l.b16 %v1533
  %v1662 = vunpack.c.l.b16 %v1534
  %v1663 = vunpack.c.l.b16 %v1535
  %v1664 = vunpack.c.l.b16 %v1536
  %v1665 = vunpack.c.l.b16 %v1537
  %v1666 = vunpack.c.l.b16 %v1538
  %v1667 = vunpack.c.l.b16 %v1539
  %v1668 = vunpack.c.l.b16 %v1540
  %v1669 = vunpack.c.l.b16 %v1541
  %v1670 = vunpack.c.l.b16 %v1542
  %v1671 = vunpack.c.l.b16 %v1543
  %v1672 = vunpack.c.l.b16 %v1544
  %v1673 = vunpack.c.l.b16 %v1545
  %v1674 = vunpack.c.l.b16 %v1546
  %v1675 = vunpack.c.l.b16 %v1547
  %v1676 = vunpack.c.l.b16 %v1548
  %v1677 = vunpack.c.l.b16 %v1549
  %v1678 = vunpack.c.l.b16 %v1550
  %v1679 = vpack.c.b16 %v1616, %v1615
  %v1680 = vpack.c.b16 %v1618, %v1617
  %v1681 = vpack.c.b16 %v1620, %v1619
  %v1682 = vpack.c.b16 %v1622, %v1621
  %v1683 = vpack.c.b16 %v1624, %v1623
  %v1684 = vpack.c.b16 %v1626, %v1625
  %v1685 = vpack.c.b16 %v1628, %v1627
  %v1686 = vpack.c.b16 %v1630, %v1629
  %v1687 = vpack.c.b16 %v1632, %v1631
  %v1688 = vpack.c.b16 %v1634, %v1633
  %v1689 = vpack.c.b16 %v1636, %v1635
  %v1690 = vpack.c.b16 %v1638, %v1637
  %v1691 = vpack.c.b16 %v1640, %v1639
  %v1692 = vpack.c.b16 %v1642, %v1641
  %v1693 = vpack.c.b16 %v1644, %v1643
  %v1694 = vpack.c.b16 %v1646, %v1645
  %v1695 = vpack.c.b16 %v1648, %v1647
  %v1696 = vpack.c.b16 %v1650, %v1649
  %v1697 = vpack.c.b16 %v1652, %v1651
  %v1698 = vpack.c.b16 %v1654, %v1653
  %v1699 = vpack.c.b16 %v1656, %v1655
  %v1700 = vpack.c.b16 %v1658, %v1657
  %v1701 = vpack.c.b16 %v1660, %v1659
  %v1702 = vpack.c.b16 %v1662, %v1661
  %v1703 = vpack.c.b16 %v1664, %v1663
  %v1704 = vpack.c.b16 %v1666, %v1665
  %v1705 = vpack.c.b16 %v1668, %v1667
  %v1706 = vpack.c.b16 %v1670, %v1669
  %v1707 = vpack.c.b16 %v1672, %v1671
  %v1708 = vpack.c.b16 %v1674, %v1673
  %v1709 = vpack.c.b16 %v1676, %v1675
  %v1710 = vpack.c.b16 %v1678, %v1677
  %1743 = vmatprep.subr.bf16.mxu0 0
  %1744 = vmatpush1.bf16.msra.mxu0 %v1679
  %1745 = vmatprep.subr.bf16.mxu0 0
  %1746 = vmatpush1.bf16.msra.mxu0 %v1680
  %1747 = vmatprep.subr.bf16.mxu0 0
  %1748 = vmatpush1.bf16.msra.mxu0 %v1681
  %1749 = vmatprep.subr.bf16.mxu0 0
  %1750 = vmatpush1.bf16.msra.mxu0 %v1682
  %1751 = vmatprep.subr.bf16.mxu0 0
  %1752 = vmatpush1.bf16.msra.mxu0 %v1683
  %1753 = vmatprep.subr.bf16.mxu0 0
  %1754 = vmatpush1.bf16.msra.mxu0 %v1684
  %1755 = vmatprep.subr.bf16.mxu0 0
  %1756 = vmatpush1.bf16.msra.mxu0 %v1685
  %1757 = vmatprep.subr.bf16.mxu0 0
  %1758 = vmatpush1.bf16.msra.mxu0 %v1686
  %1759 = vmatprep.subr.bf16.mxu0 0
  %1760 = vmatpush1.bf16.msra.mxu0 %v1687
  %1761 = vmatprep.subr.bf16.mxu0 0
  %1762 = vmatpush1.bf16.msra.mxu0 %v1688
  %1763 = vmatprep.subr.bf16.mxu0 0
  %1764 = vmatpush1.bf16.msra.mxu0 %v1689
  %1765 = vmatprep.subr.bf16.mxu0 0
  %1766 = vmatpush1.bf16.msra.mxu0 %v1690
  %1767 = vmatprep.subr.bf16.mxu0 0
  %1768 = vmatpush1.bf16.msra.mxu0 %v1691
  %1769 = vmatprep.subr.bf16.mxu0 0
  %1770 = vmatpush1.bf16.msra.mxu0 %v1692
  %1771 = vmatprep.subr.bf16.mxu0 0
  %1772 = vmatpush1.bf16.msra.mxu0 %v1693
  %1773 = vmatprep.subr.bf16.mxu0 0
  %1774 = vmatpush1.bf16.msra.mxu0 %v1694
  %1775 = vmatprep.mubr.bf16.mxu0 %v1484
  %1776 = vmatmul.mubr.bf16.gmra.mrb[0].mxu0 %v1483
  %v1777 = vpop.f32.mrb[0].mxu0
  %v1778 = vadd.f32 0.0, %v1777
  %v1779 = vpop.f32.mrb[0].mxu0
  %v1780 = vpop.f32.mrb[0].mxu0
  %v1781 = vpop.f32.mrb[0].mxu0
  %1782 = vdwg.mxu0
  %1783 = vmatprep.subr.bf16.mxu0 0
  %1784 = vmatpush1.bf16.msra.mxu0 %v1695
  %1785 = vmatprep.subr.bf16.mxu0 0
  %1786 = vmatpush1.bf16.msra.mxu0 %v1696
  %1787 = vmatprep.subr.bf16.mxu0 0
  %1788 = vmatpush1.bf16.msra.mxu0 %v1697
  %1789 = vmatprep.subr.bf16.mxu0 0
  %1790 = vmatpush1.bf16.msra.mxu0 %v1698
  %1791 = vmatprep.subr.bf16.mxu0 0
  %1792 = vmatpush1.bf16.msra.mxu0 %v1699
  %1793 = vmatprep.subr.bf16.mxu0 0
  %1794 = vmatpush1.bf16.msra.mxu0 %v1700
  %1795 = vmatprep.subr.bf16.mxu0 0
  %1796 = vmatpush1.bf16.msra.mxu0 %v1701
  %1797 = vmatprep.subr.bf16.mxu0 0
  %1798 = vmatpush1.bf16.msra.mxu0 %v1702
  %1799 = vmatprep.subr.bf16.mxu0 0
  %1800 = vmatpush1.bf16.msra.mxu0 %v1703
  %1801 = vmatprep.subr.bf16.mxu0 0
  %1802 = vmatpush1.bf16.msra.mxu0 %v1704
  %1803 = vmatprep.subr.bf16.mxu0 0
  %1804 = vmatpush1.bf16.msra.mxu0 %v1705
  %1805 = vmatprep.subr.bf16.mxu0 0
  %1806 = vmatpush1.bf16.msra.mxu0 %v1706
  %1807 = vmatprep.subr.bf16.mxu0 0
  %1808 = vmatpush1.bf16.msra.mxu0 %v1707
  %1809 = vmatprep.subr.bf16.mxu0 0
  %1810 = vmatpush1.bf16.msra.mxu0 %v1708
  %1811 = vmatprep.subr.bf16.mxu0 0
  %1812 = vmatpush1.bf16.msra.mxu0 %v1709
  %1813 = vmatprep.subr.bf16.mxu0 0
  %1814 = vmatpush1.bf16.msra.mxu0 %v1710
  %1815 = vmatprep.mubr.bf16.mxu0 %v1486
  %1816 = vmatmul.mubr.bf16.gmra.mrb[0].mxu0 %v1485
  %v1817 = vpop.f32.mrb[0].mxu0
  %v1818 = vadd.f32 %v1778, %v1817
  %v1819 = vpop.f32.mrb[0].mxu0
  %v1820 = vpop.f32.mrb[0].mxu0
  %v1821 = vpop.f32.mrb[0].mxu0
  %1822 = vdwg.mxu0
  %v1823 = vld [vmem:[%s21] sm:$0xff]
  %v1824 = vld [vmem:[%s17] sm:$0xff]
  %1825 = vadd.xlane.f32.xlu0 %v1818
  %v1826 = vpop.xlane.xlu0 %1825
  %v1827 = vmul.f32 %v1826, 0.0078125
  %v1828 = vsub.f32 %v1818, %v1827
  %v1829 = vmul.f32 %v1828, %v1828
  %1830 = vadd.xlane.f32.xlu0 %v1829
  %v1831 = vpop.xlane.xlu0 %1830
  %v1832 = vmul.f32 %v1831, 0.0078125
  %v1833 = vadd.f32 %v1832, 1e-05
  %v1834 = vrsqrt.pop %v1833
  %v1835 = vmul.f32 %v1828, %v1834
  %1837 = vset.pattern.permute.xlu0 0
  %1838 = vperm.xlu0 %1837, %v1823
  %v1839 = vpop.permute.xlu0 %1838
  %v1841 = vmul.f32 %v1835, %v1839
  %1843 = vset.pattern.permute.xlu0 0
  %1844 = vperm.xlu0 %1843, %v1824
  %v1845 = vpop.permute.xlu0 %1844
  %v1847 = vadd.f32 %v1841, %v1845
  %vm1848 = vcmp.ge.f32.partialorder %v1847, 0.0
  %v1849 = vmul.f32 %v1847, 0.01
  %v1850 = vsel %vm1848, %v1847, %v1849
  %v1851 = vld [vmem:[%s27] sm:$0xf]
  %1852 = vrot.lane.b32.xlu0 %v1850, 9
  %v1853 = vpop.permute.xlu0 %1852
  %v1854 = vld [vmem:[%s9] sm:$0x1]
  %v1856 = vlaneseq
  %v1857 = vshrl.u32 %v1856, 7
  %v1858 = vsub.s32 0, %v1857
  %v1859 = vrot.slane %v1854, %v1858
  %v1861 = vmul.f32 %v1853, %v1859
  %v1862 = vpack.c.bf16 %v1861, %v1861
  %s1863 = scalar_lea.vmem %s27, 4
  %v1864 = vld [vmem:[%s1863] sm:$0xf]
  %1865 = vrot.lane.b32.xlu0 %v1850, 8
  %v1866 = vpop.permute.xlu0 %1865
  %s1867 = scalar_lea.vmem %s9, 1
  %v1868 = vld [vmem:[%s1867] sm:$0x1]
  %v1870 = vlaneseq
  %v1871 = vshrl.u32 %v1870, 7
  %v1872 = vsub.s32 0, %v1871
  %v1873 = vrot.slane %v1868, %v1872
  %v1875 = vmul.f32 %v1866, %v1873
  %v1876 = vpack.c.bf16 %v1875, %v1875
  %vm1877 = vcmask 64512
  %v1879 = vsel %vm1877, %v1864, 0
  %vm1881 = vcmask 1043456
  %v1883 = vsel %vm1881, %v1876, 0
  %1885 = vmatprep.subr.bf16.mxu0 0
  %1886 = vmatpush1.bf16.msra.mxu0 %v1883
  %1887 = vmatprep.subr.bf16.mxu0 0
  %1888 = vmatpush1.bf16.msra.mxu0 0
  %1889 = vmatprep.subr.bf16.mxu0 0
  %1890 = vmatpush1.bf16.msra.mxu0 0
  %1891 = vmatprep.subr.bf16.mxu0 0
  %1892 = vmatpush1.bf16.msra.mxu0 0
  %1893 = vmatprep.subr.bf16.mxu0 0
  %1894 = vmatpush1.bf16.msra.mxu0 0
  %1895 = vmatprep.subr.bf16.mxu0 0
  %1896 = vmatpush1.bf16.msra.mxu0 0
  %1897 = vmatprep.subr.bf16.mxu0 0
  %1898 = vmatpush1.bf16.msra.mxu0 0
  %1899 = vmatprep.subr.bf16.mxu0 0
  %1900 = vmatpush1.bf16.msra.mxu0 0
  %1901 = vmatprep.subr.bf16.mxu0 0
  %1902 = vmatpush1.bf16.msra.mxu0 0
  %1903 = vmatprep.subr.bf16.mxu0 0
  %1904 = vmatpush1.bf16.msra.mxu0 0
  %1905 = vmatprep.subr.bf16.mxu0 0
  %1906 = vmatpush1.bf16.msra.mxu0 0
  %1907 = vmatprep.subr.bf16.mxu0 0
  %1908 = vmatpush1.bf16.msra.mxu0 0
  %1909 = vmatprep.subr.bf16.mxu0 0
  %1910 = vmatpush1.bf16.msra.mxu0 0
  %1911 = vmatprep.subr.bf16.mxu0 0
  %1912 = vmatpush1.bf16.msra.mxu0 0
  %1913 = vmatprep.subr.bf16.mxu0 0
  %1914 = vmatpush1.bf16.msra.mxu0 0
  %1915 = vmatprep.subr.bf16.mxu0 0
  %1916 = vmatpush1.bf16.msra.mxu0 0
  %1917 = vmatprep.mubr.bf16.mxu0 0
  %1918 = vmatmul.mubr.bf16.gmra.mrb[0].mxu0 %v1879
  %v1919 = vpop.f32.mrb[0].mxu0
  %v1920 = vadd.f32 0.0, %v1919
  %v1921 = vpop.f32.mrb[0].mxu0
  %v1922 = vpop.f32.mrb[0].mxu0
  %v1923 = vpop.f32.mrb[0].mxu0
  %1924 = vdwg.mxu0
  %v1926 = vsel %vm1877, %v1851, 0
  %v1929 = vsel %vm1881, %v1862, 0
  %1931 = vmatprep.subr.bf16.mxu0 0
  %1932 = vmatpush1.bf16.msra.mxu0 %v1929
  %1933 = vmatprep.subr.bf16.mxu0 0
  %1934 = vmatpush1.bf16.msra.mxu0 0
  %1935 = vmatprep.subr.bf16.mxu0 0
  %1936 = vmatpush1.bf16.msra.mxu0 0
  %1937 = vmatprep.subr.bf16.mxu0 0
  %1938 = vmatpush1.bf16.msra.mxu0 0
  %1939 = vmatprep.subr.bf16.mxu0 0
  %1940 = vmatpush1.bf16.msra.mxu0 0
  %1941 = vmatprep.subr.bf16.mxu0 0
  %1942 = vmatpush1.bf16.msra.mxu0 0
  %1943 = vmatprep.subr.bf16.mxu0 0
  %1944 = vmatpush1.bf16.msra.mxu0 0
  %1945 = vmatprep.subr.bf16.mxu0 0
  %1946 = vmatpush1.bf16.msra.mxu0 0
  %1947 = vmatprep.subr.bf16.mxu0 0
  %1948 = vmatpush1.bf16.msra.mxu0 0
  %1949 = vmatprep.subr.bf16.mxu0 0
  %1950 = vmatpush1.bf16.msra.mxu0 0
  %1951 = vmatprep.subr.bf16.mxu0 0
  %1952 = vmatpush1.bf16.msra.mxu0 0
  %1953 = vmatprep.subr.bf16.mxu0 0
  %1954 = vmatpush1.bf16.msra.mxu0 0
  %1955 = vmatprep.subr.bf16.mxu0 0
  %1956 = vmatpush1.bf16.msra.mxu0 0
  %1957 = vmatprep.subr.bf16.mxu0 0
  %1958 = vmatpush1.bf16.msra.mxu0 0
  %1959 = vmatprep.subr.bf16.mxu0 0
  %1960 = vmatpush1.bf16.msra.mxu0 0
  %1961 = vmatprep.subr.bf16.mxu0 0
  %1962 = vmatpush1.bf16.msra.mxu0 0
  %1963 = vmatprep.mubr.bf16.mxu0 0
  %1964 = vmatmul.mubr.bf16.gmra.mrb[0].mxu0 %v1926
  %v1965 = vpop.f32.mrb[0].mxu0
  %v1966 = vadd.f32 %v1920, %v1965
  %v1967 = vpop.f32.mrb[0].mxu0
  %v1968 = vpop.f32.mrb[0].mxu0
  %v1969 = vpop.f32.mrb[0].mxu0
  %1970 = vdwg.mxu0
  %s1971 = scalar_lea.vmem %s27, 8
  %v1972 = vld [vmem:[%s1971] sm:$0xf]
  %1973 = vrot.lane.b32.xlu0 %v1850, 7
  %v1974 = vpop.permute.xlu0 %1973
  %s1975 = scalar_lea.vmem %s9, 2
  %v1976 = vld [vmem:[%s1975] sm:$0x1]
  %v1978 = vlaneseq
  %v1979 = vshrl.u32 %v1978, 7
  %v1980 = vsub.s32 0, %v1979
  %v1981 = vrot.slane %v1976, %v1980
  %v1983 = vmul.f32 %v1974, %v1981
  %v1984 = vpack.c.bf16 %v1983, %v1983
  %v1986 = vsel %vm1877, %v1972, 0
  %v1989 = vsel %vm1881, %v1984, 0
  %1991 = vmatprep.subr.bf16.mxu0 0
  %1992 = vmatpush1.bf16.msra.mxu0 %v1989
  %1993 = vmatprep.subr.bf16.mxu0 0
  %1994 = vmatpush1.bf16.msra.mxu0 0
  %1995 = vmatprep.subr.bf16.mxu0 0
  %1996 = vmatpush1.bf16.msra.mxu0 0
  %1997 = vmatprep.subr.bf16.mxu0 0
  %1998 = vmatpush1.bf16.msra.mxu0 0
  %1999 = vmatprep.subr.bf16.mxu0 0
  %2000 = vmatpush1.bf16.msra.mxu0 0
  %2001 = vmatprep.subr.bf16.mxu0 0
  %2002 = vmatpush1.bf16.msra.mxu0 0
  %2003 = vmatprep.subr.bf16.mxu0 0
  %2004 = vmatpush1.bf16.msra.mxu0 0
  %2005 = vmatprep.subr.bf16.mxu0 0
  %2006 = vmatpush1.bf16.msra.mxu0 0
  %2007 = vmatprep.subr.bf16.mxu0 0
  %2008 = vmatpush1.bf16.msra.mxu0 0
  %2009 = vmatprep.subr.bf16.mxu0 0
  %2010 = vmatpush1.bf16.msra.mxu0 0
  %2011 = vmatprep.subr.bf16.mxu0 0
  %2012 = vmatpush1.bf16.msra.mxu0 0
  %2013 = vmatprep.subr.bf16.mxu0 0
  %2014 = vmatpush1.bf16.msra.mxu0 0
  %2015 = vmatprep.subr.bf16.mxu0 0
  %2016 = vmatpush1.bf16.msra.mxu0 0
  %2017 = vmatprep.subr.bf16.mxu0 0
  %2018 = vmatpush1.bf16.msra.mxu0 0
  %2019 = vmatprep.subr.bf16.mxu0 0
  %2020 = vmatpush1.bf16.msra.mxu0 0
  %2021 = vmatprep.subr.bf16.mxu0 0
  %2022 = vmatpush1.bf16.msra.mxu0 0
  %2023 = vmatprep.mubr.bf16.mxu0 0
  %2024 = vmatmul.mubr.bf16.gmra.mrb[0].mxu0 %v1986
  %v2025 = vpop.f32.mrb[0].mxu0
  %v2026 = vadd.f32 0.0, %v2025
  %v2027 = vpop.f32.mrb[0].mxu0
  %v2028 = vpop.f32.mrb[0].mxu0
  %v2029 = vpop.f32.mrb[0].mxu0
  %2030 = vdwg.mxu0
  %v2031 = vadd.f32 %v1966, %v2026
  %s2032 = scalar_lea.vmem %s27, 12
  %v2033 = vld [vmem:[%s2032] sm:$0xf]
  %2034 = vrot.lane.b32.xlu0 %v1850, 1
  %v2035 = vpop.permute.xlu0 %2034
  %s2036 = scalar_lea.vmem %s9, 3
  %v2037 = vld [vmem:[%s2036] sm:$0x1]
  %v2039 = vlaneseq
  %v2040 = vshrl.u32 %v2039, 7
  %v2041 = vsub.s32 0, %v2040
  %v2042 = vrot.slane %v2037, %v2041
  %v2044 = vmul.f32 %v2035, %v2042
  %v2045 = vpack.c.bf16 %v2044, %v2044
  %v2047 = vsel %vm1877, %v2033, 0
  %v2050 = vsel %vm1881, %v2045, 0
  %2052 = vmatprep.subr.bf16.mxu0 0
  %2053 = vmatpush1.bf16.msra.mxu0 %v2050
  %2054 = vmatprep.subr.bf16.mxu0 0
  %2055 = vmatpush1.bf16.msra.mxu0 0
  %2056 = vmatprep.subr.bf16.mxu0 0
  %2057 = vmatpush1.bf16.msra.mxu0 0
  %2058 = vmatprep.subr.bf16.mxu0 0
  %2059 = vmatpush1.bf16.msra.mxu0 0
  %2060 = vmatprep.subr.bf16.mxu0 0
  %2061 = vmatpush1.bf16.msra.mxu0 0
  %2062 = vmatprep.subr.bf16.mxu0 0
  %2063 = vmatpush1.bf16.msra.mxu0 0
  %2064 = vmatprep.subr.bf16.mxu0 0
  %2065 = vmatpush1.bf16.msra.mxu0 0
  %2066 = vmatprep.subr.bf16.mxu0 0
  %2067 = vmatpush1.bf16.msra.mxu0 0
  %2068 = vmatprep.subr.bf16.mxu0 0
  %2069 = vmatpush1.bf16.msra.mxu0 0
  %2070 = vmatprep.subr.bf16.mxu0 0
  %2071 = vmatpush1.bf16.msra.mxu0 0
  %2072 = vmatprep.subr.bf16.mxu0 0
  %2073 = vmatpush1.bf16.msra.mxu0 0
  %2074 = vmatprep.subr.bf16.mxu0 0
  %2075 = vmatpush1.bf16.msra.mxu0 0
  %2076 = vmatprep.subr.bf16.mxu0 0
  %2077 = vmatpush1.bf16.msra.mxu0 0
  %2078 = vmatprep.subr.bf16.mxu0 0
  %2079 = vmatpush1.bf16.msra.mxu0 0
  %2080 = vmatprep.subr.bf16.mxu0 0
  %2081 = vmatpush1.bf16.msra.mxu0 0
  %2082 = vmatprep.subr.bf16.mxu0 0
  %2083 = vmatpush1.bf16.msra.mxu0 0
  %2084 = vmatprep.mubr.bf16.mxu0 0
  %2085 = vmatmul.mubr.bf16.gmra.mrb[0].mxu0 %v2047
  %v2086 = vpop.f32.mrb[0].mxu0
  %v2087 = vadd.f32 0.0, %v2086
  %v2088 = vpop.f32.mrb[0].mxu0
  %v2089 = vpop.f32.mrb[0].mxu0
  %v2090 = vpop.f32.mrb[0].mxu0
  %2091 = vdwg.mxu0
  %v2092 = vadd.f32 %v2031, %v2087
  %s2093 = scalar_lea.vmem %s27, 16
  %v2094 = vld [vmem:[%s2093] sm:$0xf]
  %v2095 = vpack.c.bf16 %v1850, %v1850
  %v2097 = vsel %vm1877, %v2094, 0
  %v2100 = vsel %vm1881, %v2095, 0
  %2102 = vmatprep.subr.bf16.mxu0 0
  %2103 = vmatpush1.bf16.msra.mxu0 %v2100
  %2104 = vmatprep.subr.bf16.mxu0 0
  %2105 = vmatpush1.bf16.msra.mxu0 0
  %2106 = vmatprep.subr.bf16.mxu0 0
  %2107 = vmatpush1.bf16.msra.mxu0 0
  %2108 = vmatprep.subr.bf16.mxu0 0
  %2109 = vmatpush1.bf16.msra.mxu0 0
  %2110 = vmatprep.subr.bf16.mxu0 0
  %2111 = vmatpush1.bf16.msra.mxu0 0
  %2112 = vmatprep.subr.bf16.mxu0 0
  %2113 = vmatpush1.bf16.msra.mxu0 0
  %2114 = vmatprep.subr.bf16.mxu0 0
  %2115 = vmatpush1.bf16.msra.mxu0 0
  %2116 = vmatprep.subr.bf16.mxu0 0
  %2117 = vmatpush1.bf16.msra.mxu0 0
  %2118 = vmatprep.subr.bf16.mxu0 0
  %2119 = vmatpush1.bf16.msra.mxu0 0
  %2120 = vmatprep.subr.bf16.mxu0 0
  %2121 = vmatpush1.bf16.msra.mxu0 0
  %2122 = vmatprep.subr.bf16.mxu0 0
  %2123 = vmatpush1.bf16.msra.mxu0 0
  %2124 = vmatprep.subr.bf16.mxu0 0
  %2125 = vmatpush1.bf16.msra.mxu0 0
  %2126 = vmatprep.subr.bf16.mxu0 0
  %2127 = vmatpush1.bf16.msra.mxu0 0
  %2128 = vmatprep.subr.bf16.mxu0 0
  %2129 = vmatpush1.bf16.msra.mxu0 0
  %2130 = vmatprep.subr.bf16.mxu0 0
  %2131 = vmatpush1.bf16.msra.mxu0 0
  %2132 = vmatprep.subr.bf16.mxu0 0
  %2133 = vmatpush1.bf16.msra.mxu0 0
  %2134 = vmatprep.mubr.bf16.mxu0 0
  %2135 = vmatmul.mubr.bf16.gmra.mrb[0].mxu0 %v2097
  %v2136 = vpop.f32.mrb[0].mxu0
  %v2137 = vadd.f32 0.0, %v2136
  %v2138 = vpop.f32.mrb[0].mxu0
  %v2139 = vpop.f32.mrb[0].mxu0
  %v2140 = vpop.f32.mrb[0].mxu0
  %2141 = vdwg.mxu0
  %v2142 = vadd.f32 %v2092, %v2137
  %s2143 = scalar_lea.vmem %s27, 20
  %v2144 = vld [vmem:[%s2143] sm:$0xf]
  %2145 = vrot.lane.b32.xlu0 %v1850, 127
  %v2146 = vpop.permute.xlu0 %2145
  %s2147 = scalar_lea.vmem %s9, 5
  %v2148 = vld [vmem:[%s2147] sm:$0x1]
  %v2150 = vlaneseq
  %v2151 = vshrl.u32 %v2150, 7
  %v2152 = vsub.s32 0, %v2151
  %v2153 = vrot.slane %v2148, %v2152
  %v2155 = vmul.f32 %v2146, %v2153
  %v2156 = vpack.c.bf16 %v2155, %v2155
  %v2158 = vsel %vm1877, %v2144, 0
  %v2161 = vsel %vm1881, %v2156, 0
  %2163 = vmatprep.subr.bf16.mxu0 0
  %2164 = vmatpush1.bf16.msra.mxu0 %v2161
  %2165 = vmatprep.subr.bf16.mxu0 0
  %2166 = vmatpush1.bf16.msra.mxu0 0
  %2167 = vmatprep.subr.bf16.mxu0 0
  %2168 = vmatpush1.bf16.msra.mxu0 0
  %2169 = vmatprep.subr.bf16.mxu0 0
  %2170 = vmatpush1.bf16.msra.mxu0 0
  %2171 = vmatprep.subr.bf16.mxu0 0
  %2172 = vmatpush1.bf16.msra.mxu0 0
  %2173 = vmatprep.subr.bf16.mxu0 0
  %2174 = vmatpush1.bf16.msra.mxu0 0
  %2175 = vmatprep.subr.bf16.mxu0 0
  %2176 = vmatpush1.bf16.msra.mxu0 0
  %2177 = vmatprep.subr.bf16.mxu0 0
  %2178 = vmatpush1.bf16.msra.mxu0 0
  %2179 = vmatprep.subr.bf16.mxu0 0
  %2180 = vmatpush1.bf16.msra.mxu0 0
  %2181 = vmatprep.subr.bf16.mxu0 0
  %2182 = vmatpush1.bf16.msra.mxu0 0
  %2183 = vmatprep.subr.bf16.mxu0 0
  %2184 = vmatpush1.bf16.msra.mxu0 0
  %2185 = vmatprep.subr.bf16.mxu0 0
  %2186 = vmatpush1.bf16.msra.mxu0 0
  %2187 = vmatprep.subr.bf16.mxu0 0
  %2188 = vmatpush1.bf16.msra.mxu0 0
  %2189 = vmatprep.subr.bf16.mxu0 0
  %2190 = vmatpush1.bf16.msra.mxu0 0
  %2191 = vmatprep.subr.bf16.mxu0 0
  %2192 = vmatpush1.bf16.msra.mxu0 0
  %2193 = vmatprep.subr.bf16.mxu0 0
  %2194 = vmatpush1.bf16.msra.mxu0 0
  %2195 = vmatprep.mubr.bf16.mxu0 0
  %2196 = vmatmul.mubr.bf16.gmra.mrb[0].mxu0 %v2158
  %v2197 = vpop.f32.mrb[0].mxu0
  %v2198 = vadd.f32 0.0, %v2197
  %v2199 = vpop.f32.mrb[0].mxu0
  %v2200 = vpop.f32.mrb[0].mxu0
  %v2201 = vpop.f32.mrb[0].mxu0
  %2202 = vdwg.mxu0
  %v2203 = vadd.f32 %v2142, %v2198
  %s2204 = scalar_lea.vmem %s27, 24
  %v2205 = vld [vmem:[%s2204] sm:$0xf]
  %2206 = vrot.lane.b32.xlu0 %v1850, 121
  %v2207 = vpop.permute.xlu0 %2206
  %s2208 = scalar_lea.vmem %s9, 6
  %v2209 = vld [vmem:[%s2208] sm:$0x1]
  %v2211 = vlaneseq
  %v2212 = vshrl.u32 %v2211, 7
  %v2213 = vsub.s32 0, %v2212
  %v2214 = vrot.slane %v2209, %v2213
  %v2216 = vmul.f32 %v2207, %v2214
  %v2217 = vpack.c.bf16 %v2216, %v2216
  %v2219 = vsel %vm1877, %v2205, 0
  %v2222 = vsel %vm1881, %v2217, 0
  %2224 = vmatprep.subr.bf16.mxu0 0
  %2225 = vmatpush1.bf16.msra.mxu0 %v2222
  %2226 = vmatprep.subr.bf16.mxu0 0
  %2227 = vmatpush1.bf16.msra.mxu0 0
  %2228 = vmatprep.subr.bf16.mxu0 0
  %2229 = vmatpush1.bf16.msra.mxu0 0
  %2230 = vmatprep.subr.bf16.mxu0 0
  %2231 = vmatpush1.bf16.msra.mxu0 0
  %2232 = vmatprep.subr.bf16.mxu0 0
  %2233 = vmatpush1.bf16.msra.mxu0 0
  %2234 = vmatprep.subr.bf16.mxu0 0
  %2235 = vmatpush1.bf16.msra.mxu0 0
  %2236 = vmatprep.subr.bf16.mxu0 0
  %2237 = vmatpush1.bf16.msra.mxu0 0
  %2238 = vmatprep.subr.bf16.mxu0 0
  %2239 = vmatpush1.bf16.msra.mxu0 0
  %2240 = vmatprep.subr.bf16.mxu0 0
  %2241 = vmatpush1.bf16.msra.mxu0 0
  %2242 = vmatprep.subr.bf16.mxu0 0
  %2243 = vmatpush1.bf16.msra.mxu0 0
  %2244 = vmatprep.subr.bf16.mxu0 0
  %2245 = vmatpush1.bf16.msra.mxu0 0
  %2246 = vmatprep.subr.bf16.mxu0 0
  %2247 = vmatpush1.bf16.msra.mxu0 0
  %2248 = vmatprep.subr.bf16.mxu0 0
  %2249 = vmatpush1.bf16.msra.mxu0 0
  %2250 = vmatprep.subr.bf16.mxu0 0
  %2251 = vmatpush1.bf16.msra.mxu0 0
  %2252 = vmatprep.subr.bf16.mxu0 0
  %2253 = vmatpush1.bf16.msra.mxu0 0
  %2254 = vmatprep.subr.bf16.mxu0 0
  %2255 = vmatpush1.bf16.msra.mxu0 0
  %2256 = vmatprep.mubr.bf16.mxu0 0
  %2257 = vmatmul.mubr.bf16.gmra.mrb[0].mxu0 %v2219
  %v2258 = vpop.f32.mrb[0].mxu0
  %v2259 = vadd.f32 0.0, %v2258
  %v2260 = vpop.f32.mrb[0].mxu0
  %v2261 = vpop.f32.mrb[0].mxu0
  %v2262 = vpop.f32.mrb[0].mxu0
  %2263 = vdwg.mxu0
  %v2264 = vadd.f32 %v2203, %v2259
  %s2265 = scalar_lea.vmem %s27, 28
  %v2266 = vld [vmem:[%s2265] sm:$0xf]
  %2267 = vrot.lane.b32.xlu0 %v1850, 120
  %v2268 = vpop.permute.xlu0 %2267
  %s2269 = scalar_lea.vmem %s9, 7
  %v2270 = vld [vmem:[%s2269] sm:$0x1]
  %v2272 = vlaneseq
  %v2273 = vshrl.u32 %v2272, 7
  %v2274 = vsub.s32 0, %v2273
  %v2275 = vrot.slane %v2270, %v2274
  %v2277 = vmul.f32 %v2268, %v2275
  %v2278 = vpack.c.bf16 %v2277, %v2277
  %v2280 = vsel %vm1877, %v2266, 0
  %v2283 = vsel %vm1881, %v2278, 0
  %2285 = vmatprep.subr.bf16.mxu0 0
  %2286 = vmatpush1.bf16.msra.mxu0 %v2283
  %2287 = vmatprep.subr.bf16.mxu0 0
  %2288 = vmatpush1.bf16.msra.mxu0 0
  %2289 = vmatprep.subr.bf16.mxu0 0
  %2290 = vmatpush1.bf16.msra.mxu0 0
  %2291 = vmatprep.subr.bf16.mxu0 0
  %2292 = vmatpush1.bf16.msra.mxu0 0
  %2293 = vmatprep.subr.bf16.mxu0 0
  %2294 = vmatpush1.bf16.msra.mxu0 0
  %2295 = vmatprep.subr.bf16.mxu0 0
  %2296 = vmatpush1.bf16.msra.mxu0 0
  %2297 = vmatprep.subr.bf16.mxu0 0
  %2298 = vmatpush1.bf16.msra.mxu0 0
  %2299 = vmatprep.subr.bf16.mxu0 0
  %2300 = vmatpush1.bf16.msra.mxu0 0
  %2301 = vmatprep.subr.bf16.mxu0 0
  %2302 = vmatpush1.bf16.msra.mxu0 0
  %2303 = vmatprep.subr.bf16.mxu0 0
  %2304 = vmatpush1.bf16.msra.mxu0 0
  %2305 = vmatprep.subr.bf16.mxu0 0
  %2306 = vmatpush1.bf16.msra.mxu0 0
  %2307 = vmatprep.subr.bf16.mxu0 0
  %2308 = vmatpush1.bf16.msra.mxu0 0
  %2309 = vmatprep.subr.bf16.mxu0 0
  %2310 = vmatpush1.bf16.msra.mxu0 0
  %2311 = vmatprep.subr.bf16.mxu0 0
  %2312 = vmatpush1.bf16.msra.mxu0 0
  %2313 = vmatprep.subr.bf16.mxu0 0
  %2314 = vmatpush1.bf16.msra.mxu0 0
  %2315 = vmatprep.subr.bf16.mxu0 0
  %2316 = vmatpush1.bf16.msra.mxu0 0
  %2317 = vmatprep.mubr.bf16.mxu0 0
  %2318 = vmatmul.mubr.bf16.gmra.mrb[0].mxu0 %v2280
  %v2319 = vpop.f32.mrb[0].mxu0
  %v2320 = vadd.f32 0.0, %v2319
  %v2321 = vpop.f32.mrb[0].mxu0
  %v2322 = vpop.f32.mrb[0].mxu0
  %v2323 = vpop.f32.mrb[0].mxu0
  %2324 = vdwg.mxu0
  %v2325 = vadd.f32 %v2264, %v2320
  %s2326 = scalar_lea.vmem %s27, 32
  %v2327 = vld [vmem:[%s2326] sm:$0xf]
  %2328 = vrot.lane.b32.xlu0 %v1850, 119
  %v2329 = vpop.permute.xlu0 %2328
  %s2330 = scalar_lea.vmem %s9, 8
  %v2331 = vld [vmem:[%s2330] sm:$0x1]
  %v2333 = vlaneseq
  %v2334 = vshrl.u32 %v2333, 7
  %v2335 = vsub.s32 0, %v2334
  %v2336 = vrot.slane %v2331, %v2335
  %v2338 = vmul.f32 %v2329, %v2336
  %v2339 = vpack.c.bf16 %v2338, %v2338
  %v2341 = vsel %vm1877, %v2327, 0
  %v2344 = vsel %vm1881, %v2339, 0
  %2346 = vmatprep.subr.bf16.mxu0 0
  %2347 = vmatpush1.bf16.msra.mxu0 %v2344
  %2348 = vmatprep.subr.bf16.mxu0 0
  %2349 = vmatpush1.bf16.msra.mxu0 0
  %2350 = vmatprep.subr.bf16.mxu0 0
  %2351 = vmatpush1.bf16.msra.mxu0 0
  %2352 = vmatprep.subr.bf16.mxu0 0
  %2353 = vmatpush1.bf16.msra.mxu0 0
  %2354 = vmatprep.subr.bf16.mxu0 0
  %2355 = vmatpush1.bf16.msra.mxu0 0
  %2356 = vmatprep.subr.bf16.mxu0 0
  %2357 = vmatpush1.bf16.msra.mxu0 0
  %2358 = vmatprep.subr.bf16.mxu0 0
  %2359 = vmatpush1.bf16.msra.mxu0 0
  %2360 = vmatprep.subr.bf16.mxu0 0
  %2361 = vmatpush1.bf16.msra.mxu0 0
  %2362 = vmatprep.subr.bf16.mxu0 0
  %2363 = vmatpush1.bf16.msra.mxu0 0
  %2364 = vmatprep.subr.bf16.mxu0 0
  %2365 = vmatpush1.bf16.msra.mxu0 0
  %2366 = vmatprep.subr.bf16.mxu0 0
  %2367 = vmatpush1.bf16.msra.mxu0 0
  %2368 = vmatprep.subr.bf16.mxu0 0
  %2369 = vmatpush1.bf16.msra.mxu0 0
  %2370 = vmatprep.subr.bf16.mxu0 0
  %2371 = vmatpush1.bf16.msra.mxu0 0
  %2372 = vmatprep.subr.bf16.mxu0 0
  %2373 = vmatpush1.bf16.msra.mxu0 0
  %2374 = vmatprep.subr.bf16.mxu0 0
  %2375 = vmatpush1.bf16.msra.mxu0 0
  %2376 = vmatprep.subr.bf16.mxu0 0
  %2377 = vmatpush1.bf16.msra.mxu0 0
  %2378 = vmatprep.mubr.bf16.mxu0 0
  %2379 = vmatmul.mubr.bf16.gmra.mrb[0].mxu0 %v2341
  %v2380 = vpop.f32.mrb[0].mxu0
  %v2381 = vadd.f32 0.0, %v2380
  %v2382 = vpop.f32.mrb[0].mxu0
  %v2383 = vpop.f32.mrb[0].mxu0
  %v2384 = vpop.f32.mrb[0].mxu0
  %2385 = vdwg.mxu0
  %v2386 = vadd.f32 %v2325, %v2381
  %v2387 = vld [vmem:[%s23] sm:$0xff]
  %v2388 = vld [vmem:[%s19] sm:$0xff]
  %2389 = vadd.xlane.f32.xlu0 %v2386
  %v2390 = vpop.xlane.xlu0 %2389
  %v2391 = vmul.f32 %v2390, 0.0078125
  %v2392 = vsub.f32 %v2386, %v2391
  %v2393 = vmul.f32 %v2392, %v2392
  %2394 = vadd.xlane.f32.xlu0 %v2393
  %v2395 = vpop.xlane.xlu0 %2394
  %v2396 = vmul.f32 %v2395, 0.0078125
  %v2397 = vadd.f32 %v2396, 1e-05
  %v2398 = vrsqrt.pop %v2397
  %v2399 = vmul.f32 %v2392, %v2398
  %2401 = vset.pattern.permute.xlu0 0
  %2402 = vperm.xlu0 %2401, %v2387
  %v2403 = vpop.permute.xlu0 %2402
  %v2405 = vmul.f32 %v2399, %v2403
  %2407 = vset.pattern.permute.xlu0 0
  %2408 = vperm.xlu0 %2407, %v2388
  %v2409 = vpop.permute.xlu0 %2408
  %v2411 = vadd.f32 %v2405, %v2409
  %vm2412 = vcmp.ge.f32.partialorder %v2411, 0.0
  %v2413 = vmul.f32 %v2411, 0.01
  %v2414 = vsel %vm2412, %v2411, %v2413
  %v2415 = vld [vmem:[%s37] sm:$0xf]
  %v2416 = vld [vmem:[%s37 + $0x4] sm:$0xf]
  %2417 = vrot.lane.b32.xlu0 %v2414, 9
  %v2418 = vpop.permute.xlu0 %2417
  %v2419 = vmul.f32 %v2418, %v1859
  %v2420 = vpack.c.bf16 %v2419, %v2419
  %s2421 = scalar_lea.vmem %s37, 8
  %v2422 = vld [vmem:[%s2421] sm:$0xf]
  %v2423 = vld [vmem:[%s2421 + $0x4] sm:$0xf]
  %2424 = vrot.lane.b32.xlu0 %v2414, 8
  %v2425 = vpop.permute.xlu0 %2424
  %v2426 = vmul.f32 %v2425, %v1873
  %v2427 = vpack.c.bf16 %v2426, %v2426
  %v2430 = vunpack.c.l.b16 %v2422
  %v2431 = vunpack.c.l.b16 %v2423
  %v2432 = vpack.c.b16 %v2431, %v2430
  %v2434 = vsel %vm1877, %v2432, 0
  %v2437 = vsel %vm1881, %v2427, 0
  %2439 = vmatprep.subr.bf16.mxu0 0
  %2440 = vmatpush1.bf16.msra.mxu0 %v2437
  %2441 = vmatprep.subr.bf16.mxu0 0
  %2442 = vmatpush1.bf16.msra.mxu0 0
  %2443 = vmatprep.subr.bf16.mxu0 0
  %2444 = vmatpush1.bf16.msra.mxu0 0
  %2445 = vmatprep.subr.bf16.mxu0 0
  %2446 = vmatpush1.bf16.msra.mxu0 0
  %2447 = vmatprep.subr.bf16.mxu0 0
  %2448 = vmatpush1.bf16.msra.mxu0 0
  %2449 = vmatprep.subr.bf16.mxu0 0
  %2450 = vmatpush1.bf16.msra.mxu0 0
  %2451 = vmatprep.subr.bf16.mxu0 0
  %2452 = vmatpush1.bf16.msra.mxu0 0
  %2453 = vmatprep.subr.bf16.mxu0 0
  %2454 = vmatpush1.bf16.msra.mxu0 0
  %2455 = vmatprep.subr.bf16.mxu0 0
  %2456 = vmatpush1.bf16.msra.mxu0 0
  %2457 = vmatprep.subr.bf16.mxu0 0
  %2458 = vmatpush1.bf16.msra.mxu0 0
  %2459 = vmatprep.subr.bf16.mxu0 0
  %2460 = vmatpush1.bf16.msra.mxu0 0
  %2461 = vmatprep.subr.bf16.mxu0 0
  %2462 = vmatpush1.bf16.msra.mxu0 0
  %2463 = vmatprep.subr.bf16.mxu0 0
  %2464 = vmatpush1.bf16.msra.mxu0 0
  %2465 = vmatprep.subr.bf16.mxu0 0
  %2466 = vmatpush1.bf16.msra.mxu0 0
  %2467 = vmatprep.subr.bf16.mxu0 0
  %2468 = vmatpush1.bf16.msra.mxu0 0
  %2469 = vmatprep.subr.bf16.mxu0 0
  %2470 = vmatpush1.bf16.msra.mxu0 0
  %2471 = vmatprep.mubr.bf16.mxu0 0
  %2472 = vmatmul.mubr.bf16.gmra.mrb[0].mxu0 %v2434
  %v2473 = vpop.f32.mrb[0].mxu0
  %v2474 = vadd.f32 0.0, %v2473
  %v2475 = vpop.f32.mrb[0].mxu0
  %v2476 = vpop.f32.mrb[0].mxu0
  %v2477 = vadd.f32 0.0, %v2476
  %v2478 = vpop.f32.mrb[0].mxu0
  %2479 = vdwg.mxu0
  %v2482 = vunpack.c.l.b16 %v2415
  %v2483 = vunpack.c.l.b16 %v2416
  %v2484 = vpack.c.b16 %v2483, %v2482
  %v2486 = vsel %vm1877, %v2484, 0
  %v2489 = vsel %vm1881, %v2420, 0
  %2491 = vmatprep.subr.bf16.mxu0 0
  %2492 = vmatpush1.bf16.msra.mxu0 %v2489
  %2493 = vmatprep.subr.bf16.mxu0 0
  %2494 = vmatpush1.bf16.msra.mxu0 0
  %2495 = vmatprep.subr.bf16.mxu0 0
  %2496 = vmatpush1.bf16.msra.mxu0 0
  %2497 = vmatprep.subr.bf16.mxu0 0
  %2498 = vmatpush1.bf16.msra.mxu0 0
  %2499 = vmatprep.subr.bf16.mxu0 0
  %2500 = vmatpush1.bf16.msra.mxu0 0
  %2501 = vmatprep.subr.bf16.mxu0 0
  %2502 = vmatpush1.bf16.msra.mxu0 0
  %2503 = vmatprep.subr.bf16.mxu0 0
  %2504 = vmatpush1.bf16.msra.mxu0 0
  %2505 = vmatprep.subr.bf16.mxu0 0
  %2506 = vmatpush1.bf16.msra.mxu0 0
  %2507 = vmatprep.subr.bf16.mxu0 0
  %2508 = vmatpush1.bf16.msra.mxu0 0
  %2509 = vmatprep.subr.bf16.mxu0 0
  %2510 = vmatpush1.bf16.msra.mxu0 0
  %2511 = vmatprep.subr.bf16.mxu0 0
  %2512 = vmatpush1.bf16.msra.mxu0 0
  %2513 = vmatprep.subr.bf16.mxu0 0
  %2514 = vmatpush1.bf16.msra.mxu0 0
  %2515 = vmatprep.subr.bf16.mxu0 0
  %2516 = vmatpush1.bf16.msra.mxu0 0
  %2517 = vmatprep.subr.bf16.mxu0 0
  %2518 = vmatpush1.bf16.msra.mxu0 0
  %2519 = vmatprep.subr.bf16.mxu0 0
  %2520 = vmatpush1.bf16.msra.mxu0 0
  %2521 = vmatprep.subr.bf16.mxu0 0
  %2522 = vmatpush1.bf16.msra.mxu0 0
  %2523 = vmatprep.mubr.bf16.mxu0 0
  %2524 = vmatmul.mubr.bf16.gmra.mrb[0].mxu0 %v2486
  %v2525 = vpop.f32.mrb[0].mxu0
  %v2526 = vadd.f32 %v2474, %v2525
  %v2527 = vpop.f32.mrb[0].mxu0
  %v2528 = vpop.f32.mrb[0].mxu0
  %v2529 = vadd.f32 %v2477, %v2528
  %v2530 = vpop.f32.mrb[0].mxu0
  %2531 = vdwg.mxu0
  %s2532 = scalar_lea.vmem %s37, 16
  %v2533 = vld [vmem:[%s2532] sm:$0xf]
  %v2534 = vld [vmem:[%s2532 + $0x4] sm:$0xf]
  %2535 = vrot.lane.b32.xlu0 %v2414, 7
  %v2536 = vpop.permute.xlu0 %2535
  %v2537 = vmul.f32 %v2536, %v1981
  %v2538 = vpack.c.bf16 %v2537, %v2537
  %v2541 = vunpack.c.l.b16 %v2533
  %v2542 = vunpack.c.l.b16 %v2534
  %v2543 = vpack.c.b16 %v2542, %v2541
  %v2545 = vsel %vm1877, %v2543, 0
  %v2548 = vsel %vm1881, %v2538, 0
  %2550 = vmatprep.subr.bf16.mxu0 0
  %2551 = vmatpush1.bf16.msra.mxu0 %v2548
  %2552 = vmatprep.subr.bf16.mxu0 0
  %2553 = vmatpush1.bf16.msra.mxu0 0
  %2554 = vmatprep.subr.bf16.mxu0 0
  %2555 = vmatpush1.bf16.msra.mxu0 0
  %2556 = vmatprep.subr.bf16.mxu0 0
  %2557 = vmatpush1.bf16.msra.mxu0 0
  %2558 = vmatprep.subr.bf16.mxu0 0
  %2559 = vmatpush1.bf16.msra.mxu0 0
  %2560 = vmatprep.subr.bf16.mxu0 0
  %2561 = vmatpush1.bf16.msra.mxu0 0
  %2562 = vmatprep.subr.bf16.mxu0 0
  %2563 = vmatpush1.bf16.msra.mxu0 0
  %2564 = vmatprep.subr.bf16.mxu0 0
  %2565 = vmatpush1.bf16.msra.mxu0 0
  %2566 = vmatprep.subr.bf16.mxu0 0
  %2567 = vmatpush1.bf16.msra.mxu0 0
  %2568 = vmatprep.subr.bf16.mxu0 0
  %2569 = vmatpush1.bf16.msra.mxu0 0
  %2570 = vmatprep.subr.bf16.mxu0 0
  %2571 = vmatpush1.bf16.msra.mxu0 0
  %2572 = vmatprep.subr.bf16.mxu0 0
  %2573 = vmatpush1.bf16.msra.mxu0 0
  %2574 = vmatprep.subr.bf16.mxu0 0
  %2575 = vmatpush1.bf16.msra.mxu0 0
  %2576 = vmatprep.subr.bf16.mxu0 0
  %2577 = vmatpush1.bf16.msra.mxu0 0
  %2578 = vmatprep.subr.bf16.mxu0 0
  %2579 = vmatpush1.bf16.msra.mxu0 0
  %2580 = vmatprep.subr.bf16.mxu0 0
  %2581 = vmatpush1.bf16.msra.mxu0 0
  %2582 = vmatprep.mubr.bf16.mxu0 0
  %2583 = vmatmul.mubr.bf16.gmra.mrb[0].mxu0 %v2545
  %v2584 = vpop.f32.mrb[0].mxu0
  %v2585 = vadd.f32 0.0, %v2584
  %v2586 = vpop.f32.mrb[0].mxu0
  %v2587 = vpop.f32.mrb[0].mxu0
  %v2588 = vadd.f32 0.0, %v2587
  %v2589 = vpop.f32.mrb[0].mxu0
  %2590 = vdwg.mxu0
  %v2591 = vadd.f32 %v2526, %v2585
  %v2592 = vadd.f32 %v2529, %v2588
  %s2593 = scalar_lea.vmem %s37, 24
  %v2594 = vld [vmem:[%s2593] sm:$0xf]
  %v2595 = vld [vmem:[%s2593 + $0x4] sm:$0xf]
  %2596 = vrot.lane.b32.xlu0 %v2414, 1
  %v2597 = vpop.permute.xlu0 %2596
  %v2598 = vmul.f32 %v2597, %v2042
  %v2599 = vpack.c.bf16 %v2598, %v2598
  %v2602 = vunpack.c.l.b16 %v2594
  %v2603 = vunpack.c.l.b16 %v2595
  %v2604 = vpack.c.b16 %v2603, %v2602
  %v2606 = vsel %vm1877, %v2604, 0
  %v2609 = vsel %vm1881, %v2599, 0
  %2611 = vmatprep.subr.bf16.mxu0 0
  %2612 = vmatpush1.bf16.msra.mxu0 %v2609
  %2613 = vmatprep.subr.bf16.mxu0 0
  %2614 = vmatpush1.bf16.msra.mxu0 0
  %2615 = vmatprep.subr.bf16.mxu0 0
  %2616 = vmatpush1.bf16.msra.mxu0 0
  %2617 = vmatprep.subr.bf16.mxu0 0
  %2618 = vmatpush1.bf16.msra.mxu0 0
  %2619 = vmatprep.subr.bf16.mxu0 0
  %2620 = vmatpush1.bf16.msra.mxu0 0
  %2621 = vmatprep.subr.bf16.mxu0 0
  %2622 = vmatpush1.bf16.msra.mxu0 0
  %2623 = vmatprep.subr.bf16.mxu0 0
  %2624 = vmatpush1.bf16.msra.mxu0 0
  %2625 = vmatprep.subr.bf16.mxu0 0
  %2626 = vmatpush1.bf16.msra.mxu0 0
  %2627 = vmatprep.subr.bf16.mxu0 0
  %2628 = vmatpush1.bf16.msra.mxu0 0
  %2629 = vmatprep.subr.bf16.mxu0 0
  %2630 = vmatpush1.bf16.msra.mxu0 0
  %2631 = vmatprep.subr.bf16.mxu0 0
  %2632 = vmatpush1.bf16.msra.mxu0 0
  %2633 = vmatprep.subr.bf16.mxu0 0
  %2634 = vmatpush1.bf16.msra.mxu0 0
  %2635 = vmatprep.subr.bf16.mxu0 0
  %2636 = vmatpush1.bf16.msra.mxu0 0
  %2637 = vmatprep.subr.bf16.mxu0 0
  %2638 = vmatpush1.bf16.msra.mxu0 0
  %2639 = vmatprep.subr.bf16.mxu0 0
  %2640 = vmatpush1.bf16.msra.mxu0 0
  %2641 = vmatprep.subr.bf16.mxu0 0
  %2642 = vmatpush1.bf16.msra.mxu0 0
  %2643 = vmatprep.mubr.bf16.mxu0 0
  %2644 = vmatmul.mubr.bf16.gmra.mrb[0].mxu0 %v2606
  %v2645 = vpop.f32.mrb[0].mxu0
  %v2646 = vadd.f32 0.0, %v2645
  %v2647 = vpop.f32.mrb[0].mxu0
  %v2648 = vpop.f32.mrb[0].mxu0
  %v2649 = vadd.f32 0.0, %v2648
  %v2650 = vpop.f32.mrb[0].mxu0
  %2651 = vdwg.mxu0
  %v2652 = vadd.f32 %v2591, %v2646
  %v2653 = vadd.f32 %v2592, %v2649
  %s2654 = scalar_lea.vmem %s37, 32
  %v2655 = vld [vmem:[%s2654] sm:$0xf]
  %v2656 = vld [vmem:[%s2654 + $0x4] sm:$0xf]
  %v2657 = vpack.c.bf16 %v2414, %v2414
  %v2660 = vunpack.c.l.b16 %v2655
  %v2661 = vunpack.c.l.b16 %v2656
  %v2662 = vpack.c.b16 %v2661, %v2660
  %v2664 = vsel %vm1877, %v2662, 0
  %v2667 = vsel %vm1881, %v2657, 0
  %2669 = vmatprep.subr.bf16.mxu0 0
  %2670 = vmatpush1.bf16.msra.mxu0 %v2667
  %2671 = vmatprep.subr.bf16.mxu0 0
  %2672 = vmatpush1.bf16.msra.mxu0 0
  %2673 = vmatprep.subr.bf16.mxu0 0
  %2674 = vmatpush1.bf16.msra.mxu0 0
  %2675 = vmatprep.subr.bf16.mxu0 0
  %2676 = vmatpush1.bf16.msra.mxu0 0
  %2677 = vmatprep.subr.bf16.mxu0 0
  %2678 = vmatpush1.bf16.msra.mxu0 0
  %2679 = vmatprep.subr.bf16.mxu0 0
  %2680 = vmatpush1.bf16.msra.mxu0 0
  %2681 = vmatprep.subr.bf16.mxu0 0
  %2682 = vmatpush1.bf16.msra.mxu0 0
  %2683 = vmatprep.subr.bf16.mxu0 0
  %2684 = vmatpush1.bf16.msra.mxu0 0
  %2685 = vmatprep.subr.bf16.mxu0 0
  %2686 = vmatpush1.bf16.msra.mxu0 0
  %2687 = vmatprep.subr.bf16.mxu0 0
  %2688 = vmatpush1.bf16.msra.mxu0 0
  %2689 = vmatprep.subr.bf16.mxu0 0
  %2690 = vmatpush1.bf16.msra.mxu0 0
  %2691 = vmatprep.subr.bf16.mxu0 0
  %2692 = vmatpush1.bf16.msra.mxu0 0
  %2693 = vmatprep.subr.bf16.mxu0 0
  %2694 = vmatpush1.bf16.msra.mxu0 0
  %2695 = vmatprep.subr.bf16.mxu0 0
  %2696 = vmatpush1.bf16.msra.mxu0 0
  %2697 = vmatprep.subr.bf16.mxu0 0
  %2698 = vmatpush1.bf16.msra.mxu0 0
  %2699 = vmatprep.subr.bf16.mxu0 0
  %2700 = vmatpush1.bf16.msra.mxu0 0
  %2701 = vmatprep.mubr.bf16.mxu0 0
  %2702 = vmatmul.mubr.bf16.gmra.mrb[0].mxu0 %v2664
  %v2703 = vpop.f32.mrb[0].mxu0
  %v2704 = vadd.f32 0.0, %v2703
  %v2705 = vpop.f32.mrb[0].mxu0
  %v2706 = vpop.f32.mrb[0].mxu0
  %v2707 = vadd.f32 0.0, %v2706
  %v2708 = vpop.f32.mrb[0].mxu0
  %2709 = vdwg.mxu0
  %v2710 = vadd.f32 %v2652, %v2704
  %v2711 = vadd.f32 %v2653, %v2707
  %s2712 = scalar_lea.vmem %s37, 40
  %v2713 = vld [vmem:[%s2712] sm:$0xf]
  %v2714 = vld [vmem:[%s2712 + $0x4] sm:$0xf]
  %2715 = vrot.lane.b32.xlu0 %v2414, 127
  %v2716 = vpop.permute.xlu0 %2715
  %v2717 = vmul.f32 %v2716, %v2153
  %v2718 = vpack.c.bf16 %v2717, %v2717
  %v2721 = vunpack.c.l.b16 %v2713
  %v2722 = vunpack.c.l.b16 %v2714
  %v2723 = vpack.c.b16 %v2722, %v2721
  %v2725 = vsel %vm1877, %v2723, 0
  %v2728 = vsel %vm1881, %v2718, 0
  %2730 = vmatprep.subr.bf16.mxu0 0
  %2731 = vmatpush1.bf16.msra.mxu0 %v2728
  %2732 = vmatprep.subr.bf16.mxu0 0
  %2733 = vmatpush1.bf16.msra.mxu0 0
  %2734 = vmatprep.subr.bf16.mxu0 0
  %2735 = vmatpush1.bf16.msra.mxu0 0
  %2736 = vmatprep.subr.bf16.mxu0 0
  %2737 = vmatpush1.bf16.msra.mxu0 0
  %2738 = vmatprep.subr.bf16.mxu0 0
  %2739 = vmatpush1.bf16.msra.mxu0 0
  %2740 = vmatprep.subr.bf16.mxu0 0
  %2741 = vmatpush1.bf16.msra.mxu0 0
  %2742 = vmatprep.subr.bf16.mxu0 0
  %2743 = vmatpush1.bf16.msra.mxu0 0
  %2744 = vmatprep.subr.bf16.mxu0 0
  %2745 = vmatpush1.bf16.msra.mxu0 0
  %2746 = vmatprep.subr.bf16.mxu0 0
  %2747 = vmatpush1.bf16.msra.mxu0 0
  %2748 = vmatprep.subr.bf16.mxu0 0
  %2749 = vmatpush1.bf16.msra.mxu0 0
  %2750 = vmatprep.subr.bf16.mxu0 0
  %2751 = vmatpush1.bf16.msra.mxu0 0
  %2752 = vmatprep.subr.bf16.mxu0 0
  %2753 = vmatpush1.bf16.msra.mxu0 0
  %2754 = vmatprep.subr.bf16.mxu0 0
  %2755 = vmatpush1.bf16.msra.mxu0 0
  %2756 = vmatprep.subr.bf16.mxu0 0
  %2757 = vmatpush1.bf16.msra.mxu0 0
  %2758 = vmatprep.subr.bf16.mxu0 0
  %2759 = vmatpush1.bf16.msra.mxu0 0
  %2760 = vmatprep.subr.bf16.mxu0 0
  %2761 = vmatpush1.bf16.msra.mxu0 0
  %2762 = vmatprep.mubr.bf16.mxu0 0
  %2763 = vmatmul.mubr.bf16.gmra.mrb[0].mxu0 %v2725
  %v2764 = vpop.f32.mrb[0].mxu0
  %v2765 = vadd.f32 0.0, %v2764
  %v2766 = vpop.f32.mrb[0].mxu0
  %v2767 = vpop.f32.mrb[0].mxu0
  %v2768 = vadd.f32 0.0, %v2767
  %v2769 = vpop.f32.mrb[0].mxu0
  %2770 = vdwg.mxu0
  %v2771 = vadd.f32 %v2710, %v2765
  %v2772 = vadd.f32 %v2711, %v2768
  %s2773 = scalar_lea.vmem %s37, 48
  %v2774 = vld [vmem:[%s2773] sm:$0xf]
  %v2775 = vld [vmem:[%s2773 + $0x4] sm:$0xf]
  %2776 = vrot.lane.b32.xlu0 %v2414, 121
  %v2777 = vpop.permute.xlu0 %2776
  %v2778 = vmul.f32 %v2777, %v2214
  %v2779 = vpack.c.bf16 %v2778, %v2778
  %v2782 = vunpack.c.l.b16 %v2774
  %v2783 = vunpack.c.l.b16 %v2775
  %v2784 = vpack.c.b16 %v2783, %v2782
  %v2786 = vsel %vm1877, %v2784, 0
  %v2789 = vsel %vm1881, %v2779, 0
  %2791 = vmatprep.subr.bf16.mxu0 0
  %2792 = vmatpush1.bf16.msra.mxu0 %v2789
  %2793 = vmatprep.subr.bf16.mxu0 0
  %2794 = vmatpush1.bf16.msra.mxu0 0
  %2795 = vmatprep.subr.bf16.mxu0 0
  %2796 = vmatpush1.bf16.msra.mxu0 0
  %2797 = vmatprep.subr.bf16.mxu0 0
  %2798 = vmatpush1.bf16.msra.mxu0 0
  %2799 = vmatprep.subr.bf16.mxu0 0
  %2800 = vmatpush1.bf16.msra.mxu0 0
  %2801 = vmatprep.subr.bf16.mxu0 0
  %2802 = vmatpush1.bf16.msra.mxu0 0
  %2803 = vmatprep.subr.bf16.mxu0 0
  %2804 = vmatpush1.bf16.msra.mxu0 0
  %2805 = vmatprep.subr.bf16.mxu0 0
  %2806 = vmatpush1.bf16.msra.mxu0 0
  %2807 = vmatprep.subr.bf16.mxu0 0
  %2808 = vmatpush1.bf16.msra.mxu0 0
  %2809 = vmatprep.subr.bf16.mxu0 0
  %2810 = vmatpush1.bf16.msra.mxu0 0
  %2811 = vmatprep.subr.bf16.mxu0 0
  %2812 = vmatpush1.bf16.msra.mxu0 0
  %2813 = vmatprep.subr.bf16.mxu0 0
  %2814 = vmatpush1.bf16.msra.mxu0 0
  %2815 = vmatprep.subr.bf16.mxu0 0
  %2816 = vmatpush1.bf16.msra.mxu0 0
  %2817 = vmatprep.subr.bf16.mxu0 0
  %2818 = vmatpush1.bf16.msra.mxu0 0
  %2819 = vmatprep.subr.bf16.mxu0 0
  %2820 = vmatpush1.bf16.msra.mxu0 0
  %2821 = vmatprep.subr.bf16.mxu0 0
  %2822 = vmatpush1.bf16.msra.mxu0 0
  %2823 = vmatprep.mubr.bf16.mxu0 0
  %2824 = vmatmul.mubr.bf16.gmra.mrb[0].mxu0 %v2786
  %v2825 = vpop.f32.mrb[0].mxu0
  %v2826 = vadd.f32 0.0, %v2825
  %v2827 = vpop.f32.mrb[0].mxu0
  %v2828 = vpop.f32.mrb[0].mxu0
  %v2829 = vadd.f32 0.0, %v2828
  %v2830 = vpop.f32.mrb[0].mxu0
  %2831 = vdwg.mxu0
  %v2832 = vadd.f32 %v2771, %v2826
  %v2833 = vadd.f32 %v2772, %v2829
  %s2834 = scalar_lea.vmem %s37, 56
  %v2835 = vld [vmem:[%s2834] sm:$0xf]
  %v2836 = vld [vmem:[%s2834 + $0x4] sm:$0xf]
  %2837 = vrot.lane.b32.xlu0 %v2414, 120
  %v2838 = vpop.permute.xlu0 %2837
  %v2839 = vmul.f32 %v2838, %v2275
  %v2840 = vpack.c.bf16 %v2839, %v2839
  %v2843 = vunpack.c.l.b16 %v2835
  %v2844 = vunpack.c.l.b16 %v2836
  %v2845 = vpack.c.b16 %v2844, %v2843
  %v2847 = vsel %vm1877, %v2845, 0
  %v2850 = vsel %vm1881, %v2840, 0
  %2852 = vmatprep.subr.bf16.mxu0 0
  %2853 = vmatpush1.bf16.msra.mxu0 %v2850
  %2854 = vmatprep.subr.bf16.mxu0 0
  %2855 = vmatpush1.bf16.msra.mxu0 0
  %2856 = vmatprep.subr.bf16.mxu0 0
  %2857 = vmatpush1.bf16.msra.mxu0 0
  %2858 = vmatprep.subr.bf16.mxu0 0
  %2859 = vmatpush1.bf16.msra.mxu0 0
  %2860 = vmatprep.subr.bf16.mxu0 0
  %2861 = vmatpush1.bf16.msra.mxu0 0
  %2862 = vmatprep.subr.bf16.mxu0 0
  %2863 = vmatpush1.bf16.msra.mxu0 0
  %2864 = vmatprep.subr.bf16.mxu0 0
  %2865 = vmatpush1.bf16.msra.mxu0 0
  %2866 = vmatprep.subr.bf16.mxu0 0
  %2867 = vmatpush1.bf16.msra.mxu0 0
  %2868 = vmatprep.subr.bf16.mxu0 0
  %2869 = vmatpush1.bf16.msra.mxu0 0
  %2870 = vmatprep.subr.bf16.mxu0 0
  %2871 = vmatpush1.bf16.msra.mxu0 0
  %2872 = vmatprep.subr.bf16.mxu0 0
  %2873 = vmatpush1.bf16.msra.mxu0 0
  %2874 = vmatprep.subr.bf16.mxu0 0
  %2875 = vmatpush1.bf16.msra.mxu0 0
  %2876 = vmatprep.subr.bf16.mxu0 0
  %2877 = vmatpush1.bf16.msra.mxu0 0
  %2878 = vmatprep.subr.bf16.mxu0 0
  %2879 = vmatpush1.bf16.msra.mxu0 0
  %2880 = vmatprep.subr.bf16.mxu0 0
  %2881 = vmatpush1.bf16.msra.mxu0 0
  %2882 = vmatprep.subr.bf16.mxu0 0
  %2883 = vmatpush1.bf16.msra.mxu0 0
  %2884 = vmatprep.mubr.bf16.mxu0 0
  %2885 = vmatmul.mubr.bf16.gmra.mrb[0].mxu0 %v2847
  %v2886 = vpop.f32.mrb[0].mxu0
  %v2887 = vadd.f32 0.0, %v2886
  %v2888 = vpop.f32.mrb[0].mxu0
  %v2889 = vpop.f32.mrb[0].mxu0
  %v2890 = vadd.f32 0.0, %v2889
  %v2891 = vpop.f32.mrb[0].mxu0
  %2892 = vdwg.mxu0
  %v2893 = vadd.f32 %v2832, %v2887
  %v2894 = vadd.f32 %v2833, %v2890
  %s2895 = scalar_lea.vmem %s37, 64
  %v2896 = vld [vmem:[%s2895] sm:$0xf]
  %v2897 = vld [vmem:[%s2895 + $0x4] sm:$0xf]
  %2898 = vrot.lane.b32.xlu0 %v2414, 119
  %v2899 = vpop.permute.xlu0 %2898
  %v2900 = vmul.f32 %v2899, %v2336
  %v2901 = vpack.c.bf16 %v2900, %v2900
  %v2904 = vunpack.c.l.b16 %v2896
  %v2905 = vunpack.c.l.b16 %v2897
  %v2906 = vpack.c.b16 %v2905, %v2904
  %v2908 = vsel %vm1877, %v2906, 0
  %v2911 = vsel %vm1881, %v2901, 0
  %2913 = vmatprep.subr.bf16.mxu0 0
  %2914 = vmatpush1.bf16.msra.mxu0 %v2911
  %2915 = vmatprep.subr.bf16.mxu0 0
  %2916 = vmatpush1.bf16.msra.mxu0 0
  %2917 = vmatprep.subr.bf16.mxu0 0
  %2918 = vmatpush1.bf16.msra.mxu0 0
  %2919 = vmatprep.subr.bf16.mxu0 0
  %2920 = vmatpush1.bf16.msra.mxu0 0
  %2921 = vmatprep.subr.bf16.mxu0 0
  %2922 = vmatpush1.bf16.msra.mxu0 0
  %2923 = vmatprep.subr.bf16.mxu0 0
  %2924 = vmatpush1.bf16.msra.mxu0 0
  %2925 = vmatprep.subr.bf16.mxu0 0
  %2926 = vmatpush1.bf16.msra.mxu0 0
  %2927 = vmatprep.subr.bf16.mxu0 0
  %2928 = vmatpush1.bf16.msra.mxu0 0
  %2929 = vmatprep.subr.bf16.mxu0 0
  %2930 = vmatpush1.bf16.msra.mxu0 0
  %2931 = vmatprep.subr.bf16.mxu0 0
  %2932 = vmatpush1.bf16.msra.mxu0 0
  %2933 = vmatprep.subr.bf16.mxu0 0
  %2934 = vmatpush1.bf16.msra.mxu0 0
  %2935 = vmatprep.subr.bf16.mxu0 0
  %2936 = vmatpush1.bf16.msra.mxu0 0
  %2937 = vmatprep.subr.bf16.mxu0 0
  %2938 = vmatpush1.bf16.msra.mxu0 0
  %2939 = vmatprep.subr.bf16.mxu0 0
  %2940 = vmatpush1.bf16.msra.mxu0 0
  %2941 = vmatprep.subr.bf16.mxu0 0
  %2942 = vmatpush1.bf16.msra.mxu0 0
  %2943 = vmatprep.subr.bf16.mxu0 0
  %2944 = vmatpush1.bf16.msra.mxu0 0
  %2945 = vmatprep.mubr.bf16.mxu0 0
  %2946 = vmatmul.mubr.bf16.gmra.mrb[0].mxu0 %v2908
  %v2947 = vpop.f32.mrb[0].mxu0
  %v2948 = vadd.f32 0.0, %v2947
  %v2949 = vpop.f32.mrb[0].mxu0
  %v2950 = vpop.f32.mrb[0].mxu0
  %v2951 = vadd.f32 0.0, %v2950
  %v2952 = vpop.f32.mrb[0].mxu0
  %2953 = vdwg.mxu0
  %v2954 = vadd.f32 %v2893, %v2948
  %v2955 = vadd.f32 %v2894, %v2951
  %v2956 = vpack.c.bf16 %v2955, %v2954
  %v2957 = vld [vmem:[%s5] sm:$0xf]
  %v2958 = vld [vmem:[%s5 + $0x4] sm:$0xf]
  %v2959 = vld [vmem:[%s5 + $0x8] sm:$0xf]
  %v2960 = vld [vmem:[%s5 + $0xc] sm:$0xf]
  %v2961 = vld [vmem:[%s5 + $0x10] sm:$0xf]
  %v2962 = vld [vmem:[%s5 + $0x14] sm:$0xf]
  %v2963 = vld [vmem:[%s5 + $0x18] sm:$0xf]
  %v2964 = vld [vmem:[%s5 + $0x1c] sm:$0xf]
  %v2965 = vld [vmem:[%s5 + $0x20] sm:$0xf]
  %v2966 = vld [vmem:[%s5 + $0x24] sm:$0xf]
  %v2967 = vld [vmem:[%s5 + $0x28] sm:$0xf]
  %v2968 = vld [vmem:[%s5 + $0x2c] sm:$0xf]
  %v2969 = vld [vmem:[%s5 + $0x30] sm:$0xf]
  %v2970 = vld [vmem:[%s5 + $0x34] sm:$0xf]
  %v2971 = vld [vmem:[%s5 + $0x38] sm:$0xf]
  %v2972 = vld [vmem:[%s5 + $0x3c] sm:$0xf]
  %v2989 = vunpack.c.l.b16 %v2957
  %v2990 = vunpack.c.l.b16 %v2958
  %v2991 = vunpack.c.l.b16 %v2959
  %v2992 = vunpack.c.l.b16 %v2960
  %v2993 = vunpack.c.l.b16 %v2961
  %v2994 = vunpack.c.l.b16 %v2962
  %v2995 = vunpack.c.l.b16 %v2963
  %v2996 = vunpack.c.l.b16 %v2964
  %v2997 = vunpack.c.l.b16 %v2965
  %v2998 = vunpack.c.l.b16 %v2966
  %v2999 = vunpack.c.l.b16 %v2967
  %v3000 = vunpack.c.l.b16 %v2968
  %v3001 = vunpack.c.l.b16 %v2969
  %v3002 = vunpack.c.l.b16 %v2970
  %v3003 = vunpack.c.l.b16 %v2971
  %v3004 = vunpack.c.l.b16 %v2972
  %v3005 = vpack.c.b16 %v2990, %v2989
  %v3006 = vpack.c.b16 %v2992, %v2991
  %v3007 = vpack.c.b16 %v2994, %v2993
  %v3008 = vpack.c.b16 %v2996, %v2995
  %v3009 = vpack.c.b16 %v2998, %v2997
  %v3010 = vpack.c.b16 %v3000, %v2999
  %v3011 = vpack.c.b16 %v3002, %v3001
  %v3012 = vpack.c.b16 %v3004, %v3003
  %3021 = vmatprep.subr.bf16.mxu0 0
  %3022 = vmatpush1.bf16.msra.mxu0 %v3005
  %3023 = vmatprep.subr.bf16.mxu0 0
  %3024 = vmatpush1.bf16.msra.mxu0 %v3006
  %3025 = vmatprep.subr.bf16.mxu0 0
  %3026 = vmatpush1.bf16.msra.mxu0 %v3007
  %3027 = vmatprep.subr.bf16.mxu0 0
  %3028 = vmatpush1.bf16.msra.mxu0 %v3008
  %3029 = vmatprep.subr.bf16.mxu0 0
  %3030 = vmatpush1.bf16.msra.mxu0 %v3009
  %3031 = vmatprep.subr.bf16.mxu0 0
  %3032 = vmatpush1.bf16.msra.mxu0 %v3010
  %3033 = vmatprep.subr.bf16.mxu0 0
  %3034 = vmatpush1.bf16.msra.mxu0 %v3011
  %3035 = vmatprep.subr.bf16.mxu0 0
  %3036 = vmatpush1.bf16.msra.mxu0 %v3012
  %3037 = vmatprep.subr.bf16.mxu0 0
  %3038 = vmatpush1.bf16.msra.mxu0 0
  %3039 = vmatprep.subr.bf16.mxu0 0
  %3040 = vmatpush1.bf16.msra.mxu0 0
  %3041 = vmatprep.subr.bf16.mxu0 0
  %3042 = vmatpush1.bf16.msra.mxu0 0
  %3043 = vmatprep.subr.bf16.mxu0 0
  %3044 = vmatpush1.bf16.msra.mxu0 0
  %3045 = vmatprep.subr.bf16.mxu0 0
  %3046 = vmatpush1.bf16.msra.mxu0 0
  %3047 = vmatprep.subr.bf16.mxu0 0
  %3048 = vmatpush1.bf16.msra.mxu0 0
  %3049 = vmatprep.subr.bf16.mxu0 0
  %3050 = vmatpush1.bf16.msra.mxu0 0
  %3051 = vmatprep.subr.bf16.mxu0 0
  %3052 = vmatpush1.bf16.msra.mxu0 0
  %3053 = vmatprep.mubr.bf16.mxu0 0
  %3054 = vmatmul.mubr.bf16.gmra.mrb[0].mxu0 %v2956
  %v3055 = vpop.f32.mrb[0].mxu0
  %v3056 = vadd.f32 0.0, %v3055
  %v3057 = vpop.f32.mrb[0].mxu0
  %v3058 = vpop.f32.mrb[0].mxu0
  %v3059 = vadd.f32 0.0, %v3058
  %v3060 = vpop.f32.mrb[0].mxu0
  %3061 = vdwg.mxu0
  %v3062 = vld [vmem:[%s33] sm:$0xff]
  %v3063 = vld [vmem:[%s33 + $0x8] sm:$0xff]
  %v3064 = vld [vmem:[%s29] sm:$0xff]
  %v3065 = vld [vmem:[%s29 + $0x8] sm:$0xff]
  %vm3066 = vcmask 261120
  %v3067 = vsel %vm3066, %v3056, 0.0
  %3068 = vadd.xlane.f32.xlu0 %v3067
  %v3069 = vpop.xlane.xlu0 %3068
  %v3070 = vsel %vm3066, %v3059, 0.0
  %3071 = vadd.xlane.f32.xlu0 %v3070
  %v3072 = vpop.xlane.xlu0 %3071
  %v3073 = vmul.f32 %v3069, 0.03125
  %v3074 = vmul.f32 %v3072, 0.03125
  %v3075 = vsub.f32 %v3056, %v3073
  %v3076 = vsub.f32 %v3059, %v3074
  %v3077 = vmul.f32 %v3075, %v3075
  %v3078 = vmul.f32 %v3076, %v3076
  %v3079 = vsel %vm3066, %v3077, 0.0
  %3080 = vadd.xlane.f32.xlu0 %v3079
  %v3081 = vpop.xlane.xlu0 %3080
  %v3082 = vsel %vm3066, %v3078, 0.0
  %3083 = vadd.xlane.f32.xlu0 %v3082
  %v3084 = vpop.xlane.xlu0 %3083
  %v3085 = vmul.f32 %v3081, 0.03125
  %v3086 = vmul.f32 %v3084, 0.03125
  %v3087 = vadd.f32 %v3085, 1e-05
  %v3088 = vadd.f32 %v3086, 1e-05
  %v3089 = vrsqrt.pop %v3087
  %v3090 = vrsqrt.pop %v3088
  %v3091 = vmul.f32 %v3075, %v3089
  %v3092 = vmul.f32 %v3076, %v3090
  %3094 = vset.pattern.permute.xlu0 0
  %3095 = vperm.xlu0 %3094, %v3062
  %v3096 = vpop.permute.xlu0 %3095
  %3099 = vset.pattern.permute.xlu0 0
  %3100 = vperm.xlu0 %3099, %v3063
  %v3101 = vpop.permute.xlu0 %3100
  %v3103 = vmul.f32 %v3091, %v3096
  %v3104 = vmul.f32 %v3092, %v3101
  %3106 = vset.pattern.permute.xlu0 0
  %3107 = vperm.xlu0 %3106, %v3064
  %v3108 = vpop.permute.xlu0 %3107
  %3111 = vset.pattern.permute.xlu0 0
  %3112 = vperm.xlu0 %3111, %v3065
  %v3113 = vpop.permute.xlu0 %3112
  %v3115 = vadd.f32 %v3103, %v3108
  %v3116 = vadd.f32 %v3104, %v3113
  %vm3117 = vcmp.ge.f32.partialorder %v3115, 0.0
  %vm3118 = vcmp.ge.f32.partialorder %v3116, 0.0
  %v3119 = vmul.f32 %v3115, 0.01
  %v3120 = vmul.f32 %v3116, 0.01
  %v3121 = vsel %vm3117, %v3115, %v3119
  %v3122 = vsel %vm3118, %v3116, %v3120
  %v3123 = vld [vmem:[%s39] sm:$0xf]
  %v3124 = vld [vmem:[%s39 + $0x4] sm:$0xf]
  %v3125 = vpack.c.bf16 %v3122, %v3121
  %v3126 = vld [vmem:[%s11] sm:$0xf]
  %v3127 = vld [vmem:[%s11 + $0x4] sm:$0xf]
  %v3128 = vld [vmem:[%s11 + $0x8] sm:$0xf]
  %v3129 = vld [vmem:[%s11 + $0xc] sm:$0xf]
  %v3134 = vunpack.c.l.b16 %v3126
  %v3135 = vunpack.c.l.b16 %v3127
  %v3136 = vunpack.c.l.b16 %v3128
  %v3137 = vunpack.c.l.b16 %v3129
  %v3138 = vpack.c.b16 %v3135, %v3134
  %v3139 = vpack.c.b16 %v3137, %v3136
  %v3143 = vsel %vm3066, %v3125, 0
  %3145 = vmatprep.subr.bf16.mxu0 0
  %3146 = vmatpush1.bf16.msra.mxu0 %v3138
  %3147 = vmatprep.subr.bf16.mxu0 0
  %3148 = vmatpush1.bf16.msra.mxu0 %v3139
  %3149 = vmatprep.subr.bf16.mxu0 0
  %3150 = vmatpush1.bf16.msra.mxu0 0
  %3151 = vmatprep.subr.bf16.mxu0 0
  %3152 = vmatpush1.bf16.msra.mxu0 0
  %3153 = vmatprep.subr.bf16.mxu0 0
  %3154 = vmatpush1.bf16.msra.mxu0 0
  %3155 = vmatprep.subr.bf16.mxu0 0
  %3156 = vmatpush1.bf16.msra.mxu0 0
  %3157 = vmatprep.subr.bf16.mxu0 0
  %3158 = vmatpush1.bf16.msra.mxu0 0
  %3159 = vmatprep.subr.bf16.mxu0 0
  %3160 = vmatpush1.bf16.msra.mxu0 0
  %3161 = vmatprep.subr.bf16.mxu0 0
  %3162 = vmatpush1.bf16.msra.mxu0 0
  %3163 = vmatprep.subr.bf16.mxu0 0
  %3164 = vmatpush1.bf16.msra.mxu0 0
  %3165 = vmatprep.subr.bf16.mxu0 0
  %3166 = vmatpush1.bf16.msra.mxu0 0
  %3167 = vmatprep.subr.bf16.mxu0 0
  %3168 = vmatpush1.bf16.msra.mxu0 0
  %3169 = vmatprep.subr.bf16.mxu0 0
  %3170 = vmatpush1.bf16.msra.mxu0 0
  %3171 = vmatprep.subr.bf16.mxu0 0
  %3172 = vmatpush1.bf16.msra.mxu0 0
  %3173 = vmatprep.subr.bf16.mxu0 0
  %3174 = vmatpush1.bf16.msra.mxu0 0
  %3175 = vmatprep.subr.bf16.mxu0 0
  %3176 = vmatpush1.bf16.msra.mxu0 0
  %3177 = vmatprep.mubr.bf16.mxu0 0
  %3178 = vmatmul.mubr.bf16.gmra.mrb[0].mxu0 %v3143
  %v3179 = vpop.f32.mrb[0].mxu0
  %v3180 = vadd.f32 0.0, %v3179
  %v3181 = vpop.f32.mrb[0].mxu0
  %v3182 = vpop.f32.mrb[0].mxu0
  %v3183 = vadd.f32 0.0, %v3182
  %v3184 = vpop.f32.mrb[0].mxu0
  %3185 = vdwg.mxu0
  %v3186 = vpack.c.bf16 %v3183, %v3180
  %s3187 = scalar_lea.vmem %s39, 8
  %v3188 = vld [vmem:[%s3187] sm:$0xf]
  %v3189 = vld [vmem:[%s3187 + $0x4] sm:$0xf]
  %s3190 = scalar_lea.vmem %s11, 16
  %v3191 = vld [vmem:[%s3190] sm:$0xf]
  %v3192 = vld [vmem:[%s3190 + $0x4] sm:$0xf]
  %v3193 = vld [vmem:[%s3190 + $0x8] sm:$0xf]
  %v3194 = vld [vmem:[%s3190 + $0xc] sm:$0xf]
  %v3199 = vunpack.c.l.b16 %v3191
  %v3200 = vunpack.c.l.b16 %v3192
  %v3201 = vunpack.c.l.b16 %v3193
  %v3202 = vunpack.c.l.b16 %v3194
  %v3203 = vpack.c.b16 %v3200, %v3199
  %v3204 = vpack.c.b16 %v3202, %v3201
  %3207 = vmatprep.subr.bf16.mxu0 0
  %3208 = vmatpush1.bf16.msra.mxu0 %v3203
  %3209 = vmatprep.subr.bf16.mxu0 0
  %3210 = vmatpush1.bf16.msra.mxu0 %v3204
  %3211 = vmatprep.subr.bf16.mxu0 0
  %3212 = vmatpush1.bf16.msra.mxu0 0
  %3213 = vmatprep.subr.bf16.mxu0 0
  %3214 = vmatpush1.bf16.msra.mxu0 0
  %3215 = vmatprep.subr.bf16.mxu0 0
  %3216 = vmatpush1.bf16.msra.mxu0 0
  %3217 = vmatprep.subr.bf16.mxu0 0
  %3218 = vmatpush1.bf16.msra.mxu0 0
  %3219 = vmatprep.subr.bf16.mxu0 0
  %3220 = vmatpush1.bf16.msra.mxu0 0
  %3221 = vmatprep.subr.bf16.mxu0 0
  %3222 = vmatpush1.bf16.msra.mxu0 0
  %3223 = vmatprep.subr.bf16.mxu0 0
  %3224 = vmatpush1.bf16.msra.mxu0 0
  %3225 = vmatprep.subr.bf16.mxu0 0
  %3226 = vmatpush1.bf16.msra.mxu0 0
  %3227 = vmatprep.subr.bf16.mxu0 0
  %3228 = vmatpush1.bf16.msra.mxu0 0
  %3229 = vmatprep.subr.bf16.mxu0 0
  %3230 = vmatpush1.bf16.msra.mxu0 0
  %3231 = vmatprep.subr.bf16.mxu0 0
  %3232 = vmatpush1.bf16.msra.mxu0 0
  %3233 = vmatprep.subr.bf16.mxu0 0
  %3234 = vmatpush1.bf16.msra.mxu0 0
  %3235 = vmatprep.subr.bf16.mxu0 0
  %3236 = vmatpush1.bf16.msra.mxu0 0
  %3237 = vmatprep.subr.bf16.mxu0 0
  %3238 = vmatpush1.bf16.msra.mxu0 0
  %3239 = vmatprep.mubr.bf16.mxu0 0
  %3240 = vmatmul.mubr.bf16.gmra.mrb[0].mxu0 %v3143
  %v3241 = vpop.f32.mrb[0].mxu0
  %v3242 = vadd.f32 0.0, %v3241
  %v3243 = vpop.f32.mrb[0].mxu0
  %v3244 = vpop.f32.mrb[0].mxu0
  %v3245 = vadd.f32 0.0, %v3244
  %v3246 = vpop.f32.mrb[0].mxu0
  %3247 = vdwg.mxu0
  %v3248 = vpack.c.bf16 %v3245, %v3242
  %v3251 = vunpack.c.l.b16 %v3188
  %v3252 = vunpack.c.l.b16 %v3189
  %v3253 = vpack.c.b16 %v3252, %v3251
  %vm3254 = vcmask 130048
  %v3256 = vsel %vm3254, %v3253, 0
  %3258 = vmatprep.subr.bf16.mxu0 0
  %3259 = vmatpush1.bf16.msra.mxu0 %v3248
  %3260 = vmatprep.subr.bf16.mxu0 0
  %3261 = vmatpush1.bf16.msra.mxu0 0
  %3262 = vmatprep.subr.bf16.mxu0 0
  %3263 = vmatpush1.bf16.msra.mxu0 0
  %3264 = vmatprep.subr.bf16.mxu0 0
  %3265 = vmatpush1.bf16.msra.mxu0 0
  %3266 = vmatprep.subr.bf16.mxu0 0
  %3267 = vmatpush1.bf16.msra.mxu0 0
  %3268 = vmatprep.subr.bf16.mxu0 0
  %3269 = vmatpush1.bf16.msra.mxu0 0
  %3270 = vmatprep.subr.bf16.mxu0 0
  %3271 = vmatpush1.bf16.msra.mxu0 0
  %3272 = vmatprep.subr.bf16.mxu0 0
  %3273 = vmatpush1.bf16.msra.mxu0 0
  %3274 = vmatprep.subr.bf16.mxu0 0
  %3275 = vmatpush1.bf16.msra.mxu0 0
  %3276 = vmatprep.subr.bf16.mxu0 0
  %3277 = vmatpush1.bf16.msra.mxu0 0
  %3278 = vmatprep.subr.bf16.mxu0 0
  %3279 = vmatpush1.bf16.msra.mxu0 0
  %3280 = vmatprep.subr.bf16.mxu0 0
  %3281 = vmatpush1.bf16.msra.mxu0 0
  %3282 = vmatprep.subr.bf16.mxu0 0
  %3283 = vmatpush1.bf16.msra.mxu0 0
  %3284 = vmatprep.subr.bf16.mxu0 0
  %3285 = vmatpush1.bf16.msra.mxu0 0
  %3286 = vmatprep.subr.bf16.mxu0 0
  %3287 = vmatpush1.bf16.msra.mxu0 0
  %3288 = vmatprep.subr.bf16.mxu0 0
  %3289 = vmatpush1.bf16.msra.mxu0 0
  %3290 = vmatprep.mubr.bf16.mxu0 0
  %3291 = vmatmul.mubr.bf16.gmra.mrb[0].mxu0 %v3256
  %v3292 = vpop.f32.mrb[0].mxu0
  %v3293 = vadd.f32 0.0, %v3292
  %v3294 = vpop.f32.mrb[0].mxu0
  %v3295 = vpop.f32.mrb[0].mxu0
  %v3296 = vadd.f32 0.0, %v3295
  %v3297 = vpop.f32.mrb[0].mxu0
  %3298 = vdwg.mxu0
  %v3301 = vunpack.c.l.b16 %v3123
  %v3302 = vunpack.c.l.b16 %v3124
  %v3303 = vpack.c.b16 %v3302, %v3301
  %v3305 = vsel %vm3254, %v3303, 0
  %3307 = vmatprep.subr.bf16.mxu0 0
  %3308 = vmatpush1.bf16.msra.mxu0 %v3186
  %3309 = vmatprep.subr.bf16.mxu0 0
  %3310 = vmatpush1.bf16.msra.mxu0 0
  %3311 = vmatprep.subr.bf16.mxu0 0
  %3312 = vmatpush1.bf16.msra.mxu0 0
  %3313 = vmatprep.subr.bf16.mxu0 0
  %3314 = vmatpush1.bf16.msra.mxu0 0
  %3315 = vmatprep.subr.bf16.mxu0 0
  %3316 = vmatpush1.bf16.msra.mxu0 0
  %3317 = vmatprep.subr.bf16.mxu0 0
  %3318 = vmatpush1.bf16.msra.mxu0 0
  %3319 = vmatprep.subr.bf16.mxu0 0
  %3320 = vmatpush1.bf16.msra.mxu0 0
  %3321 = vmatprep.subr.bf16.mxu0 0
  %3322 = vmatpush1.bf16.msra.mxu0 0
  %3323 = vmatprep.subr.bf16.mxu0 0
  %3324 = vmatpush1.bf16.msra.mxu0 0
  %3325 = vmatprep.subr.bf16.mxu0 0
  %3326 = vmatpush1.bf16.msra.mxu0 0
  %3327 = vmatprep.subr.bf16.mxu0 0
  %3328 = vmatpush1.bf16.msra.mxu0 0
  %3329 = vmatprep.subr.bf16.mxu0 0
  %3330 = vmatpush1.bf16.msra.mxu0 0
  %3331 = vmatprep.subr.bf16.mxu0 0
  %3332 = vmatpush1.bf16.msra.mxu0 0
  %3333 = vmatprep.subr.bf16.mxu0 0
  %3334 = vmatpush1.bf16.msra.mxu0 0
  %3335 = vmatprep.subr.bf16.mxu0 0
  %3336 = vmatpush1.bf16.msra.mxu0 0
  %3337 = vmatprep.subr.bf16.mxu0 0
  %3338 = vmatpush1.bf16.msra.mxu0 0
  %3339 = vmatprep.mubr.bf16.mxu0 0
  %3340 = vmatmul.mubr.bf16.gmra.mrb[0].mxu0 %v3305
  %v3341 = vpop.f32.mrb[0].mxu0
  %v3342 = vadd.f32 %v3293, %v3341
  %v3343 = vpop.f32.mrb[0].mxu0
  %v3344 = vpop.f32.mrb[0].mxu0
  %v3345 = vadd.f32 %v3296, %v3344
  %v3346 = vpop.f32.mrb[0].mxu0
  %3347 = vdwg.mxu0
  %s3348 = scalar_lea.vmem %s39, 16
  %v3349 = vld [vmem:[%s3348] sm:$0xf]
  %v3350 = vld [vmem:[%s3348 + $0x4] sm:$0xf]
  %s3351 = scalar_lea.vmem %s11, 32
  %v3352 = vld [vmem:[%s3351] sm:$0xf]
  %v3353 = vld [vmem:[%s3351 + $0x4] sm:$0xf]
  %v3354 = vld [vmem:[%s3351 + $0x8] sm:$0xf]
  %v3355 = vld [vmem:[%s3351 + $0xc] sm:$0xf]
  %v3360 = vunpack.c.l.b16 %v3352
  %v3361 = vunpack.c.l.b16 %v3353
  %v3362 = vunpack.c.l.b16 %v3354
  %v3363 = vunpack.c.l.b16 %v3355
  %v3364 = vpack.c.b16 %v3361, %v3360
  %v3365 = vpack.c.b16 %v3363, %v3362
  %3368 = vmatprep.subr.bf16.mxu0 0
  %3369 = vmatpush1.bf16.msra.mxu0 %v3364
  %3370 = vmatprep.subr.bf16.mxu0 0
  %3371 = vmatpush1.bf16.msra.mxu0 %v3365
  %3372 = vmatprep.subr.bf16.mxu0 0
  %3373 = vmatpush1.bf16.msra.mxu0 0
  %3374 = vmatprep.subr.bf16.mxu0 0
  %3375 = vmatpush1.bf16.msra.mxu0 0
  %3376 = vmatprep.subr.bf16.mxu0 0
  %3377 = vmatpush1.bf16.msra.mxu0 0
  %3378 = vmatprep.subr.bf16.mxu0 0
  %3379 = vmatpush1.bf16.msra.mxu0 0
  %3380 = vmatprep.subr.bf16.mxu0 0
  %3381 = vmatpush1.bf16.msra.mxu0 0
  %3382 = vmatprep.subr.bf16.mxu0 0
  %3383 = vmatpush1.bf16.msra.mxu0 0
  %3384 = vmatprep.subr.bf16.mxu0 0
  %3385 = vmatpush1.bf16.msra.mxu0 0
  %3386 = vmatprep.subr.bf16.mxu0 0
  %3387 = vmatpush1.bf16.msra.mxu0 0
  %3388 = vmatprep.subr.bf16.mxu0 0
  %3389 = vmatpush1.bf16.msra.mxu0 0
  %3390 = vmatprep.subr.bf16.mxu0 0
  %3391 = vmatpush1.bf16.msra.mxu0 0
  %3392 = vmatprep.subr.bf16.mxu0 0
  %3393 = vmatpush1.bf16.msra.mxu0 0
  %3394 = vmatprep.subr.bf16.mxu0 0
  %3395 = vmatpush1.bf16.msra.mxu0 0
  %3396 = vmatprep.subr.bf16.mxu0 0
  %3397 = vmatpush1.bf16.msra.mxu0 0
  %3398 = vmatprep.subr.bf16.mxu0 0
  %3399 = vmatpush1.bf16.msra.mxu0 0
  %3400 = vmatprep.mubr.bf16.mxu0 0
  %3401 = vmatmul.mubr.bf16.gmra.mrb[0].mxu0 %v3143
  %v3402 = vpop.f32.mrb[0].mxu0
  %v3403 = vadd.f32 0.0, %v3402
  %v3404 = vpop.f32.mrb[0].mxu0
  %v3405 = vpop.f32.mrb[0].mxu0
  %v3406 = vadd.f32 0.0, %v3405
  %v3407 = vpop.f32.mrb[0].mxu0
  %3408 = vdwg.mxu0
  %v3409 = vpack.c.bf16 %v3406, %v3403
  %v3412 = vunpack.c.l.b16 %v3349
  %v3413 = vunpack.c.l.b16 %v3350
  %v3414 = vpack.c.b16 %v3413, %v3412
  %v3416 = vsel %vm3254, %v3414, 0
  %3418 = vmatprep.subr.bf16.mxu0 0
  %3419 = vmatpush1.bf16.msra.mxu0 %v3409
  %3420 = vmatprep.subr.bf16.mxu0 0
  %3421 = vmatpush1.bf16.msra.mxu0 0
  %3422 = vmatprep.subr.bf16.mxu0 0
  %3423 = vmatpush1.bf16.msra.mxu0 0
  %3424 = vmatprep.subr.bf16.mxu0 0
  %3425 = vmatpush1.bf16.msra.mxu0 0
  %3426 = vmatprep.subr.bf16.mxu0 0
  %3427 = vmatpush1.bf16.msra.mxu0 0
  %3428 = vmatprep.subr.bf16.mxu0 0
  %3429 = vmatpush1.bf16.msra.mxu0 0
  %3430 = vmatprep.subr.bf16.mxu0 0
  %3431 = vmatpush1.bf16.msra.mxu0 0
  %3432 = vmatprep.subr.bf16.mxu0 0
  %3433 = vmatpush1.bf16.msra.mxu0 0
  %3434 = vmatprep.subr.bf16.mxu0 0
  %3435 = vmatpush1.bf16.msra.mxu0 0
  %3436 = vmatprep.subr.bf16.mxu0 0
  %3437 = vmatpush1.bf16.msra.mxu0 0
  %3438 = vmatprep.subr.bf16.mxu0 0
  %3439 = vmatpush1.bf16.msra.mxu0 0
  %3440 = vmatprep.subr.bf16.mxu0 0
  %3441 = vmatpush1.bf16.msra.mxu0 0
  %3442 = vmatprep.subr.bf16.mxu0 0
  %3443 = vmatpush1.bf16.msra.mxu0 0
  %3444 = vmatprep.subr.bf16.mxu0 0
  %3445 = vmatpush1.bf16.msra.mxu0 0
  %3446 = vmatprep.subr.bf16.mxu0 0
  %3447 = vmatpush1.bf16.msra.mxu0 0
  %3448 = vmatprep.subr.bf16.mxu0 0
  %3449 = vmatpush1.bf16.msra.mxu0 0
  %3450 = vmatprep.mubr.bf16.mxu0 0
  %3451 = vmatmul.mubr.bf16.gmra.mrb[0].mxu0 %v3416
  %v3452 = vpop.f32.mrb[0].mxu0
  %v3453 = vadd.f32 0.0, %v3452
  %v3454 = vpop.f32.mrb[0].mxu0
  %v3455 = vpop.f32.mrb[0].mxu0
  %v3456 = vadd.f32 0.0, %v3455
  %v3457 = vpop.f32.mrb[0].mxu0
  %3458 = vdwg.mxu0
  %v3459 = vadd.f32 %v3342, %v3453
  %v3460 = vadd.f32 %v3345, %v3456
  %s3461 = scalar_lea.vmem %s39, 24
  %v3462 = vld [vmem:[%s3461] sm:$0xf]
  %v3463 = vld [vmem:[%s3461 + $0x4] sm:$0xf]
  %s3464 = scalar_lea.vmem %s11, 48
  %v3465 = vld [vmem:[%s3464] sm:$0xf]
  %v3466 = vld [vmem:[%s3464 + $0x4] sm:$0xf]
  %v3467 = vld [vmem:[%s3464 + $0x8] sm:$0xf]
  %v3468 = vld [vmem:[%s3464 + $0xc] sm:$0xf]
  %v3473 = vunpack.c.l.b16 %v3465
  %v3474 = vunpack.c.l.b16 %v3466
  %v3475 = vunpack.c.l.b16 %v3467
  %v3476 = vunpack.c.l.b16 %v3468
  %v3477 = vpack.c.b16 %v3474, %v3473
  %v3478 = vpack.c.b16 %v3476, %v3475
  %3481 = vmatprep.subr.bf16.mxu0 0
  %3482 = vmatpush1.bf16.msra.mxu0 %v3477
  %3483 = vmatprep.subr.bf16.mxu0 0
  %3484 = vmatpush1.bf16.msra.mxu0 %v3478
  %3485 = vmatprep.subr.bf16.mxu0 0
  %3486 = vmatpush1.bf16.msra.mxu0 0
  %3487 = vmatprep.subr.bf16.mxu0 0
  %3488 = vmatpush1.bf16.msra.mxu0 0
  %3489 = vmatprep.subr.bf16.mxu0 0
  %3490 = vmatpush1.bf16.msra.mxu0 0
  %3491 = vmatprep.subr.bf16.mxu0 0
  %3492 = vmatpush1.bf16.msra.mxu0 0
  %3493 = vmatprep.subr.bf16.mxu0 0
  %3494 = vmatpush1.bf16.msra.mxu0 0
  %3495 = vmatprep.subr.bf16.mxu0 0
  %3496 = vmatpush1.bf16.msra.mxu0 0
  %3497 = vmatprep.subr.bf16.mxu0 0
  %3498 = vmatpush1.bf16.msra.mxu0 0
  %3499 = vmatprep.subr.bf16.mxu0 0
  %3500 = vmatpush1.bf16.msra.mxu0 0
  %3501 = vmatprep.subr.bf16.mxu0 0
  %3502 = vmatpush1.bf16.msra.mxu0 0
  %3503 = vmatprep.subr.bf16.mxu0 0
  %3504 = vmatpush1.bf16.msra.mxu0 0
  %3505 = vmatprep.subr.bf16.mxu0 0
  %3506 = vmatpush1.bf16.msra.mxu0 0
  %3507 = vmatprep.subr.bf16.mxu0 0
  %3508 = vmatpush1.bf16.msra.mxu0 0
  %3509 = vmatprep.subr.bf16.mxu0 0
  %3510 = vmatpush1.bf16.msra.mxu0 0
  %3511 = vmatprep.subr.bf16.mxu0 0
  %3512 = vmatpush1.bf16.msra.mxu0 0
  %3513 = vmatprep.mubr.bf16.mxu0 0
  %3514 = vmatmul.mubr.bf16.gmra.mrb[0].mxu0 %v3143
  %v3515 = vpop.f32.mrb[0].mxu0
  %v3516 = vadd.f32 0.0, %v3515
  %v3517 = vpop.f32.mrb[0].mxu0
  %v3518 = vpop.f32.mrb[0].mxu0
  %v3519 = vadd.f32 0.0, %v3518
  %v3520 = vpop.f32.mrb[0].mxu0
  %3521 = vdwg.mxu0
  %v3522 = vpack.c.bf16 %v3519, %v3516
  %v3525 = vunpack.c.l.b16 %v3462
  %v3526 = vunpack.c.l.b16 %v3463
  %v3527 = vpack.c.b16 %v3526, %v3525
  %v3529 = vsel %vm3254, %v3527, 0
  %3531 = vmatprep.subr.bf16.mxu0 0
  %3532 = vmatpush1.bf16.msra.mxu0 %v3522
  %3533 = vmatprep.subr.bf16.mxu0 0
  %3534 = vmatpush1.bf16.msra.mxu0 0
  %3535 = vmatprep.subr.bf16.mxu0 0
  %3536 = vmatpush1.bf16.msra.mxu0 0
  %3537 = vmatprep.subr.bf16.mxu0 0
  %3538 = vmatpush1.bf16.msra.mxu0 0
  %3539 = vmatprep.subr.bf16.mxu0 0
  %3540 = vmatpush1.bf16.msra.mxu0 0
  %3541 = vmatprep.subr.bf16.mxu0 0
  %3542 = vmatpush1.bf16.msra.mxu0 0
  %3543 = vmatprep.subr.bf16.mxu0 0
  %3544 = vmatpush1.bf16.msra.mxu0 0
  %3545 = vmatprep.subr.bf16.mxu0 0
  %3546 = vmatpush1.bf16.msra.mxu0 0
  %3547 = vmatprep.subr.bf16.mxu0 0
  %3548 = vmatpush1.bf16.msra.mxu0 0
  %3549 = vmatprep.subr.bf16.mxu0 0
  %3550 = vmatpush1.bf16.msra.mxu0 0
  %3551 = vmatprep.subr.bf16.mxu0 0
  %3552 = vmatpush1.bf16.msra.mxu0 0
  %3553 = vmatprep.subr.bf16.mxu0 0
  %3554 = vmatpush1.bf16.msra.mxu0 0
  %3555 = vmatprep.subr.bf16.mxu0 0
  %3556 = vmatpush1.bf16.msra.mxu0 0
  %3557 = vmatprep.subr.bf16.mxu0 0
  %3558 = vmatpush1.bf16.msra.mxu0 0
  %3559 = vmatprep.subr.bf16.mxu0 0
  %3560 = vmatpush1.bf16.msra.mxu0 0
  %3561 = vmatprep.subr.bf16.mxu0 0
  %3562 = vmatpush1.bf16.msra.mxu0 0
  %3563 = vmatprep.mubr.bf16.mxu0 0
  %3564 = vmatmul.mubr.bf16.gmra.mrb[0].mxu0 %v3529
  %v3565 = vpop.f32.mrb[0].mxu0
  %v3566 = vadd.f32 0.0, %v3565
  %v3567 = vpop.f32.mrb[0].mxu0
  %v3568 = vpop.f32.mrb[0].mxu0
  %v3569 = vadd.f32 0.0, %v3568
  %v3570 = vpop.f32.mrb[0].mxu0
  %3571 = vdwg.mxu0
  %v3572 = vadd.f32 %v3459, %v3566
  %v3573 = vadd.f32 %v3460, %v3569
  %s3574 = scalar_lea.vmem %s39, 32
  %v3575 = vld [vmem:[%s3574] sm:$0xf]
  %v3576 = vld [vmem:[%s3574 + $0x4] sm:$0xf]
  %v3579 = vunpack.c.l.b16 %v3575
  %v3580 = vunpack.c.l.b16 %v3576
  %v3581 = vpack.c.b16 %v3580, %v3579
  %v3583 = vsel %vm3254, %v3581, 0
  %3585 = vmatprep.subr.bf16.mxu0 0
  %3586 = vmatpush1.bf16.msra.mxu0 %v3125
  %3587 = vmatprep.subr.bf16.mxu0 0
  %3588 = vmatpush1.bf16.msra.mxu0 0
  %3589 = vmatprep.subr.bf16.mxu0 0
  %3590 = vmatpush1.bf16.msra.mxu0 0
  %3591 = vmatprep.subr.bf16.mxu0 0
  %3592 = vmatpush1.bf16.msra.mxu0 0
  %3593 = vmatprep.subr.bf16.mxu0 0
  %3594 = vmatpush1.bf16.msra.mxu0 0
  %3595 = vmatprep.subr.bf16.mxu0 0
  %3596 = vmatpush1.bf16.msra.mxu0 0
  %3597 = vmatprep.subr.bf16.mxu0 0
  %3598 = vmatpush1.bf16.msra.mxu0 0
  %3599 = vmatprep.subr.bf16.mxu0 0
  %3600 = vmatpush1.bf16.msra.mxu0 0
  %3601 = vmatprep.subr.bf16.mxu0 0
  %3602 = vmatpush1.bf16.msra.mxu0 0
  %3603 = vmatprep.subr.bf16.mxu0 0
  %3604 = vmatpush1.bf16.msra.mxu0 0
  %3605 = vmatprep.subr.bf16.mxu0 0
  %3606 = vmatpush1.bf16.msra.mxu0 0
  %3607 = vmatprep.subr.bf16.mxu0 0
  %3608 = vmatpush1.bf16.msra.mxu0 0
  %3609 = vmatprep.subr.bf16.mxu0 0
  %3610 = vmatpush1.bf16.msra.mxu0 0
  %3611 = vmatprep.subr.bf16.mxu0 0
  %3612 = vmatpush1.bf16.msra.mxu0 0
  %3613 = vmatprep.subr.bf16.mxu0 0
  %3614 = vmatpush1.bf16.msra.mxu0 0
  %3615 = vmatprep.subr.bf16.mxu0 0
  %3616 = vmatpush1.bf16.msra.mxu0 0
  %3617 = vmatprep.mubr.bf16.mxu0 0
  %3618 = vmatmul.mubr.bf16.gmra.mrb[0].mxu0 %v3583
  %v3619 = vpop.f32.mrb[0].mxu0
  %v3620 = vadd.f32 0.0, %v3619
  %v3621 = vpop.f32.mrb[0].mxu0
  %v3622 = vpop.f32.mrb[0].mxu0
  %v3623 = vadd.f32 0.0, %v3622
  %v3624 = vpop.f32.mrb[0].mxu0
  %3625 = vdwg.mxu0
  %v3626 = vadd.f32 %v3572, %v3620
  %v3627 = vadd.f32 %v3573, %v3623
  %s3628 = scalar_lea.vmem %s39, 40
  %v3629 = vld [vmem:[%s3628] sm:$0xf]
  %v3630 = vld [vmem:[%s3628 + $0x4] sm:$0xf]
  %s3631 = scalar_lea.vmem %s11, 80
  %v3632 = vld [vmem:[%s3631] sm:$0xf]
  %v3633 = vld [vmem:[%s3631 + $0x4] sm:$0xf]
  %v3634 = vld [vmem:[%s3631 + $0x8] sm:$0xf]
  %v3635 = vld [vmem:[%s3631 + $0xc] sm:$0xf]
  %v3640 = vunpack.c.l.b16 %v3632
  %v3641 = vunpack.c.l.b16 %v3633
  %v3642 = vunpack.c.l.b16 %v3634
  %v3643 = vunpack.c.l.b16 %v3635
  %v3644 = vpack.c.b16 %v3641, %v3640
  %v3645 = vpack.c.b16 %v3643, %v3642
  %3648 = vmatprep.subr.bf16.mxu0 0
  %3649 = vmatpush1.bf16.msra.mxu0 %v3644
  %3650 = vmatprep.subr.bf16.mxu0 0
  %3651 = vmatpush1.bf16.msra.mxu0 %v3645
  %3652 = vmatprep.subr.bf16.mxu0 0
  %3653 = vmatpush1.bf16.msra.mxu0 0
  %3654 = vmatprep.subr.bf16.mxu0 0
  %3655 = vmatpush1.bf16.msra.mxu0 0
  %3656 = vmatprep.subr.bf16.mxu0 0
  %3657 = vmatpush1.bf16.msra.mxu0 0
  %3658 = vmatprep.subr.bf16.mxu0 0
  %3659 = vmatpush1.bf16.msra.mxu0 0
  %3660 = vmatprep.subr.bf16.mxu0 0
  %3661 = vmatpush1.bf16.msra.mxu0 0
  %3662 = vmatprep.subr.bf16.mxu0 0
  %3663 = vmatpush1.bf16.msra.mxu0 0
  %3664 = vmatprep.subr.bf16.mxu0 0
  %3665 = vmatpush1.bf16.msra.mxu0 0
  %3666 = vmatprep.subr.bf16.mxu0 0
  %3667 = vmatpush1.bf16.msra.mxu0 0
  %3668 = vmatprep.subr.bf16.mxu0 0
  %3669 = vmatpush1.bf16.msra.mxu0 0
  %3670 = vmatprep.subr.bf16.mxu0 0
  %3671 = vmatpush1.bf16.msra.mxu0 0
  %3672 = vmatprep.subr.bf16.mxu0 0
  %3673 = vmatpush1.bf16.msra.mxu0 0
  %3674 = vmatprep.subr.bf16.mxu0 0
  %3675 = vmatpush1.bf16.msra.mxu0 0
  %3676 = vmatprep.subr.bf16.mxu0 0
  %3677 = vmatpush1.bf16.msra.mxu0 0
  %3678 = vmatprep.subr.bf16.mxu0 0
  %3679 = vmatpush1.bf16.msra.mxu0 0
  %3680 = vmatprep.mubr.bf16.mxu0 0
  %3681 = vmatmul.mubr.bf16.gmra.mrb[0].mxu0 %v3143
  %v3682 = vpop.f32.mrb[0].mxu0
  %v3683 = vadd.f32 0.0, %v3682
  %v3684 = vpop.f32.mrb[0].mxu0
  %v3685 = vpop.f32.mrb[0].mxu0
  %v3686 = vadd.f32 0.0, %v3685
  %v3687 = vpop.f32.mrb[0].mxu0
  %3688 = vdwg.mxu0
  %v3689 = vpack.c.bf16 %v3686, %v3683
  %v3692 = vunpack.c.l.b16 %v3629
  %v3693 = vunpack.c.l.b16 %v3630
  %v3694 = vpack.c.b16 %v3693, %v3692
  %v3696 = vsel %vm3254, %v3694, 0
  %3698 = vmatprep.subr.bf16.mxu0 0
  %3699 = vmatpush1.bf16.msra.mxu0 %v3689
  %3700 = vmatprep.subr.bf16.mxu0 0
  %3701 = vmatpush1.bf16.msra.mxu0 0
  %3702 = vmatprep.subr.bf16.mxu0 0
  %3703 = vmatpush1.bf16.msra.mxu0 0
  %3704 = vmatprep.subr.bf16.mxu0 0
  %3705 = vmatpush1.bf16.msra.mxu0 0
  %3706 = vmatprep.subr.bf16.mxu0 0
  %3707 = vmatpush1.bf16.msra.mxu0 0
  %3708 = vmatprep.subr.bf16.mxu0 0
  %3709 = vmatpush1.bf16.msra.mxu0 0
  %3710 = vmatprep.subr.bf16.mxu0 0
  %3711 = vmatpush1.bf16.msra.mxu0 0
  %3712 = vmatprep.subr.bf16.mxu0 0
  %3713 = vmatpush1.bf16.msra.mxu0 0
  %3714 = vmatprep.subr.bf16.mxu0 0
  %3715 = vmatpush1.bf16.msra.mxu0 0
  %3716 = vmatprep.subr.bf16.mxu0 0
  %3717 = vmatpush1.bf16.msra.mxu0 0
  %3718 = vmatprep.subr.bf16.mxu0 0
  %3719 = vmatpush1.bf16.msra.mxu0 0
  %3720 = vmatprep.subr.bf16.mxu0 0
  %3721 = vmatpush1.bf16.msra.mxu0 0
  %3722 = vmatprep.subr.bf16.mxu0 0
  %3723 = vmatpush1.bf16.msra.mxu0 0
  %3724 = vmatprep.subr.bf16.mxu0 0
  %3725 = vmatpush1.bf16.msra.mxu0 0
  %3726 = vmatprep.subr.bf16.mxu0 0
  %3727 = vmatpush1.bf16.msra.mxu0 0
  %3728 = vmatprep.subr.bf16.mxu0 0
  %3729 = vmatpush1.bf16.msra.mxu0 0
  %3730 = vmatprep.mubr.bf16.mxu0 0
  %3731 = vmatmul.mubr.bf16.gmra.mrb[0].mxu0 %v3696
  %v3732 = vpop.f32.mrb[0].mxu0
  %v3733 = vadd.f32 0.0, %v3732
  %v3734 = vpop.f32.mrb[0].mxu0
  %v3735 = vpop.f32.mrb[0].mxu0
  %v3736 = vadd.f32 0.0, %v3735
  %v3737 = vpop.f32.mrb[0].mxu0
  %3738 = vdwg.mxu0
  %v3739 = vadd.f32 %v3626, %v3733
  %v3740 = vadd.f32 %v3627, %v3736
  %s3741 = scalar_lea.vmem %s39, 48
  %v3742 = vld [vmem:[%s3741] sm:$0xf]
  %v3743 = vld [vmem:[%s3741 + $0x4] sm:$0xf]
  %s3744 = scalar_lea.vmem %s11, 96
  %v3745 = vld [vmem:[%s3744] sm:$0xf]
  %v3746 = vld [vmem:[%s3744 + $0x4] sm:$0xf]
  %v3747 = vld [vmem:[%s3744 + $0x8] sm:$0xf]
  %v3748 = vld [vmem:[%s3744 + $0xc] sm:$0xf]
  %v3753 = vunpack.c.l.b16 %v3745
  %v3754 = vunpack.c.l.b16 %v3746
  %v3755 = vunpack.c.l.b16 %v3747
  %v3756 = vunpack.c.l.b16 %v3748
  %v3757 = vpack.c.b16 %v3754, %v3753
  %v3758 = vpack.c.b16 %v3756, %v3755
  %3761 = vmatprep.subr.bf16.mxu0 0
  %3762 = vmatpush1.bf16.msra.mxu0 %v3757
  %3763 = vmatprep.subr.bf16.mxu0 0
  %3764 = vmatpush1.bf16.msra.mxu0 %v3758
  %3765 = vmatprep.subr.bf16.mxu0 0
  %3766 = vmatpush1.bf16.msra.mxu0 0
  %3767 = vmatprep.subr.bf16.mxu0 0
  %3768 = vmatpush1.bf16.msra.mxu0 0
  %3769 = vmatprep.subr.bf16.mxu0 0
  %3770 = vmatpush1.bf16.msra.mxu0 0
  %3771 = vmatprep.subr.bf16.mxu0 0
  %3772 = vmatpush1.bf16.msra.mxu0 0
  %3773 = vmatprep.subr.bf16.mxu0 0
  %3774 = vmatpush1.bf16.msra.mxu0 0
  %3775 = vmatprep.subr.bf16.mxu0 0
  %3776 = vmatpush1.bf16.msra.mxu0 0
  %3777 = vmatprep.subr.bf16.mxu0 0
  %3778 = vmatpush1.bf16.msra.mxu0 0
  %3779 = vmatprep.subr.bf16.mxu0 0
  %3780 = vmatpush1.bf16.msra.mxu0 0
  %3781 = vmatprep.subr.bf16.mxu0 0
  %3782 = vmatpush1.bf16.msra.mxu0 0
  %3783 = vmatprep.subr.bf16.mxu0 0
  %3784 = vmatpush1.bf16.msra.mxu0 0
  %3785 = vmatprep.subr.bf16.mxu0 0
  %3786 = vmatpush1.bf16.msra.mxu0 0
  %3787 = vmatprep.subr.bf16.mxu0 0
  %3788 = vmatpush1.bf16.msra.mxu0 0
  %3789 = vmatprep.subr.bf16.mxu0 0
  %3790 = vmatpush1.bf16.msra.mxu0 0
  %3791 = vmatprep.subr.bf16.mxu0 0
  %3792 = vmatpush1.bf16.msra.mxu0 0
  %3793 = vmatprep.mubr.bf16.mxu0 0
  %3794 = vmatmul.mubr.bf16.gmra.mrb[0].mxu0 %v3143
  %v3795 = vpop.f32.mrb[0].mxu0
  %v3796 = vadd.f32 0.0, %v3795
  %v3797 = vpop.f32.mrb[0].mxu0
  %v3798 = vpop.f32.mrb[0].mxu0
  %v3799 = vadd.f32 0.0, %v3798
  %v3800 = vpop.f32.mrb[0].mxu0
  %3801 = vdwg.mxu0
  %v3802 = vpack.c.bf16 %v3799, %v3796
  %v3805 = vunpack.c.l.b16 %v3742
  %v3806 = vunpack.c.l.b16 %v3743
  %v3807 = vpack.c.b16 %v3806, %v3805
  %v3809 = vsel %vm3254, %v3807, 0
  %3811 = vmatprep.subr.bf16.mxu0 0
  %3812 = vmatpush1.bf16.msra.mxu0 %v3802
  %3813 = vmatprep.subr.bf16.mxu0 0
  %3814 = vmatpush1.bf16.msra.mxu0 0
  %3815 = vmatprep.subr.bf16.mxu0 0
  %3816 = vmatpush1.bf16.msra.mxu0 0
  %3817 = vmatprep.subr.bf16.mxu0 0
  %3818 = vmatpush1.bf16.msra.mxu0 0
  %3819 = vmatprep.subr.bf16.mxu0 0
  %3820 = vmatpush1.bf16.msra.mxu0 0
  %3821 = vmatprep.subr.bf16.mxu0 0
  %3822 = vmatpush1.bf16.msra.mxu0 0
  %3823 = vmatprep.subr.bf16.mxu0 0
  %3824 = vmatpush1.bf16.msra.mxu0 0
  %3825 = vmatprep.subr.bf16.mxu0 0
  %3826 = vmatpush1.bf16.msra.mxu0 0
  %3827 = vmatprep.subr.bf16.mxu0 0
  %3828 = vmatpush1.bf16.msra.mxu0 0
  %3829 = vmatprep.subr.bf16.mxu0 0
  %3830 = vmatpush1.bf16.msra.mxu0 0
  %3831 = vmatprep.subr.bf16.mxu0 0
  %3832 = vmatpush1.bf16.msra.mxu0 0
  %3833 = vmatprep.subr.bf16.mxu0 0
  %3834 = vmatpush1.bf16.msra.mxu0 0
  %3835 = vmatprep.subr.bf16.mxu0 0
  %3836 = vmatpush1.bf16.msra.mxu0 0
  %3837 = vmatprep.subr.bf16.mxu0 0
  %3838 = vmatpush1.bf16.msra.mxu0 0
  %3839 = vmatprep.subr.bf16.mxu0 0
  %3840 = vmatpush1.bf16.msra.mxu0 0
  %3841 = vmatprep.subr.bf16.mxu0 0
  %3842 = vmatpush1.bf16.msra.mxu0 0
  %3843 = vmatprep.mubr.bf16.mxu0 0
  %3844 = vmatmul.mubr.bf16.gmra.mrb[0].mxu0 %v3809
  %v3845 = vpop.f32.mrb[0].mxu0
  %v3846 = vadd.f32 0.0, %v3845
  %v3847 = vpop.f32.mrb[0].mxu0
  %v3848 = vpop.f32.mrb[0].mxu0
  %v3849 = vadd.f32 0.0, %v3848
  %v3850 = vpop.f32.mrb[0].mxu0
  %3851 = vdwg.mxu0
  %v3852 = vadd.f32 %v3739, %v3846
  %v3853 = vadd.f32 %v3740, %v3849
  %s3854 = scalar_lea.vmem %s39, 56
  %v3855 = vld [vmem:[%s3854] sm:$0xf]
  %v3856 = vld [vmem:[%s3854 + $0x4] sm:$0xf]
  %s3857 = scalar_lea.vmem %s11, 112
  %v3858 = vld [vmem:[%s3857] sm:$0xf]
  %v3859 = vld [vmem:[%s3857 + $0x4] sm:$0xf]
  %v3860 = vld [vmem:[%s3857 + $0x8] sm:$0xf]
  %v3861 = vld [vmem:[%s3857 + $0xc] sm:$0xf]
  %v3866 = vunpack.c.l.b16 %v3858
  %v3867 = vunpack.c.l.b16 %v3859
  %v3868 = vunpack.c.l.b16 %v3860
  %v3869 = vunpack.c.l.b16 %v3861
  %v3870 = vpack.c.b16 %v3867, %v3866
  %v3871 = vpack.c.b16 %v3869, %v3868
  %3874 = vmatprep.subr.bf16.mxu0 0
  %3875 = vmatpush1.bf16.msra.mxu0 %v3870
  %3876 = vmatprep.subr.bf16.mxu0 0
  %3877 = vmatpush1.bf16.msra.mxu0 %v3871
  %3878 = vmatprep.subr.bf16.mxu0 0
  %3879 = vmatpush1.bf16.msra.mxu0 0
  %3880 = vmatprep.subr.bf16.mxu0 0
  %3881 = vmatpush1.bf16.msra.mxu0 0
  %3882 = vmatprep.subr.bf16.mxu0 0
  %3883 = vmatpush1.bf16.msra.mxu0 0
  %3884 = vmatprep.subr.bf16.mxu0 0
  %3885 = vmatpush1.bf16.msra.mxu0 0
  %3886 = vmatprep.subr.bf16.mxu0 0
  %3887 = vmatpush1.bf16.msra.mxu0 0
  %3888 = vmatprep.subr.bf16.mxu0 0
  %3889 = vmatpush1.bf16.msra.mxu0 0
  %3890 = vmatprep.subr.bf16.mxu0 0
  %3891 = vmatpush1.bf16.msra.mxu0 0
  %3892 = vmatprep.subr.bf16.mxu0 0
  %3893 = vmatpush1.bf16.msra.mxu0 0
  %3894 = vmatprep.subr.bf16.mxu0 0
  %3895 = vmatpush1.bf16.msra.mxu0 0
  %3896 = vmatprep.subr.bf16.mxu0 0
  %3897 = vmatpush1.bf16.msra.mxu0 0
  %3898 = vmatprep.subr.bf16.mxu0 0
  %3899 = vmatpush1.bf16.msra.mxu0 0
  %3900 = vmatprep.subr.bf16.mxu0 0
  %3901 = vmatpush1.bf16.msra.mxu0 0
  %3902 = vmatprep.subr.bf16.mxu0 0
  %3903 = vmatpush1.bf16.msra.mxu0 0
  %3904 = vmatprep.subr.bf16.mxu0 0
  %3905 = vmatpush1.bf16.msra.mxu0 0
  %3906 = vmatprep.mubr.bf16.mxu0 0
  %3907 = vmatmul.mubr.bf16.gmra.mrb[0].mxu0 %v3143
  %v3908 = vpop.f32.mrb[0].mxu0
  %v3909 = vadd.f32 0.0, %v3908
  %v3910 = vpop.f32.mrb[0].mxu0
  %v3911 = vpop.f32.mrb[0].mxu0
  %v3912 = vadd.f32 0.0, %v3911
  %v3913 = vpop.f32.mrb[0].mxu0
  %3914 = vdwg.mxu0
  %v3915 = vpack.c.bf16 %v3912, %v3909
  %v3918 = vunpack.c.l.b16 %v3855
  %v3919 = vunpack.c.l.b16 %v3856
  %v3920 = vpack.c.b16 %v3919, %v3918
  %v3922 = vsel %vm3254, %v3920, 0
  %3924 = vmatprep.subr.bf16.mxu0 0
  %3925 = vmatpush1.bf16.msra.mxu0 %v3915
  %3926 = vmatprep.subr.bf16.mxu0 0
  %3927 = vmatpush1.bf16.msra.mxu0 0
  %3928 = vmatprep.subr.bf16.mxu0 0
  %3929 = vmatpush1.bf16.msra.mxu0 0
  %3930 = vmatprep.subr.bf16.mxu0 0
  %3931 = vmatpush1.bf16.msra.mxu0 0
  %3932 = vmatprep.subr.bf16.mxu0 0
  %3933 = vmatpush1.bf16.msra.mxu0 0
  %3934 = vmatprep.subr.bf16.mxu0 0
  %3935 = vmatpush1.bf16.msra.mxu0 0
  %3936 = vmatprep.subr.bf16.mxu0 0
  %3937 = vmatpush1.bf16.msra.mxu0 0
  %3938 = vmatprep.subr.bf16.mxu0 0
  %3939 = vmatpush1.bf16.msra.mxu0 0
  %3940 = vmatprep.subr.bf16.mxu0 0
  %3941 = vmatpush1.bf16.msra.mxu0 0
  %3942 = vmatprep.subr.bf16.mxu0 0
  %3943 = vmatpush1.bf16.msra.mxu0 0
  %3944 = vmatprep.subr.bf16.mxu0 0
  %3945 = vmatpush1.bf16.msra.mxu0 0
  %3946 = vmatprep.subr.bf16.mxu0 0
  %3947 = vmatpush1.bf16.msra.mxu0 0
  %3948 = vmatprep.subr.bf16.mxu0 0
  %3949 = vmatpush1.bf16.msra.mxu0 0
  %3950 = vmatprep.subr.bf16.mxu0 0
  %3951 = vmatpush1.bf16.msra.mxu0 0
  %3952 = vmatprep.subr.bf16.mxu0 0
  %3953 = vmatpush1.bf16.msra.mxu0 0
  %3954 = vmatprep.subr.bf16.mxu0 0
  %3955 = vmatpush1.bf16.msra.mxu0 0
  %3956 = vmatprep.mubr.bf16.mxu0 0
  %3957 = vmatmul.mubr.bf16.gmra.mrb[0].mxu0 %v3922
  %v3958 = vpop.f32.mrb[0].mxu0
  %v3959 = vadd.f32 0.0, %v3958
  %v3960 = vpop.f32.mrb[0].mxu0
  %v3961 = vpop.f32.mrb[0].mxu0
  %v3962 = vadd.f32 0.0, %v3961
  %v3963 = vpop.f32.mrb[0].mxu0
  %3964 = vdwg.mxu0
  %v3965 = vadd.f32 %v3852, %v3959
  %v3966 = vadd.f32 %v3853, %v3962
  %s3967 = scalar_lea.vmem %s39, 64
  %v3968 = vld [vmem:[%s3967] sm:$0xf]
  %v3969 = vld [vmem:[%s3967 + $0x4] sm:$0xf]
  %s3970 = scalar_lea.vmem %s11, 128
  %v3971 = vld [vmem:[%s3970] sm:$0xf]
  %v3972 = vld [vmem:[%s3970 + $0x4] sm:$0xf]
  %v3973 = vld [vmem:[%s3970 + $0x8] sm:$0xf]
  %v3974 = vld [vmem:[%s3970 + $0xc] sm:$0xf]
  %v3979 = vunpack.c.l.b16 %v3971
  %v3980 = vunpack.c.l.b16 %v3972
  %v3981 = vunpack.c.l.b16 %v3973
  %v3982 = vunpack.c.l.b16 %v3974
  %v3983 = vpack.c.b16 %v3980, %v3979
  %v3984 = vpack.c.b16 %v3982, %v3981
  %3987 = vmatprep.subr.bf16.mxu0 0
  %3988 = vmatpush1.bf16.msra.mxu0 %v3983
  %3989 = vmatprep.subr.bf16.mxu0 0
  %3990 = vmatpush1.bf16.msra.mxu0 %v3984
  %3991 = vmatprep.subr.bf16.mxu0 0
  %3992 = vmatpush1.bf16.msra.mxu0 0
  %3993 = vmatprep.subr.bf16.mxu0 0
  %3994 = vmatpush1.bf16.msra.mxu0 0
  %3995 = vmatprep.subr.bf16.mxu0 0
  %3996 = vmatpush1.bf16.msra.mxu0 0
  %3997 = vmatprep.subr.bf16.mxu0 0
  %3998 = vmatpush1.bf16.msra.mxu0 0
  %3999 = vmatprep.subr.bf16.mxu0 0
  %4000 = vmatpush1.bf16.msra.mxu0 0
  %4001 = vmatprep.subr.bf16.mxu0 0
  %4002 = vmatpush1.bf16.msra.mxu0 0
  %4003 = vmatprep.subr.bf16.mxu0 0
  %4004 = vmatpush1.bf16.msra.mxu0 0
  %4005 = vmatprep.subr.bf16.mxu0 0
  %4006 = vmatpush1.bf16.msra.mxu0 0
  %4007 = vmatprep.subr.bf16.mxu0 0
  %4008 = vmatpush1.bf16.msra.mxu0 0
  %4009 = vmatprep.subr.bf16.mxu0 0
  %4010 = vmatpush1.bf16.msra.mxu0 0
  %4011 = vmatprep.subr.bf16.mxu0 0
  %4012 = vmatpush1.bf16.msra.mxu0 0
  %4013 = vmatprep.subr.bf16.mxu0 0
  %4014 = vmatpush1.bf16.msra.mxu0 0
  %4015 = vmatprep.subr.bf16.mxu0 0
  %4016 = vmatpush1.bf16.msra.mxu0 0
  %4017 = vmatprep.subr.bf16.mxu0 0
  %4018 = vmatpush1.bf16.msra.mxu0 0
  %4019 = vmatprep.mubr.bf16.mxu0 0
  %4020 = vmatmul.mubr.bf16.gmra.mrb[0].mxu0 %v3143
  %v4021 = vpop.f32.mrb[0].mxu0
  %v4022 = vadd.f32 0.0, %v4021
  %v4023 = vpop.f32.mrb[0].mxu0
  %v4024 = vpop.f32.mrb[0].mxu0
  %v4025 = vadd.f32 0.0, %v4024
  %v4026 = vpop.f32.mrb[0].mxu0
  %4027 = vdwg.mxu0
  %v4028 = vpack.c.bf16 %v4025, %v4022
  %v4031 = vunpack.c.l.b16 %v3968
  %v4032 = vunpack.c.l.b16 %v3969
  %v4033 = vpack.c.b16 %v4032, %v4031
  %v4035 = vsel %vm3254, %v4033, 0
  %4037 = vmatprep.subr.bf16.mxu0 0
  %4038 = vmatpush1.bf16.msra.mxu0 %v4028
  %4039 = vmatprep.subr.bf16.mxu0 0
  %4040 = vmatpush1.bf16.msra.mxu0 0
  %4041 = vmatprep.subr.bf16.mxu0 0
  %4042 = vmatpush1.bf16.msra.mxu0 0
  %4043 = vmatprep.subr.bf16.mxu0 0
  %4044 = vmatpush1.bf16.msra.mxu0 0
  %4045 = vmatprep.subr.bf16.mxu0 0
  %4046 = vmatpush1.bf16.msra.mxu0 0
  %4047 = vmatprep.subr.bf16.mxu0 0
  %4048 = vmatpush1.bf16.msra.mxu0 0
  %4049 = vmatprep.subr.bf16.mxu0 0
  %4050 = vmatpush1.bf16.msra.mxu0 0
  %4051 = vmatprep.subr.bf16.mxu0 0
  %4052 = vmatpush1.bf16.msra.mxu0 0
  %4053 = vmatprep.subr.bf16.mxu0 0
  %4054 = vmatpush1.bf16.msra.mxu0 0
  %4055 = vmatprep.subr.bf16.mxu0 0
  %4056 = vmatpush1.bf16.msra.mxu0 0
  %4057 = vmatprep.subr.bf16.mxu0 0
  %4058 = vmatpush1.bf16.msra.mxu0 0
  %4059 = vmatprep.subr.bf16.mxu0 0
  %4060 = vmatpush1.bf16.msra.mxu0 0
  %4061 = vmatprep.subr.bf16.mxu0 0
  %4062 = vmatpush1.bf16.msra.mxu0 0
  %4063 = vmatprep.subr.bf16.mxu0 0
  %4064 = vmatpush1.bf16.msra.mxu0 0
  %4065 = vmatprep.subr.bf16.mxu0 0
  %4066 = vmatpush1.bf16.msra.mxu0 0
  %4067 = vmatprep.subr.bf16.mxu0 0
  %4068 = vmatpush1.bf16.msra.mxu0 0
  %4069 = vmatprep.mubr.bf16.mxu0 0
  %4070 = vmatmul.mubr.bf16.gmra.mrb[0].mxu0 %v4035
  %v4071 = vpop.f32.mrb[0].mxu0
  %v4072 = vadd.f32 0.0, %v4071
  %v4073 = vpop.f32.mrb[0].mxu0
  %v4074 = vpop.f32.mrb[0].mxu0
  %v4075 = vadd.f32 0.0, %v4074
  %v4076 = vpop.f32.mrb[0].mxu0
  %4077 = vdwg.mxu0
  %v4078 = vadd.f32 %v3965, %v4072
  %v4079 = vadd.f32 %v3966, %v4075
  %v4080 = vld [vmem:[%s35] sm:$0xff]
  %v4081 = vld [vmem:[%s35 + $0x8] sm:$0xff]
  %v4082 = vld [vmem:[%s31] sm:$0xff]
  %v4083 = vld [vmem:[%s31 + $0x8] sm:$0xff]
  %v4084 = vsel %vm3066, %v4078, 0.0
  %4085 = vadd.xlane.f32.xlu0 %v4084
  %v4086 = vpop.xlane.xlu0 %4085
  %v4087 = vsel %vm3066, %v4079, 0.0
  %4088 = vadd.xlane.f32.xlu0 %v4087
  %v4089 = vpop.xlane.xlu0 %4088
  %v4090 = vmul.f32 %v4086, 0.03125
  %v4091 = vmul.f32 %v4089, 0.03125
  %v4092 = vsub.f32 %v4078, %v4090
  %v4093 = vsub.f32 %v4079, %v4091
  %v4094 = vmul.f32 %v4092, %v4092
  %v4095 = vmul.f32 %v4093, %v4093
  %v4096 = vsel %vm3066, %v4094, 0.0
  %4097 = vadd.xlane.f32.xlu0 %v4096
  %v4098 = vpop.xlane.xlu0 %4097
  %v4099 = vsel %vm3066, %v4095, 0.0
  %4100 = vadd.xlane.f32.xlu0 %v4099
  %v4101 = vpop.xlane.xlu0 %4100
  %v4102 = vmul.f32 %v4098, 0.03125
  %v4103 = vmul.f32 %v4101, 0.03125
  %v4104 = vadd.f32 %v4102, 1e-05
  %v4105 = vadd.f32 %v4103, 1e-05
  %v4106 = vrsqrt.pop %v4104
  %v4107 = vrsqrt.pop %v4105
  %v4108 = vmul.f32 %v4092, %v4106
  %v4109 = vmul.f32 %v4093, %v4107
  %4111 = vset.pattern.permute.xlu0 0
  %4112 = vperm.xlu0 %4111, %v4080
  %v4113 = vpop.permute.xlu0 %4112
  %4116 = vset.pattern.permute.xlu0 0
  %4117 = vperm.xlu0 %4116, %v4081
  %v4118 = vpop.permute.xlu0 %4117
  %v4120 = vmul.f32 %v4108, %v4113
  %v4121 = vmul.f32 %v4109, %v4118
  %4123 = vset.pattern.permute.xlu0 0
  %4124 = vperm.xlu0 %4123, %v4082
  %v4125 = vpop.permute.xlu0 %4124
  %4128 = vset.pattern.permute.xlu0 0
  %4129 = vperm.xlu0 %4128, %v4083
  %v4130 = vpop.permute.xlu0 %4129
  %v4132 = vadd.f32 %v4120, %v4125
  %v4133 = vadd.f32 %v4121, %v4130
  %vm4134 = vcmp.ge.f32.partialorder %v4132, 0.0
  %vm4135 = vcmp.ge.f32.partialorder %v4133, 0.0
  %v4136 = vmul.f32 %v4132, 0.01
  %v4137 = vmul.f32 %v4133, 0.01
  %v4138 = vsel %vm4134, %v4132, %v4136
  %v4139 = vsel %vm4135, %v4133, %v4137
  %v4140 = vld [vmem:[%s51] sm:$0x3]
  %v4142 = vsel %vm1877, %v4140, 0
  %4144 = vmatprep.subr.bf16.mxu0 0
  %4145 = vmatpush1.bf16.msra.mxu0 %v2667
  %4146 = vmatprep.subr.bf16.mxu0 0
  %4147 = vmatpush1.bf16.msra.mxu0 0
  %4148 = vmatprep.subr.bf16.mxu0 0
  %4149 = vmatpush1.bf16.msra.mxu0 0
  %4150 = vmatprep.subr.bf16.mxu0 0
  %4151 = vmatpush1.bf16.msra.mxu0 0
  %4152 = vmatprep.subr.bf16.mxu0 0
  %4153 = vmatpush1.bf16.msra.mxu0 0
  %4154 = vmatprep.subr.bf16.mxu0 0
  %4155 = vmatpush1.bf16.msra.mxu0 0
  %4156 = vmatprep.subr.bf16.mxu0 0
  %4157 = vmatpush1.bf16.msra.mxu0 0
  %4158 = vmatprep.subr.bf16.mxu0 0
  %4159 = vmatpush1.bf16.msra.mxu0 0
  %4160 = vmatprep.subr.bf16.mxu0 0
  %4161 = vmatpush1.bf16.msra.mxu0 0
  %4162 = vmatprep.subr.bf16.mxu0 0
  %4163 = vmatpush1.bf16.msra.mxu0 0
  %4164 = vmatprep.subr.bf16.mxu0 0
  %4165 = vmatpush1.bf16.msra.mxu0 0
  %4166 = vmatprep.subr.bf16.mxu0 0
  %4167 = vmatpush1.bf16.msra.mxu0 0
  %4168 = vmatprep.subr.bf16.mxu0 0
  %4169 = vmatpush1.bf16.msra.mxu0 0
  %4170 = vmatprep.subr.bf16.mxu0 0
  %4171 = vmatpush1.bf16.msra.mxu0 0
  %4172 = vmatprep.subr.bf16.mxu0 0
  %4173 = vmatpush1.bf16.msra.mxu0 0
  %4174 = vmatprep.subr.bf16.mxu0 0
  %4175 = vmatpush1.bf16.msra.mxu0 0
  %4176 = vmatprep.mubr.bf16.mxu0 0
  %4177 = vmatmul.mubr.bf16.gmra.mrb[0].mxu0 %v4142
  %v4178 = vpop.f32.mrb[0].mxu0
  %v4179 = vadd.f32 0.0, %v4178
  %v4180 = vpop.f32.mrb[0].mxu0
  %v4181 = vpop.f32.mrb[0].mxu0
  %v4182 = vpop.f32.mrb[0].mxu0
  %4183 = vdwg.mxu0
  %v4184 = vld [vmem:[%s49] sm:$0xf]
  %v4185 = vld [vmem:[%s47] sm:$0xf]
  %v4186 = vsel %vm1881, %v4179, 0.0
  %4187 = vadd.xlane.f32.xlu0 %v4186
  %v4188 = vpop.xlane.xlu0 %4187
  %v4189 = vmul.f32 %v4188, 0.0078125
  %v4190 = vsub.f32 %v4179, %v4189
  %v4191 = vmul.f32 %v4190, %v4190
  %v4192 = vsel %vm1881, %v4191, 0.0
  %4193 = vadd.xlane.f32.xlu0 %v4192
  %v4194 = vpop.xlane.xlu0 %4193
  %v4195 = vmul.f32 %v4194, 0.0078125
  %v4196 = vadd.f32 %v4195, 1e-05
  %v4197 = vrsqrt.pop %v4196
  %v4198 = vmul.f32 %v4190, %v4197
  %4200 = vset.pattern.permute.xlu0 0
  %4201 = vperm.xlu0 %4200, %v4184
  %v4202 = vpop.permute.xlu0 %4201
  %v4204 = vmul.f32 %v4198, %v4202
  %4206 = vset.pattern.permute.xlu0 0
  %4207 = vperm.xlu0 %4206, %v4185
  %v4208 = vpop.permute.xlu0 %4207
  %v4210 = vadd.f32 %v4204, %v4208
  %vm4211 = vcmp.ge.f32.partialorder %v4210, 0.0
  %v4212 = vmul.f32 %v4210, 0.01
  %v4213 = vsel %vm4211, %v4210, %v4212
  %v4214 = vld [vmem:[%s57] sm:$0x3]
  %v4215 = vpack.c.bf16 %v4139, %v4138
  %v4217 = vsel %vm3254, %v4214, 0
  %4219 = vmatprep.subr.bf16.mxu0 0
  %4220 = vmatpush1.bf16.msra.mxu0 %v4215
  %4221 = vmatprep.subr.bf16.mxu0 0
  %4222 = vmatpush1.bf16.msra.mxu0 0
  %4223 = vmatprep.subr.bf16.mxu0 0
  %4224 = vmatpush1.bf16.msra.mxu0 0
  %4225 = vmatprep.subr.bf16.mxu0 0
  %4226 = vmatpush1.bf16.msra.mxu0 0
  %4227 = vmatprep.subr.bf16.mxu0 0
  %4228 = vmatpush1.bf16.msra.mxu0 0
  %4229 = vmatprep.subr.bf16.mxu0 0
  %4230 = vmatpush1.bf16.msra.mxu0 0
  %4231 = vmatprep.subr.bf16.mxu0 0
  %4232 = vmatpush1.bf16.msra.mxu0 0
  %4233 = vmatprep.subr.bf16.mxu0 0
  %4234 = vmatpush1.bf16.msra.mxu0 0
  %4235 = vmatprep.subr.bf16.mxu0 0
  %4236 = vmatpush1.bf16.msra.mxu0 0
  %4237 = vmatprep.subr.bf16.mxu0 0
  %4238 = vmatpush1.bf16.msra.mxu0 0
  %4239 = vmatprep.subr.bf16.mxu0 0
  %4240 = vmatpush1.bf16.msra.mxu0 0
  %4241 = vmatprep.subr.bf16.mxu0 0
  %4242 = vmatpush1.bf16.msra.mxu0 0
  %4243 = vmatprep.subr.bf16.mxu0 0
  %4244 = vmatpush1.bf16.msra.mxu0 0
  %4245 = vmatprep.subr.bf16.mxu0 0
  %4246 = vmatpush1.bf16.msra.mxu0 0
  %4247 = vmatprep.subr.bf16.mxu0 0
  %4248 = vmatpush1.bf16.msra.mxu0 0
  %4249 = vmatprep.subr.bf16.mxu0 0
  %4250 = vmatpush1.bf16.msra.mxu0 0
  %4251 = vmatprep.mubr.bf16.mxu0 0
  %4252 = vmatmul.mubr.bf16.gmra.mrb[0].mxu0 %v4217
  %v4253 = vpop.f32.mrb[0].mxu0
  %v4254 = vadd.f32 0.0, %v4253
  %v4255 = vpop.f32.mrb[0].mxu0
  %v4256 = vpop.f32.mrb[0].mxu0
  %v4257 = vpop.f32.mrb[0].mxu0
  %4258 = vdwg.mxu0
  %v4259 = vld [vmem:[%s55] sm:$0xf]
  %v4260 = vld [vmem:[%s53] sm:$0xf]
  %vm4261 = vcmask 257024
  %v4262 = vsel %vm4261, %v4254, 0.0
  %4263 = vadd.xlane.f32.xlu0 %v4262
  %v4264 = vpop.xlane.xlu0 %4263
  %v4265 = vmul.f32 %v4264, 0.03125
  %v4266 = vsub.f32 %v4254, %v4265
  %v4267 = vmul.f32 %v4266, %v4266
  %v4268 = vsel %vm4261, %v4267, 0.0
  %4269 = vadd.xlane.f32.xlu0 %v4268
  %v4270 = vpop.xlane.xlu0 %4269
  %v4271 = vmul.f32 %v4270, 0.03125
  %v4272 = vadd.f32 %v4271, 1e-05
  %v4273 = vrsqrt.pop %v4272
  %v4274 = vmul.f32 %v4266, %v4273
  %4276 = vset.pattern.permute.xlu0 0
  %4277 = vperm.xlu0 %4276, %v4259
  %v4278 = vpop.permute.xlu0 %4277
  %v4280 = vmul.f32 %v4274, %v4278
  %4282 = vset.pattern.permute.xlu0 0
  %4283 = vperm.xlu0 %4282, %v4260
  %v4284 = vpop.permute.xlu0 %4283
  %v4286 = vadd.f32 %v4280, %v4284
  %vm4287 = vcmp.ge.f32.partialorder %v4286, 0.0
  %v4288 = vmul.f32 %v4286, 0.01
  %v4289 = vsel %vm4287, %v4286, %v4288
  %v4290 = vld [vmem:[%s87] sm:$0xff]
  %v4291 = vld [vmem:[%s87 + $0x8] sm:$0xff]
  %v4292 = vld [vmem:[%s87 + $0x10] sm:$0xf]
  %v4293 = vld [vmem:[%s85] sm:$0xff]
  %v4294 = vld [vmem:[%s85 + $0x8] sm:$0xff]
  %v4295 = vld [vmem:[%s85 + $0x10] sm:$0xf]
  %v4296 = vsel %vm3066, %v4138, 0.0
  %4297 = vadd.xlane.f32.xlu0 %v4296
  %v4298 = vpop.xlane.xlu0 %4297
  %v4299 = vsel %vm3066, %v4139, 0.0
  %4300 = vadd.xlane.f32.xlu0 %v4299
  %v4301 = vpop.xlane.xlu0 %4300
  %v4302 = vmul.f32 %v4298, 0.03125
  %v4303 = vmul.f32 %v4301, 0.03125
  %v4304 = vsub.f32 %v4138, %v4302
  %v4305 = vsub.f32 %v4139, %v4303
  %v4306 = vmul.f32 %v4304, %v4304
  %v4307 = vmul.f32 %v4305, %v4305
  %v4308 = vsel %vm3066, %v4306, 0.0
  %4309 = vadd.xlane.f32.xlu0 %v4308
  %v4310 = vpop.xlane.xlu0 %4309
  %v4311 = vsel %vm3066, %v4307, 0.0
  %4312 = vadd.xlane.f32.xlu0 %v4311
  %v4313 = vpop.xlane.xlu0 %4312
  %v4314 = vmul.f32 %v4310, 0.03125
  %v4315 = vmul.f32 %v4313, 0.03125
  %v4316 = vadd.f32 %v4314, 1e-05
  %v4317 = vadd.f32 %v4315, 1e-05
  %v4318 = vrsqrt.pop %v4316
  %v4319 = vrsqrt.pop %v4317
  %v4320 = vmul.f32 %v4304, %v4318
  %v4321 = vmul.f32 %v4305, %v4319
  %4323 = vset.pattern.permute.xlu0 0
  %4324 = vperm.xlu0 %4323, %v4290
  %v4325 = vpop.permute.xlu0 %4324
  %4328 = vset.pattern.permute.xlu0 0
  %4329 = vperm.xlu0 %4328, %v4291
  %v4330 = vpop.permute.xlu0 %4329
  %v4332 = vmul.f32 %v4320, %v4325
  %v4333 = vmul.f32 %v4321, %v4330
  %4335 = vset.pattern.permute.xlu0 0
  %4336 = vperm.xlu0 %4335, %v4293
  %v4337 = vpop.permute.xlu0 %4336
  %4340 = vset.pattern.permute.xlu0 0
  %4341 = vperm.xlu0 %4340, %v4294
  %v4342 = vpop.permute.xlu0 %4341
  %v4344 = vadd.f32 %v4332, %v4337
  %v4345 = vadd.f32 %v4333, %v4342
  %v4346 = vsel %vm4261, %v4289, 0.0
  %4347 = vadd.xlane.f32.xlu0 %v4346
  %v4348 = vpop.xlane.xlu0 %4347
  %v4349 = vmul.f32 %v4348, 0.03125
  %v4350 = vsub.f32 %v4289, %v4349
  %v4351 = vmul.f32 %v4350, %v4350
  %v4352 = vsel %vm4261, %v4351, 0.0
  %4353 = vadd.xlane.f32.xlu0 %v4352
  %v4354 = vpop.xlane.xlu0 %4353
  %v4355 = vmul.f32 %v4354, 0.03125
  %v4356 = vadd.f32 %v4355, 1e-05
  %v4357 = vrsqrt.pop %v4356
  %v4358 = vmul.f32 %v4350, %v4357
  %4360 = vset.pattern.permute.xlu0 0
  %4361 = vperm.xlu0 %4360, %v4292
  %v4362 = vpop.permute.xlu0 %4361
  %v4364 = vmul.f32 %v4358, %v4362
  %4366 = vset.pattern.permute.xlu0 0
  %4367 = vperm.xlu0 %4366, %v4295
  %v4368 = vpop.permute.xlu0 %4367
  %v4370 = vadd.f32 %v4364, %v4368
  %v4371 = vld [vmem:[%s89] sm:$0xf]
  %v4372 = vld [vmem:[%s89 + $0x4] sm:$0xf]
  %v4373 = vpack.c.bf16 %v4345, %v4344
  %v4375 = vsel %vm3066, %v4373, 0
  %4377 = vmatprep.subr.bf16.mxu0 0
  %4378 = vmatpush1.bf16.msra.mxu0 %v3138
  %4379 = vmatprep.subr.bf16.mxu0 0
  %4380 = vmatpush1.bf16.msra.mxu0 %v3139
  %4381 = vmatprep.subr.bf16.mxu0 0
  %4382 = vmatpush1.bf16.msra.mxu0 0
  %4383 = vmatprep.subr.bf16.mxu0 0
  %4384 = vmatpush1.bf16.msra.mxu0 0
  %4385 = vmatprep.subr.bf16.mxu0 0
  %4386 = vmatpush1.bf16.msra.mxu0 0
  %4387 = vmatprep.subr.bf16.mxu0 0
  %4388 = vmatpush1.bf16.msra.mxu0 0
  %4389 = vmatprep.subr.bf16.mxu0 0
  %4390 = vmatpush1.bf16.msra.mxu0 0
  %4391 = vmatprep.subr.bf16.mxu0 0
  %4392 = vmatpush1.bf16.msra.mxu0 0
  %4393 = vmatprep.subr.bf16.mxu0 0
  %4394 = vmatpush1.bf16.msra.mxu0 0
  %4395 = vmatprep.subr.bf16.mxu0 0
  %4396 = vmatpush1.bf16.msra.mxu0 0
  %4397 = vmatprep.subr.bf16.mxu0 0
  %4398 = vmatpush1.bf16.msra.mxu0 0
  %4399 = vmatprep.subr.bf16.mxu0 0
  %4400 = vmatpush1.bf16.msra.mxu0 0
  %4401 = vmatprep.subr.bf16.mxu0 0
  %4402 = vmatpush1.bf16.msra.mxu0 0
  %4403 = vmatprep.subr.bf16.mxu0 0
  %4404 = vmatpush1.bf16.msra.mxu0 0
  %4405 = vmatprep.subr.bf16.mxu0 0
  %4406 = vmatpush1.bf16.msra.mxu0 0
  %4407 = vmatprep.subr.bf16.mxu0 0
  %4408 = vmatpush1.bf16.msra.mxu0 0
  %4409 = vmatprep.mubr.bf16.mxu0 0
  %4410 = vmatmul.mubr.bf16.gmra.mrb[0].mxu0 %v4375
  %v4411 = vpop.f32.mrb[0].mxu0
  %v4412 = vadd.f32 0.0, %v4411
  %v4413 = vpop.f32.mrb[0].mxu0
  %v4414 = vpop.f32.mrb[0].mxu0
  %v4415 = vadd.f32 0.0, %v4414
  %v4416 = vpop.f32.mrb[0].mxu0
  %4417 = vdwg.mxu0
  %v4418 = vpack.c.bf16 %v4415, %v4412
  %v4419 = vld [vmem:[%s91] sm:$0xf]
  %v4420 = vld [vmem:[%s91 + $0x4] sm:$0xf]
  %v4421 = vpack.c.bf16 %v4370, %v4370
  %v4423 = vsel %vm3066, %v4421, 0
  %4425 = vmatprep.subr.bf16.mxu0 0
  %4426 = vmatpush1.bf16.msra.mxu0 %v3138
  %4427 = vmatprep.subr.bf16.mxu0 0
  %4428 = vmatpush1.bf16.msra.mxu0 %v3139
  %4429 = vmatprep.subr.bf16.mxu0 0
  %4430 = vmatpush1.bf16.msra.mxu0 0
  %4431 = vmatprep.subr.bf16.mxu0 0
  %4432 = vmatpush1.bf16.msra.mxu0 0
  %4433 = vmatprep.subr.bf16.mxu0 0
  %4434 = vmatpush1.bf16.msra.mxu0 0
  %4435 = vmatprep.subr.bf16.mxu0 0
  %4436 = vmatpush1.bf16.msra.mxu0 0
  %4437 = vmatprep.subr.bf16.mxu0 0
  %4438 = vmatpush1.bf16.msra.mxu0 0
  %4439 = vmatprep.subr.bf16.mxu0 0
  %4440 = vmatpush1.bf16.msra.mxu0 0
  %4441 = vmatprep.subr.bf16.mxu0 0
  %4442 = vmatpush1.bf16.msra.mxu0 0
  %4443 = vmatprep.subr.bf16.mxu0 0
  %4444 = vmatpush1.bf16.msra.mxu0 0
  %4445 = vmatprep.subr.bf16.mxu0 0
  %4446 = vmatpush1.bf16.msra.mxu0 0
  %4447 = vmatprep.subr.bf16.mxu0 0
  %4448 = vmatpush1.bf16.msra.mxu0 0
  %4449 = vmatprep.subr.bf16.mxu0 0
  %4450 = vmatpush1.bf16.msra.mxu0 0
  %4451 = vmatprep.subr.bf16.mxu0 0
  %4452 = vmatpush1.bf16.msra.mxu0 0
  %4453 = vmatprep.subr.bf16.mxu0 0
  %4454 = vmatpush1.bf16.msra.mxu0 0
  %4455 = vmatprep.subr.bf16.mxu0 0
  %4456 = vmatpush1.bf16.msra.mxu0 0
  %4457 = vmatprep.mubr.bf16.mxu0 0
  %4458 = vmatmul.mubr.bf16.gmra.mrb[0].mxu0 %v4423
  %v4459 = vpop.f32.mrb[0].mxu0
  %v4460 = vadd.f32 0.0, %v4459
  %v4461 = vpop.f32.mrb[0].mxu0
  %v4462 = vpop.f32.mrb[0].mxu0
  %v4463 = vpop.f32.mrb[0].mxu0
  %4464 = vdwg.mxu0
  %v4465 = vpack.c.bf16 %v4460, %v4460
  %v4468 = vunpack.c.l.b16 %v4419
  %v4469 = vunpack.c.l.b16 %v4420
  %v4470 = vpack.c.b16 %v4469, %v4468
  %vm4471 = vcmask 31744
  %v4473 = vsel %vm4471, %v4470, 0
  %v4476 = vsel %vm300, %v4465, 0
  %4478 = vmatprep.subr.bf16.mxu0 0
  %4479 = vmatpush1.bf16.msra.mxu0 %v4476
  %4480 = vmatprep.subr.bf16.mxu0 0
  %4481 = vmatpush1.bf16.msra.mxu0 0
  %4482 = vmatprep.subr.bf16.mxu0 0
  %4483 = vmatpush1.bf16.msra.mxu0 0
  %4484 = vmatprep.subr.bf16.mxu0 0
  %4485 = vmatpush1.bf16.msra.mxu0 0
  %4486 = vmatprep.subr.bf16.mxu0 0
  %4487 = vmatpush1.bf16.msra.mxu0 0
  %4488 = vmatprep.subr.bf16.mxu0 0
  %4489 = vmatpush1.bf16.msra.mxu0 0
  %4490 = vmatprep.subr.bf16.mxu0 0
  %4491 = vmatpush1.bf16.msra.mxu0 0
  %4492 = vmatprep.subr.bf16.mxu0 0
  %4493 = vmatpush1.bf16.msra.mxu0 0
  %4494 = vmatprep.subr.bf16.mxu0 0
  %4495 = vmatpush1.bf16.msra.mxu0 0
  %4496 = vmatprep.subr.bf16.mxu0 0
  %4497 = vmatpush1.bf16.msra.mxu0 0
  %4498 = vmatprep.subr.bf16.mxu0 0
  %4499 = vmatpush1.bf16.msra.mxu0 0
  %4500 = vmatprep.subr.bf16.mxu0 0
  %4501 = vmatpush1.bf16.msra.mxu0 0
  %4502 = vmatprep.subr.bf16.mxu0 0
  %4503 = vmatpush1.bf16.msra.mxu0 0
  %4504 = vmatprep.subr.bf16.mxu0 0
  %4505 = vmatpush1.bf16.msra.mxu0 0
  %4506 = vmatprep.subr.bf16.mxu0 0
  %4507 = vmatpush1.bf16.msra.mxu0 0
  %4508 = vmatprep.subr.bf16.mxu0 0
  %4509 = vmatpush1.bf16.msra.mxu0 0
  %4510 = vmatprep.mubr.bf16.mxu0 0
  %4511 = vmatmul.mubr.bf16.gmra.mrb[0].mxu0 %v4473
  %v4512 = vpop.f32.mrb[0].mxu0
  %v4513 = vadd.f32 0.0, %v4512
  %v4514 = vpop.f32.mrb[0].mxu0
  %v4515 = vpop.f32.mrb[0].mxu0
  %v4516 = vadd.f32 0.0, %v4515
  %v4517 = vpop.f32.mrb[0].mxu0
  %4518 = vdwg.mxu0
  %v4521 = vunpack.c.l.b16 %v4371
  %v4522 = vunpack.c.l.b16 %v4372
  %v4523 = vpack.c.b16 %v4522, %v4521
  %v4525 = vsel %vm3254, %v4523, 0
  %4527 = vmatprep.subr.bf16.mxu0 0
  %4528 = vmatpush1.bf16.msra.mxu0 %v4418
  %4529 = vmatprep.subr.bf16.mxu0 0
  %4530 = vmatpush1.bf16.msra.mxu0 0
  %4531 = vmatprep.subr.bf16.mxu0 0
  %4532 = vmatpush1.bf16.msra.mxu0 0
  %4533 = vmatprep.subr.bf16.mxu0 0
  %4534 = vmatpush1.bf16.msra.mxu0 0
  %4535 = vmatprep.subr.bf16.mxu0 0
  %4536 = vmatpush1.bf16.msra.mxu0 0
  %4537 = vmatprep.subr.bf16.mxu0 0
  %4538 = vmatpush1.bf16.msra.mxu0 0
  %4539 = vmatprep.subr.bf16.mxu0 0
  %4540 = vmatpush1.bf16.msra.mxu0 0
  %4541 = vmatprep.subr.bf16.mxu0 0
  %4542 = vmatpush1.bf16.msra.mxu0 0
  %4543 = vmatprep.subr.bf16.mxu0 0
  %4544 = vmatpush1.bf16.msra.mxu0 0
  %4545 = vmatprep.subr.bf16.mxu0 0
  %4546 = vmatpush1.bf16.msra.mxu0 0
  %4547 = vmatprep.subr.bf16.mxu0 0
  %4548 = vmatpush1.bf16.msra.mxu0 0
  %4549 = vmatprep.subr.bf16.mxu0 0
  %4550 = vmatpush1.bf16.msra.mxu0 0
  %4551 = vmatprep.subr.bf16.mxu0 0
  %4552 = vmatpush1.bf16.msra.mxu0 0
  %4553 = vmatprep.subr.bf16.mxu0 0
  %4554 = vmatpush1.bf16.msra.mxu0 0
  %4555 = vmatprep.subr.bf16.mxu0 0
  %4556 = vmatpush1.bf16.msra.mxu0 0
  %4557 = vmatprep.subr.bf16.mxu0 0
  %4558 = vmatpush1.bf16.msra.mxu0 0
  %4559 = vmatprep.mubr.bf16.mxu0 0
  %4560 = vmatmul.mubr.bf16.gmra.mrb[0].mxu0 %v4525
  %v4561 = vpop.f32.mrb[0].mxu0
  %v4562 = vadd.f32 %v4513, %v4561
  %v4563 = vpop.f32.mrb[0].mxu0
  %v4564 = vpop.f32.mrb[0].mxu0
  %v4565 = vadd.f32 %v4516, %v4564
  %v4566 = vpop.f32.mrb[0].mxu0
  %4567 = vdwg.mxu0
  %s4568 = scalar_lea.vmem %s89, 8
  %v4569 = vld [vmem:[%s4568] sm:$0xf]
  %v4570 = vld [vmem:[%s4568 + $0x4] sm:$0xf]
  %4571 = vmatprep.subr.bf16.mxu0 0
  %4572 = vmatpush1.bf16.msra.mxu0 %v3203
  %4573 = vmatprep.subr.bf16.mxu0 0
  %4574 = vmatpush1.bf16.msra.mxu0 %v3204
  %4575 = vmatprep.subr.bf16.mxu0 0
  %4576 = vmatpush1.bf16.msra.mxu0 0
  %4577 = vmatprep.subr.bf16.mxu0 0
  %4578 = vmatpush1.bf16.msra.mxu0 0
  %4579 = vmatprep.subr.bf16.mxu0 0
  %4580 = vmatpush1.bf16.msra.mxu0 0
  %4581 = vmatprep.subr.bf16.mxu0 0
  %4582 = vmatpush1.bf16.msra.mxu0 0
  %4583 = vmatprep.subr.bf16.mxu0 0
  %4584 = vmatpush1.bf16.msra.mxu0 0
  %4585 = vmatprep.subr.bf16.mxu0 0
  %4586 = vmatpush1.bf16.msra.mxu0 0
  %4587 = vmatprep.subr.bf16.mxu0 0
  %4588 = vmatpush1.bf16.msra.mxu0 0
  %4589 = vmatprep.subr.bf16.mxu0 0
  %4590 = vmatpush1.bf16.msra.mxu0 0
  %4591 = vmatprep.subr.bf16.mxu0 0
  %4592 = vmatpush1.bf16.msra.mxu0 0
  %4593 = vmatprep.subr.bf16.mxu0 0
  %4594 = vmatpush1.bf16.msra.mxu0 0
  %4595 = vmatprep.subr.bf16.mxu0 0
  %4596 = vmatpush1.bf16.msra.mxu0 0
  %4597 = vmatprep.subr.bf16.mxu0 0
  %4598 = vmatpush1.bf16.msra.mxu0 0
  %4599 = vmatprep.subr.bf16.mxu0 0
  %4600 = vmatpush1.bf16.msra.mxu0 0
  %4601 = vmatprep.subr.bf16.mxu0 0
  %4602 = vmatpush1.bf16.msra.mxu0 0
  %4603 = vmatprep.mubr.bf16.mxu0 0
  %4604 = vmatmul.mubr.bf16.gmra.mrb[0].mxu0 %v4375
  %v4605 = vpop.f32.mrb[0].mxu0
  %v4606 = vadd.f32 0.0, %v4605
  %v4607 = vpop.f32.mrb[0].mxu0
  %v4608 = vpop.f32.mrb[0].mxu0
  %v4609 = vadd.f32 0.0, %v4608
  %v4610 = vpop.f32.mrb[0].mxu0
  %4611 = vdwg.mxu0
  %v4612 = vpack.c.bf16 %v4609, %v4606
  %v4615 = vunpack.c.l.b16 %v4569
  %v4616 = vunpack.c.l.b16 %v4570
  %v4617 = vpack.c.b16 %v4616, %v4615
  %v4619 = vsel %vm3254, %v4617, 0
  %4621 = vmatprep.subr.bf16.mxu0 0
  %4622 = vmatpush1.bf16.msra.mxu0 %v4612
  %4623 = vmatprep.subr.bf16.mxu0 0
  %4624 = vmatpush1.bf16.msra.mxu0 0
  %4625 = vmatprep.subr.bf16.mxu0 0
  %4626 = vmatpush1.bf16.msra.mxu0 0
  %4627 = vmatprep.subr.bf16.mxu0 0
  %4628 = vmatpush1.bf16.msra.mxu0 0
  %4629 = vmatprep.subr.bf16.mxu0 0
  %4630 = vmatpush1.bf16.msra.mxu0 0
  %4631 = vmatprep.subr.bf16.mxu0 0
  %4632 = vmatpush1.bf16.msra.mxu0 0
  %4633 = vmatprep.subr.bf16.mxu0 0
  %4634 = vmatpush1.bf16.msra.mxu0 0
  %4635 = vmatprep.subr.bf16.mxu0 0
  %4636 = vmatpush1.bf16.msra.mxu0 0
  %4637 = vmatprep.subr.bf16.mxu0 0
  %4638 = vmatpush1.bf16.msra.mxu0 0
  %4639 = vmatprep.subr.bf16.mxu0 0
  %4640 = vmatpush1.bf16.msra.mxu0 0
  %4641 = vmatprep.subr.bf16.mxu0 0
  %4642 = vmatpush1.bf16.msra.mxu0 0
  %4643 = vmatprep.subr.bf16.mxu0 0
  %4644 = vmatpush1.bf16.msra.mxu0 0
  %4645 = vmatprep.subr.bf16.mxu0 0
  %4646 = vmatpush1.bf16.msra.mxu0 0
  %4647 = vmatprep.subr.bf16.mxu0 0
  %4648 = vmatpush1.bf16.msra.mxu0 0
  %4649 = vmatprep.subr.bf16.mxu0 0
  %4650 = vmatpush1.bf16.msra.mxu0 0
  %4651 = vmatprep.subr.bf16.mxu0 0
  %4652 = vmatpush1.bf16.msra.mxu0 0
  %4653 = vmatprep.mubr.bf16.mxu0 0
  %4654 = vmatmul.mubr.bf16.gmra.mrb[0].mxu0 %v4619
  %v4655 = vpop.f32.mrb[0].mxu0
  %v4656 = vadd.f32 0.0, %v4655
  %v4657 = vpop.f32.mrb[0].mxu0
  %v4658 = vpop.f32.mrb[0].mxu0
  %v4659 = vadd.f32 0.0, %v4658
  %v4660 = vpop.f32.mrb[0].mxu0
  %4661 = vdwg.mxu0
  %v4662 = vadd.f32 %v4562, %v4656
  %v4663 = vadd.f32 %v4565, %v4659
  %s4664 = scalar_lea.vmem %s91, 8
  %v4665 = vld [vmem:[%s4664] sm:$0xf]
  %v4666 = vld [vmem:[%s4664 + $0x4] sm:$0xf]
  %4667 = vmatprep.subr.bf16.mxu0 0
  %4668 = vmatpush1.bf16.msra.mxu0 %v3203
  %4669 = vmatprep.subr.bf16.mxu0 0
  %4670 = vmatpush1.bf16.msra.mxu0 %v3204
  %4671 = vmatprep.subr.bf16.mxu0 0
  %4672 = vmatpush1.bf16.msra.mxu0 0
  %4673 = vmatprep.subr.bf16.mxu0 0
  %4674 = vmatpush1.bf16.msra.mxu0 0
  %4675 = vmatprep.subr.bf16.mxu0 0
  %4676 = vmatpush1.bf16.msra.mxu0 0
  %4677 = vmatprep.subr.bf16.mxu0 0
  %4678 = vmatpush1.bf16.msra.mxu0 0
  %4679 = vmatprep.subr.bf16.mxu0 0
  %4680 = vmatpush1.bf16.msra.mxu0 0
  %4681 = vmatprep.subr.bf16.mxu0 0
  %4682 = vmatpush1.bf16.msra.mxu0 0
  %4683 = vmatprep.subr.bf16.mxu0 0
  %4684 = vmatpush1.bf16.msra.mxu0 0
  %4685 = vmatprep.subr.bf16.mxu0 0
  %4686 = vmatpush1.bf16.msra.mxu0 0
  %4687 = vmatprep.subr.bf16.mxu0 0
  %4688 = vmatpush1.bf16.msra.mxu0 0
  %4689 = vmatprep.subr.bf16.mxu0 0
  %4690 = vmatpush1.bf16.msra.mxu0 0
  %4691 = vmatprep.subr.bf16.mxu0 0
  %4692 = vmatpush1.bf16.msra.mxu0 0
  %4693 = vmatprep.subr.bf16.mxu0 0
  %4694 = vmatpush1.bf16.msra.mxu0 0
  %4695 = vmatprep.subr.bf16.mxu0 0
  %4696 = vmatpush1.bf16.msra.mxu0 0
  %4697 = vmatprep.subr.bf16.mxu0 0
  %4698 = vmatpush1.bf16.msra.mxu0 0
  %4699 = vmatprep.mubr.bf16.mxu0 0
  %4700 = vmatmul.mubr.bf16.gmra.mrb[0].mxu0 %v4423
  %v4701 = vpop.f32.mrb[0].mxu0
  %v4702 = vadd.f32 0.0, %v4701
  %v4703 = vpop.f32.mrb[0].mxu0
  %v4704 = vpop.f32.mrb[0].mxu0
  %v4705 = vpop.f32.mrb[0].mxu0
  %4706 = vdwg.mxu0
  %v4707 = vpack.c.bf16 %v4702, %v4702
  %v4710 = vunpack.c.l.b16 %v4665
  %v4711 = vunpack.c.l.b16 %v4666
  %v4712 = vpack.c.b16 %v4711, %v4710
  %v4714 = vsel %vm4471, %v4712, 0
  %v4717 = vsel %vm300, %v4707, 0
  %4719 = vmatprep.subr.bf16.mxu0 0
  %4720 = vmatpush1.bf16.msra.mxu0 %v4717
  %4721 = vmatprep.subr.bf16.mxu0 0
  %4722 = vmatpush1.bf16.msra.mxu0 0
  %4723 = vmatprep.subr.bf16.mxu0 0
  %4724 = vmatpush1.bf16.msra.mxu0 0
  %4725 = vmatprep.subr.bf16.mxu0 0
  %4726 = vmatpush1.bf16.msra.mxu0 0
  %4727 = vmatprep.subr.bf16.mxu0 0
  %4728 = vmatpush1.bf16.msra.mxu0 0
  %4729 = vmatprep.subr.bf16.mxu0 0
  %4730 = vmatpush1.bf16.msra.mxu0 0
  %4731 = vmatprep.subr.bf16.mxu0 0
  %4732 = vmatpush1.bf16.msra.mxu0 0
  %4733 = vmatprep.subr.bf16.mxu0 0
  %4734 = vmatpush1.bf16.msra.mxu0 0
  %4735 = vmatprep.subr.bf16.mxu0 0
  %4736 = vmatpush1.bf16.msra.mxu0 0
  %4737 = vmatprep.subr.bf16.mxu0 0
  %4738 = vmatpush1.bf16.msra.mxu0 0
  %4739 = vmatprep.subr.bf16.mxu0 0
  %4740 = vmatpush1.bf16.msra.mxu0 0
  %4741 = vmatprep.subr.bf16.mxu0 0
  %4742 = vmatpush1.bf16.msra.mxu0 0
  %4743 = vmatprep.subr.bf16.mxu0 0
  %4744 = vmatpush1.bf16.msra.mxu0 0
  %4745 = vmatprep.subr.bf16.mxu0 0
  %4746 = vmatpush1.bf16.msra.mxu0 0
  %4747 = vmatprep.subr.bf16.mxu0 0
  %4748 = vmatpush1.bf16.msra.mxu0 0
  %4749 = vmatprep.subr.bf16.mxu0 0
  %4750 = vmatpush1.bf16.msra.mxu0 0
  %4751 = vmatprep.mubr.bf16.mxu0 0
  %4752 = vmatmul.mubr.bf16.gmra.mrb[0].mxu0 %v4714
  %v4753 = vpop.f32.mrb[0].mxu0
  %v4754 = vadd.f32 0.0, %v4753
  %v4755 = vpop.f32.mrb[0].mxu0
  %v4756 = vpop.f32.mrb[0].mxu0
  %v4757 = vadd.f32 0.0, %v4756
  %v4758 = vpop.f32.mrb[0].mxu0
  %4759 = vdwg.mxu0
  %v4760 = vadd.f32 %v4662, %v4754
  %v4761 = vadd.f32 %v4663, %v4757
  %s4762 = scalar_lea.vmem %s89, 16
  %v4763 = vld [vmem:[%s4762] sm:$0xf]
  %v4764 = vld [vmem:[%s4762 + $0x4] sm:$0xf]
  %4765 = vmatprep.subr.bf16.mxu0 0
  %4766 = vmatpush1.bf16.msra.mxu0 %v3364
  %4767 = vmatprep.subr.bf16.mxu0 0
  %4768 = vmatpush1.bf16.msra.mxu0 %v3365
  %4769 = vmatprep.subr.bf16.mxu0 0
  %4770 = vmatpush1.bf16.msra.mxu0 0
  %4771 = vmatprep.subr.bf16.mxu0 0
  %4772 = vmatpush1.bf16.msra.mxu0 0
  %4773 = vmatprep.subr.bf16.mxu0 0
  %4774 = vmatpush1.bf16.msra.mxu0 0
  %4775 = vmatprep.subr.bf16.mxu0 0
  %4776 = vmatpush1.bf16.msra.mxu0 0
  %4777 = vmatprep.subr.bf16.mxu0 0
  %4778 = vmatpush1.bf16.msra.mxu0 0
  %4779 = vmatprep.subr.bf16.mxu0 0
  %4780 = vmatpush1.bf16.msra.mxu0 0
  %4781 = vmatprep.subr.bf16.mxu0 0
  %4782 = vmatpush1.bf16.msra.mxu0 0
  %4783 = vmatprep.subr.bf16.mxu0 0
  %4784 = vmatpush1.bf16.msra.mxu0 0
  %4785 = vmatprep.subr.bf16.mxu0 0
  %4786 = vmatpush1.bf16.msra.mxu0 0
  %4787 = vmatprep.subr.bf16.mxu0 0
  %4788 = vmatpush1.bf16.msra.mxu0 0
  %4789 = vmatprep.subr.bf16.mxu0 0
  %4790 = vmatpush1.bf16.msra.mxu0 0
  %4791 = vmatprep.subr.bf16.mxu0 0
  %4792 = vmatpush1.bf16.msra.mxu0 0
  %4793 = vmatprep.subr.bf16.mxu0 0
  %4794 = vmatpush1.bf16.msra.mxu0 0
  %4795 = vmatprep.subr.bf16.mxu0 0
  %4796 = vmatpush1.bf16.msra.mxu0 0
  %4797 = vmatprep.mubr.bf16.mxu0 0
  %4798 = vmatmul.mubr.bf16.gmra.mrb[0].mxu0 %v4375
  %v4799 = vpop.f32.mrb[0].mxu0
  %v4800 = vadd.f32 0.0, %v4799
  %v4801 = vpop.f32.mrb[0].mxu0
  %v4802 = vpop.f32.mrb[0].mxu0
  %v4803 = vadd.f32 0.0, %v4802
  %v4804 = vpop.f32.mrb[0].mxu0
  %4805 = vdwg.mxu0
  %v4806 = vpack.c.bf16 %v4803, %v4800
  %v4809 = vunpack.c.l.b16 %v4763
  %v4810 = vunpack.c.l.b16 %v4764
  %v4811 = vpack.c.b16 %v4810, %v4809
  %v4813 = vsel %vm3254, %v4811, 0
  %4815 = vmatprep.subr.bf16.mxu0 0
  %4816 = vmatpush1.bf16.msra.mxu0 %v4806
  %4817 = vmatprep.subr.bf16.mxu0 0
  %4818 = vmatpush1.bf16.msra.mxu0 0
  %4819 = vmatprep.subr.bf16.mxu0 0
  %4820 = vmatpush1.bf16.msra.mxu0 0
  %4821 = vmatprep.subr.bf16.mxu0 0
  %4822 = vmatpush1.bf16.msra.mxu0 0
  %4823 = vmatprep.subr.bf16.mxu0 0
  %4824 = vmatpush1.bf16.msra.mxu0 0
  %4825 = vmatprep.subr.bf16.mxu0 0
  %4826 = vmatpush1.bf16.msra.mxu0 0
  %4827 = vmatprep.subr.bf16.mxu0 0
  %4828 = vmatpush1.bf16.msra.mxu0 0
  %4829 = vmatprep.subr.bf16.mxu0 0
  %4830 = vmatpush1.bf16.msra.mxu0 0
  %4831 = vmatprep.subr.bf16.mxu0 0
  %4832 = vmatpush1.bf16.msra.mxu0 0
  %4833 = vmatprep.subr.bf16.mxu0 0
  %4834 = vmatpush1.bf16.msra.mxu0 0
  %4835 = vmatprep.subr.bf16.mxu0 0
  %4836 = vmatpush1.bf16.msra.mxu0 0
  %4837 = vmatprep.subr.bf16.mxu0 0
  %4838 = vmatpush1.bf16.msra.mxu0 0
  %4839 = vmatprep.subr.bf16.mxu0 0
  %4840 = vmatpush1.bf16.msra.mxu0 0
  %4841 = vmatprep.subr.bf16.mxu0 0
  %4842 = vmatpush1.bf16.msra.mxu0 0
  %4843 = vmatprep.subr.bf16.mxu0 0
  %4844 = vmatpush1.bf16.msra.mxu0 0
  %4845 = vmatprep.subr.bf16.mxu0 0
  %4846 = vmatpush1.bf16.msra.mxu0 0
  %4847 = vmatprep.mubr.bf16.mxu0 0
  %4848 = vmatmul.mubr.bf16.gmra.mrb[0].mxu0 %v4813
  %v4849 = vpop.f32.mrb[0].mxu0
  %v4850 = vadd.f32 0.0, %v4849
  %v4851 = vpop.f32.mrb[0].mxu0
  %v4852 = vpop.f32.mrb[0].mxu0
  %v4853 = vadd.f32 0.0, %v4852
  %v4854 = vpop.f32.mrb[0].mxu0
  %4855 = vdwg.mxu0
  %v4856 = vadd.f32 %v4760, %v4850
  %v4857 = vadd.f32 %v4761, %v4853
  %s4858 = scalar_lea.vmem %s91, 16
  %v4859 = vld [vmem:[%s4858] sm:$0xf]
  %v4860 = vld [vmem:[%s4858 + $0x4] sm:$0xf]
  %4861 = vmatprep.subr.bf16.mxu0 0
  %4862 = vmatpush1.bf16.msra.mxu0 %v3364
  %4863 = vmatprep.subr.bf16.mxu0 0
  %4864 = vmatpush1.bf16.msra.mxu0 %v3365
  %4865 = vmatprep.subr.bf16.mxu0 0
  %4866 = vmatpush1.bf16.msra.mxu0 0
  %4867 = vmatprep.subr.bf16.mxu0 0
  %4868 = vmatpush1.bf16.msra.mxu0 0
  %4869 = vmatprep.subr.bf16.mxu0 0
  %4870 = vmatpush1.bf16.msra.mxu0 0
  %4871 = vmatprep.subr.bf16.mxu0 0
  %4872 = vmatpush1.bf16.msra.mxu0 0
  %4873 = vmatprep.subr.bf16.mxu0 0
  %4874 = vmatpush1.bf16.msra.mxu0 0
  %4875 = vmatprep.subr.bf16.mxu0 0
  %4876 = vmatpush1.bf16.msra.mxu0 0
  %4877 = vmatprep.subr.bf16.mxu0 0
  %4878 = vmatpush1.bf16.msra.mxu0 0
  %4879 = vmatprep.subr.bf16.mxu0 0
  %4880 = vmatpush1.bf16.msra.mxu0 0
  %4881 = vmatprep.subr.bf16.mxu0 0
  %4882 = vmatpush1.bf16.msra.mxu0 0
  %4883 = vmatprep.subr.bf16.mxu0 0
  %4884 = vmatpush1.bf16.msra.mxu0 0
  %4885 = vmatprep.subr.bf16.mxu0 0
  %4886 = vmatpush1.bf16.msra.mxu0 0
  %4887 = vmatprep.subr.bf16.mxu0 0
  %4888 = vmatpush1.bf16.msra.mxu0 0
  %4889 = vmatprep.subr.bf16.mxu0 0
  %4890 = vmatpush1.bf16.msra.mxu0 0
  %4891 = vmatprep.subr.bf16.mxu0 0
  %4892 = vmatpush1.bf16.msra.mxu0 0
  %4893 = vmatprep.mubr.bf16.mxu0 0
  %4894 = vmatmul.mubr.bf16.gmra.mrb[0].mxu0 %v4423
  %v4895 = vpop.f32.mrb[0].mxu0
  %v4896 = vadd.f32 0.0, %v4895
  %v4897 = vpop.f32.mrb[0].mxu0
  %v4898 = vpop.f32.mrb[0].mxu0
  %v4899 = vpop.f32.mrb[0].mxu0
  %4900 = vdwg.mxu0
  %v4901 = vpack.c.bf16 %v4896, %v4896
  %v4904 = vunpack.c.l.b16 %v4859
  %v4905 = vunpack.c.l.b16 %v4860
  %v4906 = vpack.c.b16 %v4905, %v4904
  %v4908 = vsel %vm4471, %v4906, 0
  %v4911 = vsel %vm300, %v4901, 0
  %4913 = vmatprep.subr.bf16.mxu0 0
  %4914 = vmatpush1.bf16.msra.mxu0 %v4911
  %4915 = vmatprep.subr.bf16.mxu0 0
  %4916 = vmatpush1.bf16.msra.mxu0 0
  %4917 = vmatprep.subr.bf16.mxu0 0
  %4918 = vmatpush1.bf16.msra.mxu0 0
  %4919 = vmatprep.subr.bf16.mxu0 0
  %4920 = vmatpush1.bf16.msra.mxu0 0
  %4921 = vmatprep.subr.bf16.mxu0 0
  %4922 = vmatpush1.bf16.msra.mxu0 0
  %4923 = vmatprep.subr.bf16.mxu0 0
  %4924 = vmatpush1.bf16.msra.mxu0 0
  %4925 = vmatprep.subr.bf16.mxu0 0
  %4926 = vmatpush1.bf16.msra.mxu0 0
  %4927 = vmatprep.subr.bf16.mxu0 0
  %4928 = vmatpush1.bf16.msra.mxu0 0
  %4929 = vmatprep.subr.bf16.mxu0 0
  %4930 = vmatpush1.bf16.msra.mxu0 0
  %4931 = vmatprep.subr.bf16.mxu0 0
  %4932 = vmatpush1.bf16.msra.mxu0 0
  %4933 = vmatprep.subr.bf16.mxu0 0
  %4934 = vmatpush1.bf16.msra.mxu0 0
  %4935 = vmatprep.subr.bf16.mxu0 0
  %4936 = vmatpush1.bf16.msra.mxu0 0
  %4937 = vmatprep.subr.bf16.mxu0 0
  %4938 = vmatpush1.bf16.msra.mxu0 0
  %4939 = vmatprep.subr.bf16.mxu0 0
  %4940 = vmatpush1.bf16.msra.mxu0 0
  %4941 = vmatprep.subr.bf16.mxu0 0
  %4942 = vmatpush1.bf16.msra.mxu0 0
  %4943 = vmatprep.subr.bf16.mxu0 0
  %4944 = vmatpush1.bf16.msra.mxu0 0
  %4945 = vmatprep.mubr.bf16.mxu0 0
  %4946 = vmatmul.mubr.bf16.gmra.mrb[0].mxu0 %v4908
  %v4947 = vpop.f32.mrb[0].mxu0
  %v4948 = vadd.f32 0.0, %v4947
  %v4949 = vpop.f32.mrb[0].mxu0
  %v4950 = vpop.f32.mrb[0].mxu0
  %v4951 = vadd.f32 0.0, %v4950
  %v4952 = vpop.f32.mrb[0].mxu0
  %4953 = vdwg.mxu0
  %v4954 = vadd.f32 %v4856, %v4948
  %v4955 = vadd.f32 %v4857, %v4951
  %s4956 = scalar_lea.vmem %s89, 24
  %v4957 = vld [vmem:[%s4956] sm:$0xf]
  %v4958 = vld [vmem:[%s4956 + $0x4] sm:$0xf]
  %4959 = vmatprep.subr.bf16.mxu0 0
  %4960 = vmatpush1.bf16.msra.mxu0 %v3477
  %4961 = vmatprep.subr.bf16.mxu0 0
  %4962 = vmatpush1.bf16.msra.mxu0 %v3478
  %4963 = vmatprep.subr.bf16.mxu0 0
  %4964 = vmatpush1.bf16.msra.mxu0 0
  %4965 = vmatprep.subr.bf16.mxu0 0
  %4966 = vmatpush1.bf16.msra.mxu0 0
  %4967 = vmatprep.subr.bf16.mxu0 0
  %4968 = vmatpush1.bf16.msra.mxu0 0
  %4969 = vmatprep.subr.bf16.mxu0 0
  %4970 = vmatpush1.bf16.msra.mxu0 0
  %4971 = vmatprep.subr.bf16.mxu0 0
  %4972 = vmatpush1.bf16.msra.mxu0 0
  %4973 = vmatprep.subr.bf16.mxu0 0
  %4974 = vmatpush1.bf16.msra.mxu0 0
  %4975 = vmatprep.subr.bf16.mxu0 0
  %4976 = vmatpush1.bf16.msra.mxu0 0
  %4977 = vmatprep.subr.bf16.mxu0 0
  %4978 = vmatpush1.bf16.msra.mxu0 0
  %4979 = vmatprep.subr.bf16.mxu0 0
  %4980 = vmatpush1.bf16.msra.mxu0 0
  %4981 = vmatprep.subr.bf16.mxu0 0
  %4982 = vmatpush1.bf16.msra.mxu0 0
  %4983 = vmatprep.subr.bf16.mxu0 0
  %4984 = vmatpush1.bf16.msra.mxu0 0
  %4985 = vmatprep.subr.bf16.mxu0 0
  %4986 = vmatpush1.bf16.msra.mxu0 0
  %4987 = vmatprep.subr.bf16.mxu0 0
  %4988 = vmatpush1.bf16.msra.mxu0 0
  %4989 = vmatprep.subr.bf16.mxu0 0
  %4990 = vmatpush1.bf16.msra.mxu0 0
  %4991 = vmatprep.mubr.bf16.mxu0 0
  %4992 = vmatmul.mubr.bf16.gmra.mrb[0].mxu0 %v4375
  %v4993 = vpop.f32.mrb[0].mxu0
  %v4994 = vadd.f32 0.0, %v4993
  %v4995 = vpop.f32.mrb[0].mxu0
  %v4996 = vpop.f32.mrb[0].mxu0
  %v4997 = vadd.f32 0.0, %v4996
  %v4998 = vpop.f32.mrb[0].mxu0
  %4999 = vdwg.mxu0
  %v5000 = vpack.c.bf16 %v4997, %v4994
  %v5003 = vunpack.c.l.b16 %v4957
  %v5004 = vunpack.c.l.b16 %v4958
  %v5005 = vpack.c.b16 %v5004, %v5003
  %v5007 = vsel %vm3254, %v5005, 0
  %5009 = vmatprep.subr.bf16.mxu0 0
  %5010 = vmatpush1.bf16.msra.mxu0 %v5000
  %5011 = vmatprep.subr.bf16.mxu0 0
  %5012 = vmatpush1.bf16.msra.mxu0 0
  %5013 = vmatprep.subr.bf16.mxu0 0
  %5014 = vmatpush1.bf16.msra.mxu0 0
  %5015 = vmatprep.subr.bf16.mxu0 0
  %5016 = vmatpush1.bf16.msra.mxu0 0
  %5017 = vmatprep.subr.bf16.mxu0 0
  %5018 = vmatpush1.bf16.msra.mxu0 0
  %5019 = vmatprep.subr.bf16.mxu0 0
  %5020 = vmatpush1.bf16.msra.mxu0 0
  %5021 = vmatprep.subr.bf16.mxu0 0
  %5022 = vmatpush1.bf16.msra.mxu0 0
  %5023 = vmatprep.subr.bf16.mxu0 0
  %5024 = vmatpush1.bf16.msra.mxu0 0
  %5025 = vmatprep.subr.bf16.mxu0 0
  %5026 = vmatpush1.bf16.msra.mxu0 0
  %5027 = vmatprep.subr.bf16.mxu0 0
  %5028 = vmatpush1.bf16.msra.mxu0 0
  %5029 = vmatprep.subr.bf16.mxu0 0
  %5030 = vmatpush1.bf16.msra.mxu0 0
  %5031 = vmatprep.subr.bf16.mxu0 0
  %5032 = vmatpush1.bf16.msra.mxu0 0
  %5033 = vmatprep.subr.bf16.mxu0 0
  %5034 = vmatpush1.bf16.msra.mxu0 0
  %5035 = vmatprep.subr.bf16.mxu0 0
  %5036 = vmatpush1.bf16.msra.mxu0 0
  %5037 = vmatprep.subr.bf16.mxu0 0
  %5038 = vmatpush1.bf16.msra.mxu0 0
  %5039 = vmatprep.subr.bf16.mxu0 0
  %5040 = vmatpush1.bf16.msra.mxu0 0
  %5041 = vmatprep.mubr.bf16.mxu0 0
  %5042 = vmatmul.mubr.bf16.gmra.mrb[0].mxu0 %v5007
  %v5043 = vpop.f32.mrb[0].mxu0
  %v5044 = vadd.f32 0.0, %v5043
  %v5045 = vpop.f32.mrb[0].mxu0
  %v5046 = vpop.f32.mrb[0].mxu0
  %v5047 = vadd.f32 0.0, %v5046
  %v5048 = vpop.f32.mrb[0].mxu0
  %5049 = vdwg.mxu0
  %v5050 = vadd.f32 %v4954, %v5044
  %v5051 = vadd.f32 %v4955, %v5047
  %s5052 = scalar_lea.vmem %s91, 24
  %v5053 = vld [vmem:[%s5052] sm:$0xf]
  %v5054 = vld [vmem:[%s5052 + $0x4] sm:$0xf]
  %5055 = vmatprep.subr.bf16.mxu0 0
  %5056 = vmatpush1.bf16.msra.mxu0 %v3477
  %5057 = vmatprep.subr.bf16.mxu0 0
  %5058 = vmatpush1.bf16.msra.mxu0 %v3478
  %5059 = vmatprep.subr.bf16.mxu0 0
  %5060 = vmatpush1.bf16.msra.mxu0 0
  %5061 = vmatprep.subr.bf16.mxu0 0
  %5062 = vmatpush1.bf16.msra.mxu0 0
  %5063 = vmatprep.subr.bf16.mxu0 0
  %5064 = vmatpush1.bf16.msra.mxu0 0
  %5065 = vmatprep.subr.bf16.mxu0 0
  %5066 = vmatpush1.bf16.msra.mxu0 0
  %5067 = vmatprep.subr.bf16.mxu0 0
  %5068 = vmatpush1.bf16.msra.mxu0 0
  %5069 = vmatprep.subr.bf16.mxu0 0
  %5070 = vmatpush1.bf16.msra.mxu0 0
  %5071 = vmatprep.subr.bf16.mxu0 0
  %5072 = vmatpush1.bf16.msra.mxu0 0
  %5073 = vmatprep.subr.bf16.mxu0 0
  %5074 = vmatpush1.bf16.msra.mxu0 0
  %5075 = vmatprep.subr.bf16.mxu0 0
  %5076 = vmatpush1.bf16.msra.mxu0 0
  %5077 = vmatprep.subr.bf16.mxu0 0
  %5078 = vmatpush1.bf16.msra.mxu0 0
  %5079 = vmatprep.subr.bf16.mxu0 0
  %5080 = vmatpush1.bf16.msra.mxu0 0
  %5081 = vmatprep.subr.bf16.mxu0 0
  %5082 = vmatpush1.bf16.msra.mxu0 0
  %5083 = vmatprep.subr.bf16.mxu0 0
  %5084 = vmatpush1.bf16.msra.mxu0 0
  %5085 = vmatprep.subr.bf16.mxu0 0
  %5086 = vmatpush1.bf16.msra.mxu0 0
  %5087 = vmatprep.mubr.bf16.mxu0 0
  %5088 = vmatmul.mubr.bf16.gmra.mrb[0].mxu0 %v4423
  %v5089 = vpop.f32.mrb[0].mxu0
  %v5090 = vadd.f32 0.0, %v5089
  %v5091 = vpop.f32.mrb[0].mxu0
  %v5092 = vpop.f32.mrb[0].mxu0
  %v5093 = vpop.f32.mrb[0].mxu0
  %5094 = vdwg.mxu0
  %v5095 = vpack.c.bf16 %v5090, %v5090
  %v5098 = vunpack.c.l.b16 %v5053
  %v5099 = vunpack.c.l.b16 %v5054
  %v5100 = vpack.c.b16 %v5099, %v5098
  %v5102 = vsel %vm4471, %v5100, 0
  %v5105 = vsel %vm300, %v5095, 0
  %5107 = vmatprep.subr.bf16.mxu0 0
  %5108 = vmatpush1.bf16.msra.mxu0 %v5105
  %5109 = vmatprep.subr.bf16.mxu0 0
  %5110 = vmatpush1.bf16.msra.mxu0 0
  %5111 = vmatprep.subr.bf16.mxu0 0
  %5112 = vmatpush1.bf16.msra.mxu0 0
  %5113 = vmatprep.subr.bf16.mxu0 0
  %5114 = vmatpush1.bf16.msra.mxu0 0
  %5115 = vmatprep.subr.bf16.mxu0 0
  %5116 = vmatpush1.bf16.msra.mxu0 0
  %5117 = vmatprep.subr.bf16.mxu0 0
  %5118 = vmatpush1.bf16.msra.mxu0 0
  %5119 = vmatprep.subr.bf16.mxu0 0
  %5120 = vmatpush1.bf16.msra.mxu0 0
  %5121 = vmatprep.subr.bf16.mxu0 0
  %5122 = vmatpush1.bf16.msra.mxu0 0
  %5123 = vmatprep.subr.bf16.mxu0 0
  %5124 = vmatpush1.bf16.msra.mxu0 0
  %5125 = vmatprep.subr.bf16.mxu0 0
  %5126 = vmatpush1.bf16.msra.mxu0 0
  %5127 = vmatprep.subr.bf16.mxu0 0
  %5128 = vmatpush1.bf16.msra.mxu0 0
  %5129 = vmatprep.subr.bf16.mxu0 0
  %5130 = vmatpush1.bf16.msra.mxu0 0
  %5131 = vmatprep.subr.bf16.mxu0 0
  %5132 = vmatpush1.bf16.msra.mxu0 0
  %5133 = vmatprep.subr.bf16.mxu0 0
  %5134 = vmatpush1.bf16.msra.mxu0 0
  %5135 = vmatprep.subr.bf16.mxu0 0
  %5136 = vmatpush1.bf16.msra.mxu0 0
  %5137 = vmatprep.subr.bf16.mxu0 0
  %5138 = vmatpush1.bf16.msra.mxu0 0
  %5139 = vmatprep.mubr.bf16.mxu0 0
  %5140 = vmatmul.mubr.bf16.gmra.mrb[0].mxu0 %v5102
  %v5141 = vpop.f32.mrb[0].mxu0
  %v5142 = vadd.f32 0.0, %v5141
  %v5143 = vpop.f32.mrb[0].mxu0
  %v5144 = vpop.f32.mrb[0].mxu0
  %v5145 = vadd.f32 0.0, %v5144
  %v5146 = vpop.f32.mrb[0].mxu0
  %5147 = vdwg.mxu0
  %v5148 = vadd.f32 %v5050, %v5142
  %v5149 = vadd.f32 %v5051, %v5145
  %s5150 = scalar_lea.vmem %s89, 32
  %v5151 = vld [vmem:[%s5150] sm:$0xf]
  %v5152 = vld [vmem:[%s5150 + $0x4] sm:$0xf]
  %v5155 = vunpack.c.l.b16 %v5151
  %v5156 = vunpack.c.l.b16 %v5152
  %v5157 = vpack.c.b16 %v5156, %v5155
  %v5159 = vsel %vm3254, %v5157, 0
  %5161 = vmatprep.subr.bf16.mxu0 0
  %5162 = vmatpush1.bf16.msra.mxu0 %v4373
  %5163 = vmatprep.subr.bf16.mxu0 0
  %5164 = vmatpush1.bf16.msra.mxu0 0
  %5165 = vmatprep.subr.bf16.mxu0 0
  %5166 = vmatpush1.bf16.msra.mxu0 0
  %5167 = vmatprep.subr.bf16.mxu0 0
  %5168 = vmatpush1.bf16.msra.mxu0 0
  %5169 = vmatprep.subr.bf16.mxu0 0
  %5170 = vmatpush1.bf16.msra.mxu0 0
  %5171 = vmatprep.subr.bf16.mxu0 0
  %5172 = vmatpush1.bf16.msra.mxu0 0
  %5173 = vmatprep.subr.bf16.mxu0 0
  %5174 = vmatpush1.bf16.msra.mxu0 0
  %5175 = vmatprep.subr.bf16.mxu0 0
  %5176 = vmatpush1.bf16.msra.mxu0 0
  %5177 = vmatprep.subr.bf16.mxu0 0
  %5178 = vmatpush1.bf16.msra.mxu0 0
  %5179 = vmatprep.subr.bf16.mxu0 0
  %5180 = vmatpush1.bf16.msra.mxu0 0
  %5181 = vmatprep.subr.bf16.mxu0 0
  %5182 = vmatpush1.bf16.msra.mxu0 0
  %5183 = vmatprep.subr.bf16.mxu0 0
  %5184 = vmatpush1.bf16.msra.mxu0 0
  %5185 = vmatprep.subr.bf16.mxu0 0
  %5186 = vmatpush1.bf16.msra.mxu0 0
  %5187 = vmatprep.subr.bf16.mxu0 0
  %5188 = vmatpush1.bf16.msra.mxu0 0
  %5189 = vmatprep.subr.bf16.mxu0 0
  %5190 = vmatpush1.bf16.msra.mxu0 0
  %5191 = vmatprep.subr.bf16.mxu0 0
  %5192 = vmatpush1.bf16.msra.mxu0 0
  %5193 = vmatprep.mubr.bf16.mxu0 0
  %5194 = vmatmul.mubr.bf16.gmra.mrb[0].mxu0 %v5159
  %v5195 = vpop.f32.mrb[0].mxu0
  %v5196 = vadd.f32 0.0, %v5195
  %v5197 = vpop.f32.mrb[0].mxu0
  %v5198 = vpop.f32.mrb[0].mxu0
  %v5199 = vadd.f32 0.0, %v5198
  %v5200 = vpop.f32.mrb[0].mxu0
  %5201 = vdwg.mxu0
  %v5202 = vadd.f32 %v5148, %v5196
  %v5203 = vadd.f32 %v5149, %v5199
  %s5204 = scalar_lea.vmem %s91, 32
  %v5205 = vld [vmem:[%s5204] sm:$0xf]
  %v5206 = vld [vmem:[%s5204 + $0x4] sm:$0xf]
  %v5209 = vunpack.c.l.b16 %v5205
  %v5210 = vunpack.c.l.b16 %v5206
  %v5211 = vpack.c.b16 %v5210, %v5209
  %v5213 = vsel %vm4471, %v5211, 0
  %v5215 = vsel %vm300, %v4421, 0
  %5217 = vmatprep.subr.bf16.mxu0 0
  %5218 = vmatpush1.bf16.msra.mxu0 %v5215
  %5219 = vmatprep.subr.bf16.mxu0 0
  %5220 = vmatpush1.bf16.msra.mxu0 0
  %5221 = vmatprep.subr.bf16.mxu0 0
  %5222 = vmatpush1.bf16.msra.mxu0 0
  %5223 = vmatprep.subr.bf16.mxu0 0
  %5224 = vmatpush1.bf16.msra.mxu0 0
  %5225 = vmatprep.subr.bf16.mxu0 0
  %5226 = vmatpush1.bf16.msra.mxu0 0
  %5227 = vmatprep.subr.bf16.mxu0 0
  %5228 = vmatpush1.bf16.msra.mxu0 0
  %5229 = vmatprep.subr.bf16.mxu0 0
  %5230 = vmatpush1.bf16.msra.mxu0 0
  %5231 = vmatprep.subr.bf16.mxu0 0
  %5232 = vmatpush1.bf16.msra.mxu0 0
  %5233 = vmatprep.subr.bf16.mxu0 0
  %5234 = vmatpush1.bf16.msra.mxu0 0
  %5235 = vmatprep.subr.bf16.mxu0 0
  %5236 = vmatpush1.bf16.msra.mxu0 0
  %5237 = vmatprep.subr.bf16.mxu0 0
  %5238 = vmatpush1.bf16.msra.mxu0 0
  %5239 = vmatprep.subr.bf16.mxu0 0
  %5240 = vmatpush1.bf16.msra.mxu0 0
  %5241 = vmatprep.subr.bf16.mxu0 0
  %5242 = vmatpush1.bf16.msra.mxu0 0
  %5243 = vmatprep.subr.bf16.mxu0 0
  %5244 = vmatpush1.bf16.msra.mxu0 0
  %5245 = vmatprep.subr.bf16.mxu0 0
  %5246 = vmatpush1.bf16.msra.mxu0 0
  %5247 = vmatprep.subr.bf16.mxu0 0
  %5248 = vmatpush1.bf16.msra.mxu0 0
  %5249 = vmatprep.mubr.bf16.mxu0 0
  %5250 = vmatmul.mubr.bf16.gmra.mrb[0].mxu0 %v5213
  %v5251 = vpop.f32.mrb[0].mxu0
  %v5252 = vadd.f32 0.0, %v5251
  %v5253 = vpop.f32.mrb[0].mxu0
  %v5254 = vpop.f32.mrb[0].mxu0
  %v5255 = vadd.f32 0.0, %v5254
  %v5256 = vpop.f32.mrb[0].mxu0
  %5257 = vdwg.mxu0
  %v5258 = vadd.f32 %v5202, %v5252
  %v5259 = vadd.f32 %v5203, %v5255
  %s5260 = scalar_lea.vmem %s89, 40
  %v5261 = vld [vmem:[%s5260] sm:$0xf]
  %v5262 = vld [vmem:[%s5260 + $0x4] sm:$0xf]
  %5263 = vmatprep.subr.bf16.mxu0 0
  %5264 = vmatpush1.bf16.msra.mxu0 %v3644
  %5265 = vmatprep.subr.bf16.mxu0 0
  %5266 = vmatpush1.bf16.msra.mxu0 %v3645
  %5267 = vmatprep.subr.bf16.mxu0 0
  %5268 = vmatpush1.bf16.msra.mxu0 0
  %5269 = vmatprep.subr.bf16.mxu0 0
  %5270 = vmatpush1.bf16.msra.mxu0 0
  %5271 = vmatprep.subr.bf16.mxu0 0
  %5272 = vmatpush1.bf16.msra.mxu0 0
  %5273 = vmatprep.subr.bf16.mxu0 0
  %5274 = vmatpush1.bf16.msra.mxu0 0
  %5275 = vmatprep.subr.bf16.mxu0 0
  %5276 = vmatpush1.bf16.msra.mxu0 0
  %5277 = vmatprep.subr.bf16.mxu0 0
  %5278 = vmatpush1.bf16.msra.mxu0 0
  %5279 = vmatprep.subr.bf16.mxu0 0
  %5280 = vmatpush1.bf16.msra.mxu0 0
  %5281 = vmatprep.subr.bf16.mxu0 0
  %5282 = vmatpush1.bf16.msra.mxu0 0
  %5283 = vmatprep.subr.bf16.mxu0 0
  %5284 = vmatpush1.bf16.msra.mxu0 0
  %5285 = vmatprep.subr.bf16.mxu0 0
  %5286 = vmatpush1.bf16.msra.mxu0 0
  %5287 = vmatprep.subr.bf16.mxu0 0
  %5288 = vmatpush1.bf16.msra.mxu0 0
  %5289 = vmatprep.subr.bf16.mxu0 0
  %5290 = vmatpush1.bf16.msra.mxu0 0
  %5291 = vmatprep.subr.bf16.mxu0 0
  %5292 = vmatpush1.bf16.msra.mxu0 0
  %5293 = vmatprep.subr.bf16.mxu0 0
  %5294 = vmatpush1.bf16.msra.mxu0 0
  %5295 = vmatprep.mubr.bf16.mxu0 0
  %5296 = vmatmul.mubr.bf16.gmra.mrb[0].mxu0 %v4375
  %v5297 = vpop.f32.mrb[0].mxu0
  %v5298 = vadd.f32 0.0, %v5297
  %v5299 = vpop.f32.mrb[0].mxu0
  %v5300 = vpop.f32.mrb[0].mxu0
  %v5301 = vadd.f32 0.0, %v5300
  %v5302 = vpop.f32.mrb[0].mxu0
  %5303 = vdwg.mxu0
  %v5304 = vpack.c.bf16 %v5301, %v5298
  %v5307 = vunpack.c.l.b16 %v5261
  %v5308 = vunpack.c.l.b16 %v5262
  %v5309 = vpack.c.b16 %v5308, %v5307
  %v5311 = vsel %vm3254, %v5309, 0
  %5313 = vmatprep.subr.bf16.mxu0 0
  %5314 = vmatpush1.bf16.msra.mxu0 %v5304
  %5315 = vmatprep.subr.bf16.mxu0 0
  %5316 = vmatpush1.bf16.msra.mxu0 0
  %5317 = vmatprep.subr.bf16.mxu0 0
  %5318 = vmatpush1.bf16.msra.mxu0 0
  %5319 = vmatprep.subr.bf16.mxu0 0
  %5320 = vmatpush1.bf16.msra.mxu0 0
  %5321 = vmatprep.subr.bf16.mxu0 0
  %5322 = vmatpush1.bf16.msra.mxu0 0
  %5323 = vmatprep.subr.bf16.mxu0 0
  %5324 = vmatpush1.bf16.msra.mxu0 0
  %5325 = vmatprep.subr.bf16.mxu0 0
  %5326 = vmatpush1.bf16.msra.mxu0 0
  %5327 = vmatprep.subr.bf16.mxu0 0
  %5328 = vmatpush1.bf16.msra.mxu0 0
  %5329 = vmatprep.subr.bf16.mxu0 0
  %5330 = vmatpush1.bf16.msra.mxu0 0
  %5331 = vmatprep.subr.bf16.mxu0 0
  %5332 = vmatpush1.bf16.msra.mxu0 0
  %5333 = vmatprep.subr.bf16.mxu0 0
  %5334 = vmatpush1.bf16.msra.mxu0 0
  %5335 = vmatprep.subr.bf16.mxu0 0
  %5336 = vmatpush1.bf16.msra.mxu0 0
  %5337 = vmatprep.subr.bf16.mxu0 0
  %5338 = vmatpush1.bf16.msra.mxu0 0
  %5339 = vmatprep.subr.bf16.mxu0 0
  %5340 = vmatpush1.bf16.msra.mxu0 0
  %5341 = vmatprep.subr.bf16.mxu0 0
  %5342 = vmatpush1.bf16.msra.mxu0 0
  %5343 = vmatprep.subr.bf16.mxu0 0
  %5344 = vmatpush1.bf16.msra.mxu0 0
  %5345 = vmatprep.mubr.bf16.mxu0 0
  %5346 = vmatmul.mubr.bf16.gmra.mrb[0].mxu0 %v5311
  %v5347 = vpop.f32.mrb[0].mxu0
  %v5348 = vadd.f32 0.0, %v5347
  %v5349 = vpop.f32.mrb[0].mxu0
  %v5350 = vpop.f32.mrb[0].mxu0
  %v5351 = vadd.f32 0.0, %v5350
  %v5352 = vpop.f32.mrb[0].mxu0
  %5353 = vdwg.mxu0
  %v5354 = vadd.f32 %v5258, %v5348
  %v5355 = vadd.f32 %v5259, %v5351
  %s5356 = scalar_lea.vmem %s91, 40
  %v5357 = vld [vmem:[%s5356] sm:$0xf]
  %v5358 = vld [vmem:[%s5356 + $0x4] sm:$0xf]
  %5359 = vmatprep.subr.bf16.mxu0 0
  %5360 = vmatpush1.bf16.msra.mxu0 %v3644
  %5361 = vmatprep.subr.bf16.mxu0 0
  %5362 = vmatpush1.bf16.msra.mxu0 %v3645
  %5363 = vmatprep.subr.bf16.mxu0 0
  %5364 = vmatpush1.bf16.msra.mxu0 0
  %5365 = vmatprep.subr.bf16.mxu0 0
  %5366 = vmatpush1.bf16.msra.mxu0 0
  %5367 = vmatprep.subr.bf16.mxu0 0
  %5368 = vmatpush1.bf16.msra.mxu0 0
  %5369 = vmatprep.subr.bf16.mxu0 0
  %5370 = vmatpush1.bf16.msra.mxu0 0
  %5371 = vmatprep.subr.bf16.mxu0 0
  %5372 = vmatpush1.bf16.msra.mxu0 0
  %5373 = vmatprep.subr.bf16.mxu0 0
  %5374 = vmatpush1.bf16.msra.mxu0 0
  %5375 = vmatprep.subr.bf16.mxu0 0
  %5376 = vmatpush1.bf16.msra.mxu0 0
  %5377 = vmatprep.subr.bf16.mxu0 0
  %5378 = vmatpush1.bf16.msra.mxu0 0
  %5379 = vmatprep.subr.bf16.mxu0 0
  %5380 = vmatpush1.bf16.msra.mxu0 0
  %5381 = vmatprep.subr.bf16.mxu0 0
  %5382 = vmatpush1.bf16.msra.mxu0 0
  %5383 = vmatprep.subr.bf16.mxu0 0
  %5384 = vmatpush1.bf16.msra.mxu0 0
  %5385 = vmatprep.subr.bf16.mxu0 0
  %5386 = vmatpush1.bf16.msra.mxu0 0
  %5387 = vmatprep.subr.bf16.mxu0 0
  %5388 = vmatpush1.bf16.msra.mxu0 0
  %5389 = vmatprep.subr.bf16.mxu0 0
  %5390 = vmatpush1.bf16.msra.mxu0 0
  %5391 = vmatprep.mubr.bf16.mxu0 0
  %5392 = vmatmul.mubr.bf16.gmra.mrb[0].mxu0 %v4423
  %v5393 = vpop.f32.mrb[0].mxu0
  %v5394 = vadd.f32 0.0, %v5393
  %v5395 = vpop.f32.mrb[0].mxu0
  %v5396 = vpop.f32.mrb[0].mxu0
  %v5397 = vpop.f32.mrb[0].mxu0
  %5398 = vdwg.mxu0
  %v5399 = vpack.c.bf16 %v5394, %v5394
  %v5402 = vunpack.c.l.b16 %v5357
  %v5403 = vunpack.c.l.b16 %v5358
  %v5404 = vpack.c.b16 %v5403, %v5402
  %v5406 = vsel %vm4471, %v5404, 0
  %v5409 = vsel %vm300, %v5399, 0
  %5411 = vmatprep.subr.bf16.mxu0 0
  %5412 = vmatpush1.bf16.msra.mxu0 %v5409
  %5413 = vmatprep.subr.bf16.mxu0 0
  %5414 = vmatpush1.bf16.msra.mxu0 0
  %5415 = vmatprep.subr.bf16.mxu0 0
  %5416 = vmatpush1.bf16.msra.mxu0 0
  %5417 = vmatprep.subr.bf16.mxu0 0
  %5418 = vmatpush1.bf16.msra.mxu0 0
  %5419 = vmatprep.subr.bf16.mxu0 0
  %5420 = vmatpush1.bf16.msra.mxu0 0
  %5421 = vmatprep.subr.bf16.mxu0 0
  %5422 = vmatpush1.bf16.msra.mxu0 0
  %5423 = vmatprep.subr.bf16.mxu0 0
  %5424 = vmatpush1.bf16.msra.mxu0 0
  %5425 = vmatprep.subr.bf16.mxu0 0
  %5426 = vmatpush1.bf16.msra.mxu0 0
  %5427 = vmatprep.subr.bf16.mxu0 0
  %5428 = vmatpush1.bf16.msra.mxu0 0
  %5429 = vmatprep.subr.bf16.mxu0 0
  %5430 = vmatpush1.bf16.msra.mxu0 0
  %5431 = vmatprep.subr.bf16.mxu0 0
  %5432 = vmatpush1.bf16.msra.mxu0 0
  %5433 = vmatprep.subr.bf16.mxu0 0
  %5434 = vmatpush1.bf16.msra.mxu0 0
  %5435 = vmatprep.subr.bf16.mxu0 0
  %5436 = vmatpush1.bf16.msra.mxu0 0
  %5437 = vmatprep.subr.bf16.mxu0 0
  %5438 = vmatpush1.bf16.msra.mxu0 0
  %5439 = vmatprep.subr.bf16.mxu0 0
  %5440 = vmatpush1.bf16.msra.mxu0 0
  %5441 = vmatprep.subr.bf16.mxu0 0
  %5442 = vmatpush1.bf16.msra.mxu0 0
  %5443 = vmatprep.mubr.bf16.mxu0 0
  %5444 = vmatmul.mubr.bf16.gmra.mrb[0].mxu0 %v5406
  %v5445 = vpop.f32.mrb[0].mxu0
  %v5446 = vadd.f32 0.0, %v5445
  %v5447 = vpop.f32.mrb[0].mxu0
  %v5448 = vpop.f32.mrb[0].mxu0
  %v5449 = vadd.f32 0.0, %v5448
  %v5450 = vpop.f32.mrb[0].mxu0
  %5451 = vdwg.mxu0
  %v5452 = vadd.f32 %v5354, %v5446
  %v5453 = vadd.f32 %v5355, %v5449
  %s5454 = scalar_lea.vmem %s89, 48
  %v5455 = vld [vmem:[%s5454] sm:$0xf]
  %v5456 = vld [vmem:[%s5454 + $0x4] sm:$0xf]
  %5457 = vmatprep.subr.bf16.mxu0 0
  %5458 = vmatpush1.bf16.msra.mxu0 %v3757
  %5459 = vmatprep.subr.bf16.mxu0 0
  %5460 = vmatpush1.bf16.msra.mxu0 %v3758
  %5461 = vmatprep.subr.bf16.mxu0 0
  %5462 = vmatpush1.bf16.msra.mxu0 0
  %5463 = vmatprep.subr.bf16.mxu0 0
  %5464 = vmatpush1.bf16.msra.mxu0 0
  %5465 = vmatprep.subr.bf16.mxu0 0
  %5466 = vmatpush1.bf16.msra.mxu0 0
  %5467 = vmatprep.subr.bf16.mxu0 0
  %5468 = vmatpush1.bf16.msra.mxu0 0
  %5469 = vmatprep.subr.bf16.mxu0 0
  %5470 = vmatpush1.bf16.msra.mxu0 0
  %5471 = vmatprep.subr.bf16.mxu0 0
  %5472 = vmatpush1.bf16.msra.mxu0 0
  %5473 = vmatprep.subr.bf16.mxu0 0
  %5474 = vmatpush1.bf16.msra.mxu0 0
  %5475 = vmatprep.subr.bf16.mxu0 0
  %5476 = vmatpush1.bf16.msra.mxu0 0
  %5477 = vmatprep.subr.bf16.mxu0 0
  %5478 = vmatpush1.bf16.msra.mxu0 0
  %5479 = vmatprep.subr.bf16.mxu0 0
  %5480 = vmatpush1.bf16.msra.mxu0 0
  %5481 = vmatprep.subr.bf16.mxu0 0
  %5482 = vmatpush1.bf16.msra.mxu0 0
  %5483 = vmatprep.subr.bf16.mxu0 0
  %5484 = vmatpush1.bf16.msra.mxu0 0
  %5485 = vmatprep.subr.bf16.mxu0 0
  %5486 = vmatpush1.bf16.msra.mxu0 0
  %5487 = vmatprep.subr.bf16.mxu0 0
  %5488 = vmatpush1.bf16.msra.mxu0 0
  %5489 = vmatprep.mubr.bf16.mxu0 0
  %5490 = vmatmul.mubr.bf16.gmra.mrb[0].mxu0 %v4375
  %v5491 = vpop.f32.mrb[0].mxu0
  %v5492 = vadd.f32 0.0, %v5491
  %v5493 = vpop.f32.mrb[0].mxu0
  %v5494 = vpop.f32.mrb[0].mxu0
  %v5495 = vadd.f32 0.0, %v5494
  %v5496 = vpop.f32.mrb[0].mxu0
  %5497 = vdwg.mxu0
  %v5498 = vpack.c.bf16 %v5495, %v5492
  %v5501 = vunpack.c.l.b16 %v5455
  %v5502 = vunpack.c.l.b16 %v5456
  %v5503 = vpack.c.b16 %v5502, %v5501
  %v5505 = vsel %vm3254, %v5503, 0
  %5507 = vmatprep.subr.bf16.mxu0 0
  %5508 = vmatpush1.bf16.msra.mxu0 %v5498
  %5509 = vmatprep.subr.bf16.mxu0 0
  %5510 = vmatpush1.bf16.msra.mxu0 0
  %5511 = vmatprep.subr.bf16.mxu0 0
  %5512 = vmatpush1.bf16.msra.mxu0 0
  %5513 = vmatprep.subr.bf16.mxu0 0
  %5514 = vmatpush1.bf16.msra.mxu0 0
  %5515 = vmatprep.subr.bf16.mxu0 0
  %5516 = vmatpush1.bf16.msra.mxu0 0
  %5517 = vmatprep.subr.bf16.mxu0 0
  %5518 = vmatpush1.bf16.msra.mxu0 0
  %5519 = vmatprep.subr.bf16.mxu0 0
  %5520 = vmatpush1.bf16.msra.mxu0 0
  %5521 = vmatprep.subr.bf16.mxu0 0
  %5522 = vmatpush1.bf16.msra.mxu0 0
  %5523 = vmatprep.subr.bf16.mxu0 0
  %5524 = vmatpush1.bf16.msra.mxu0 0
  %5525 = vmatprep.subr.bf16.mxu0 0
  %5526 = vmatpush1.bf16.msra.mxu0 0
  %5527 = vmatprep.subr.bf16.mxu0 0
  %5528 = vmatpush1.bf16.msra.mxu0 0
  %5529 = vmatprep.subr.bf16.mxu0 0
  %5530 = vmatpush1.bf16.msra.mxu0 0
  %5531 = vmatprep.subr.bf16.mxu0 0
  %5532 = vmatpush1.bf16.msra.mxu0 0
  %5533 = vmatprep.subr.bf16.mxu0 0
  %5534 = vmatpush1.bf16.msra.mxu0 0
  %5535 = vmatprep.subr.bf16.mxu0 0
  %5536 = vmatpush1.bf16.msra.mxu0 0
  %5537 = vmatprep.subr.bf16.mxu0 0
  %5538 = vmatpush1.bf16.msra.mxu0 0
  %5539 = vmatprep.mubr.bf16.mxu0 0
  %5540 = vmatmul.mubr.bf16.gmra.mrb[0].mxu0 %v5505
  %v5541 = vpop.f32.mrb[0].mxu0
  %v5542 = vadd.f32 0.0, %v5541
  %v5543 = vpop.f32.mrb[0].mxu0
  %v5544 = vpop.f32.mrb[0].mxu0
  %v5545 = vadd.f32 0.0, %v5544
  %v5546 = vpop.f32.mrb[0].mxu0
  %5547 = vdwg.mxu0
  %v5548 = vadd.f32 %v5452, %v5542
  %v5549 = vadd.f32 %v5453, %v5545
  %s5550 = scalar_lea.vmem %s91, 48
  %v5551 = vld [vmem:[%s5550] sm:$0xf]
  %v5552 = vld [vmem:[%s5550 + $0x4] sm:$0xf]
  %5553 = vmatprep.subr.bf16.mxu0 0
  %5554 = vmatpush1.bf16.msra.mxu0 %v3757
  %5555 = vmatprep.subr.bf16.mxu0 0
  %5556 = vmatpush1.bf16.msra.mxu0 %v3758
  %5557 = vmatprep.subr.bf16.mxu0 0
  %5558 = vmatpush1.bf16.msra.mxu0 0
  %5559 = vmatprep.subr.bf16.mxu0 0
  %5560 = vmatpush1.bf16.msra.mxu0 0
  %5561 = vmatprep.subr.bf16.mxu0 0
  %5562 = vmatpush1.bf16.msra.mxu0 0
  %5563 = vmatprep.subr.bf16.mxu0 0
  %5564 = vmatpush1.bf16.msra.mxu0 0
  %5565 = vmatprep.subr.bf16.mxu0 0
  %5566 = vmatpush1.bf16.msra.mxu0 0
  %5567 = vmatprep.subr.bf16.mxu0 0
  %5568 = vmatpush1.bf16.msra.mxu0 0
  %5569 = vmatprep.subr.bf16.mxu0 0
  %5570 = vmatpush1.bf16.msra.mxu0 0
  %5571 = vmatprep.subr.bf16.mxu0 0
  %5572 = vmatpush1.bf16.msra.mxu0 0
  %5573 = vmatprep.subr.bf16.mxu0 0
  %5574 = vmatpush1.bf16.msra.mxu0 0
  %5575 = vmatprep.subr.bf16.mxu0 0
  %5576 = vmatpush1.bf16.msra.mxu0 0
  %5577 = vmatprep.subr.bf16.mxu0 0
  %5578 = vmatpush1.bf16.msra.mxu0 0
  %5579 = vmatprep.subr.bf16.mxu0 0
  %5580 = vmatpush1.bf16.msra.mxu0 0
  %5581 = vmatprep.subr.bf16.mxu0 0
  %5582 = vmatpush1.bf16.msra.mxu0 0
  %5583 = vmatprep.subr.bf16.mxu0 0
  %5584 = vmatpush1.bf16.msra.mxu0 0
  %5585 = vmatprep.mubr.bf16.mxu0 0
  %5586 = vmatmul.mubr.bf16.gmra.mrb[0].mxu0 %v4423
  %v5587 = vpop.f32.mrb[0].mxu0
  %v5588 = vadd.f32 0.0, %v5587
  %v5589 = vpop.f32.mrb[0].mxu0
  %v5590 = vpop.f32.mrb[0].mxu0
  %v5591 = vpop.f32.mrb[0].mxu0
  %5592 = vdwg.mxu0
  %v5593 = vpack.c.bf16 %v5588, %v5588
  %v5596 = vunpack.c.l.b16 %v5551
  %v5597 = vunpack.c.l.b16 %v5552
  %v5598 = vpack.c.b16 %v5597, %v5596
  %v5600 = vsel %vm4471, %v5598, 0
  %v5603 = vsel %vm300, %v5593, 0
  %5605 = vmatprep.subr.bf16.mxu0 0
  %5606 = vmatpush1.bf16.msra.mxu0 %v5603
  %5607 = vmatprep.subr.bf16.mxu0 0
  %5608 = vmatpush1.bf16.msra.mxu0 0
  %5609 = vmatprep.subr.bf16.mxu0 0
  %5610 = vmatpush1.bf16.msra.mxu0 0
  %5611 = vmatprep.subr.bf16.mxu0 0
  %5612 = vmatpush1.bf16.msra.mxu0 0
  %5613 = vmatprep.subr.bf16.mxu0 0
  %5614 = vmatpush1.bf16.msra.mxu0 0
  %5615 = vmatprep.subr.bf16.mxu0 0
  %5616 = vmatpush1.bf16.msra.mxu0 0
  %5617 = vmatprep.subr.bf16.mxu0 0
  %5618 = vmatpush1.bf16.msra.mxu0 0
  %5619 = vmatprep.subr.bf16.mxu0 0
  %5620 = vmatpush1.bf16.msra.mxu0 0
  %5621 = vmatprep.subr.bf16.mxu0 0
  %5622 = vmatpush1.bf16.msra.mxu0 0
  %5623 = vmatprep.subr.bf16.mxu0 0
  %5624 = vmatpush1.bf16.msra.mxu0 0
  %5625 = vmatprep.subr.bf16.mxu0 0
  %5626 = vmatpush1.bf16.msra.mxu0 0
  %5627 = vmatprep.subr.bf16.mxu0 0
  %5628 = vmatpush1.bf16.msra.mxu0 0
  %5629 = vmatprep.subr.bf16.mxu0 0
  %5630 = vmatpush1.bf16.msra.mxu0 0
  %5631 = vmatprep.subr.bf16.mxu0 0
  %5632 = vmatpush1.bf16.msra.mxu0 0
  %5633 = vmatprep.subr.bf16.mxu0 0
  %5634 = vmatpush1.bf16.msra.mxu0 0
  %5635 = vmatprep.subr.bf16.mxu0 0
  %5636 = vmatpush1.bf16.msra.mxu0 0
  %5637 = vmatprep.mubr.bf16.mxu0 0
  %5638 = vmatmul.mubr.bf16.gmra.mrb[0].mxu0 %v5600
  %v5639 = vpop.f32.mrb[0].mxu0
  %v5640 = vadd.f32 0.0, %v5639
  %v5641 = vpop.f32.mrb[0].mxu0
  %v5642 = vpop.f32.mrb[0].mxu0
  %v5643 = vadd.f32 0.0, %v5642
  %v5644 = vpop.f32.mrb[0].mxu0
  %5645 = vdwg.mxu0
  %v5646 = vadd.f32 %v5548, %v5640
  %v5647 = vadd.f32 %v5549, %v5643
  %s5648 = scalar_lea.vmem %s89, 56
  %v5649 = vld [vmem:[%s5648] sm:$0xf]
  %v5650 = vld [vmem:[%s5648 + $0x4] sm:$0xf]
  %5651 = vmatprep.subr.bf16.mxu0 0
  %5652 = vmatpush1.bf16.msra.mxu0 %v3870
  %5653 = vmatprep.subr.bf16.mxu0 0
  %5654 = vmatpush1.bf16.msra.mxu0 %v3871
  %5655 = vmatprep.subr.bf16.mxu0 0
  %5656 = vmatpush1.bf16.msra.mxu0 0
  %5657 = vmatprep.subr.bf16.mxu0 0
  %5658 = vmatpush1.bf16.msra.mxu0 0
  %5659 = vmatprep.subr.bf16.mxu0 0
  %5660 = vmatpush1.bf16.msra.mxu0 0
  %5661 = vmatprep.subr.bf16.mxu0 0
  %5662 = vmatpush1.bf16.msra.mxu0 0
  %5663 = vmatprep.subr.bf16.mxu0 0
  %5664 = vmatpush1.bf16.msra.mxu0 0
  %5665 = vmatprep.subr.bf16.mxu0 0
  %5666 = vmatpush1.bf16.msra.mxu0 0
  %5667 = vmatprep.subr.bf16.mxu0 0
  %5668 = vmatpush1.bf16.msra.mxu0 0
  %5669 = vmatprep.subr.bf16.mxu0 0
  %5670 = vmatpush1.bf16.msra.mxu0 0
  %5671 = vmatprep.subr.bf16.mxu0 0
  %5672 = vmatpush1.bf16.msra.mxu0 0
  %5673 = vmatprep.subr.bf16.mxu0 0
  %5674 = vmatpush1.bf16.msra.mxu0 0
  %5675 = vmatprep.subr.bf16.mxu0 0
  %5676 = vmatpush1.bf16.msra.mxu0 0
  %5677 = vmatprep.subr.bf16.mxu0 0
  %5678 = vmatpush1.bf16.msra.mxu0 0
  %5679 = vmatprep.subr.bf16.mxu0 0
  %5680 = vmatpush1.bf16.msra.mxu0 0
  %5681 = vmatprep.subr.bf16.mxu0 0
  %5682 = vmatpush1.bf16.msra.mxu0 0
  %5683 = vmatprep.mubr.bf16.mxu0 0
  %5684 = vmatmul.mubr.bf16.gmra.mrb[0].mxu0 %v4375
  %v5685 = vpop.f32.mrb[0].mxu0
  %v5686 = vadd.f32 0.0, %v5685
  %v5687 = vpop.f32.mrb[0].mxu0
  %v5688 = vpop.f32.mrb[0].mxu0
  %v5689 = vadd.f32 0.0, %v5688
  %v5690 = vpop.f32.mrb[0].mxu0
  %5691 = vdwg.mxu0
  %v5692 = vpack.c.bf16 %v5689, %v5686
  %v5695 = vunpack.c.l.b16 %v5649
  %v5696 = vunpack.c.l.b16 %v5650
  %v5697 = vpack.c.b16 %v5696, %v5695
  %v5699 = vsel %vm3254, %v5697, 0
  %5701 = vmatprep.subr.bf16.mxu0 0
  %5702 = vmatpush1.bf16.msra.mxu0 %v5692
  %5703 = vmatprep.subr.bf16.mxu0 0
  %5704 = vmatpush1.bf16.msra.mxu0 0
  %5705 = vmatprep.subr.bf16.mxu0 0
  %5706 = vmatpush1.bf16.msra.mxu0 0
  %5707 = vmatprep.subr.bf16.mxu0 0
  %5708 = vmatpush1.bf16.msra.mxu0 0
  %5709 = vmatprep.subr.bf16.mxu0 0
  %5710 = vmatpush1.bf16.msra.mxu0 0
  %5711 = vmatprep.subr.bf16.mxu0 0
  %5712 = vmatpush1.bf16.msra.mxu0 0
  %5713 = vmatprep.subr.bf16.mxu0 0
  %5714 = vmatpush1.bf16.msra.mxu0 0
  %5715 = vmatprep.subr.bf16.mxu0 0
  %5716 = vmatpush1.bf16.msra.mxu0 0
  %5717 = vmatprep.subr.bf16.mxu0 0
  %5718 = vmatpush1.bf16.msra.mxu0 0
  %5719 = vmatprep.subr.bf16.mxu0 0
  %5720 = vmatpush1.bf16.msra.mxu0 0
  %5721 = vmatprep.subr.bf16.mxu0 0
  %5722 = vmatpush1.bf16.msra.mxu0 0
  %5723 = vmatprep.subr.bf16.mxu0 0
  %5724 = vmatpush1.bf16.msra.mxu0 0
  %5725 = vmatprep.subr.bf16.mxu0 0
  %5726 = vmatpush1.bf16.msra.mxu0 0
  %5727 = vmatprep.subr.bf16.mxu0 0
  %5728 = vmatpush1.bf16.msra.mxu0 0
  %5729 = vmatprep.subr.bf16.mxu0 0
  %5730 = vmatpush1.bf16.msra.mxu0 0
  %5731 = vmatprep.subr.bf16.mxu0 0
  %5732 = vmatpush1.bf16.msra.mxu0 0
  %5733 = vmatprep.mubr.bf16.mxu0 0
  %5734 = vmatmul.mubr.bf16.gmra.mrb[0].mxu0 %v5699
  %v5735 = vpop.f32.mrb[0].mxu0
  %v5736 = vadd.f32 0.0, %v5735
  %v5737 = vpop.f32.mrb[0].mxu0
  %v5738 = vpop.f32.mrb[0].mxu0
  %v5739 = vadd.f32 0.0, %v5738
  %v5740 = vpop.f32.mrb[0].mxu0
  %5741 = vdwg.mxu0
  %v5742 = vadd.f32 %v5646, %v5736
  %v5743 = vadd.f32 %v5647, %v5739
  %s5744 = scalar_lea.vmem %s91, 56
  %v5745 = vld [vmem:[%s5744] sm:$0xf]
  %v5746 = vld [vmem:[%s5744 + $0x4] sm:$0xf]
  %5747 = vmatprep.subr.bf16.mxu0 0
  %5748 = vmatpush1.bf16.msra.mxu0 %v3870
  %5749 = vmatprep.subr.bf16.mxu0 0
  %5750 = vmatpush1.bf16.msra.mxu0 %v3871
  %5751 = vmatprep.subr.bf16.mxu0 0
  %5752 = vmatpush1.bf16.msra.mxu0 0
  %5753 = vmatprep.subr.bf16.mxu0 0
  %5754 = vmatpush1.bf16.msra.mxu0 0
  %5755 = vmatprep.subr.bf16.mxu0 0
  %5756 = vmatpush1.bf16.msra.mxu0 0
  %5757 = vmatprep.subr.bf16.mxu0 0
  %5758 = vmatpush1.bf16.msra.mxu0 0
  %5759 = vmatprep.subr.bf16.mxu0 0
  %5760 = vmatpush1.bf16.msra.mxu0 0
  %5761 = vmatprep.subr.bf16.mxu0 0
  %5762 = vmatpush1.bf16.msra.mxu0 0
  %5763 = vmatprep.subr.bf16.mxu0 0
  %5764 = vmatpush1.bf16.msra.mxu0 0
  %5765 = vmatprep.subr.bf16.mxu0 0
  %5766 = vmatpush1.bf16.msra.mxu0 0
  %5767 = vmatprep.subr.bf16.mxu0 0
  %5768 = vmatpush1.bf16.msra.mxu0 0
  %5769 = vmatprep.subr.bf16.mxu0 0
  %5770 = vmatpush1.bf16.msra.mxu0 0
  %5771 = vmatprep.subr.bf16.mxu0 0
  %5772 = vmatpush1.bf16.msra.mxu0 0
  %5773 = vmatprep.subr.bf16.mxu0 0
  %5774 = vmatpush1.bf16.msra.mxu0 0
  %5775 = vmatprep.subr.bf16.mxu0 0
  %5776 = vmatpush1.bf16.msra.mxu0 0
  %5777 = vmatprep.subr.bf16.mxu0 0
  %5778 = vmatpush1.bf16.msra.mxu0 0
  %5779 = vmatprep.mubr.bf16.mxu0 0
  %5780 = vmatmul.mubr.bf16.gmra.mrb[0].mxu0 %v4423
  %v5781 = vpop.f32.mrb[0].mxu0
  %v5782 = vadd.f32 0.0, %v5781
  %v5783 = vpop.f32.mrb[0].mxu0
  %v5784 = vpop.f32.mrb[0].mxu0
  %v5785 = vpop.f32.mrb[0].mxu0
  %5786 = vdwg.mxu0
  %v5787 = vpack.c.bf16 %v5782, %v5782
  %v5790 = vunpack.c.l.b16 %v5745
  %v5791 = vunpack.c.l.b16 %v5746
  %v5792 = vpack.c.b16 %v5791, %v5790
  %v5794 = vsel %vm4471, %v5792, 0
  %v5797 = vsel %vm300, %v5787, 0
  %5799 = vmatprep.subr.bf16.mxu0 0
  %5800 = vmatpush1.bf16.msra.mxu0 %v5797
  %5801 = vmatprep.subr.bf16.mxu0 0
  %5802 = vmatpush1.bf16.msra.mxu0 0
  %5803 = vmatprep.subr.bf16.mxu0 0
  %5804 = vmatpush1.bf16.msra.mxu0 0
  %5805 = vmatprep.subr.bf16.mxu0 0
  %5806 = vmatpush1.bf16.msra.mxu0 0
  %5807 = vmatprep.subr.bf16.mxu0 0
  %5808 = vmatpush1.bf16.msra.mxu0 0
  %5809 = vmatprep.subr.bf16.mxu0 0
  %5810 = vmatpush1.bf16.msra.mxu0 0
  %5811 = vmatprep.subr.bf16.mxu0 0
  %5812 = vmatpush1.bf16.msra.mxu0 0
  %5813 = vmatprep.subr.bf16.mxu0 0
  %5814 = vmatpush1.bf16.msra.mxu0 0
  %5815 = vmatprep.subr.bf16.mxu0 0
  %5816 = vmatpush1.bf16.msra.mxu0 0
  %5817 = vmatprep.subr.bf16.mxu0 0
  %5818 = vmatpush1.bf16.msra.mxu0 0
  %5819 = vmatprep.subr.bf16.mxu0 0
  %5820 = vmatpush1.bf16.msra.mxu0 0
  %5821 = vmatprep.subr.bf16.mxu0 0
  %5822 = vmatpush1.bf16.msra.mxu0 0
  %5823 = vmatprep.subr.bf16.mxu0 0
  %5824 = vmatpush1.bf16.msra.mxu0 0
  %5825 = vmatprep.subr.bf16.mxu0 0
  %5826 = vmatpush1.bf16.msra.mxu0 0
  %5827 = vmatprep.subr.bf16.mxu0 0
  %5828 = vmatpush1.bf16.msra.mxu0 0
  %5829 = vmatprep.subr.bf16.mxu0 0
  %5830 = vmatpush1.bf16.msra.mxu0 0
  %5831 = vmatprep.mubr.bf16.mxu0 0
  %5832 = vmatmul.mubr.bf16.gmra.mrb[0].mxu0 %v5794
  %v5833 = vpop.f32.mrb[0].mxu0
  %v5834 = vadd.f32 0.0, %v5833
  %v5835 = vpop.f32.mrb[0].mxu0
  %v5836 = vpop.f32.mrb[0].mxu0
  %v5837 = vadd.f32 0.0, %v5836
  %v5838 = vpop.f32.mrb[0].mxu0
  %5839 = vdwg.mxu0
  %v5840 = vadd.f32 %v5742, %v5834
  %v5841 = vadd.f32 %v5743, %v5837
  %s5842 = scalar_lea.vmem %s89, 64
  %v5843 = vld [vmem:[%s5842] sm:$0xf]
  %v5844 = vld [vmem:[%s5842 + $0x4] sm:$0xf]
  %5845 = vmatprep.subr.bf16.mxu0 0
  %5846 = vmatpush1.bf16.msra.mxu0 %v3983
  %5847 = vmatprep.subr.bf16.mxu0 0
  %5848 = vmatpush1.bf16.msra.mxu0 %v3984
  %5849 = vmatprep.subr.bf16.mxu0 0
  %5850 = vmatpush1.bf16.msra.mxu0 0
  %5851 = vmatprep.subr.bf16.mxu0 0
  %5852 = vmatpush1.bf16.msra.mxu0 0
  %5853 = vmatprep.subr.bf16.mxu0 0
  %5854 = vmatpush1.bf16.msra.mxu0 0
  %5855 = vmatprep.subr.bf16.mxu0 0
  %5856 = vmatpush1.bf16.msra.mxu0 0
  %5857 = vmatprep.subr.bf16.mxu0 0
  %5858 = vmatpush1.bf16.msra.mxu0 0
  %5859 = vmatprep.subr.bf16.mxu0 0
  %5860 = vmatpush1.bf16.msra.mxu0 0
  %5861 = vmatprep.subr.bf16.mxu0 0
  %5862 = vmatpush1.bf16.msra.mxu0 0
  %5863 = vmatprep.subr.bf16.mxu0 0
  %5864 = vmatpush1.bf16.msra.mxu0 0
  %5865 = vmatprep.subr.bf16.mxu0 0
  %5866 = vmatpush1.bf16.msra.mxu0 0
  %5867 = vmatprep.subr.bf16.mxu0 0
  %5868 = vmatpush1.bf16.msra.mxu0 0
  %5869 = vmatprep.subr.bf16.mxu0 0
  %5870 = vmatpush1.bf16.msra.mxu0 0
  %5871 = vmatprep.subr.bf16.mxu0 0
  %5872 = vmatpush1.bf16.msra.mxu0 0
  %5873 = vmatprep.subr.bf16.mxu0 0
  %5874 = vmatpush1.bf16.msra.mxu0 0
  %5875 = vmatprep.subr.bf16.mxu0 0
  %5876 = vmatpush1.bf16.msra.mxu0 0
  %5877 = vmatprep.mubr.bf16.mxu0 0
  %5878 = vmatmul.mubr.bf16.gmra.mrb[0].mxu0 %v4375
  %v5879 = vpop.f32.mrb[0].mxu0
  %v5880 = vadd.f32 0.0, %v5879
  %v5881 = vpop.f32.mrb[0].mxu0
  %v5882 = vpop.f32.mrb[0].mxu0
  %v5883 = vadd.f32 0.0, %v5882
  %v5884 = vpop.f32.mrb[0].mxu0
  %5885 = vdwg.mxu0
  %v5886 = vpack.c.bf16 %v5883, %v5880
  %v5889 = vunpack.c.l.b16 %v5843
  %v5890 = vunpack.c.l.b16 %v5844
  %v5891 = vpack.c.b16 %v5890, %v5889
  %v5893 = vsel %vm3254, %v5891, 0
  %5895 = vmatprep.subr.bf16.mxu0 0
  %5896 = vmatpush1.bf16.msra.mxu0 %v5886
  %5897 = vmatprep.subr.bf16.mxu0 0
  %5898 = vmatpush1.bf16.msra.mxu0 0
  %5899 = vmatprep.subr.bf16.mxu0 0
  %5900 = vmatpush1.bf16.msra.mxu0 0
  %5901 = vmatprep.subr.bf16.mxu0 0
  %5902 = vmatpush1.bf16.msra.mxu0 0
  %5903 = vmatprep.subr.bf16.mxu0 0
  %5904 = vmatpush1.bf16.msra.mxu0 0
  %5905 = vmatprep.subr.bf16.mxu0 0
  %5906 = vmatpush1.bf16.msra.mxu0 0
  %5907 = vmatprep.subr.bf16.mxu0 0
  %5908 = vmatpush1.bf16.msra.mxu0 0
  %5909 = vmatprep.subr.bf16.mxu0 0
  %5910 = vmatpush1.bf16.msra.mxu0 0
  %5911 = vmatprep.subr.bf16.mxu0 0
  %5912 = vmatpush1.bf16.msra.mxu0 0
  %5913 = vmatprep.subr.bf16.mxu0 0
  %5914 = vmatpush1.bf16.msra.mxu0 0
  %5915 = vmatprep.subr.bf16.mxu0 0
  %5916 = vmatpush1.bf16.msra.mxu0 0
  %5917 = vmatprep.subr.bf16.mxu0 0
  %5918 = vmatpush1.bf16.msra.mxu0 0
  %5919 = vmatprep.subr.bf16.mxu0 0
  %5920 = vmatpush1.bf16.msra.mxu0 0
  %5921 = vmatprep.subr.bf16.mxu0 0
  %5922 = vmatpush1.bf16.msra.mxu0 0
  %5923 = vmatprep.subr.bf16.mxu0 0
  %5924 = vmatpush1.bf16.msra.mxu0 0
  %5925 = vmatprep.subr.bf16.mxu0 0
  %5926 = vmatpush1.bf16.msra.mxu0 0
  %5927 = vmatprep.mubr.bf16.mxu0 0
  %5928 = vmatmul.mubr.bf16.gmra.mrb[0].mxu0 %v5893
  %v5929 = vpop.f32.mrb[0].mxu0
  %v5930 = vadd.f32 0.0, %v5929
  %v5931 = vpop.f32.mrb[0].mxu0
  %v5932 = vpop.f32.mrb[0].mxu0
  %v5933 = vadd.f32 0.0, %v5932
  %v5934 = vpop.f32.mrb[0].mxu0
  %5935 = vdwg.mxu0
  %v5936 = vadd.f32 %v5840, %v5930
  %v5937 = vadd.f32 %v5841, %v5933
  %s5938 = scalar_lea.vmem %s91, 64
  %v5939 = vld [vmem:[%s5938] sm:$0xf]
  %v5940 = vld [vmem:[%s5938 + $0x4] sm:$0xf]
  %5941 = vmatprep.subr.bf16.mxu0 0
  %5942 = vmatpush1.bf16.msra.mxu0 %v3983
  %5943 = vmatprep.subr.bf16.mxu0 0
  %5944 = vmatpush1.bf16.msra.mxu0 %v3984
  %5945 = vmatprep.subr.bf16.mxu0 0
  %5946 = vmatpush1.bf16.msra.mxu0 0
  %5947 = vmatprep.subr.bf16.mxu0 0
  %5948 = vmatpush1.bf16.msra.mxu0 0
  %5949 = vmatprep.subr.bf16.mxu0 0
  %5950 = vmatpush1.bf16.msra.mxu0 0
  %5951 = vmatprep.subr.bf16.mxu0 0
  %5952 = vmatpush1.bf16.msra.mxu0 0
  %5953 = vmatprep.subr.bf16.mxu0 0
  %5954 = vmatpush1.bf16.msra.mxu0 0
  %5955 = vmatprep.subr.bf16.mxu0 0
  %5956 = vmatpush1.bf16.msra.mxu0 0
  %5957 = vmatprep.subr.bf16.mxu0 0
  %5958 = vmatpush1.bf16.msra.mxu0 0
  %5959 = vmatprep.subr.bf16.mxu0 0
  %5960 = vmatpush1.bf16.msra.mxu0 0
  %5961 = vmatprep.subr.bf16.mxu0 0
  %5962 = vmatpush1.bf16.msra.mxu0 0
  %5963 = vmatprep.subr.bf16.mxu0 0
  %5964 = vmatpush1.bf16.msra.mxu0 0
  %5965 = vmatprep.subr.bf16.mxu0 0
  %5966 = vmatpush1.bf16.msra.mxu0 0
  %5967 = vmatprep.subr.bf16.mxu0 0
  %5968 = vmatpush1.bf16.msra.mxu0 0
  %5969 = vmatprep.subr.bf16.mxu0 0
  %5970 = vmatpush1.bf16.msra.mxu0 0
  %5971 = vmatprep.subr.bf16.mxu0 0
  %5972 = vmatpush1.bf16.msra.mxu0 0
  %5973 = vmatprep.mubr.bf16.mxu0 0
  %5974 = vmatmul.mubr.bf16.gmra.mrb[0].mxu0 %v4423
  %v5975 = vpop.f32.mrb[0].mxu0
  %v5976 = vadd.f32 0.0, %v5975
  %v5977 = vpop.f32.mrb[0].mxu0
  %v5978 = vpop.f32.mrb[0].mxu0
  %v5979 = vpop.f32.mrb[0].mxu0
  %5980 = vdwg.mxu0
  %v5981 = vpack.c.bf16 %v5976, %v5976
  %v5984 = vunpack.c.l.b16 %v5939
  %v5985 = vunpack.c.l.b16 %v5940
  %v5986 = vpack.c.b16 %v5985, %v5984
  %v5988 = vsel %vm4471, %v5986, 0
  %v5991 = vsel %vm300, %v5981, 0
  %5993 = vmatprep.subr.bf16.mxu0 0
  %5994 = vmatpush1.bf16.msra.mxu0 %v5991
  %5995 = vmatprep.subr.bf16.mxu0 0
  %5996 = vmatpush1.bf16.msra.mxu0 0
  %5997 = vmatprep.subr.bf16.mxu0 0
  %5998 = vmatpush1.bf16.msra.mxu0 0
  %5999 = vmatprep.subr.bf16.mxu0 0
  %6000 = vmatpush1.bf16.msra.mxu0 0
  %6001 = vmatprep.subr.bf16.mxu0 0
  %6002 = vmatpush1.bf16.msra.mxu0 0
  %6003 = vmatprep.subr.bf16.mxu0 0
  %6004 = vmatpush1.bf16.msra.mxu0 0
  %6005 = vmatprep.subr.bf16.mxu0 0
  %6006 = vmatpush1.bf16.msra.mxu0 0
  %6007 = vmatprep.subr.bf16.mxu0 0
  %6008 = vmatpush1.bf16.msra.mxu0 0
  %6009 = vmatprep.subr.bf16.mxu0 0
  %6010 = vmatpush1.bf16.msra.mxu0 0
  %6011 = vmatprep.subr.bf16.mxu0 0
  %6012 = vmatpush1.bf16.msra.mxu0 0
  %6013 = vmatprep.subr.bf16.mxu0 0
  %6014 = vmatpush1.bf16.msra.mxu0 0
  %6015 = vmatprep.subr.bf16.mxu0 0
  %6016 = vmatpush1.bf16.msra.mxu0 0
  %6017 = vmatprep.subr.bf16.mxu0 0
  %6018 = vmatpush1.bf16.msra.mxu0 0
  %6019 = vmatprep.subr.bf16.mxu0 0
  %6020 = vmatpush1.bf16.msra.mxu0 0
  %6021 = vmatprep.subr.bf16.mxu0 0
  %6022 = vmatpush1.bf16.msra.mxu0 0
  %6023 = vmatprep.subr.bf16.mxu0 0
  %6024 = vmatpush1.bf16.msra.mxu0 0
  %6025 = vmatprep.mubr.bf16.mxu0 0
  %6026 = vmatmul.mubr.bf16.gmra.mrb[0].mxu0 %v5988
  %v6027 = vpop.f32.mrb[0].mxu0
  %v6028 = vadd.f32 0.0, %v6027
  %v6029 = vpop.f32.mrb[0].mxu0
  %v6030 = vpop.f32.mrb[0].mxu0
  %v6031 = vadd.f32 0.0, %v6030
  %v6032 = vpop.f32.mrb[0].mxu0
  %6033 = vdwg.mxu0
  %v6034 = vadd.f32 %v5936, %v6028
  %v6035 = vadd.f32 %v5937, %v6031
  %v6036 = vld [vmem:[%s81] sm:$0xff]
  %v6037 = vld [vmem:[%s81 + $0x8] sm:$0xff]
  %v6038 = vld [vmem:[%s77] sm:$0xff]
  %v6039 = vld [vmem:[%s77 + $0x8] sm:$0xff]
  %v6040 = vsel %vm3066, %v6034, 0.0
  %6041 = vadd.xlane.f32.xlu0 %v6040
  %v6042 = vpop.xlane.xlu0 %6041
  %v6043 = vsel %vm3066, %v6035, 0.0
  %6044 = vadd.xlane.f32.xlu0 %v6043
  %v6045 = vpop.xlane.xlu0 %6044
  %v6046 = vmul.f32 %v6042, 0.03125
  %v6047 = vmul.f32 %v6045, 0.03125
  %v6048 = vsub.f32 %v6034, %v6046
  %v6049 = vsub.f32 %v6035, %v6047
  %v6050 = vmul.f32 %v6048, %v6048
  %v6051 = vmul.f32 %v6049, %v6049
  %v6052 = vsel %vm3066, %v6050, 0.0
  %6053 = vadd.xlane.f32.xlu0 %v6052
  %v6054 = vpop.xlane.xlu0 %6053
  %v6055 = vsel %vm3066, %v6051, 0.0
  %6056 = vadd.xlane.f32.xlu0 %v6055
  %v6057 = vpop.xlane.xlu0 %6056
  %v6058 = vmul.f32 %v6054, 0.03125
  %v6059 = vmul.f32 %v6057, 0.03125
  %v6060 = vadd.f32 %v6058, 1e-05
  %v6061 = vadd.f32 %v6059, 1e-05
  %v6062 = vrsqrt.pop %v6060
  %v6063 = vrsqrt.pop %v6061
  %v6064 = vmul.f32 %v6048, %v6062
  %v6065 = vmul.f32 %v6049, %v6063
  %6067 = vset.pattern.permute.xlu0 0
  %6068 = vperm.xlu0 %6067, %v6036
  %v6069 = vpop.permute.xlu0 %6068
  %6072 = vset.pattern.permute.xlu0 0
  %6073 = vperm.xlu0 %6072, %v6037
  %v6074 = vpop.permute.xlu0 %6073
  %v6076 = vmul.f32 %v6064, %v6069
  %v6077 = vmul.f32 %v6065, %v6074
  %6079 = vset.pattern.permute.xlu0 0
  %6080 = vperm.xlu0 %6079, %v6038
  %v6081 = vpop.permute.xlu0 %6080
  %6084 = vset.pattern.permute.xlu0 0
  %6085 = vperm.xlu0 %6084, %v6039
  %v6086 = vpop.permute.xlu0 %6085
  %v6088 = vadd.f32 %v6076, %v6081
  %v6089 = vadd.f32 %v6077, %v6086
  %vm6090 = vcmp.ge.f32.partialorder %v6088, 0.0
  %vm6091 = vcmp.ge.f32.partialorder %v6089, 0.0
  %v6092 = vmul.f32 %v6088, 0.01
  %v6093 = vmul.f32 %v6089, 0.01
  %v6094 = vsel %vm6090, %v6088, %v6092
  %v6095 = vsel %vm6091, %v6089, %v6093
  %v6096 = vld [vmem:[%s93] sm:$0xf]
  %v6097 = vld [vmem:[%s93 + $0x4] sm:$0xf]
  %v6098 = vpack.c.bf16 %v6095, %v6094
  %v6101 = vunpack.c.l.b16 %v6096
  %v6102 = vunpack.c.l.b16 %v6097
  %v6103 = vpack.c.b16 %v6102, %v6101
  %v6105 = vsel %vm3254, %v6103, 0
  %6107 = vmatprep.subr.bf16.mxu0 0
  %6108 = vmatpush1.bf16.msra.mxu0 %v6098
  %6109 = vmatprep.subr.bf16.mxu0 0
  %6110 = vmatpush1.bf16.msra.mxu0 0
  %6111 = vmatprep.subr.bf16.mxu0 0
  %6112 = vmatpush1.bf16.msra.mxu0 0
  %6113 = vmatprep.subr.bf16.mxu0 0
  %6114 = vmatpush1.bf16.msra.mxu0 0
  %6115 = vmatprep.subr.bf16.mxu0 0
  %6116 = vmatpush1.bf16.msra.mxu0 0
  %6117 = vmatprep.subr.bf16.mxu0 0
  %6118 = vmatpush1.bf16.msra.mxu0 0
  %6119 = vmatprep.subr.bf16.mxu0 0
  %6120 = vmatpush1.bf16.msra.mxu0 0
  %6121 = vmatprep.subr.bf16.mxu0 0
  %6122 = vmatpush1.bf16.msra.mxu0 0
  %6123 = vmatprep.subr.bf16.mxu0 0
  %6124 = vmatpush1.bf16.msra.mxu0 0
  %6125 = vmatprep.subr.bf16.mxu0 0
  %6126 = vmatpush1.bf16.msra.mxu0 0
  %6127 = vmatprep.subr.bf16.mxu0 0
  %6128 = vmatpush1.bf16.msra.mxu0 0
  %6129 = vmatprep.subr.bf16.mxu0 0
  %6130 = vmatpush1.bf16.msra.mxu0 0
  %6131 = vmatprep.subr.bf16.mxu0 0
  %6132 = vmatpush1.bf16.msra.mxu0 0
  %6133 = vmatprep.subr.bf16.mxu0 0
  %6134 = vmatpush1.bf16.msra.mxu0 0
  %6135 = vmatprep.subr.bf16.mxu0 0
  %6136 = vmatpush1.bf16.msra.mxu0 0
  %6137 = vmatprep.subr.bf16.mxu0 0
  %6138 = vmatpush1.bf16.msra.mxu0 0
  %6139 = vmatprep.mubr.bf16.mxu0 0
  %6140 = vmatmul.mubr.bf16.gmra.mrb[0].mxu0 %v6105
  %v6141 = vpop.f32.mrb[0].mxu0
  %v6142 = vadd.f32 0.0, %v6141
  %v6143 = vpop.f32.mrb[0].mxu0
  %v6144 = vpop.f32.mrb[0].mxu0
  %v6145 = vadd.f32 0.0, %v6144
  %v6146 = vpop.f32.mrb[0].mxu0
  %6147 = vdwg.mxu0
  %v6148 = vld [vmem:[%s83] sm:$0xff]
  %v6149 = vld [vmem:[%s83 + $0x8] sm:$0xff]
  %v6150 = vld [vmem:[%s79] sm:$0xff]
  %v6151 = vld [vmem:[%s79 + $0x8] sm:$0xff]
  %v6152 = vsel %vm3066, %v6142, 0.0
  %6153 = vadd.xlane.f32.xlu0 %v6152
  %v6154 = vpop.xlane.xlu0 %6153
  %v6155 = vsel %vm3066, %v6145, 0.0
  %6156 = vadd.xlane.f32.xlu0 %v6155
  %v6157 = vpop.xlane.xlu0 %6156
  %v6158 = vmul.f32 %v6154, 0.03125
  %v6159 = vmul.f32 %v6157, 0.03125
  %v6160 = vsub.f32 %v6142, %v6158
  %v6161 = vsub.f32 %v6145, %v6159
  %v6162 = vmul.f32 %v6160, %v6160
  %v6163 = vmul.f32 %v6161, %v6161
  %v6164 = vsel %vm3066, %v6162, 0.0
  %6165 = vadd.xlane.f32.xlu0 %v6164
  %v6166 = vpop.xlane.xlu0 %6165
  %v6167 = vsel %vm3066, %v6163, 0.0
  %6168 = vadd.xlane.f32.xlu0 %v6167
  %v6169 = vpop.xlane.xlu0 %6168
  %v6170 = vmul.f32 %v6166, 0.03125
  %v6171 = vmul.f32 %v6169, 0.03125
  %v6172 = vadd.f32 %v6170, 1e-05
  %v6173 = vadd.f32 %v6171, 1e-05
  %v6174 = vrsqrt.pop %v6172
  %v6175 = vrsqrt.pop %v6173
  %v6176 = vmul.f32 %v6160, %v6174
  %v6177 = vmul.f32 %v6161, %v6175
  %6179 = vset.pattern.permute.xlu0 0
  %6180 = vperm.xlu0 %6179, %v6148
  %v6181 = vpop.permute.xlu0 %6180
  %6184 = vset.pattern.permute.xlu0 0
  %6185 = vperm.xlu0 %6184, %v6149
  %v6186 = vpop.permute.xlu0 %6185
  %v6188 = vmul.f32 %v6176, %v6181
  %v6189 = vmul.f32 %v6177, %v6186
  %6191 = vset.pattern.permute.xlu0 0
  %6192 = vperm.xlu0 %6191, %v6150
  %v6193 = vpop.permute.xlu0 %6192
  %6196 = vset.pattern.permute.xlu0 0
  %6197 = vperm.xlu0 %6196, %v6151
  %v6198 = vpop.permute.xlu0 %6197
  %v6200 = vadd.f32 %v6188, %v6193
  %v6201 = vadd.f32 %v6189, %v6198
  %vm6202 = vcmp.ge.f32.partialorder %v6200, 0.0
  %vm6203 = vcmp.ge.f32.partialorder %v6201, 0.0
  %v6204 = vmul.f32 %v6200, 0.01
  %v6205 = vmul.f32 %v6201, 0.01
  %v6206 = vsel %vm6202, %v6200, %v6204
  %v6207 = vsel %vm6203, %v6201, %v6205
  %v6208 = vpack.c.bf16 %v6207, %v6206
  %v6209 = vld [vmem:[%s15] sm:$0xf]
  %v6210 = vld [vmem:[%s15 + $0x4] sm:$0xf]
  %v6211 = vld [vmem:[%s15 + $0x8] sm:$0xf]
  %v6212 = vld [vmem:[%s15 + $0xc] sm:$0xf]
  %v6217 = vunpack.c.l.b16 %v6209
  %v6218 = vunpack.c.l.b16 %v6210
  %v6219 = vunpack.c.l.b16 %v6211
  %v6220 = vunpack.c.l.b16 %v6212
  %v6221 = vpack.c.b16 %v6218, %v6217
  %v6222 = vpack.c.b16 %v6220, %v6219
  %v6226 = vsel %vm3066, %v6208, 0
  %6228 = vmatprep.subr.bf16.mxu0 0
  %6229 = vmatpush1.bf16.msra.mxu0 %v6221
  %6230 = vmatprep.subr.bf16.mxu0 0
  %6231 = vmatpush1.bf16.msra.mxu0 %v6222
  %6232 = vmatprep.subr.bf16.mxu0 0
  %6233 = vmatpush1.bf16.msra.mxu0 0
  %6234 = vmatprep.subr.bf16.mxu0 0
  %6235 = vmatpush1.bf16.msra.mxu0 0
  %6236 = vmatprep.subr.bf16.mxu0 0
  %6237 = vmatpush1.bf16.msra.mxu0 0
  %6238 = vmatprep.subr.bf16.mxu0 0
  %6239 = vmatpush1.bf16.msra.mxu0 0
  %6240 = vmatprep.subr.bf16.mxu0 0
  %6241 = vmatpush1.bf16.msra.mxu0 0
  %6242 = vmatprep.subr.bf16.mxu0 0
  %6243 = vmatpush1.bf16.msra.mxu0 0
  %6244 = vmatprep.subr.bf16.mxu0 0
  %6245 = vmatpush1.bf16.msra.mxu0 0
  %6246 = vmatprep.subr.bf16.mxu0 0
  %6247 = vmatpush1.bf16.msra.mxu0 0
  %6248 = vmatprep.subr.bf16.mxu0 0
  %6249 = vmatpush1.bf16.msra.mxu0 0
  %6250 = vmatprep.subr.bf16.mxu0 0
  %6251 = vmatpush1.bf16.msra.mxu0 0
  %6252 = vmatprep.subr.bf16.mxu0 0
  %6253 = vmatpush1.bf16.msra.mxu0 0
  %6254 = vmatprep.subr.bf16.mxu0 0
  %6255 = vmatpush1.bf16.msra.mxu0 0
  %6256 = vmatprep.subr.bf16.mxu0 0
  %6257 = vmatpush1.bf16.msra.mxu0 0
  %6258 = vmatprep.subr.bf16.mxu0 0
  %6259 = vmatpush1.bf16.msra.mxu0 0
  %6260 = vmatprep.mubr.bf16.mxu0 0
  %6261 = vmatmul.mubr.bf16.gmra.mrb[0].mxu0 %v6226
  %v6262 = vpop.f32.mrb[0].mxu0
  %v6263 = vadd.f32 0.0, %v6262
  %v6264 = vpop.f32.mrb[0].mxu0
  %v6265 = vpop.f32.mrb[0].mxu0
  %v6266 = vadd.f32 0.0, %v6265
  %v6267 = vpop.f32.mrb[0].mxu0
  %6268 = vdwg.mxu0
  %v6269 = vld [vmem:[%s69] sm:$0xff]
  %v6270 = vld [vmem:[%s69 + $0x8] sm:$0xff]
  %v6271 = vld [vmem:[%s69 + $0x10] sm:$0xf]
  %v6272 = vld [vmem:[%s67] sm:$0xff]
  %v6273 = vld [vmem:[%s67 + $0x8] sm:$0xff]
  %v6274 = vld [vmem:[%s67 + $0x10] sm:$0xf]
  %6275 = vadd.xlane.f32.xlu0 %v6263
  %v6276 = vpop.xlane.xlu0 %6275
  %6277 = vadd.xlane.f32.xlu0 %v6266
  %v6278 = vpop.xlane.xlu0 %6277
  %v6279 = vmul.f32 %v6276, 0.0078125
  %v6280 = vmul.f32 %v6278, 0.0078125
  %v6281 = vsub.f32 %v6263, %v6279
  %v6282 = vsub.f32 %v6266, %v6280
  %v6283 = vmul.f32 %v6281, %v6281
  %v6284 = vmul.f32 %v6282, %v6282
  %6285 = vadd.xlane.f32.xlu0 %v6283
  %v6286 = vpop.xlane.xlu0 %6285
  %6287 = vadd.xlane.f32.xlu0 %v6284
  %v6288 = vpop.xlane.xlu0 %6287
  %v6289 = vmul.f32 %v6286, 0.0078125
  %v6290 = vmul.f32 %v6288, 0.0078125
  %v6291 = vadd.f32 %v6289, 1e-05
  %v6292 = vadd.f32 %v6290, 1e-05
  %v6293 = vrsqrt.pop %v6291
  %v6294 = vrsqrt.pop %v6292
  %v6295 = vmul.f32 %v6281, %v6293
  %v6296 = vmul.f32 %v6282, %v6294
  %6298 = vset.pattern.permute.xlu0 0
  %6299 = vperm.xlu0 %6298, %v6269
  %v6300 = vpop.permute.xlu0 %6299
  %6303 = vset.pattern.permute.xlu0 0
  %6304 = vperm.xlu0 %6303, %v6270
  %v6305 = vpop.permute.xlu0 %6304
  %v6307 = vmul.f32 %v6295, %v6300
  %v6308 = vmul.f32 %v6296, %v6305
  %6310 = vset.pattern.permute.xlu0 0
  %6311 = vperm.xlu0 %6310, %v6272
  %v6312 = vpop.permute.xlu0 %6311
  %6315 = vset.pattern.permute.xlu0 0
  %6316 = vperm.xlu0 %6315, %v6273
  %v6317 = vpop.permute.xlu0 %6316
  %v6319 = vadd.f32 %v6307, %v6312
  %v6320 = vadd.f32 %v6308, %v6317
  %v6321 = vsel %vm1881, %v4213, 0.0
  %6322 = vadd.xlane.f32.xlu0 %v6321
  %v6323 = vpop.xlane.xlu0 %6322
  %v6324 = vmul.f32 %v6323, 0.0078125
  %v6325 = vsub.f32 %v4213, %v6324
  %v6326 = vmul.f32 %v6325, %v6325
  %v6327 = vsel %vm1881, %v6326, 0.0
  %6328 = vadd.xlane.f32.xlu0 %v6327
  %v6329 = vpop.xlane.xlu0 %6328
  %v6330 = vmul.f32 %v6329, 0.0078125
  %v6331 = vadd.f32 %v6330, 1e-05
  %v6332 = vrsqrt.pop %v6331
  %v6333 = vmul.f32 %v6325, %v6332
  %6335 = vset.pattern.permute.xlu0 0
  %6336 = vperm.xlu0 %6335, %v6271
  %v6337 = vpop.permute.xlu0 %6336
  %v6339 = vmul.f32 %v6333, %v6337
  %6341 = vset.pattern.permute.xlu0 0
  %6342 = vperm.xlu0 %6341, %v6274
  %v6343 = vpop.permute.xlu0 %6342
  %v6345 = vadd.f32 %v6339, %v6343
  %v6346 = vld [vmem:[%s71] sm:$0xf]
  %6347 = vrot.lane.b32.xlu0 %v6319, 9
  %v6348 = vpop.permute.xlu0 %6347
  %6349 = vrot.lane.b32.xlu0 %v6320, 9
  %v6350 = vpop.permute.xlu0 %6349
  %v6351 = vmul.f32 %v6348, %v1859
  %v6352 = vmul.f32 %v6350, %v1859
  %v6353 = vpack.c.bf16 %v6352, %v6351
  %v6354 = vld [vmem:[%s73] sm:$0xf]
  %6355 = vrot.lane.b32.xlu0 %v6345, 9
  %v6356 = vpop.permute.xlu0 %6355
  %v6357 = vmul.f32 %v6356, %v1859
  %v6358 = vpack.c.bf16 %v6357, %v6357
  %v6360 = vsel %vm4471, %v6354, 0
  %v6363 = vsel %vm300, %v6358, 0
  %6365 = vmatprep.subr.bf16.mxu0 0
  %6366 = vmatpush1.bf16.msra.mxu0 %v6363
  %6367 = vmatprep.subr.bf16.mxu0 0
  %6368 = vmatpush1.bf16.msra.mxu0 0
  %6369 = vmatprep.subr.bf16.mxu0 0
  %6370 = vmatpush1.bf16.msra.mxu0 0
  %6371 = vmatprep.subr.bf16.mxu0 0
  %6372 = vmatpush1.bf16.msra.mxu0 0
  %6373 = vmatprep.subr.bf16.mxu0 0
  %6374 = vmatpush1.bf16.msra.mxu0 0
  %6375 = vmatprep.subr.bf16.mxu0 0
  %6376 = vmatpush1.bf16.msra.mxu0 0
  %6377 = vmatprep.subr.bf16.mxu0 0
  %6378 = vmatpush1.bf16.msra.mxu0 0
  %6379 = vmatprep.subr.bf16.mxu0 0
  %6380 = vmatpush1.bf16.msra.mxu0 0
  %6381 = vmatprep.subr.bf16.mxu0 0
  %6382 = vmatpush1.bf16.msra.mxu0 0
  %6383 = vmatprep.subr.bf16.mxu0 0
  %6384 = vmatpush1.bf16.msra.mxu0 0
  %6385 = vmatprep.subr.bf16.mxu0 0
  %6386 = vmatpush1.bf16.msra.mxu0 0
  %6387 = vmatprep.subr.bf16.mxu0 0
  %6388 = vmatpush1.bf16.msra.mxu0 0
  %6389 = vmatprep.subr.bf16.mxu0 0
  %6390 = vmatpush1.bf16.msra.mxu0 0
  %6391 = vmatprep.subr.bf16.mxu0 0
  %6392 = vmatpush1.bf16.msra.mxu0 0
  %6393 = vmatprep.subr.bf16.mxu0 0
  %6394 = vmatpush1.bf16.msra.mxu0 0
  %6395 = vmatprep.subr.bf16.mxu0 0
  %6396 = vmatpush1.bf16.msra.mxu0 0
  %6397 = vmatprep.mubr.bf16.mxu0 0
  %6398 = vmatmul.mubr.bf16.gmra.mrb[0].mxu0 %v6360
  %v6399 = vpop.f32.mrb[0].mxu0
  %v6400 = vadd.f32 0.0, %v6399
  %v6401 = vpop.f32.mrb[0].mxu0
  %v6402 = vpop.f32.mrb[0].mxu0
  %v6403 = vpop.f32.mrb[0].mxu0
  %6404 = vdwg.mxu0
  %v6406 = vsel %vm3254, %v6346, 0
  %6408 = vmatprep.subr.bf16.mxu0 0
  %6409 = vmatpush1.bf16.msra.mxu0 %v6353
  %6410 = vmatprep.subr.bf16.mxu0 0
  %6411 = vmatpush1.bf16.msra.mxu0 0
  %6412 = vmatprep.subr.bf16.mxu0 0
  %6413 = vmatpush1.bf16.msra.mxu0 0
  %6414 = vmatprep.subr.bf16.mxu0 0
  %6415 = vmatpush1.bf16.msra.mxu0 0
  %6416 = vmatprep.subr.bf16.mxu0 0
  %6417 = vmatpush1.bf16.msra.mxu0 0
  %6418 = vmatprep.subr.bf16.mxu0 0
  %6419 = vmatpush1.bf16.msra.mxu0 0
  %6420 = vmatprep.subr.bf16.mxu0 0
  %6421 = vmatpush1.bf16.msra.mxu0 0
  %6422 = vmatprep.subr.bf16.mxu0 0
  %6423 = vmatpush1.bf16.msra.mxu0 0
  %6424 = vmatprep.subr.bf16.mxu0 0
  %6425 = vmatpush1.bf16.msra.mxu0 0
  %6426 = vmatprep.subr.bf16.mxu0 0
  %6427 = vmatpush1.bf16.msra.mxu0 0
  %6428 = vmatprep.subr.bf16.mxu0 0
  %6429 = vmatpush1.bf16.msra.mxu0 0
  %6430 = vmatprep.subr.bf16.mxu0 0
  %6431 = vmatpush1.bf16.msra.mxu0 0
  %6432 = vmatprep.subr.bf16.mxu0 0
  %6433 = vmatpush1.bf16.msra.mxu0 0
  %6434 = vmatprep.subr.bf16.mxu0 0
  %6435 = vmatpush1.bf16.msra.mxu0 0
  %6436 = vmatprep.subr.bf16.mxu0 0
  %6437 = vmatpush1.bf16.msra.mxu0 0
  %6438 = vmatprep.subr.bf16.mxu0 0
  %6439 = vmatpush1.bf16.msra.mxu0 0
  %6440 = vmatprep.mubr.bf16.mxu0 0
  %6441 = vmatmul.mubr.bf16.gmra.mrb[0].mxu0 %v6406
  %v6442 = vpop.f32.mrb[0].mxu0
  %v6443 = vadd.f32 %v6400, %v6442
  %v6444 = vpop.f32.mrb[0].mxu0
  %v6445 = vpop.f32.mrb[0].mxu0
  %v6446 = vpop.f32.mrb[0].mxu0
  %6447 = vdwg.mxu0
  %s6448 = scalar_lea.vmem %s71, 4
  %v6449 = vld [vmem:[%s6448] sm:$0xf]
  %6450 = vrot.lane.b32.xlu0 %v6319, 8
  %v6451 = vpop.permute.xlu0 %6450
  %6452 = vrot.lane.b32.xlu0 %v6320, 8
  %v6453 = vpop.permute.xlu0 %6452
  %v6454 = vmul.f32 %v6451, %v1873
  %v6455 = vmul.f32 %v6453, %v1873
  %v6456 = vpack.c.bf16 %v6455, %v6454
  %v6458 = vsel %vm3254, %v6449, 0
  %6460 = vmatprep.subr.bf16.mxu0 0
  %6461 = vmatpush1.bf16.msra.mxu0 %v6456
  %6462 = vmatprep.subr.bf16.mxu0 0
  %6463 = vmatpush1.bf16.msra.mxu0 0
  %6464 = vmatprep.subr.bf16.mxu0 0
  %6465 = vmatpush1.bf16.msra.mxu0 0
  %6466 = vmatprep.subr.bf16.mxu0 0
  %6467 = vmatpush1.bf16.msra.mxu0 0
  %6468 = vmatprep.subr.bf16.mxu0 0
  %6469 = vmatpush1.bf16.msra.mxu0 0
  %6470 = vmatprep.subr.bf16.mxu0 0
  %6471 = vmatpush1.bf16.msra.mxu0 0
  %6472 = vmatprep.subr.bf16.mxu0 0
  %6473 = vmatpush1.bf16.msra.mxu0 0
  %6474 = vmatprep.subr.bf16.mxu0 0
  %6475 = vmatpush1.bf16.msra.mxu0 0
  %6476 = vmatprep.subr.bf16.mxu0 0
  %6477 = vmatpush1.bf16.msra.mxu0 0
  %6478 = vmatprep.subr.bf16.mxu0 0
  %6479 = vmatpush1.bf16.msra.mxu0 0
  %6480 = vmatprep.subr.bf16.mxu0 0
  %6481 = vmatpush1.bf16.msra.mxu0 0
  %6482 = vmatprep.subr.bf16.mxu0 0
  %6483 = vmatpush1.bf16.msra.mxu0 0
  %6484 = vmatprep.subr.bf16.mxu0 0
  %6485 = vmatpush1.bf16.msra.mxu0 0
  %6486 = vmatprep.subr.bf16.mxu0 0
  %6487 = vmatpush1.bf16.msra.mxu0 0
  %6488 = vmatprep.subr.bf16.mxu0 0
  %6489 = vmatpush1.bf16.msra.mxu0 0
  %6490 = vmatprep.subr.bf16.mxu0 0
  %6491 = vmatpush1.bf16.msra.mxu0 0
  %6492 = vmatprep.mubr.bf16.mxu0 0
  %6493 = vmatmul.mubr.bf16.gmra.mrb[0].mxu0 %v6458
  %v6494 = vpop.f32.mrb[0].mxu0
  %v6495 = vadd.f32 0.0, %v6494
  %v6496 = vpop.f32.mrb[0].mxu0
  %v6497 = vpop.f32.mrb[0].mxu0
  %v6498 = vpop.f32.mrb[0].mxu0
  %6499 = vdwg.mxu0
  %v6500 = vadd.f32 %v6443, %v6495
  %s6501 = scalar_lea.vmem %s73, 4
  %v6502 = vld [vmem:[%s6501] sm:$0xf]
  %6503 = vrot.lane.b32.xlu0 %v6345, 8
  %v6504 = vpop.permute.xlu0 %6503
  %v6505 = vmul.f32 %v6504, %v1873
  %v6506 = vpack.c.bf16 %v6505, %v6505
  %v6508 = vsel %vm4471, %v6502, 0
  %v6511 = vsel %vm300, %v6506, 0
  %6513 = vmatprep.subr.bf16.mxu0 0
  %6514 = vmatpush1.bf16.msra.mxu0 %v6511
  %6515 = vmatprep.subr.bf16.mxu0 0
  %6516 = vmatpush1.bf16.msra.mxu0 0
  %6517 = vmatprep.subr.bf16.mxu0 0
  %6518 = vmatpush1.bf16.msra.mxu0 0
  %6519 = vmatprep.subr.bf16.mxu0 0
  %6520 = vmatpush1.bf16.msra.mxu0 0
  %6521 = vmatprep.subr.bf16.mxu0 0
  %6522 = vmatpush1.bf16.msra.mxu0 0
  %6523 = vmatprep.subr.bf16.mxu0 0
  %6524 = vmatpush1.bf16.msra.mxu0 0
  %6525 = vmatprep.subr.bf16.mxu0 0
  %6526 = vmatpush1.bf16.msra.mxu0 0
  %6527 = vmatprep.subr.bf16.mxu0 0
  %6528 = vmatpush1.bf16.msra.mxu0 0
  %6529 = vmatprep.subr.bf16.mxu0 0
  %6530 = vmatpush1.bf16.msra.mxu0 0
  %6531 = vmatprep.subr.bf16.mxu0 0
  %6532 = vmatpush1.bf16.msra.mxu0 0
  %6533 = vmatprep.subr.bf16.mxu0 0
  %6534 = vmatpush1.bf16.msra.mxu0 0
  %6535 = vmatprep.subr.bf16.mxu0 0
  %6536 = vmatpush1.bf16.msra.mxu0 0
  %6537 = vmatprep.subr.bf16.mxu0 0
  %6538 = vmatpush1.bf16.msra.mxu0 0
  %6539 = vmatprep.subr.bf16.mxu0 0
  %6540 = vmatpush1.bf16.msra.mxu0 0
  %6541 = vmatprep.subr.bf16.mxu0 0
  %6542 = vmatpush1.bf16.msra.mxu0 0
  %6543 = vmatprep.subr.bf16.mxu0 0
  %6544 = vmatpush1.bf16.msra.mxu0 0
  %6545 = vmatprep.mubr.bf16.mxu0 0
  %6546 = vmatmul.mubr.bf16.gmra.mrb[0].mxu0 %v6508
  %v6547 = vpop.f32.mrb[0].mxu0
  %v6548 = vadd.f32 0.0, %v6547
  %v6549 = vpop.f32.mrb[0].mxu0
  %v6550 = vpop.f32.mrb[0].mxu0
  %v6551 = vpop.f32.mrb[0].mxu0
  %6552 = vdwg.mxu0
  %v6553 = vadd.f32 %v6500, %v6548
  %s6554 = scalar_lea.vmem %s71, 8
  %v6555 = vld [vmem:[%s6554] sm:$0xf]
  %6556 = vrot.lane.b32.xlu0 %v6319, 7
  %v6557 = vpop.permute.xlu0 %6556
  %6558 = vrot.lane.b32.xlu0 %v6320, 7
  %v6559 = vpop.permute.xlu0 %6558
  %v6560 = vmul.f32 %v6557, %v1981
  %v6561 = vmul.f32 %v6559, %v1981
  %v6562 = vpack.c.bf16 %v6561, %v6560
  %v6564 = vsel %vm3254, %v6555, 0
  %6566 = vmatprep.subr.bf16.mxu0 0
  %6567 = vmatpush1.bf16.msra.mxu0 %v6562
  %6568 = vmatprep.subr.bf16.mxu0 0
  %6569 = vmatpush1.bf16.msra.mxu0 0
  %6570 = vmatprep.subr.bf16.mxu0 0
  %6571 = vmatpush1.bf16.msra.mxu0 0
  %6572 = vmatprep.subr.bf16.mxu0 0
  %6573 = vmatpush1.bf16.msra.mxu0 0
  %6574 = vmatprep.subr.bf16.mxu0 0
  %6575 = vmatpush1.bf16.msra.mxu0 0
  %6576 = vmatprep.subr.bf16.mxu0 0
  %6577 = vmatpush1.bf16.msra.mxu0 0
  %6578 = vmatprep.subr.bf16.mxu0 0
  %6579 = vmatpush1.bf16.msra.mxu0 0
  %6580 = vmatprep.subr.bf16.mxu0 0
  %6581 = vmatpush1.bf16.msra.mxu0 0
  %6582 = vmatprep.subr.bf16.mxu0 0
  %6583 = vmatpush1.bf16.msra.mxu0 0
  %6584 = vmatprep.subr.bf16.mxu0 0
  %6585 = vmatpush1.bf16.msra.mxu0 0
  %6586 = vmatprep.subr.bf16.mxu0 0
  %6587 = vmatpush1.bf16.msra.mxu0 0
  %6588 = vmatprep.subr.bf16.mxu0 0
  %6589 = vmatpush1.bf16.msra.mxu0 0
  %6590 = vmatprep.subr.bf16.mxu0 0
  %6591 = vmatpush1.bf16.msra.mxu0 0
  %6592 = vmatprep.subr.bf16.mxu0 0
  %6593 = vmatpush1.bf16.msra.mxu0 0
  %6594 = vmatprep.subr.bf16.mxu0 0
  %6595 = vmatpush1.bf16.msra.mxu0 0
  %6596 = vmatprep.subr.bf16.mxu0 0
  %6597 = vmatpush1.bf16.msra.mxu0 0
  %6598 = vmatprep.mubr.bf16.mxu0 0
  %6599 = vmatmul.mubr.bf16.gmra.mrb[0].mxu0 %v6564
  %v6600 = vpop.f32.mrb[0].mxu0
  %v6601 = vadd.f32 0.0, %v6600
  %v6602 = vpop.f32.mrb[0].mxu0
  %v6603 = vpop.f32.mrb[0].mxu0
  %v6604 = vpop.f32.mrb[0].mxu0
  %6605 = vdwg.mxu0
  %v6606 = vadd.f32 %v6553, %v6601
  %s6607 = scalar_lea.vmem %s73, 8
  %v6608 = vld [vmem:[%s6607] sm:$0xf]
  %6609 = vrot.lane.b32.xlu0 %v6345, 7
  %v6610 = vpop.permute.xlu0 %6609
  %v6611 = vmul.f32 %v6610, %v1981
  %v6612 = vpack.c.bf16 %v6611, %v6611
  %v6614 = vsel %vm4471, %v6608, 0
  %v6617 = vsel %vm300, %v6612, 0
  %6619 = vmatprep.subr.bf16.mxu0 0
  %6620 = vmatpush1.bf16.msra.mxu0 %v6617
  %6621 = vmatprep.subr.bf16.mxu0 0
  %6622 = vmatpush1.bf16.msra.mxu0 0
  %6623 = vmatprep.subr.bf16.mxu0 0
  %6624 = vmatpush1.bf16.msra.mxu0 0
  %6625 = vmatprep.subr.bf16.mxu0 0
  %6626 = vmatpush1.bf16.msra.mxu0 0
  %6627 = vmatprep.subr.bf16.mxu0 0
  %6628 = vmatpush1.bf16.msra.mxu0 0
  %6629 = vmatprep.subr.bf16.mxu0 0
  %6630 = vmatpush1.bf16.msra.mxu0 0
  %6631 = vmatprep.subr.bf16.mxu0 0
  %6632 = vmatpush1.bf16.msra.mxu0 0
  %6633 = vmatprep.subr.bf16.mxu0 0
  %6634 = vmatpush1.bf16.msra.mxu0 0
  %6635 = vmatprep.subr.bf16.mxu0 0
  %6636 = vmatpush1.bf16.msra.mxu0 0
  %6637 = vmatprep.subr.bf16.mxu0 0
  %6638 = vmatpush1.bf16.msra.mxu0 0
  %6639 = vmatprep.subr.bf16.mxu0 0
  %6640 = vmatpush1.bf16.msra.mxu0 0
  %6641 = vmatprep.subr.bf16.mxu0 0
  %6642 = vmatpush1.bf16.msra.mxu0 0
  %6643 = vmatprep.subr.bf16.mxu0 0
  %6644 = vmatpush1.bf16.msra.mxu0 0
  %6645 = vmatprep.subr.bf16.mxu0 0
  %6646 = vmatpush1.bf16.msra.mxu0 0
  %6647 = vmatprep.subr.bf16.mxu0 0
  %6648 = vmatpush1.bf16.msra.mxu0 0
  %6649 = vmatprep.subr.bf16.mxu0 0
  %6650 = vmatpush1.bf16.msra.mxu0 0
  %6651 = vmatprep.mubr.bf16.mxu0 0
  %6652 = vmatmul.mubr.bf16.gmra.mrb[0].mxu0 %v6614
  %v6653 = vpop.f32.mrb[0].mxu0
  %v6654 = vadd.f32 0.0, %v6653
  %v6655 = vpop.f32.mrb[0].mxu0
  %v6656 = vpop.f32.mrb[0].mxu0
  %v6657 = vpop.f32.mrb[0].mxu0
  %6658 = vdwg.mxu0
  %v6659 = vadd.f32 %v6606, %v6654
  %s6660 = scalar_lea.vmem %s71, 12
  %v6661 = vld [vmem:[%s6660] sm:$0xf]
  %6662 = vrot.lane.b32.xlu0 %v6319, 1
  %v6663 = vpop.permute.xlu0 %6662
  %6664 = vrot.lane.b32.xlu0 %v6320, 1
  %v6665 = vpop.permute.xlu0 %6664
  %v6666 = vmul.f32 %v6663, %v2042
  %v6667 = vmul.f32 %v6665, %v2042
  %v6668 = vpack.c.bf16 %v6667, %v6666
  %v6670 = vsel %vm3254, %v6661, 0
  %6672 = vmatprep.subr.bf16.mxu0 0
  %6673 = vmatpush1.bf16.msra.mxu0 %v6668
  %6674 = vmatprep.subr.bf16.mxu0 0
  %6675 = vmatpush1.bf16.msra.mxu0 0
  %6676 = vmatprep.subr.bf16.mxu0 0
  %6677 = vmatpush1.bf16.msra.mxu0 0
  %6678 = vmatprep.subr.bf16.mxu0 0
  %6679 = vmatpush1.bf16.msra.mxu0 0
  %6680 = vmatprep.subr.bf16.mxu0 0
  %6681 = vmatpush1.bf16.msra.mxu0 0
  %6682 = vmatprep.subr.bf16.mxu0 0
  %6683 = vmatpush1.bf16.msra.mxu0 0
  %6684 = vmatprep.subr.bf16.mxu0 0
  %6685 = vmatpush1.bf16.msra.mxu0 0
  %6686 = vmatprep.subr.bf16.mxu0 0
  %6687 = vmatpush1.bf16.msra.mxu0 0
  %6688 = vmatprep.subr.bf16.mxu0 0
  %6689 = vmatpush1.bf16.msra.mxu0 0
  %6690 = vmatprep.subr.bf16.mxu0 0
  %6691 = vmatpush1.bf16.msra.mxu0 0
  %6692 = vmatprep.subr.bf16.mxu0 0
  %6693 = vmatpush1.bf16.msra.mxu0 0
  %6694 = vmatprep.subr.bf16.mxu0 0
  %6695 = vmatpush1.bf16.msra.mxu0 0
  %6696 = vmatprep.subr.bf16.mxu0 0
  %6697 = vmatpush1.bf16.msra.mxu0 0
  %6698 = vmatprep.subr.bf16.mxu0 0
  %6699 = vmatpush1.bf16.msra.mxu0 0
  %6700 = vmatprep.subr.bf16.mxu0 0
  %6701 = vmatpush1.bf16.msra.mxu0 0
  %6702 = vmatprep.subr.bf16.mxu0 0
  %6703 = vmatpush1.bf16.msra.mxu0 0
  %6704 = vmatprep.mubr.bf16.mxu0 0
  %6705 = vmatmul.mubr.bf16.gmra.mrb[0].mxu0 %v6670
  %v6706 = vpop.f32.mrb[0].mxu0
  %v6707 = vadd.f32 0.0, %v6706
  %v6708 = vpop.f32.mrb[0].mxu0
  %v6709 = vpop.f32.mrb[0].mxu0
  %v6710 = vpop.f32.mrb[0].mxu0
  %6711 = vdwg.mxu0
  %v6712 = vadd.f32 %v6659, %v6707
  %s6713 = scalar_lea.vmem %s73, 12
  %v6714 = vld [vmem:[%s6713] sm:$0xf]
  %6715 = vrot.lane.b32.xlu0 %v6345, 1
  %v6716 = vpop.permute.xlu0 %6715
  %v6717 = vmul.f32 %v6716, %v2042
  %v6718 = vpack.c.bf16 %v6717, %v6717
  %v6720 = vsel %vm4471, %v6714, 0
  %v6723 = vsel %vm300, %v6718, 0
  %6725 = vmatprep.subr.bf16.mxu0 0
  %6726 = vmatpush1.bf16.msra.mxu0 %v6723
  %6727 = vmatprep.subr.bf16.mxu0 0
  %6728 = vmatpush1.bf16.msra.mxu0 0
  %6729 = vmatprep.subr.bf16.mxu0 0
  %6730 = vmatpush1.bf16.msra.mxu0 0
  %6731 = vmatprep.subr.bf16.mxu0 0
  %6732 = vmatpush1.bf16.msra.mxu0 0
  %6733 = vmatprep.subr.bf16.mxu0 0
  %6734 = vmatpush1.bf16.msra.mxu0 0
  %6735 = vmatprep.subr.bf16.mxu0 0
  %6736 = vmatpush1.bf16.msra.mxu0 0
  %6737 = vmatprep.subr.bf16.mxu0 0
  %6738 = vmatpush1.bf16.msra.mxu0 0
  %6739 = vmatprep.subr.bf16.mxu0 0
  %6740 = vmatpush1.bf16.msra.mxu0 0
  %6741 = vmatprep.subr.bf16.mxu0 0
  %6742 = vmatpush1.bf16.msra.mxu0 0
  %6743 = vmatprep.subr.bf16.mxu0 0
  %6744 = vmatpush1.bf16.msra.mxu0 0
  %6745 = vmatprep.subr.bf16.mxu0 0
  %6746 = vmatpush1.bf16.msra.mxu0 0
  %6747 = vmatprep.subr.bf16.mxu0 0
  %6748 = vmatpush1.bf16.msra.mxu0 0
  %6749 = vmatprep.subr.bf16.mxu0 0
  %6750 = vmatpush1.bf16.msra.mxu0 0
  %6751 = vmatprep.subr.bf16.mxu0 0
  %6752 = vmatpush1.bf16.msra.mxu0 0
  %6753 = vmatprep.subr.bf16.mxu0 0
  %6754 = vmatpush1.bf16.msra.mxu0 0
  %6755 = vmatprep.subr.bf16.mxu0 0
  %6756 = vmatpush1.bf16.msra.mxu0 0
  %6757 = vmatprep.mubr.bf16.mxu0 0
  %6758 = vmatmul.mubr.bf16.gmra.mrb[0].mxu0 %v6720
  %v6759 = vpop.f32.mrb[0].mxu0
  %v6760 = vadd.f32 0.0, %v6759
  %v6761 = vpop.f32.mrb[0].mxu0
  %v6762 = vpop.f32.mrb[0].mxu0
  %v6763 = vpop.f32.mrb[0].mxu0
  %6764 = vdwg.mxu0
  %v6765 = vadd.f32 %v6712, %v6760
  %s6766 = scalar_lea.vmem %s71, 16
  %v6767 = vld [vmem:[%s6766] sm:$0xf]
  %v6768 = vpack.c.bf16 %v6320, %v6319
  %v6770 = vsel %vm3254, %v6767, 0
  %6772 = vmatprep.subr.bf16.mxu0 0
  %6773 = vmatpush1.bf16.msra.mxu0 %v6768
  %6774 = vmatprep.subr.bf16.mxu0 0
  %6775 = vmatpush1.bf16.msra.mxu0 0
  %6776 = vmatprep.subr.bf16.mxu0 0
  %6777 = vmatpush1.bf16.msra.mxu0 0
  %6778 = vmatprep.subr.bf16.mxu0 0
  %6779 = vmatpush1.bf16.msra.mxu0 0
  %6780 = vmatprep.subr.bf16.mxu0 0
  %6781 = vmatpush1.bf16.msra.mxu0 0
  %6782 = vmatprep.subr.bf16.mxu0 0
  %6783 = vmatpush1.bf16.msra.mxu0 0
  %6784 = vmatprep.subr.bf16.mxu0 0
  %6785 = vmatpush1.bf16.msra.mxu0 0
  %6786 = vmatprep.subr.bf16.mxu0 0
  %6787 = vmatpush1.bf16.msra.mxu0 0
  %6788 = vmatprep.subr.bf16.mxu0 0
  %6789 = vmatpush1.bf16.msra.mxu0 0
  %6790 = vmatprep.subr.bf16.mxu0 0
  %6791 = vmatpush1.bf16.msra.mxu0 0
  %6792 = vmatprep.subr.bf16.mxu0 0
  %6793 = vmatpush1.bf16.msra.mxu0 0
  %6794 = vmatprep.subr.bf16.mxu0 0
  %6795 = vmatpush1.bf16.msra.mxu0 0
  %6796 = vmatprep.subr.bf16.mxu0 0
  %6797 = vmatpush1.bf16.msra.mxu0 0
  %6798 = vmatprep.subr.bf16.mxu0 0
  %6799 = vmatpush1.bf16.msra.mxu0 0
  %6800 = vmatprep.subr.bf16.mxu0 0
  %6801 = vmatpush1.bf16.msra.mxu0 0
  %6802 = vmatprep.subr.bf16.mxu0 0
  %6803 = vmatpush1.bf16.msra.mxu0 0
  %6804 = vmatprep.mubr.bf16.mxu0 0
  %6805 = vmatmul.mubr.bf16.gmra.mrb[0].mxu0 %v6770
  %v6806 = vpop.f32.mrb[0].mxu0
  %v6807 = vadd.f32 0.0, %v6806
  %v6808 = vpop.f32.mrb[0].mxu0
  %v6809 = vpop.f32.mrb[0].mxu0
  %v6810 = vpop.f32.mrb[0].mxu0
  %6811 = vdwg.mxu0
  %v6812 = vadd.f32 %v6765, %v6807
  %s6813 = scalar_lea.vmem %s73, 16
  %v6814 = vld [vmem:[%s6813] sm:$0xf]
  %v6815 = vpack.c.bf16 %v6345, %v6345
  %v6817 = vsel %vm4471, %v6814, 0
  %v6820 = vsel %vm300, %v6815, 0
  %6822 = vmatprep.subr.bf16.mxu0 0
  %6823 = vmatpush1.bf16.msra.mxu0 %v6820
  %6824 = vmatprep.subr.bf16.mxu0 0
  %6825 = vmatpush1.bf16.msra.mxu0 0
  %6826 = vmatprep.subr.bf16.mxu0 0
  %6827 = vmatpush1.bf16.msra.mxu0 0
  %6828 = vmatprep.subr.bf16.mxu0 0
  %6829 = vmatpush1.bf16.msra.mxu0 0
  %6830 = vmatprep.subr.bf16.mxu0 0
  %6831 = vmatpush1.bf16.msra.mxu0 0
  %6832 = vmatprep.subr.bf16.mxu0 0
  %6833 = vmatpush1.bf16.msra.mxu0 0
  %6834 = vmatprep.subr.bf16.mxu0 0
  %6835 = vmatpush1.bf16.msra.mxu0 0
  %6836 = vmatprep.subr.bf16.mxu0 0
  %6837 = vmatpush1.bf16.msra.mxu0 0
  %6838 = vmatprep.subr.bf16.mxu0 0
  %6839 = vmatpush1.bf16.msra.mxu0 0
  %6840 = vmatprep.subr.bf16.mxu0 0
  %6841 = vmatpush1.bf16.msra.mxu0 0
  %6842 = vmatprep.subr.bf16.mxu0 0
  %6843 = vmatpush1.bf16.msra.mxu0 0
  %6844 = vmatprep.subr.bf16.mxu0 0
  %6845 = vmatpush1.bf16.msra.mxu0 0
  %6846 = vmatprep.subr.bf16.mxu0 0
  %6847 = vmatpush1.bf16.msra.mxu0 0
  %6848 = vmatprep.subr.bf16.mxu0 0
  %6849 = vmatpush1.bf16.msra.mxu0 0
  %6850 = vmatprep.subr.bf16.mxu0 0
  %6851 = vmatpush1.bf16.msra.mxu0 0
  %6852 = vmatprep.subr.bf16.mxu0 0
  %6853 = vmatpush1.bf16.msra.mxu0 0
  %6854 = vmatprep.mubr.bf16.mxu0 0
  %6855 = vmatmul.mubr.bf16.gmra.mrb[0].mxu0 %v6817
  %v6856 = vpop.f32.mrb[0].mxu0
  %v6857 = vadd.f32 0.0, %v6856
  %v6858 = vpop.f32.mrb[0].mxu0
  %v6859 = vpop.f32.mrb[0].mxu0
  %v6860 = vpop.f32.mrb[0].mxu0
  %6861 = vdwg.mxu0
  %v6862 = vadd.f32 %v6812, %v6857
  %s6863 = scalar_lea.vmem %s71, 20
  %v6864 = vld [vmem:[%s6863] sm:$0xf]
  %6865 = vrot.lane.b32.xlu0 %v6319, 127
  %v6866 = vpop.permute.xlu0 %6865
  %6867 = vrot.lane.b32.xlu0 %v6320, 127
  %v6868 = vpop.permute.xlu0 %6867
  %v6869 = vmul.f32 %v6866, %v2153
  %v6870 = vmul.f32 %v6868, %v2153
  %v6871 = vpack.c.bf16 %v6870, %v6869
  %v6873 = vsel %vm3254, %v6864, 0
  %6875 = vmatprep.subr.bf16.mxu0 0
  %6876 = vmatpush1.bf16.msra.mxu0 %v6871
  %6877 = vmatprep.subr.bf16.mxu0 0
  %6878 = vmatpush1.bf16.msra.mxu0 0
  %6879 = vmatprep.subr.bf16.mxu0 0
  %6880 = vmatpush1.bf16.msra.mxu0 0
  %6881 = vmatprep.subr.bf16.mxu0 0
  %6882 = vmatpush1.bf16.msra.mxu0 0
  %6883 = vmatprep.subr.bf16.mxu0 0
  %6884 = vmatpush1.bf16.msra.mxu0 0
  %6885 = vmatprep.subr.bf16.mxu0 0
  %6886 = vmatpush1.bf16.msra.mxu0 0
  %6887 = vmatprep.subr.bf16.mxu0 0
  %6888 = vmatpush1.bf16.msra.mxu0 0
  %6889 = vmatprep.subr.bf16.mxu0 0
  %6890 = vmatpush1.bf16.msra.mxu0 0
  %6891 = vmatprep.subr.bf16.mxu0 0
  %6892 = vmatpush1.bf16.msra.mxu0 0
  %6893 = vmatprep.subr.bf16.mxu0 0
  %6894 = vmatpush1.bf16.msra.mxu0 0
  %6895 = vmatprep.subr.bf16.mxu0 0
  %6896 = vmatpush1.bf16.msra.mxu0 0
  %6897 = vmatprep.subr.bf16.mxu0 0
  %6898 = vmatpush1.bf16.msra.mxu0 0
  %6899 = vmatprep.subr.bf16.mxu0 0
  %6900 = vmatpush1.bf16.msra.mxu0 0
  %6901 = vmatprep.subr.bf16.mxu0 0
  %6902 = vmatpush1.bf16.msra.mxu0 0
  %6903 = vmatprep.subr.bf16.mxu0 0
  %6904 = vmatpush1.bf16.msra.mxu0 0
  %6905 = vmatprep.subr.bf16.mxu0 0
  %6906 = vmatpush1.bf16.msra.mxu0 0
  %6907 = vmatprep.mubr.bf16.mxu0 0
  %6908 = vmatmul.mubr.bf16.gmra.mrb[0].mxu0 %v6873
  %v6909 = vpop.f32.mrb[0].mxu0
  %v6910 = vadd.f32 0.0, %v6909
  %v6911 = vpop.f32.mrb[0].mxu0
  %v6912 = vpop.f32.mrb[0].mxu0
  %v6913 = vpop.f32.mrb[0].mxu0
  %6914 = vdwg.mxu0
  %v6915 = vadd.f32 %v6862, %v6910
  %s6916 = scalar_lea.vmem %s73, 20
  %v6917 = vld [vmem:[%s6916] sm:$0xf]
  %6918 = vrot.lane.b32.xlu0 %v6345, 127
  %v6919 = vpop.permute.xlu0 %6918
  %v6920 = vmul.f32 %v6919, %v2153
  %v6921 = vpack.c.bf16 %v6920, %v6920
  %v6923 = vsel %vm4471, %v6917, 0
  %v6926 = vsel %vm300, %v6921, 0
  %6928 = vmatprep.subr.bf16.mxu0 0
  %6929 = vmatpush1.bf16.msra.mxu0 %v6926
  %6930 = vmatprep.subr.bf16.mxu0 0
  %6931 = vmatpush1.bf16.msra.mxu0 0
  %6932 = vmatprep.subr.bf16.mxu0 0
  %6933 = vmatpush1.bf16.msra.mxu0 0
  %6934 = vmatprep.subr.bf16.mxu0 0
  %6935 = vmatpush1.bf16.msra.mxu0 0
  %6936 = vmatprep.subr.bf16.mxu0 0
  %6937 = vmatpush1.bf16.msra.mxu0 0
  %6938 = vmatprep.subr.bf16.mxu0 0
  %6939 = vmatpush1.bf16.msra.mxu0 0
  %6940 = vmatprep.subr.bf16.mxu0 0
  %6941 = vmatpush1.bf16.msra.mxu0 0
  %6942 = vmatprep.subr.bf16.mxu0 0
  %6943 = vmatpush1.bf16.msra.mxu0 0
  %6944 = vmatprep.subr.bf16.mxu0 0
  %6945 = vmatpush1.bf16.msra.mxu0 0
  %6946 = vmatprep.subr.bf16.mxu0 0
  %6947 = vmatpush1.bf16.msra.mxu0 0
  %6948 = vmatprep.subr.bf16.mxu0 0
  %6949 = vmatpush1.bf16.msra.mxu0 0
  %6950 = vmatprep.subr.bf16.mxu0 0
  %6951 = vmatpush1.bf16.msra.mxu0 0
  %6952 = vmatprep.subr.bf16.mxu0 0
  %6953 = vmatpush1.bf16.msra.mxu0 0
  %6954 = vmatprep.subr.bf16.mxu0 0
  %6955 = vmatpush1.bf16.msra.mxu0 0
  %6956 = vmatprep.subr.bf16.mxu0 0
  %6957 = vmatpush1.bf16.msra.mxu0 0
  %6958 = vmatprep.subr.bf16.mxu0 0
  %6959 = vmatpush1.bf16.msra.mxu0 0
  %6960 = vmatprep.mubr.bf16.mxu0 0
  %6961 = vmatmul.mubr.bf16.gmra.mrb[0].mxu0 %v6923
  %v6962 = vpop.f32.mrb[0].mxu0
  %v6963 = vadd.f32 0.0, %v6962
  %v6964 = vpop.f32.mrb[0].mxu0
  %v6965 = vpop.f32.mrb[0].mxu0
  %v6966 = vpop.f32.mrb[0].mxu0
  %6967 = vdwg.mxu0
  %v6968 = vadd.f32 %v6915, %v6963
  %s6969 = scalar_lea.vmem %s71, 24
  %v6970 = vld [vmem:[%s6969] sm:$0xf]
  %6971 = vrot.lane.b32.xlu0 %v6319, 121
  %v6972 = vpop.permute.xlu0 %6971
  %6973 = vrot.lane.b32.xlu0 %v6320, 121
  %v6974 = vpop.permute.xlu0 %6973
  %v6975 = vmul.f32 %v6972, %v2214
  %v6976 = vmul.f32 %v6974, %v2214
  %v6977 = vpack.c.bf16 %v6976, %v6975
  %v6979 = vsel %vm3254, %v6970, 0
  %6981 = vmatprep.subr.bf16.mxu0 0
  %6982 = vmatpush1.bf16.msra.mxu0 %v6977
  %6983 = vmatprep.subr.bf16.mxu0 0
  %6984 = vmatpush1.bf16.msra.mxu0 0
  %6985 = vmatprep.subr.bf16.mxu0 0
  %6986 = vmatpush1.bf16.msra.mxu0 0
  %6987 = vmatprep.subr.bf16.mxu0 0
  %6988 = vmatpush1.bf16.msra.mxu0 0
  %6989 = vmatprep.subr.bf16.mxu0 0
  %6990 = vmatpush1.bf16.msra.mxu0 0
  %6991 = vmatprep.subr.bf16.mxu0 0
  %6992 = vmatpush1.bf16.msra.mxu0 0
  %6993 = vmatprep.subr.bf16.mxu0 0
  %6994 = vmatpush1.bf16.msra.mxu0 0
  %6995 = vmatprep.subr.bf16.mxu0 0
  %6996 = vmatpush1.bf16.msra.mxu0 0
  %6997 = vmatprep.subr.bf16.mxu0 0
  %6998 = vmatpush1.bf16.msra.mxu0 0
  %6999 = vmatprep.subr.bf16.mxu0 0
  %7000 = vmatpush1.bf16.msra.mxu0 0
  %7001 = vmatprep.subr.bf16.mxu0 0
  %7002 = vmatpush1.bf16.msra.mxu0 0
  %7003 = vmatprep.subr.bf16.mxu0 0
  %7004 = vmatpush1.bf16.msra.mxu0 0
  %7005 = vmatprep.subr.bf16.mxu0 0
  %7006 = vmatpush1.bf16.msra.mxu0 0
  %7007 = vmatprep.subr.bf16.mxu0 0
  %7008 = vmatpush1.bf16.msra.mxu0 0
  %7009 = vmatprep.subr.bf16.mxu0 0
  %7010 = vmatpush1.bf16.msra.mxu0 0
  %7011 = vmatprep.subr.bf16.mxu0 0
  %7012 = vmatpush1.bf16.msra.mxu0 0
  %7013 = vmatprep.mubr.bf16.mxu0 0
  %7014 = vmatmul.mubr.bf16.gmra.mrb[0].mxu0 %v6979
  %v7015 = vpop.f32.mrb[0].mxu0
  %v7016 = vadd.f32 0.0, %v7015
  %v7017 = vpop.f32.mrb[0].mxu0
  %v7018 = vpop.f32.mrb[0].mxu0
  %v7019 = vpop.f32.mrb[0].mxu0
  %7020 = vdwg.mxu0
  %v7021 = vadd.f32 %v6968, %v7016
  %s7022 = scalar_lea.vmem %s73, 24
  %v7023 = vld [vmem:[%s7022] sm:$0xf]
  %7024 = vrot.lane.b32.xlu0 %v6345, 121
  %v7025 = vpop.permute.xlu0 %7024
  %v7026 = vmul.f32 %v7025, %v2214
  %v7027 = vpack.c.bf16 %v7026, %v7026
  %v7029 = vsel %vm4471, %v7023, 0
  %v7032 = vsel %vm300, %v7027, 0
  %7034 = vmatprep.subr.bf16.mxu0 0
  %7035 = vmatpush1.bf16.msra.mxu0 %v7032
  %7036 = vmatprep.subr.bf16.mxu0 0
  %7037 = vmatpush1.bf16.msra.mxu0 0
  %7038 = vmatprep.subr.bf16.mxu0 0
  %7039 = vmatpush1.bf16.msra.mxu0 0
  %7040 = vmatprep.subr.bf16.mxu0 0
  %7041 = vmatpush1.bf16.msra.mxu0 0
  %7042 = vmatprep.subr.bf16.mxu0 0
  %7043 = vmatpush1.bf16.msra.mxu0 0
  %7044 = vmatprep.subr.bf16.mxu0 0
  %7045 = vmatpush1.bf16.msra.mxu0 0
  %7046 = vmatprep.subr.bf16.mxu0 0
  %7047 = vmatpush1.bf16.msra.mxu0 0
  %7048 = vmatprep.subr.bf16.mxu0 0
  %7049 = vmatpush1.bf16.msra.mxu0 0
  %7050 = vmatprep.subr.bf16.mxu0 0
  %7051 = vmatpush1.bf16.msra.mxu0 0
  %7052 = vmatprep.subr.bf16.mxu0 0
  %7053 = vmatpush1.bf16.msra.mxu0 0
  %7054 = vmatprep.subr.bf16.mxu0 0
  %7055 = vmatpush1.bf16.msra.mxu0 0
  %7056 = vmatprep.subr.bf16.mxu0 0
  %7057 = vmatpush1.bf16.msra.mxu0 0
  %7058 = vmatprep.subr.bf16.mxu0 0
  %7059 = vmatpush1.bf16.msra.mxu0 0
  %7060 = vmatprep.subr.bf16.mxu0 0
  %7061 = vmatpush1.bf16.msra.mxu0 0
  %7062 = vmatprep.subr.bf16.mxu0 0
  %7063 = vmatpush1.bf16.msra.mxu0 0
  %7064 = vmatprep.subr.bf16.mxu0 0
  %7065 = vmatpush1.bf16.msra.mxu0 0
  %7066 = vmatprep.mubr.bf16.mxu0 0
  %7067 = vmatmul.mubr.bf16.gmra.mrb[0].mxu0 %v7029
  %v7068 = vpop.f32.mrb[0].mxu0
  %v7069 = vadd.f32 0.0, %v7068
  %v7070 = vpop.f32.mrb[0].mxu0
  %v7071 = vpop.f32.mrb[0].mxu0
  %v7072 = vpop.f32.mrb[0].mxu0
  %7073 = vdwg.mxu0
  %v7074 = vadd.f32 %v7021, %v7069
  %s7075 = scalar_lea.vmem %s71, 28
  %v7076 = vld [vmem:[%s7075] sm:$0xf]
  %7077 = vrot.lane.b32.xlu0 %v6319, 120
  %v7078 = vpop.permute.xlu0 %7077
  %7079 = vrot.lane.b32.xlu0 %v6320, 120
  %v7080 = vpop.permute.xlu0 %7079
  %v7081 = vmul.f32 %v7078, %v2275
  %v7082 = vmul.f32 %v7080, %v2275
  %v7083 = vpack.c.bf16 %v7082, %v7081
  %v7085 = vsel %vm3254, %v7076, 0
  %7087 = vmatprep.subr.bf16.mxu0 0
  %7088 = vmatpush1.bf16.msra.mxu0 %v7083
  %7089 = vmatprep.subr.bf16.mxu0 0
  %7090 = vmatpush1.bf16.msra.mxu0 0
  %7091 = vmatprep.subr.bf16.mxu0 0
  %7092 = vmatpush1.bf16.msra.mxu0 0
  %7093 = vmatprep.subr.bf16.mxu0 0
  %7094 = vmatpush1.bf16.msra.mxu0 0
  %7095 = vmatprep.subr.bf16.mxu0 0
  %7096 = vmatpush1.bf16.msra.mxu0 0
  %7097 = vmatprep.subr.bf16.mxu0 0
  %7098 = vmatpush1.bf16.msra.mxu0 0
  %7099 = vmatprep.subr.bf16.mxu0 0
  %7100 = vmatpush1.bf16.msra.mxu0 0
  %7101 = vmatprep.subr.bf16.mxu0 0
  %7102 = vmatpush1.bf16.msra.mxu0 0
  %7103 = vmatprep.subr.bf16.mxu0 0
  %7104 = vmatpush1.bf16.msra.mxu0 0
  %7105 = vmatprep.subr.bf16.mxu0 0
  %7106 = vmatpush1.bf16.msra.mxu0 0
  %7107 = vmatprep.subr.bf16.mxu0 0
  %7108 = vmatpush1.bf16.msra.mxu0 0
  %7109 = vmatprep.subr.bf16.mxu0 0
  %7110 = vmatpush1.bf16.msra.mxu0 0
  %7111 = vmatprep.subr.bf16.mxu0 0
  %7112 = vmatpush1.bf16.msra.mxu0 0
  %7113 = vmatprep.subr.bf16.mxu0 0
  %7114 = vmatpush1.bf16.msra.mxu0 0
  %7115 = vmatprep.subr.bf16.mxu0 0
  %7116 = vmatpush1.bf16.msra.mxu0 0
  %7117 = vmatprep.subr.bf16.mxu0 0
  %7118 = vmatpush1.bf16.msra.mxu0 0
  %7119 = vmatprep.mubr.bf16.mxu0 0
  %7120 = vmatmul.mubr.bf16.gmra.mrb[0].mxu0 %v7085
  %v7121 = vpop.f32.mrb[0].mxu0
  %v7122 = vadd.f32 0.0, %v7121
  %v7123 = vpop.f32.mrb[0].mxu0
  %v7124 = vpop.f32.mrb[0].mxu0
  %v7125 = vpop.f32.mrb[0].mxu0
  %7126 = vdwg.mxu0
  %v7127 = vadd.f32 %v7074, %v7122
  %s7128 = scalar_lea.vmem %s73, 28
  %v7129 = vld [vmem:[%s7128] sm:$0xf]
  %7130 = vrot.lane.b32.xlu0 %v6345, 120
  %v7131 = vpop.permute.xlu0 %7130
  %v7132 = vmul.f32 %v7131, %v2275
  %v7133 = vpack.c.bf16 %v7132, %v7132
  %v7135 = vsel %vm4471, %v7129, 0
  %v7138 = vsel %vm300, %v7133, 0
  %7140 = vmatprep.subr.bf16.mxu0 0
  %7141 = vmatpush1.bf16.msra.mxu0 %v7138
  %7142 = vmatprep.subr.bf16.mxu0 0
  %7143 = vmatpush1.bf16.msra.mxu0 0
  %7144 = vmatprep.subr.bf16.mxu0 0
  %7145 = vmatpush1.bf16.msra.mxu0 0
  %7146 = vmatprep.subr.bf16.mxu0 0
  %7147 = vmatpush1.bf16.msra.mxu0 0
  %7148 = vmatprep.subr.bf16.mxu0 0
  %7149 = vmatpush1.bf16.msra.mxu0 0
  %7150 = vmatprep.subr.bf16.mxu0 0
  %7151 = vmatpush1.bf16.msra.mxu0 0
  %7152 = vmatprep.subr.bf16.mxu0 0
  %7153 = vmatpush1.bf16.msra.mxu0 0
  %7154 = vmatprep.subr.bf16.mxu0 0
  %7155 = vmatpush1.bf16.msra.mxu0 0
  %7156 = vmatprep.subr.bf16.mxu0 0
  %7157 = vmatpush1.bf16.msra.mxu0 0
  %7158 = vmatprep.subr.bf16.mxu0 0
  %7159 = vmatpush1.bf16.msra.mxu0 0
  %7160 = vmatprep.subr.bf16.mxu0 0
  %7161 = vmatpush1.bf16.msra.mxu0 0
  %7162 = vmatprep.subr.bf16.mxu0 0
  %7163 = vmatpush1.bf16.msra.mxu0 0
  %7164 = vmatprep.subr.bf16.mxu0 0
  %7165 = vmatpush1.bf16.msra.mxu0 0
  %7166 = vmatprep.subr.bf16.mxu0 0
  %7167 = vmatpush1.bf16.msra.mxu0 0
  %7168 = vmatprep.subr.bf16.mxu0 0
  %7169 = vmatpush1.bf16.msra.mxu0 0
  %7170 = vmatprep.subr.bf16.mxu0 0
  %7171 = vmatpush1.bf16.msra.mxu0 0
  %7172 = vmatprep.mubr.bf16.mxu0 0
  %7173 = vmatmul.mubr.bf16.gmra.mrb[0].mxu0 %v7135
  %v7174 = vpop.f32.mrb[0].mxu0
  %v7175 = vadd.f32 0.0, %v7174
  %v7176 = vpop.f32.mrb[0].mxu0
  %v7177 = vpop.f32.mrb[0].mxu0
  %v7178 = vpop.f32.mrb[0].mxu0
  %7179 = vdwg.mxu0
  %v7180 = vadd.f32 %v7127, %v7175
  %s7181 = scalar_lea.vmem %s71, 32
  %v7182 = vld [vmem:[%s7181] sm:$0xf]
  %7183 = vrot.lane.b32.xlu0 %v6319, 119
  %v7184 = vpop.permute.xlu0 %7183
  %7185 = vrot.lane.b32.xlu0 %v6320, 119
  %v7186 = vpop.permute.xlu0 %7185
  %v7187 = vmul.f32 %v7184, %v2336
  %v7188 = vmul.f32 %v7186, %v2336
  %v7189 = vpack.c.bf16 %v7188, %v7187
  %v7191 = vsel %vm3254, %v7182, 0
  %7193 = vmatprep.subr.bf16.mxu0 0
  %7194 = vmatpush1.bf16.msra.mxu0 %v7189
  %7195 = vmatprep.subr.bf16.mxu0 0
  %7196 = vmatpush1.bf16.msra.mxu0 0
  %7197 = vmatprep.subr.bf16.mxu0 0
  %7198 = vmatpush1.bf16.msra.mxu0 0
  %7199 = vmatprep.subr.bf16.mxu0 0
  %7200 = vmatpush1.bf16.msra.mxu0 0
  %7201 = vmatprep.subr.bf16.mxu0 0
  %7202 = vmatpush1.bf16.msra.mxu0 0
  %7203 = vmatprep.subr.bf16.mxu0 0
  %7204 = vmatpush1.bf16.msra.mxu0 0
  %7205 = vmatprep.subr.bf16.mxu0 0
  %7206 = vmatpush1.bf16.msra.mxu0 0
  %7207 = vmatprep.subr.bf16.mxu0 0
  %7208 = vmatpush1.bf16.msra.mxu0 0
  %7209 = vmatprep.subr.bf16.mxu0 0
  %7210 = vmatpush1.bf16.msra.mxu0 0
  %7211 = vmatprep.subr.bf16.mxu0 0
  %7212 = vmatpush1.bf16.msra.mxu0 0
  %7213 = vmatprep.subr.bf16.mxu0 0
  %7214 = vmatpush1.bf16.msra.mxu0 0
  %7215 = vmatprep.subr.bf16.mxu0 0
  %7216 = vmatpush1.bf16.msra.mxu0 0
  %7217 = vmatprep.subr.bf16.mxu0 0
  %7218 = vmatpush1.bf16.msra.mxu0 0
  %7219 = vmatprep.subr.bf16.mxu0 0
  %7220 = vmatpush1.bf16.msra.mxu0 0
  %7221 = vmatprep.subr.bf16.mxu0 0
  %7222 = vmatpush1.bf16.msra.mxu0 0
  %7223 = vmatprep.subr.bf16.mxu0 0
  %7224 = vmatpush1.bf16.msra.mxu0 0
  %7225 = vmatprep.mubr.bf16.mxu0 0
  %7226 = vmatmul.mubr.bf16.gmra.mrb[0].mxu0 %v7191
  %v7227 = vpop.f32.mrb[0].mxu0
  %v7228 = vadd.f32 0.0, %v7227
  %v7229 = vpop.f32.mrb[0].mxu0
  %v7230 = vpop.f32.mrb[0].mxu0
  %v7231 = vpop.f32.mrb[0].mxu0
  %7232 = vdwg.mxu0
  %v7233 = vadd.f32 %v7180, %v7228
  %s7234 = scalar_lea.vmem %s73, 32
  %v7235 = vld [vmem:[%s7234] sm:$0xf]
  %7236 = vrot.lane.b32.xlu0 %v6345, 119
  %v7237 = vpop.permute.xlu0 %7236
  %v7238 = vmul.f32 %v7237, %v2336
  %v7239 = vpack.c.bf16 %v7238, %v7238
  %v7241 = vsel %vm4471, %v7235, 0
  %v7244 = vsel %vm300, %v7239, 0
  %7246 = vmatprep.subr.bf16.mxu0 0
  %7247 = vmatpush1.bf16.msra.mxu0 %v7244
  %7248 = vmatprep.subr.bf16.mxu0 0
  %7249 = vmatpush1.bf16.msra.mxu0 0
  %7250 = vmatprep.subr.bf16.mxu0 0
  %7251 = vmatpush1.bf16.msra.mxu0 0
  %7252 = vmatprep.subr.bf16.mxu0 0
  %7253 = vmatpush1.bf16.msra.mxu0 0
  %7254 = vmatprep.subr.bf16.mxu0 0
  %7255 = vmatpush1.bf16.msra.mxu0 0
  %7256 = vmatprep.subr.bf16.mxu0 0
  %7257 = vmatpush1.bf16.msra.mxu0 0
  %7258 = vmatprep.subr.bf16.mxu0 0
  %7259 = vmatpush1.bf16.msra.mxu0 0
  %7260 = vmatprep.subr.bf16.mxu0 0
  %7261 = vmatpush1.bf16.msra.mxu0 0
  %7262 = vmatprep.subr.bf16.mxu0 0
  %7263 = vmatpush1.bf16.msra.mxu0 0
  %7264 = vmatprep.subr.bf16.mxu0 0
  %7265 = vmatpush1.bf16.msra.mxu0 0
  %7266 = vmatprep.subr.bf16.mxu0 0
  %7267 = vmatpush1.bf16.msra.mxu0 0
  %7268 = vmatprep.subr.bf16.mxu0 0
  %7269 = vmatpush1.bf16.msra.mxu0 0
  %7270 = vmatprep.subr.bf16.mxu0 0
  %7271 = vmatpush1.bf16.msra.mxu0 0
  %7272 = vmatprep.subr.bf16.mxu0 0
  %7273 = vmatpush1.bf16.msra.mxu0 0
  %7274 = vmatprep.subr.bf16.mxu0 0
  %7275 = vmatpush1.bf16.msra.mxu0 0
  %7276 = vmatprep.subr.bf16.mxu0 0
  %7277 = vmatpush1.bf16.msra.mxu0 0
  %7278 = vmatprep.mubr.bf16.mxu0 0
  %7279 = vmatmul.mubr.bf16.gmra.mrb[0].mxu0 %v7241
  %v7280 = vpop.f32.mrb[0].mxu0
  %v7281 = vadd.f32 0.0, %v7280
  %v7282 = vpop.f32.mrb[0].mxu0
  %v7283 = vpop.f32.mrb[0].mxu0
  %v7284 = vpop.f32.mrb[0].mxu0
  %7285 = vdwg.mxu0
  %v7286 = vadd.f32 %v7233, %v7281
  %v7287 = vld [vmem:[%s63] sm:$0xff]
  %v7288 = vld [vmem:[%s59] sm:$0xff]
  %7289 = vadd.xlane.f32.xlu0 %v7286
  %v7290 = vpop.xlane.xlu0 %7289
  %v7291 = vmul.f32 %v7290, 0.0078125
  %v7292 = vsub.f32 %v7286, %v7291
  %v7293 = vmul.f32 %v7292, %v7292
  %7294 = vadd.xlane.f32.xlu0 %v7293
  %v7295 = vpop.xlane.xlu0 %7294
  %v7296 = vmul.f32 %v7295, 0.0078125
  %v7297 = vadd.f32 %v7296, 1e-05
  %v7298 = vrsqrt.pop %v7297
  %v7299 = vmul.f32 %v7292, %v7298
  %7301 = vset.pattern.permute.xlu0 0
  %7302 = vperm.xlu0 %7301, %v7287
  %v7303 = vpop.permute.xlu0 %7302
  %v7305 = vmul.f32 %v7299, %v7303
  %7307 = vset.pattern.permute.xlu0 0
  %7308 = vperm.xlu0 %7307, %v7288
  %v7309 = vpop.permute.xlu0 %7308
  %v7311 = vadd.f32 %v7305, %v7309
  %vm7312 = vcmp.ge.f32.partialorder %v7311, 0.0
  %v7313 = vmul.f32 %v7311, 0.01
  %v7314 = vsel %vm7312, %v7311, %v7313
  %v7315 = vld [vmem:[%s75] sm:$0xf]
  %v7316 = vpack.c.bf16 %v7314, %v7314
  %v7318 = vsel %vm1877, %v7315, 0
  %v7321 = vsel %vm1881, %v7316, 0
  %7323 = vmatprep.subr.bf16.mxu0 0
  %7324 = vmatpush1.bf16.msra.mxu0 %v7321
  %7325 = vmatprep.subr.bf16.mxu0 0
  %7326 = vmatpush1.bf16.msra.mxu0 0
  %7327 = vmatprep.subr.bf16.mxu0 0
  %7328 = vmatpush1.bf16.msra.mxu0 0
  %7329 = vmatprep.subr.bf16.mxu0 0
  %7330 = vmatpush1.bf16.msra.mxu0 0
  %7331 = vmatprep.subr.bf16.mxu0 0
  %7332 = vmatpush1.bf16.msra.mxu0 0
  %7333 = vmatprep.subr.bf16.mxu0 0
  %7334 = vmatpush1.bf16.msra.mxu0 0
  %7335 = vmatprep.subr.bf16.mxu0 0
  %7336 = vmatpush1.bf16.msra.mxu0 0
  %7337 = vmatprep.subr.bf16.mxu0 0
  %7338 = vmatpush1.bf16.msra.mxu0 0
  %7339 = vmatprep.subr.bf16.mxu0 0
  %7340 = vmatpush1.bf16.msra.mxu0 0
  %7341 = vmatprep.subr.bf16.mxu0 0
  %7342 = vmatpush1.bf16.msra.mxu0 0
  %7343 = vmatprep.subr.bf16.mxu0 0
  %7344 = vmatpush1.bf16.msra.mxu0 0
  %7345 = vmatprep.subr.bf16.mxu0 0
  %7346 = vmatpush1.bf16.msra.mxu0 0
  %7347 = vmatprep.subr.bf16.mxu0 0
  %7348 = vmatpush1.bf16.msra.mxu0 0
  %7349 = vmatprep.subr.bf16.mxu0 0
  %7350 = vmatpush1.bf16.msra.mxu0 0
  %7351 = vmatprep.subr.bf16.mxu0 0
  %7352 = vmatpush1.bf16.msra.mxu0 0
  %7353 = vmatprep.subr.bf16.mxu0 0
  %7354 = vmatpush1.bf16.msra.mxu0 0
  %7355 = vmatprep.mubr.bf16.mxu0 0
  %7356 = vmatmul.mubr.bf16.gmra.mrb[0].mxu0 %v7318
  %v7357 = vpop.f32.mrb[0].mxu0
  %v7358 = vadd.f32 0.0, %v7357
  %v7359 = vpop.f32.mrb[0].mxu0
  %v7360 = vpop.f32.mrb[0].mxu0
  %v7361 = vpop.f32.mrb[0].mxu0
  %7362 = vdwg.mxu0
  %v7363 = vld [vmem:[%s65] sm:$0xff]
  %v7364 = vld [vmem:[%s61] sm:$0xff]
  %7365 = vadd.xlane.f32.xlu0 %v7358
  %v7366 = vpop.xlane.xlu0 %7365
  %v7367 = vmul.f32 %v7366, 0.0078125
  %v7368 = vsub.f32 %v7358, %v7367
  %v7369 = vmul.f32 %v7368, %v7368
  %7370 = vadd.xlane.f32.xlu0 %v7369
  %v7371 = vpop.xlane.xlu0 %7370
  %v7372 = vmul.f32 %v7371, 0.0078125
  %v7373 = vadd.f32 %v7372, 1e-05
  %v7374 = vrsqrt.pop %v7373
  %v7375 = vmul.f32 %v7368, %v7374
  %7377 = vset.pattern.permute.xlu0 0
  %7378 = vperm.xlu0 %7377, %v7363
  %v7379 = vpop.permute.xlu0 %7378
  %v7381 = vmul.f32 %v7375, %v7379
  %7383 = vset.pattern.permute.xlu0 0
  %7384 = vperm.xlu0 %7383, %v7364
  %v7385 = vpop.permute.xlu0 %7384
  %v7387 = vadd.f32 %v7381, %v7385
  %vm7388 = vcmp.ge.f32.partialorder %v7387, 0.0
  %v7389 = vmul.f32 %v7387, 0.01
  %v7390 = vsel %vm7388, %v7387, %v7389
  %v7391 = vpack.c.bf16 %v7390, %v7390
  %v7392 = vld [vmem:[%s13] sm:$0xff]
  %v7393 = vld [vmem:[%s13 + $0x8] sm:$0xff]
  %v7394 = vld [vmem:[%s13 + $0x10] sm:$0xff]
  %v7395 = vld [vmem:[%s13 + $0x18] sm:$0xff]
  %v7396 = vld [vmem:[%s13 + $0x20] sm:$0xff]
  %v7397 = vld [vmem:[%s13 + $0x28] sm:$0xff]
  %v7398 = vld [vmem:[%s13 + $0x30] sm:$0xff]
  %v7399 = vld [vmem:[%s13 + $0x38] sm:$0xff]
  %v7400 = vld [vmem:[%s13 + $0x40] sm:$0xff]
  %v7401 = vld [vmem:[%s13 + $0x48] sm:$0xff]
  %v7402 = vld [vmem:[%s13 + $0x50] sm:$0xff]
  %v7403 = vld [vmem:[%s13 + $0x58] sm:$0xff]
  %v7404 = vld [vmem:[%s13 + $0x60] sm:$0xff]
  %v7405 = vld [vmem:[%s13 + $0x68] sm:$0xff]
  %v7406 = vld [vmem:[%s13 + $0x70] sm:$0xff]
  %v7407 = vld [vmem:[%s13 + $0x78] sm:$0xff]
  %v7408 = vld [vmem:[%s13 + $0x80] sm:$0xff]
  %v7409 = vld [vmem:[%s13 + $0x88] sm:$0xff]
  %v7410 = vld [vmem:[%s13 + $0x90] sm:$0xff]
  %v7411 = vld [vmem:[%s13 + $0x98] sm:$0xff]
  %v7412 = vld [vmem:[%s13 + $0xa0] sm:$0xff]
  %v7413 = vld [vmem:[%s13 + $0xa8] sm:$0xff]
  %v7414 = vld [vmem:[%s13 + $0xb0] sm:$0xff]
  %v7415 = vld [vmem:[%s13 + $0xb8] sm:$0xff]
  %v7416 = vld [vmem:[%s13 + $0xc0] sm:$0xff]
  %v7417 = vld [vmem:[%s13 + $0xc8] sm:$0xff]
  %v7418 = vld [vmem:[%s13 + $0xd0] sm:$0xff]
  %v7419 = vld [vmem:[%s13 + $0xd8] sm:$0xff]
  %v7420 = vld [vmem:[%s13 + $0xe0] sm:$0xff]
  %v7421 = vld [vmem:[%s13 + $0xe8] sm:$0xff]
  %v7422 = vld [vmem:[%s13 + $0xf0] sm:$0xff]
  %v7423 = vld [vmem:[%s13 + $0xf8] sm:$0xff]
  %v7456 = vunpack.c.l.b16 %v7392
  %v7457 = vunpack.c.h.b16 %v7392
  %v7458 = vunpack.c.l.b16 %v7393
  %v7459 = vunpack.c.h.b16 %v7393
  %v7460 = vunpack.c.l.b16 %v7394
  %v7461 = vunpack.c.h.b16 %v7394
  %v7462 = vunpack.c.l.b16 %v7395
  %v7463 = vunpack.c.h.b16 %v7395
  %v7464 = vunpack.c.l.b16 %v7396
  %v7465 = vunpack.c.h.b16 %v7396
  %v7466 = vunpack.c.l.b16 %v7397
  %v7467 = vunpack.c.h.b16 %v7397
  %v7468 = vunpack.c.l.b16 %v7398
  %v7469 = vunpack.c.h.b16 %v7398
  %v7470 = vunpack.c.l.b16 %v7399
  %v7471 = vunpack.c.h.b16 %v7399
  %v7472 = vunpack.c.l.b16 %v7400
  %v7473 = vunpack.c.h.b16 %v7400
  %v7474 = vunpack.c.l.b16 %v7401
  %v7475 = vunpack.c.h.b16 %v7401
  %v7476 = vunpack.c.l.b16 %v7402
  %v7477 = vunpack.c.h.b16 %v7402
  %v7478 = vunpack.c.l.b16 %v7403
  %v7479 = vunpack.c.h.b16 %v7403
  %v7480 = vunpack.c.l.b16 %v7404
  %v7481 = vunpack.c.h.b16 %v7404
  %v7482 = vunpack.c.l.b16 %v7405
  %v7483 = vunpack.c.h.b16 %v7405
  %v7484 = vunpack.c.l.b16 %v7406
  %v7485 = vunpack.c.h.b16 %v7406
  %v7486 = vunpack.c.l.b16 %v7407
  %v7487 = vunpack.c.h.b16 %v7407
  %v7488 = vunpack.c.l.b16 %v7408
  %v7489 = vunpack.c.h.b16 %v7408
  %v7490 = vunpack.c.l.b16 %v7409
  %v7491 = vunpack.c.h.b16 %v7409
  %v7492 = vunpack.c.l.b16 %v7410
  %v7493 = vunpack.c.h.b16 %v7410
  %v7494 = vunpack.c.l.b16 %v7411
  %v7495 = vunpack.c.h.b16 %v7411
  %v7496 = vunpack.c.l.b16 %v7412
  %v7497 = vunpack.c.h.b16 %v7412
  %v7498 = vunpack.c.l.b16 %v7413
  %v7499 = vunpack.c.h.b16 %v7413
  %v7500 = vunpack.c.l.b16 %v7414
  %v7501 = vunpack.c.h.b16 %v7414
  %v7502 = vunpack.c.l.b16 %v7415
  %v7503 = vunpack.c.h.b16 %v7415
  %v7504 = vunpack.c.l.b16 %v7416
  %v7505 = vunpack.c.h.b16 %v7416
  %v7506 = vunpack.c.l.b16 %v7417
  %v7507 = vunpack.c.h.b16 %v7417
  %v7508 = vunpack.c.l.b16 %v7418
  %v7509 = vunpack.c.h.b16 %v7418
  %v7510 = vunpack.c.l.b16 %v7419
  %v7511 = vunpack.c.h.b16 %v7419
  %v7512 = vunpack.c.l.b16 %v7420
  %v7513 = vunpack.c.h.b16 %v7420
  %v7514 = vunpack.c.l.b16 %v7421
  %v7515 = vunpack.c.h.b16 %v7421
  %v7516 = vunpack.c.l.b16 %v7422
  %v7517 = vunpack.c.h.b16 %v7422
  %v7518 = vunpack.c.l.b16 %v7423
  %v7519 = vunpack.c.h.b16 %v7423
  %v7520 = vpack.c.b16 %v7460, %v7456
  %v7521 = vpack.c.b16 %v7461, %v7457
  %v7522 = vpack.c.b16 %v7462, %v7458
  %v7523 = vpack.c.b16 %v7463, %v7459
  %v7524 = vpack.c.b16 %v7468, %v7464
  %v7525 = vpack.c.b16 %v7469, %v7465
  %v7526 = vpack.c.b16 %v7470, %v7466
  %v7527 = vpack.c.b16 %v7471, %v7467
  %v7528 = vpack.c.b16 %v7476, %v7472
  %v7529 = vpack.c.b16 %v7477, %v7473
  %v7530 = vpack.c.b16 %v7478, %v7474
  %v7531 = vpack.c.b16 %v7479, %v7475
  %v7532 = vpack.c.b16 %v7484, %v7480
  %v7533 = vpack.c.b16 %v7485, %v7481
  %v7534 = vpack.c.b16 %v7486, %v7482
  %v7535 = vpack.c.b16 %v7487, %v7483
  %v7536 = vpack.c.b16 %v7492, %v7488
  %v7537 = vpack.c.b16 %v7493, %v7489
  %v7538 = vpack.c.b16 %v7494, %v7490
  %v7539 = vpack.c.b16 %v7495, %v7491
  %v7540 = vpack.c.b16 %v7500, %v7496
  %v7541 = vpack.c.b16 %v7501, %v7497
  %v7542 = vpack.c.b16 %v7502, %v7498
  %v7543 = vpack.c.b16 %v7503, %v7499
  %v7544 = vpack.c.b16 %v7508, %v7504
  %v7545 = vpack.c.b16 %v7509, %v7505
  %v7546 = vpack.c.b16 %v7510, %v7506
  %v7547 = vpack.c.b16 %v7511, %v7507
  %v7548 = vpack.c.b16 %v7516, %v7512
  %v7549 = vpack.c.b16 %v7517, %v7513
  %v7550 = vpack.c.b16 %v7518, %v7514
  %v7551 = vpack.c.b16 %v7519, %v7515
  %7584 = vmatprep.subr.bf16.mxu0 %v7521
  %7585 = vmatpush1.bf16.msra.mxu0 %v7520
  %7586 = vmatprep.subr.bf16.mxu0 %v7525
  %7587 = vmatpush1.bf16.msra.mxu0 %v7524
  %7588 = vmatprep.subr.bf16.mxu0 %v7529
  %7589 = vmatpush1.bf16.msra.mxu0 %v7528
  %7590 = vmatprep.subr.bf16.mxu0 %v7533
  %7591 = vmatpush1.bf16.msra.mxu0 %v7532
  %7592 = vmatprep.subr.bf16.mxu0 %v7537
  %7593 = vmatpush1.bf16.msra.mxu0 %v7536
  %7594 = vmatprep.subr.bf16.mxu0 %v7541
  %7595 = vmatpush1.bf16.msra.mxu0 %v7540
  %7596 = vmatprep.subr.bf16.mxu0 %v7545
  %7597 = vmatpush1.bf16.msra.mxu0 %v7544
  %7598 = vmatprep.subr.bf16.mxu0 %v7549
  %7599 = vmatpush1.bf16.msra.mxu0 %v7548
  %7600 = vmatprep.subr.bf16.mxu0 0
  %7601 = vmatpush1.bf16.msra.mxu0 0
  %7602 = vmatprep.subr.bf16.mxu0 0
  %7603 = vmatpush1.bf16.msra.mxu0 0
  %7604 = vmatprep.subr.bf16.mxu0 0
  %7605 = vmatpush1.bf16.msra.mxu0 0
  %7606 = vmatprep.subr.bf16.mxu0 0
  %7607 = vmatpush1.bf16.msra.mxu0 0
  %7608 = vmatprep.subr.bf16.mxu0 0
  %7609 = vmatpush1.bf16.msra.mxu0 0
  %7610 = vmatprep.subr.bf16.mxu0 0
  %7611 = vmatpush1.bf16.msra.mxu0 0
  %7612 = vmatprep.subr.bf16.mxu0 0
  %7613 = vmatpush1.bf16.msra.mxu0 0
  %7614 = vmatprep.subr.bf16.mxu0 0
  %7615 = vmatpush1.bf16.msra.mxu0 0
  %7616 = vmatprep.mubr.bf16.mxu0 0
  %7617 = vmatmul.mubr.bf16.gmra.mrb[0].mxu0 %v7391
  %v7618 = vpop.f32.mrb[0].mxu0
  %v7619 = vadd.f32 0.0, %v7618
  %v7620 = vpop.f32.mrb[0].mxu0
  %v7621 = vadd.f32 0.0, %v7620
  %v7622 = vpop.f32.mrb[0].mxu0
  %v7623 = vpop.f32.mrb[0].mxu0
  %7624 = vdwg.mxu0
  %7625 = vmatprep.subr.bf16.mxu0 %v7523
  %7626 = vmatpush1.bf16.msra.mxu0 %v7522
  %7627 = vmatprep.subr.bf16.mxu0 %v7527
  %7628 = vmatpush1.bf16.msra.mxu0 %v7526
  %7629 = vmatprep.subr.bf16.mxu0 %v7531
  %7630 = vmatpush1.bf16.msra.mxu0 %v7530
  %7631 = vmatprep.subr.bf16.mxu0 %v7535
  %7632 = vmatpush1.bf16.msra.mxu0 %v7534
  %7633 = vmatprep.subr.bf16.mxu0 %v7539
  %7634 = vmatpush1.bf16.msra.mxu0 %v7538
  %7635 = vmatprep.subr.bf16.mxu0 %v7543
  %7636 = vmatpush1.bf16.msra.mxu0 %v7542
  %7637 = vmatprep.subr.bf16.mxu0 %v7547
  %7638 = vmatpush1.bf16.msra.mxu0 %v7546
  %7639 = vmatprep.subr.bf16.mxu0 %v7551
  %7640 = vmatpush1.bf16.msra.mxu0 %v7550
  %7641 = vmatprep.subr.bf16.mxu0 0
  %7642 = vmatpush1.bf16.msra.mxu0 0
  %7643 = vmatprep.subr.bf16.mxu0 0
  %7644 = vmatpush1.bf16.msra.mxu0 0
  %7645 = vmatprep.subr.bf16.mxu0 0
  %7646 = vmatpush1.bf16.msra.mxu0 0
  %7647 = vmatprep.subr.bf16.mxu0 0
  %7648 = vmatpush1.bf16.msra.mxu0 0
  %7649 = vmatprep.subr.bf16.mxu0 0
  %7650 = vmatpush1.bf16.msra.mxu0 0
  %7651 = vmatprep.subr.bf16.mxu0 0
  %7652 = vmatpush1.bf16.msra.mxu0 0
  %7653 = vmatprep.subr.bf16.mxu0 0
  %7654 = vmatpush1.bf16.msra.mxu0 0
  %7655 = vmatprep.subr.bf16.mxu0 0
  %7656 = vmatpush1.bf16.msra.mxu0 0
  %7657 = vmatprep.mubr.bf16.mxu0 0
  %7658 = vmatmul.mubr.bf16.gmra.mrb[0].mxu0 %v7391
  %v7659 = vpop.f32.mrb[0].mxu0
  %v7660 = vadd.f32 0.0, %v7659
  %v7661 = vpop.f32.mrb[0].mxu0
  %v7662 = vadd.f32 0.0, %v7661
  %v7663 = vpop.f32.mrb[0].mxu0
  %v7664 = vpop.f32.mrb[0].mxu0
  %7665 = vdwg.mxu0
  %v7666 = vld [vmem:[%s45] sm:$0x3]
  %7667 = vrot.lane.b32.xlu0 %v7619, 17
  %v7668 = vpop.permute.xlu0 %7667
  %7669 = vrot.lane.b32.xlu0 %v7621, 17
  %v7670 = vpop.permute.xlu0 %7669
  %7671 = vrot.lane.b32.xlu0 %v7660, 17
  %v7672 = vpop.permute.xlu0 %7671
  %7673 = vrot.lane.b32.xlu0 %v7662, 17
  %v7674 = vpop.permute.xlu0 %7673
  %v7675 = vsel %vm214, %v7672, %v7674
  %v7676 = vsel %vm214, %v7670, %v7672
  %v7677 = vsel %vm214, %v7668, %v7670
  %v7678 = vsel %vm214, %v7674, %v7668
  %v7679 = vmul.f32 %v7678, %v224
  %v7680 = vmul.f32 %v7677, %v228
  %v7681 = vmul.f32 %v7676, %v232
  %v7682 = vmul.f32 %v7675, %v236
  %v7683 = vpack.c.bf16 %v7679, %v7679
  %v7684 = vpack.c.bf16 %v7680, %v7680
  %v7685 = vpack.c.bf16 %v7681, %v7681
  %v7686 = vpack.c.bf16 %v7682, %v7682
  %s7687 = scalar_lea.vmem %s45, 2
  %v7688 = vld [vmem:[%s7687] sm:$0x3]
  %7689 = vrot.lane.b32.xlu0 %v7619, 16
  %v7690 = vpop.permute.xlu0 %7689
  %7691 = vrot.lane.b32.xlu0 %v7621, 16
  %v7692 = vpop.permute.xlu0 %7691
  %7693 = vrot.lane.b32.xlu0 %v7660, 16
  %v7694 = vpop.permute.xlu0 %7693
  %7695 = vrot.lane.b32.xlu0 %v7662, 16
  %v7696 = vpop.permute.xlu0 %7695
  %v7697 = vsel %vm259, %v7694, %v7696
  %v7698 = vsel %vm259, %v7692, %v7694
  %v7699 = vsel %vm259, %v7690, %v7692
  %v7700 = vsel %vm259, %v7696, %v7690
  %v7701 = vmul.f32 %v7700, %v270
  %v7702 = vmul.f32 %v7699, %v274
  %v7703 = vmul.f32 %v7698, %v278
  %v7704 = vmul.f32 %v7697, %v282
  %v7705 = vpack.c.bf16 %v7701, %v7701
  %v7706 = vpack.c.bf16 %v7702, %v7702
  %v7707 = vpack.c.bf16 %v7703, %v7703
  %v7708 = vpack.c.bf16 %v7704, %v7704
  %v7710 = vsel %vm1877, %v7688, 0
  %v7713 = vsel %vm1881, %v7705, 0
  %v7716 = vsel %vm1881, %v7706, 0
  %v7719 = vsel %vm1881, %v7707, 0
  %v7722 = vsel %vm1881, %v7708, 0
  %7724 = vmatprep.subr.bf16.mxu0 %v7716
  %7725 = vmatpush1.bf16.msra.mxu0 %v7713
  %7726 = vmatprep.subr.bf16.mxu0 0
  %7727 = vmatpush1.bf16.msra.mxu0 0
  %7728 = vmatprep.subr.bf16.mxu0 0
  %7729 = vmatpush1.bf16.msra.mxu0 0
  %7730 = vmatprep.subr.bf16.mxu0 0
  %7731 = vmatpush1.bf16.msra.mxu0 0
  %7732 = vmatprep.subr.bf16.mxu0 0
  %7733 = vmatpush1.bf16.msra.mxu0 0
  %7734 = vmatprep.subr.bf16.mxu0 0
  %7735 = vmatpush1.bf16.msra.mxu0 0
  %7736 = vmatprep.subr.bf16.mxu0 0
  %7737 = vmatpush1.bf16.msra.mxu0 0
  %7738 = vmatprep.subr.bf16.mxu0 0
  %7739 = vmatpush1.bf16.msra.mxu0 0
  %7740 = vmatprep.subr.bf16.mxu0 0
  %7741 = vmatpush1.bf16.msra.mxu0 0
  %7742 = vmatprep.subr.bf16.mxu0 0
  %7743 = vmatpush1.bf16.msra.mxu0 0
  %7744 = vmatprep.subr.bf16.mxu0 0
  %7745 = vmatpush1.bf16.msra.mxu0 0
  %7746 = vmatprep.subr.bf16.mxu0 0
  %7747 = vmatpush1.bf16.msra.mxu0 0
  %7748 = vmatprep.subr.bf16.mxu0 0
  %7749 = vmatpush1.bf16.msra.mxu0 0
  %7750 = vmatprep.subr.bf16.mxu0 0
  %7751 = vmatpush1.bf16.msra.mxu0 0
  %7752 = vmatprep.subr.bf16.mxu0 0
  %7753 = vmatpush1.bf16.msra.mxu0 0
  %7754 = vmatprep.subr.bf16.mxu0 0
  %7755 = vmatpush1.bf16.msra.mxu0 0
  %7756 = vmatprep.mubr.bf16.mxu0 0
  %7757 = vmatmul.mubr.bf16.gmra.mrb[0].mxu0 %v7710
  %v7758 = vpop.f32.mrb[0].mxu0
  %v7759 = vadd.f32 0.0, %v7758
  %v7760 = vpop.f32.mrb[0].mxu0
  %v7761 = vadd.f32 0.0, %v7760
  %v7762 = vpop.f32.mrb[0].mxu0
  %v7763 = vpop.f32.mrb[0].mxu0
  %7764 = vdwg.mxu0
  %7765 = vmatprep.subr.bf16.mxu0 %v7722
  %7766 = vmatpush1.bf16.msra.mxu0 %v7719
  %7767 = vmatprep.subr.bf16.mxu0 0
  %7768 = vmatpush1.bf16.msra.mxu0 0
  %7769 = vmatprep.subr.bf16.mxu0 0
  %7770 = vmatpush1.bf16.msra.mxu0 0
  %7771 = vmatprep.subr.bf16.mxu0 0
  %7772 = vmatpush1.bf16.msra.mxu0 0
  %7773 = vmatprep.subr.bf16.mxu0 0
  %7774 = vmatpush1.bf16.msra.mxu0 0
  %7775 = vmatprep.subr.bf16.mxu0 0
  %7776 = vmatpush1.bf16.msra.mxu0 0
  %7777 = vmatprep.subr.bf16.mxu0 0
  %7778 = vmatpush1.bf16.msra.mxu0 0
  %7779 = vmatprep.subr.bf16.mxu0 0
  %7780 = vmatpush1.bf16.msra.mxu0 0
  %7781 = vmatprep.subr.bf16.mxu0 0
  %7782 = vmatpush1.bf16.msra.mxu0 0
  %7783 = vmatprep.subr.bf16.mxu0 0
  %7784 = vmatpush1.bf16.msra.mxu0 0
  %7785 = vmatprep.subr.bf16.mxu0 0
  %7786 = vmatpush1.bf16.msra.mxu0 0
  %7787 = vmatprep.subr.bf16.mxu0 0
  %7788 = vmatpush1.bf16.msra.mxu0 0
  %7789 = vmatprep.subr.bf16.mxu0 0
  %7790 = vmatpush1.bf16.msra.mxu0 0
  %7791 = vmatprep.subr.bf16.mxu0 0
  %7792 = vmatpush1.bf16.msra.mxu0 0
  %7793 = vmatprep.subr.bf16.mxu0 0
  %7794 = vmatpush1.bf16.msra.mxu0 0
  %7795 = vmatprep.subr.bf16.mxu0 0
  %7796 = vmatpush1.bf16.msra.mxu0 0
  %7797 = vmatprep.mubr.bf16.mxu0 0
  %7798 = vmatmul.mubr.bf16.gmra.mrb[0].mxu0 %v7710
  %v7799 = vpop.f32.mrb[0].mxu0
  %v7800 = vadd.f32 0.0, %v7799
  %v7801 = vpop.f32.mrb[0].mxu0
  %v7802 = vadd.f32 0.0, %v7801
  %v7803 = vpop.f32.mrb[0].mxu0
  %v7804 = vpop.f32.mrb[0].mxu0
  %7805 = vdwg.mxu0
  %v7807 = vsel %vm1877, %v7666, 0
  %v7810 = vsel %vm1881, %v7683, 0
  %v7813 = vsel %vm1881, %v7684, 0
  %v7816 = vsel %vm1881, %v7685, 0
  %v7819 = vsel %vm1881, %v7686, 0
  %7821 = vmatprep.subr.bf16.mxu0 %v7813
  %7822 = vmatpush1.bf16.msra.mxu0 %v7810
  %7823 = vmatprep.subr.bf16.mxu0 0
  %7824 = vmatpush1.bf16.msra.mxu0 0
  %7825 = vmatprep.subr.bf16.mxu0 0
  %7826 = vmatpush1.bf16.msra.mxu0 0
  %7827 = vmatprep.subr.bf16.mxu0 0
  %7828 = vmatpush1.bf16.msra.mxu0 0
  %7829 = vmatprep.subr.bf16.mxu0 0
  %7830 = vmatpush1.bf16.msra.mxu0 0
  %7831 = vmatprep.subr.bf16.mxu0 0
  %7832 = vmatpush1.bf16.msra.mxu0 0
  %7833 = vmatprep.subr.bf16.mxu0 0
  %7834 = vmatpush1.bf16.msra.mxu0 0
  %7835 = vmatprep.subr.bf16.mxu0 0
  %7836 = vmatpush1.bf16.msra.mxu0 0
  %7837 = vmatprep.subr.bf16.mxu0 0
  %7838 = vmatpush1.bf16.msra.mxu0 0
  %7839 = vmatprep.subr.bf16.mxu0 0
  %7840 = vmatpush1.bf16.msra.mxu0 0
  %7841 = vmatprep.subr.bf16.mxu0 0
  %7842 = vmatpush1.bf16.msra.mxu0 0
  %7843 = vmatprep.subr.bf16.mxu0 0
  %7844 = vmatpush1.bf16.msra.mxu0 0
  %7845 = vmatprep.subr.bf16.mxu0 0
  %7846 = vmatpush1.bf16.msra.mxu0 0
  %7847 = vmatprep.subr.bf16.mxu0 0
  %7848 = vmatpush1.bf16.msra.mxu0 0
  %7849 = vmatprep.subr.bf16.mxu0 0
  %7850 = vmatpush1.bf16.msra.mxu0 0
  %7851 = vmatprep.subr.bf16.mxu0 0
  %7852 = vmatpush1.bf16.msra.mxu0 0
  %7853 = vmatprep.mubr.bf16.mxu0 0
  %7854 = vmatmul.mubr.bf16.gmra.mrb[0].mxu0 %v7807
  %v7855 = vpop.f32.mrb[0].mxu0
  %v7856 = vadd.f32 %v7759, %v7855
  %v7857 = vpop.f32.mrb[0].mxu0
  %v7858 = vadd.f32 %v7761, %v7857
  %v7859 = vpop.f32.mrb[0].mxu0
  %v7860 = vpop.f32.mrb[0].mxu0
  %7861 = vdwg.mxu0
  %7862 = vmatprep.subr.bf16.mxu0 %v7819
  %7863 = vmatpush1.bf16.msra.mxu0 %v7816
  %7864 = vmatprep.subr.bf16.mxu0 0
  %7865 = vmatpush1.bf16.msra.mxu0 0
  %7866 = vmatprep.subr.bf16.mxu0 0
  %7867 = vmatpush1.bf16.msra.mxu0 0
  %7868 = vmatprep.subr.bf16.mxu0 0
  %7869 = vmatpush1.bf16.msra.mxu0 0
  %7870 = vmatprep.subr.bf16.mxu0 0
  %7871 = vmatpush1.bf16.msra.mxu0 0
  %7872 = vmatprep.subr.bf16.mxu0 0
  %7873 = vmatpush1.bf16.msra.mxu0 0
  %7874 = vmatprep.subr.bf16.mxu0 0
  %7875 = vmatpush1.bf16.msra.mxu0 0
  %7876 = vmatprep.subr.bf16.mxu0 0
  %7877 = vmatpush1.bf16.msra.mxu0 0
  %7878 = vmatprep.subr.bf16.mxu0 0
  %7879 = vmatpush1.bf16.msra.mxu0 0
  %7880 = vmatprep.subr.bf16.mxu0 0
  %7881 = vmatpush1.bf16.msra.mxu0 0
  %7882 = vmatprep.subr.bf16.mxu0 0
  %7883 = vmatpush1.bf16.msra.mxu0 0
  %7884 = vmatprep.subr.bf16.mxu0 0
  %7885 = vmatpush1.bf16.msra.mxu0 0
  %7886 = vmatprep.subr.bf16.mxu0 0
  %7887 = vmatpush1.bf16.msra.mxu0 0
  %7888 = vmatprep.subr.bf16.mxu0 0
  %7889 = vmatpush1.bf16.msra.mxu0 0
  %7890 = vmatprep.subr.bf16.mxu0 0
  %7891 = vmatpush1.bf16.msra.mxu0 0
  %7892 = vmatprep.subr.bf16.mxu0 0
  %7893 = vmatpush1.bf16.msra.mxu0 0
  %7894 = vmatprep.mubr.bf16.mxu0 0
  %7895 = vmatmul.mubr.bf16.gmra.mrb[0].mxu0 %v7807
  %v7896 = vpop.f32.mrb[0].mxu0
  %v7897 = vadd.f32 %v7800, %v7896
  %v7898 = vpop.f32.mrb[0].mxu0
  %v7899 = vadd.f32 %v7802, %v7898
  %v7900 = vpop.f32.mrb[0].mxu0
  %v7901 = vpop.f32.mrb[0].mxu0
  %7902 = vdwg.mxu0
  %s7903 = scalar_lea.vmem %s45, 4
  %v7904 = vld [vmem:[%s7903] sm:$0x3]
  %7905 = vrot.lane.b32.xlu0 %v7619, 15
  %v7906 = vpop.permute.xlu0 %7905
  %7907 = vrot.lane.b32.xlu0 %v7621, 15
  %v7908 = vpop.permute.xlu0 %7907
  %7909 = vrot.lane.b32.xlu0 %v7660, 15
  %v7910 = vpop.permute.xlu0 %7909
  %7911 = vrot.lane.b32.xlu0 %v7662, 15
  %v7912 = vpop.permute.xlu0 %7911
  %v7913 = vsel %vm504, %v7910, %v7912
  %v7914 = vsel %vm504, %v7908, %v7910
  %v7915 = vsel %vm504, %v7906, %v7908
  %v7916 = vsel %vm504, %v7912, %v7906
  %v7917 = vmul.f32 %v7916, %v515
  %v7918 = vmul.f32 %v7915, %v519
  %v7919 = vmul.f32 %v7914, %v523
  %v7920 = vmul.f32 %v7913, %v527
  %v7921 = vpack.c.bf16 %v7917, %v7917
  %v7922 = vpack.c.bf16 %v7918, %v7918
  %v7923 = vpack.c.bf16 %v7919, %v7919
  %v7924 = vpack.c.bf16 %v7920, %v7920
  %v7926 = vsel %vm1877, %v7904, 0
  %v7929 = vsel %vm1881, %v7921, 0
  %v7932 = vsel %vm1881, %v7922, 0
  %v7935 = vsel %vm1881, %v7923, 0
  %v7938 = vsel %vm1881, %v7924, 0
  %7940 = vmatprep.subr.bf16.mxu0 %v7932
  %7941 = vmatpush1.bf16.msra.mxu0 %v7929
  %7942 = vmatprep.subr.bf16.mxu0 0
  %7943 = vmatpush1.bf16.msra.mxu0 0
  %7944 = vmatprep.subr.bf16.mxu0 0
  %7945 = vmatpush1.bf16.msra.mxu0 0
  %7946 = vmatprep.subr.bf16.mxu0 0
  %7947 = vmatpush1.bf16.msra.mxu0 0
  %7948 = vmatprep.subr.bf16.mxu0 0
  %7949 = vmatpush1.bf16.msra.mxu0 0
  %7950 = vmatprep.subr.bf16.mxu0 0
  %7951 = vmatpush1.bf16.msra.mxu0 0
  %7952 = vmatprep.subr.bf16.mxu0 0
  %7953 = vmatpush1.bf16.msra.mxu0 0
  %7954 = vmatprep.subr.bf16.mxu0 0
  %7955 = vmatpush1.bf16.msra.mxu0 0
  %7956 = vmatprep.subr.bf16.mxu0 0
  %7957 = vmatpush1.bf16.msra.mxu0 0
  %7958 = vmatprep.subr.bf16.mxu0 0
  %7959 = vmatpush1.bf16.msra.mxu0 0
  %7960 = vmatprep.subr.bf16.mxu0 0
  %7961 = vmatpush1.bf16.msra.mxu0 0
  %7962 = vmatprep.subr.bf16.mxu0 0
  %7963 = vmatpush1.bf16.msra.mxu0 0
  %7964 = vmatprep.subr.bf16.mxu0 0
  %7965 = vmatpush1.bf16.msra.mxu0 0
  %7966 = vmatprep.subr.bf16.mxu0 0
  %7967 = vmatpush1.bf16.msra.mxu0 0
  %7968 = vmatprep.subr.bf16.mxu0 0
  %7969 = vmatpush1.bf16.msra.mxu0 0
  %7970 = vmatprep.subr.bf16.mxu0 0
  %7971 = vmatpush1.bf16.msra.mxu0 0
  %7972 = vmatprep.mubr.bf16.mxu0 0
  %7973 = vmatmul.mubr.bf16.gmra.mrb[0].mxu0 %v7926
  %v7974 = vpop.f32.mrb[0].mxu0
  %v7975 = vadd.f32 0.0, %v7974
  %v7976 = vpop.f32.mrb[0].mxu0
  %v7977 = vadd.f32 0.0, %v7976
  %v7978 = vpop.f32.mrb[0].mxu0
  %v7979 = vpop.f32.mrb[0].mxu0
  %7980 = vdwg.mxu0
  %7981 = vmatprep.subr.bf16.mxu0 %v7938
  %7982 = vmatpush1.bf16.msra.mxu0 %v7935
  %7983 = vmatprep.subr.bf16.mxu0 0
  %7984 = vmatpush1.bf16.msra.mxu0 0
  %7985 = vmatprep.subr.bf16.mxu0 0
  %7986 = vmatpush1.bf16.msra.mxu0 0
  %7987 = vmatprep.subr.bf16.mxu0 0
  %7988 = vmatpush1.bf16.msra.mxu0 0
  %7989 = vmatprep.subr.bf16.mxu0 0
  %7990 = vmatpush1.bf16.msra.mxu0 0
  %7991 = vmatprep.subr.bf16.mxu0 0
  %7992 = vmatpush1.bf16.msra.mxu0 0
  %7993 = vmatprep.subr.bf16.mxu0 0
  %7994 = vmatpush1.bf16.msra.mxu0 0
  %7995 = vmatprep.subr.bf16.mxu0 0
  %7996 = vmatpush1.bf16.msra.mxu0 0
  %7997 = vmatprep.subr.bf16.mxu0 0
  %7998 = vmatpush1.bf16.msra.mxu0 0
  %7999 = vmatprep.subr.bf16.mxu0 0
  %8000 = vmatpush1.bf16.msra.mxu0 0
  %8001 = vmatprep.subr.bf16.mxu0 0
  %8002 = vmatpush1.bf16.msra.mxu0 0
  %8003 = vmatprep.subr.bf16.mxu0 0
  %8004 = vmatpush1.bf16.msra.mxu0 0
  %8005 = vmatprep.subr.bf16.mxu0 0
  %8006 = vmatpush1.bf16.msra.mxu0 0
  %8007 = vmatprep.subr.bf16.mxu0 0
  %8008 = vmatpush1.bf16.msra.mxu0 0
  %8009 = vmatprep.subr.bf16.mxu0 0
  %8010 = vmatpush1.bf16.msra.mxu0 0
  %8011 = vmatprep.subr.bf16.mxu0 0
  %8012 = vmatpush1.bf16.msra.mxu0 0
  %8013 = vmatprep.mubr.bf16.mxu0 0
  %8014 = vmatmul.mubr.bf16.gmra.mrb[0].mxu0 %v7926
  %v8015 = vpop.f32.mrb[0].mxu0
  %v8016 = vadd.f32 0.0, %v8015
  %v8017 = vpop.f32.mrb[0].mxu0
  %v8018 = vadd.f32 0.0, %v8017
  %v8019 = vpop.f32.mrb[0].mxu0
  %v8020 = vpop.f32.mrb[0].mxu0
  %8021 = vdwg.mxu0
  %v8022 = vadd.f32 %v7856, %v7975
  %v8023 = vadd.f32 %v7858, %v7977
  %v8024 = vadd.f32 %v7897, %v8016
  %v8025 = vadd.f32 %v7899, %v8018
  %s8026 = scalar_lea.vmem %s45, 6
  %v8027 = vld [vmem:[%s8026] sm:$0x3]
  %8028 = vrot.lane.b32.xlu0 %v7619, 1
  %v8029 = vpop.permute.xlu0 %8028
  %8030 = vrot.lane.b32.xlu0 %v7621, 1
  %v8031 = vpop.permute.xlu0 %8030
  %8032 = vrot.lane.b32.xlu0 %v7660, 1
  %v8033 = vpop.permute.xlu0 %8032
  %8034 = vrot.lane.b32.xlu0 %v7662, 1
  %v8035 = vpop.permute.xlu0 %8034
  %v8036 = vsel %vm651, %v8033, %v8035
  %v8037 = vsel %vm651, %v8031, %v8033
  %v8038 = vsel %vm651, %v8029, %v8031
  %v8039 = vsel %vm651, %v8035, %v8029
  %v8040 = vmul.f32 %v8039, %v662
  %v8041 = vmul.f32 %v8038, %v666
  %v8042 = vmul.f32 %v8037, %v670
  %v8043 = vmul.f32 %v8036, %v674
  %v8044 = vpack.c.bf16 %v8040, %v8040
  %v8045 = vpack.c.bf16 %v8041, %v8041
  %v8046 = vpack.c.bf16 %v8042, %v8042
  %v8047 = vpack.c.bf16 %v8043, %v8043
  %v8049 = vsel %vm1877, %v8027, 0
  %v8052 = vsel %vm1881, %v8044, 0
  %v8055 = vsel %vm1881, %v8045, 0
  %v8058 = vsel %vm1881, %v8046, 0
  %v8061 = vsel %vm1881, %v8047, 0
  %8063 = vmatprep.subr.bf16.mxu0 %v8055
  %8064 = vmatpush1.bf16.msra.mxu0 %v8052
  %8065 = vmatprep.subr.bf16.mxu0 0
  %8066 = vmatpush1.bf16.msra.mxu0 0
  %8067 = vmatprep.subr.bf16.mxu0 0
  %8068 = vmatpush1.bf16.msra.mxu0 0
  %8069 = vmatprep.subr.bf16.mxu0 0
  %8070 = vmatpush1.bf16.msra.mxu0 0
  %8071 = vmatprep.subr.bf16.mxu0 0
  %8072 = vmatpush1.bf16.msra.mxu0 0
  %8073 = vmatprep.subr.bf16.mxu0 0
  %8074 = vmatpush1.bf16.msra.mxu0 0
  %8075 = vmatprep.subr.bf16.mxu0 0
  %8076 = vmatpush1.bf16.msra.mxu0 0
  %8077 = vmatprep.subr.bf16.mxu0 0
  %8078 = vmatpush1.bf16.msra.mxu0 0
  %8079 = vmatprep.subr.bf16.mxu0 0
  %8080 = vmatpush1.bf16.msra.mxu0 0
  %8081 = vmatprep.subr.bf16.mxu0 0
  %8082 = vmatpush1.bf16.msra.mxu0 0
  %8083 = vmatprep.subr.bf16.mxu0 0
  %8084 = vmatpush1.bf16.msra.mxu0 0
  %8085 = vmatprep.subr.bf16.mxu0 0
  %8086 = vmatpush1.bf16.msra.mxu0 0
  %8087 = vmatprep.subr.bf16.mxu0 0
  %8088 = vmatpush1.bf16.msra.mxu0 0
  %8089 = vmatprep.subr.bf16.mxu0 0
  %8090 = vmatpush1.bf16.msra.mxu0 0
  %8091 = vmatprep.subr.bf16.mxu0 0
  %8092 = vmatpush1.bf16.msra.mxu0 0
  %8093 = vmatprep.subr.bf16.mxu0 0
  %8094 = vmatpush1.bf16.msra.mxu0 0
  %8095 = vmatprep.mubr.bf16.mxu0 0
  %8096 = vmatmul.mubr.bf16.gmra.mrb[0].mxu0 %v8049
  %v8097 = vpop.f32.mrb[0].mxu0
  %v8098 = vadd.f32 0.0, %v8097
  %v8099 = vpop.f32.mrb[0].mxu0
  %v8100 = vadd.f32 0.0, %v8099
  %v8101 = vpop.f32.mrb[0].mxu0
  %v8102 = vpop.f32.mrb[0].mxu0
  %8103 = vdwg.mxu0
  %8104 = vmatprep.subr.bf16.mxu0 %v8061
  %8105 = vmatpush1.bf16.msra.mxu0 %v8058
  %8106 = vmatprep.subr.bf16.mxu0 0
  %8107 = vmatpush1.bf16.msra.mxu0 0
  %8108 = vmatprep.subr.bf16.mxu0 0
  %8109 = vmatpush1.bf16.msra.mxu0 0
  %8110 = vmatprep.subr.bf16.mxu0 0
  %8111 = vmatpush1.bf16.msra.mxu0 0
  %8112 = vmatprep.subr.bf16.mxu0 0
  %8113 = vmatpush1.bf16.msra.mxu0 0
  %8114 = vmatprep.subr.bf16.mxu0 0
  %8115 = vmatpush1.bf16.msra.mxu0 0
  %8116 = vmatprep.subr.bf16.mxu0 0
  %8117 = vmatpush1.bf16.msra.mxu0 0
  %8118 = vmatprep.subr.bf16.mxu0 0
  %8119 = vmatpush1.bf16.msra.mxu0 0
  %8120 = vmatprep.subr.bf16.mxu0 0
  %8121 = vmatpush1.bf16.msra.mxu0 0
  %8122 = vmatprep.subr.bf16.mxu0 0
  %8123 = vmatpush1.bf16.msra.mxu0 0
  %8124 = vmatprep.subr.bf16.mxu0 0
  %8125 = vmatpush1.bf16.msra.mxu0 0
  %8126 = vmatprep.subr.bf16.mxu0 0
  %8127 = vmatpush1.bf16.msra.mxu0 0
  %8128 = vmatprep.subr.bf16.mxu0 0
  %8129 = vmatpush1.bf16.msra.mxu0 0
  %8130 = vmatprep.subr.bf16.mxu0 0
  %8131 = vmatpush1.bf16.msra.mxu0 0
  %8132 = vmatprep.subr.bf16.mxu0 0
  %8133 = vmatpush1.bf16.msra.mxu0 0
  %8134 = vmatprep.subr.bf16.mxu0 0
  %8135 = vmatpush1.bf16.msra.mxu0 0
  %8136 = vmatprep.mubr.bf16.mxu0 0
  %8137 = vmatmul.mubr.bf16.gmra.mrb[0].mxu0 %v8049
  %v8138 = vpop.f32.mrb[0].mxu0
  %v8139 = vadd.f32 0.0, %v8138
  %v8140 = vpop.f32.mrb[0].mxu0
  %v8141 = vadd.f32 0.0, %v8140
  %v8142 = vpop.f32.mrb[0].mxu0
  %v8143 = vpop.f32.mrb[0].mxu0
  %8144 = vdwg.mxu0
  %v8145 = vadd.f32 %v8022, %v8098
  %v8146 = vadd.f32 %v8023, %v8100
  %v8147 = vadd.f32 %v8024, %v8139
  %v8148 = vadd.f32 %v8025, %v8141
  %s8149 = scalar_lea.vmem %s45, 8
  %v8150 = vld [vmem:[%s8149] sm:$0x3]
  %v8151 = vpack.c.bf16 %v7619, %v7619
  %v8152 = vpack.c.bf16 %v7621, %v7621
  %v8153 = vpack.c.bf16 %v7660, %v7660
  %v8154 = vpack.c.bf16 %v7662, %v7662
  %v8156 = vsel %vm1877, %v8150, 0
  %v8159 = vsel %vm1881, %v8151, 0
  %v8162 = vsel %vm1881, %v8152, 0
  %v8165 = vsel %vm1881, %v8153, 0
  %v8168 = vsel %vm1881, %v8154, 0
  %8170 = vmatprep.subr.bf16.mxu0 %v8162
  %8171 = vmatpush1.bf16.msra.mxu0 %v8159
  %8172 = vmatprep.subr.bf16.mxu0 0
  %8173 = vmatpush1.bf16.msra.mxu0 0
  %8174 = vmatprep.subr.bf16.mxu0 0
  %8175 = vmatpush1.bf16.msra.mxu0 0
  %8176 = vmatprep.subr.bf16.mxu0 0
  %8177 = vmatpush1.bf16.msra.mxu0 0
  %8178 = vmatprep.subr.bf16.mxu0 0
  %8179 = vmatpush1.bf16.msra.mxu0 0
  %8180 = vmatprep.subr.bf16.mxu0 0
  %8181 = vmatpush1.bf16.msra.mxu0 0
  %8182 = vmatprep.subr.bf16.mxu0 0
  %8183 = vmatpush1.bf16.msra.mxu0 0
  %8184 = vmatprep.subr.bf16.mxu0 0
  %8185 = vmatpush1.bf16.msra.mxu0 0
  %8186 = vmatprep.subr.bf16.mxu0 0
  %8187 = vmatpush1.bf16.msra.mxu0 0
  %8188 = vmatprep.subr.bf16.mxu0 0
  %8189 = vmatpush1.bf16.msra.mxu0 0
  %8190 = vmatprep.subr.bf16.mxu0 0
  %8191 = vmatpush1.bf16.msra.mxu0 0
  %8192 = vmatprep.subr.bf16.mxu0 0
  %8193 = vmatpush1.bf16.msra.mxu0 0
  %8194 = vmatprep.subr.bf16.mxu0 0
  %8195 = vmatpush1.bf16.msra.mxu0 0
  %8196 = vmatprep.subr.bf16.mxu0 0
  %8197 = vmatpush1.bf16.msra.mxu0 0
  %8198 = vmatprep.subr.bf16.mxu0 0
  %8199 = vmatpush1.bf16.msra.mxu0 0
  %8200 = vmatprep.subr.bf16.mxu0 0
  %8201 = vmatpush1.bf16.msra.mxu0 0
  %8202 = vmatprep.mubr.bf16.mxu0 0
  %8203 = vmatmul.mubr.bf16.gmra.mrb[0].mxu0 %v8156
  %v8204 = vpop.f32.mrb[0].mxu0
  %v8205 = vadd.f32 0.0, %v8204
  %v8206 = vpop.f32.mrb[0].mxu0
  %v8207 = vadd.f32 0.0, %v8206
  %v8208 = vpop.f32.mrb[0].mxu0
  %v8209 = vpop.f32.mrb[0].mxu0
  %8210 = vdwg.mxu0
  %8211 = vmatprep.subr.bf16.mxu0 %v8168
  %8212 = vmatpush1.bf16.msra.mxu0 %v8165
  %8213 = vmatprep.subr.bf16.mxu0 0
  %8214 = vmatpush1.bf16.msra.mxu0 0
  %8215 = vmatprep.subr.bf16.mxu0 0
  %8216 = vmatpush1.bf16.msra.mxu0 0
  %8217 = vmatprep.subr.bf16.mxu0 0
  %8218 = vmatpush1.bf16.msra.mxu0 0
  %8219 = vmatprep.subr.bf16.mxu0 0
  %8220 = vmatpush1.bf16.msra.mxu0 0
  %8221 = vmatprep.subr.bf16.mxu0 0
  %8222 = vmatpush1.bf16.msra.mxu0 0
  %8223 = vmatprep.subr.bf16.mxu0 0
  %8224 = vmatpush1.bf16.msra.mxu0 0
  %8225 = vmatprep.subr.bf16.mxu0 0
  %8226 = vmatpush1.bf16.msra.mxu0 0
  %8227 = vmatprep.subr.bf16.mxu0 0
  %8228 = vmatpush1.bf16.msra.mxu0 0
  %8229 = vmatprep.subr.bf16.mxu0 0
  %8230 = vmatpush1.bf16.msra.mxu0 0
  %8231 = vmatprep.subr.bf16.mxu0 0
  %8232 = vmatpush1.bf16.msra.mxu0 0
  %8233 = vmatprep.subr.bf16.mxu0 0
  %8234 = vmatpush1.bf16.msra.mxu0 0
  %8235 = vmatprep.subr.bf16.mxu0 0
  %8236 = vmatpush1.bf16.msra.mxu0 0
  %8237 = vmatprep.subr.bf16.mxu0 0
  %8238 = vmatpush1.bf16.msra.mxu0 0
  %8239 = vmatprep.subr.bf16.mxu0 0
  %8240 = vmatpush1.bf16.msra.mxu0 0
  %8241 = vmatprep.subr.bf16.mxu0 0
  %8242 = vmatpush1.bf16.msra.mxu0 0
  %8243 = vmatprep.mubr.bf16.mxu0 0
  %8244 = vmatmul.mubr.bf16.gmra.mrb[0].mxu0 %v8156
  %v8245 = vpop.f32.mrb[0].mxu0
  %v8246 = vadd.f32 0.0, %v8245
  %v8247 = vpop.f32.mrb[0].mxu0
  %v8248 = vadd.f32 0.0, %v8247
  %v8249 = vpop.f32.mrb[0].mxu0
  %v8250 = vpop.f32.mrb[0].mxu0
  %8251 = vdwg.mxu0
  %v8252 = vadd.f32 %v8145, %v8205
  %v8253 = vadd.f32 %v8146, %v8207
  %v8254 = vadd.f32 %v8147, %v8246
  %v8255 = vadd.f32 %v8148, %v8248
  %s8256 = scalar_lea.vmem %s45, 10
  %v8257 = vld [vmem:[%s8256] sm:$0x3]
  %8258 = vrot.lane.b32.xlu0 %v7619, 127
  %v8259 = vpop.permute.xlu0 %8258
  %8260 = vrot.lane.b32.xlu0 %v7621, 127
  %v8261 = vpop.permute.xlu0 %8260
  %8262 = vrot.lane.b32.xlu0 %v7660, 127
  %v8263 = vpop.permute.xlu0 %8262
  %8264 = vrot.lane.b32.xlu0 %v7662, 127
  %v8265 = vpop.permute.xlu0 %8264
  %v8266 = vsel %vm905, %v8263, %v8265
  %v8267 = vsel %vm905, %v8261, %v8263
  %v8268 = vsel %vm905, %v8259, %v8261
  %v8269 = vsel %vm905, %v8265, %v8259
  %v8270 = vmul.f32 %v8268, %v916
  %v8271 = vmul.f32 %v8267, %v920
  %v8272 = vmul.f32 %v8266, %v924
  %v8273 = vmul.f32 %v8269, %v928
  %v8274 = vpack.c.bf16 %v8270, %v8270
  %v8275 = vpack.c.bf16 %v8271, %v8271
  %v8276 = vpack.c.bf16 %v8272, %v8272
  %v8277 = vpack.c.bf16 %v8273, %v8273
  %v8279 = vsel %vm1877, %v8257, 0
  %v8282 = vsel %vm1881, %v8274, 0
  %v8285 = vsel %vm1881, %v8275, 0
  %v8288 = vsel %vm1881, %v8276, 0
  %v8291 = vsel %vm1881, %v8277, 0
  %8293 = vmatprep.subr.bf16.mxu0 %v8285
  %8294 = vmatpush1.bf16.msra.mxu0 %v8282
  %8295 = vmatprep.subr.bf16.mxu0 0
  %8296 = vmatpush1.bf16.msra.mxu0 0
  %8297 = vmatprep.subr.bf16.mxu0 0
  %8298 = vmatpush1.bf16.msra.mxu0 0
  %8299 = vmatprep.subr.bf16.mxu0 0
  %8300 = vmatpush1.bf16.msra.mxu0 0
  %8301 = vmatprep.subr.bf16.mxu0 0
  %8302 = vmatpush1.bf16.msra.mxu0 0
  %8303 = vmatprep.subr.bf16.mxu0 0
  %8304 = vmatpush1.bf16.msra.mxu0 0
  %8305 = vmatprep.subr.bf16.mxu0 0
  %8306 = vmatpush1.bf16.msra.mxu0 0
  %8307 = vmatprep.subr.bf16.mxu0 0
  %8308 = vmatpush1.bf16.msra.mxu0 0
  %8309 = vmatprep.subr.bf16.mxu0 0
  %8310 = vmatpush1.bf16.msra.mxu0 0
  %8311 = vmatprep.subr.bf16.mxu0 0
  %8312 = vmatpush1.bf16.msra.mxu0 0
  %8313 = vmatprep.subr.bf16.mxu0 0
  %8314 = vmatpush1.bf16.msra.mxu0 0
  %8315 = vmatprep.subr.bf16.mxu0 0
  %8316 = vmatpush1.bf16.msra.mxu0 0
  %8317 = vmatprep.subr.bf16.mxu0 0
  %8318 = vmatpush1.bf16.msra.mxu0 0
  %8319 = vmatprep.subr.bf16.mxu0 0
  %8320 = vmatpush1.bf16.msra.mxu0 0
  %8321 = vmatprep.subr.bf16.mxu0 0
  %8322 = vmatpush1.bf16.msra.mxu0 0
  %8323 = vmatprep.subr.bf16.mxu0 0
  %8324 = vmatpush1.bf16.msra.mxu0 0
  %8325 = vmatprep.mubr.bf16.mxu0 0
  %8326 = vmatmul.mubr.bf16.gmra.mrb[0].mxu0 %v8279
  %v8327 = vpop.f32.mrb[0].mxu0
  %v8328 = vadd.f32 0.0, %v8327
  %v8329 = vpop.f32.mrb[0].mxu0
  %v8330 = vadd.f32 0.0, %v8329
  %v8331 = vpop.f32.mrb[0].mxu0
  %v8332 = vpop.f32.mrb[0].mxu0
  %8333 = vdwg.mxu0
  %8334 = vmatprep.subr.bf16.mxu0 %v8291
  %8335 = vmatpush1.bf16.msra.mxu0 %v8288
  %8336 = vmatprep.subr.bf16.mxu0 0
  %8337 = vmatpush1.bf16.msra.mxu0 0
  %8338 = vmatprep.subr.bf16.mxu0 0
  %8339 = vmatpush1.bf16.msra.mxu0 0
  %8340 = vmatprep.subr.bf16.mxu0 0
  %8341 = vmatpush1.bf16.msra.mxu0 0
  %8342 = vmatprep.subr.bf16.mxu0 0
  %8343 = vmatpush1.bf16.msra.mxu0 0
  %8344 = vmatprep.subr.bf16.mxu0 0
  %8345 = vmatpush1.bf16.msra.mxu0 0
  %8346 = vmatprep.subr.bf16.mxu0 0
  %8347 = vmatpush1.bf16.msra.mxu0 0
  %8348 = vmatprep.subr.bf16.mxu0 0
  %8349 = vmatpush1.bf16.msra.mxu0 0
  %8350 = vmatprep.subr.bf16.mxu0 0
  %8351 = vmatpush1.bf16.msra.mxu0 0
  %8352 = vmatprep.subr.bf16.mxu0 0
  %8353 = vmatpush1.bf16.msra.mxu0 0
  %8354 = vmatprep.subr.bf16.mxu0 0
  %8355 = vmatpush1.bf16.msra.mxu0 0
  %8356 = vmatprep.subr.bf16.mxu0 0
  %8357 = vmatpush1.bf16.msra.mxu0 0
  %8358 = vmatprep.subr.bf16.mxu0 0
  %8359 = vmatpush1.bf16.msra.mxu0 0
  %8360 = vmatprep.subr.bf16.mxu0 0
  %8361 = vmatpush1.bf16.msra.mxu0 0
  %8362 = vmatprep.subr.bf16.mxu0 0
  %8363 = vmatpush1.bf16.msra.mxu0 0
  %8364 = vmatprep.subr.bf16.mxu0 0
  %8365 = vmatpush1.bf16.msra.mxu0 0
  %8366 = vmatprep.mubr.bf16.mxu0 0
  %8367 = vmatmul.mubr.bf16.gmra.mrb[0].mxu0 %v8279
  %v8368 = vpop.f32.mrb[0].mxu0
  %v8369 = vadd.f32 0.0, %v8368
  %v8370 = vpop.f32.mrb[0].mxu0
  %v8371 = vadd.f32 0.0, %v8370
  %v8372 = vpop.f32.mrb[0].mxu0
  %v8373 = vpop.f32.mrb[0].mxu0
  %8374 = vdwg.mxu0
  %v8375 = vadd.f32 %v8252, %v8328
  %v8376 = vadd.f32 %v8253, %v8330
  %v8377 = vadd.f32 %v8254, %v8369
  %v8378 = vadd.f32 %v8255, %v8371
  %s8379 = scalar_lea.vmem %s45, 12
  %v8380 = vld [vmem:[%s8379] sm:$0x3]
  %8381 = vrot.lane.b32.xlu0 %v7619, 113
  %v8382 = vpop.permute.xlu0 %8381
  %8383 = vrot.lane.b32.xlu0 %v7621, 113
  %v8384 = vpop.permute.xlu0 %8383
  %8385 = vrot.lane.b32.xlu0 %v7660, 113
  %v8386 = vpop.permute.xlu0 %8385
  %8387 = vrot.lane.b32.xlu0 %v7662, 113
  %v8388 = vpop.permute.xlu0 %8387
  %v8389 = vsel %vm1052, %v8386, %v8388
  %v8390 = vsel %vm1052, %v8384, %v8386
  %v8391 = vsel %vm1052, %v8382, %v8384
  %v8392 = vsel %vm1052, %v8388, %v8382
  %v8393 = vmul.f32 %v8391, %v1063
  %v8394 = vmul.f32 %v8390, %v1067
  %v8395 = vmul.f32 %v8389, %v1071
  %v8396 = vmul.f32 %v8392, %v1075
  %v8397 = vpack.c.bf16 %v8393, %v8393
  %v8398 = vpack.c.bf16 %v8394, %v8394
  %v8399 = vpack.c.bf16 %v8395, %v8395
  %v8400 = vpack.c.bf16 %v8396, %v8396
  %v8402 = vsel %vm1877, %v8380, 0
  %v8405 = vsel %vm1881, %v8397, 0
  %v8408 = vsel %vm1881, %v8398, 0
  %v8411 = vsel %vm1881, %v8399, 0
  %v8414 = vsel %vm1881, %v8400, 0
  %8416 = vmatprep.subr.bf16.mxu0 %v8408
  %8417 = vmatpush1.bf16.msra.mxu0 %v8405
  %8418 = vmatprep.subr.bf16.mxu0 0
  %8419 = vmatpush1.bf16.msra.mxu0 0
  %8420 = vmatprep.subr.bf16.mxu0 0
  %8421 = vmatpush1.bf16.msra.mxu0 0
  %8422 = vmatprep.subr.bf16.mxu0 0
  %8423 = vmatpush1.bf16.msra.mxu0 0
  %8424 = vmatprep.subr.bf16.mxu0 0
  %8425 = vmatpush1.bf16.msra.mxu0 0
  %8426 = vmatprep.subr.bf16.mxu0 0
  %8427 = vmatpush1.bf16.msra.mxu0 0
  %8428 = vmatprep.subr.bf16.mxu0 0
  %8429 = vmatpush1.bf16.msra.mxu0 0
  %8430 = vmatprep.subr.bf16.mxu0 0
  %8431 = vmatpush1.bf16.msra.mxu0 0
  %8432 = vmatprep.subr.bf16.mxu0 0
  %8433 = vmatpush1.bf16.msra.mxu0 0
  %8434 = vmatprep.subr.bf16.mxu0 0
  %8435 = vmatpush1.bf16.msra.mxu0 0
  %8436 = vmatprep.subr.bf16.mxu0 0
  %8437 = vmatpush1.bf16.msra.mxu0 0
  %8438 = vmatprep.subr.bf16.mxu0 0
  %8439 = vmatpush1.bf16.msra.mxu0 0
  %8440 = vmatprep.subr.bf16.mxu0 0
  %8441 = vmatpush1.bf16.msra.mxu0 0
  %8442 = vmatprep.subr.bf16.mxu0 0
  %8443 = vmatpush1.bf16.msra.mxu0 0
  %8444 = vmatprep.subr.bf16.mxu0 0
  %8445 = vmatpush1.bf16.msra.mxu0 0
  %8446 = vmatprep.subr.bf16.mxu0 0
  %8447 = vmatpush1.bf16.msra.mxu0 0
  %8448 = vmatprep.mubr.bf16.mxu0 0
  %8449 = vmatmul.mubr.bf16.gmra.mrb[0].mxu0 %v8402
  %v8450 = vpop.f32.mrb[0].mxu0
  %v8451 = vadd.f32 0.0, %v8450
  %v8452 = vpop.f32.mrb[0].mxu0
  %v8453 = vadd.f32 0.0, %v8452
  %v8454 = vpop.f32.mrb[0].mxu0
  %v8455 = vpop.f32.mrb[0].mxu0
  %8456 = vdwg.mxu0
  %8457 = vmatprep.subr.bf16.mxu0 %v8414
  %8458 = vmatpush1.bf16.msra.mxu0 %v8411
  %8459 = vmatprep.subr.bf16.mxu0 0
  %8460 = vmatpush1.bf16.msra.mxu0 0
  %8461 = vmatprep.subr.bf16.mxu0 0
  %8462 = vmatpush1.bf16.msra.mxu0 0
  %8463 = vmatprep.subr.bf16.mxu0 0
  %8464 = vmatpush1.bf16.msra.mxu0 0
  %8465 = vmatprep.subr.bf16.mxu0 0
  %8466 = vmatpush1.bf16.msra.mxu0 0
  %8467 = vmatprep.subr.bf16.mxu0 0
  %8468 = vmatpush1.bf16.msra.mxu0 0
  %8469 = vmatprep.subr.bf16.mxu0 0
  %8470 = vmatpush1.bf16.msra.mxu0 0
  %8471 = vmatprep.subr.bf16.mxu0 0
  %8472 = vmatpush1.bf16.msra.mxu0 0
  %8473 = vmatprep.subr.bf16.mxu0 0
  %8474 = vmatpush1.bf16.msra.mxu0 0
  %8475 = vmatprep.subr.bf16.mxu0 0
  %8476 = vmatpush1.bf16.msra.mxu0 0
  %8477 = vmatprep.subr.bf16.mxu0 0
  %8478 = vmatpush1.bf16.msra.mxu0 0
  %8479 = vmatprep.subr.bf16.mxu0 0
  %8480 = vmatpush1.bf16.msra.mxu0 0
  %8481 = vmatprep.subr.bf16.mxu0 0
  %8482 = vmatpush1.bf16.msra.mxu0 0
  %8483 = vmatprep.subr.bf16.mxu0 0
  %8484 = vmatpush1.bf16.msra.mxu0 0
  %8485 = vmatprep.subr.bf16.mxu0 0
  %8486 = vmatpush1.bf16.msra.mxu0 0
  %8487 = vmatprep.subr.bf16.mxu0 0
  %8488 = vmatpush1.bf16.msra.mxu0 0
  %8489 = vmatprep.mubr.bf16.mxu0 0
  %8490 = vmatmul.mubr.bf16.gmra.mrb[0].mxu0 %v8402
  %v8491 = vpop.f32.mrb[0].mxu0
  %v8492 = vadd.f32 0.0, %v8491
  %v8493 = vpop.f32.mrb[0].mxu0
  %v8494 = vadd.f32 0.0, %v8493
  %v8495 = vpop.f32.mrb[0].mxu0
  %v8496 = vpop.f32.mrb[0].mxu0
  %8497 = vdwg.mxu0
  %v8498 = vadd.f32 %v8375, %v8451
  %v8499 = vadd.f32 %v8376, %v8453
  %v8500 = vadd.f32 %v8377, %v8492
  %v8501 = vadd.f32 %v8378, %v8494
  %s8502 = scalar_lea.vmem %s45, 14
  %v8503 = vld [vmem:[%s8502] sm:$0x3]
  %8504 = vrot.lane.b32.xlu0 %v7619, 112
  %v8505 = vpop.permute.xlu0 %8504
  %8506 = vrot.lane.b32.xlu0 %v7621, 112
  %v8507 = vpop.permute.xlu0 %8506
  %8508 = vrot.lane.b32.xlu0 %v7660, 112
  %v8509 = vpop.permute.xlu0 %8508
  %8510 = vrot.lane.b32.xlu0 %v7662, 112
  %v8511 = vpop.permute.xlu0 %8510
  %v8512 = vsel %vm1199, %v8509, %v8511
  %v8513 = vsel %vm1199, %v8507, %v8509
  %v8514 = vsel %vm1199, %v8505, %v8507
  %v8515 = vsel %vm1199, %v8511, %v8505
  %v8516 = vmul.f32 %v8514, %v1210
  %v8517 = vmul.f32 %v8513, %v1214
  %v8518 = vmul.f32 %v8512, %v1218
  %v8519 = vmul.f32 %v8515, %v1222
  %v8520 = vpack.c.bf16 %v8516, %v8516
  %v8521 = vpack.c.bf16 %v8517, %v8517
  %v8522 = vpack.c.bf16 %v8518, %v8518
  %v8523 = vpack.c.bf16 %v8519, %v8519
  %v8525 = vsel %vm1877, %v8503, 0
  %v8528 = vsel %vm1881, %v8520, 0
  %v8531 = vsel %vm1881, %v8521, 0
  %v8534 = vsel %vm1881, %v8522, 0
  %v8537 = vsel %vm1881, %v8523, 0
  %8539 = vmatprep.subr.bf16.mxu0 %v8531
  %8540 = vmatpush1.bf16.msra.mxu0 %v8528
  %8541 = vmatprep.subr.bf16.mxu0 0
  %8542 = vmatpush1.bf16.msra.mxu0 0
  %8543 = vmatprep.subr.bf16.mxu0 0
  %8544 = vmatpush1.bf16.msra.mxu0 0
  %8545 = vmatprep.subr.bf16.mxu0 0
  %8546 = vmatpush1.bf16.msra.mxu0 0
  %8547 = vmatprep.subr.bf16.mxu0 0
  %8548 = vmatpush1.bf16.msra.mxu0 0
  %8549 = vmatprep.subr.bf16.mxu0 0
  %8550 = vmatpush1.bf16.msra.mxu0 0
  %8551 = vmatprep.subr.bf16.mxu0 0
  %8552 = vmatpush1.bf16.msra.mxu0 0
  %8553 = vmatprep.subr.bf16.mxu0 0
  %8554 = vmatpush1.bf16.msra.mxu0 0
  %8555 = vmatprep.subr.bf16.mxu0 0
  %8556 = vmatpush1.bf16.msra.mxu0 0
  %8557 = vmatprep.subr.bf16.mxu0 0
  %8558 = vmatpush1.bf16.msra.mxu0 0
  %8559 = vmatprep.subr.bf16.mxu0 0
  %8560 = vmatpush1.bf16.msra.mxu0 0
  %8561 = vmatprep.subr.bf16.mxu0 0
  %8562 = vmatpush1.bf16.msra.mxu0 0
  %8563 = vmatprep.subr.bf16.mxu0 0
  %8564 = vmatpush1.bf16.msra.mxu0 0
  %8565 = vmatprep.subr.bf16.mxu0 0
  %8566 = vmatpush1.bf16.msra.mxu0 0
  %8567 = vmatprep.subr.bf16.mxu0 0
  %8568 = vmatpush1.bf16.msra.mxu0 0
  %8569 = vmatprep.subr.bf16.mxu0 0
  %8570 = vmatpush1.bf16.msra.mxu0 0
  %8571 = vmatprep.mubr.bf16.mxu0 0
  %8572 = vmatmul.mubr.bf16.gmra.mrb[0].mxu0 %v8525
  %v8573 = vpop.f32.mrb[0].mxu0
  %v8574 = vadd.f32 0.0, %v8573
  %v8575 = vpop.f32.mrb[0].mxu0
  %v8576 = vadd.f32 0.0, %v8575
  %v8577 = vpop.f32.mrb[0].mxu0
  %v8578 = vpop.f32.mrb[0].mxu0
  %8579 = vdwg.mxu0
  %8580 = vmatprep.subr.bf16.mxu0 %v8537
  %8581 = vmatpush1.bf16.msra.mxu0 %v8534
  %8582 = vmatprep.subr.bf16.mxu0 0
  %8583 = vmatpush1.bf16.msra.mxu0 0
  %8584 = vmatprep.subr.bf16.mxu0 0
  %8585 = vmatpush1.bf16.msra.mxu0 0
  %8586 = vmatprep.subr.bf16.mxu0 0
  %8587 = vmatpush1.bf16.msra.mxu0 0
  %8588 = vmatprep.subr.bf16.mxu0 0
  %8589 = vmatpush1.bf16.msra.mxu0 0
  %8590 = vmatprep.subr.bf16.mxu0 0
  %8591 = vmatpush1.bf16.msra.mxu0 0
  %8592 = vmatprep.subr.bf16.mxu0 0
  %8593 = vmatpush1.bf16.msra.mxu0 0
  %8594 = vmatprep.subr.bf16.mxu0 0
  %8595 = vmatpush1.bf16.msra.mxu0 0
  %8596 = vmatprep.subr.bf16.mxu0 0
  %8597 = vmatpush1.bf16.msra.mxu0 0
  %8598 = vmatprep.subr.bf16.mxu0 0
  %8599 = vmatpush1.bf16.msra.mxu0 0
  %8600 = vmatprep.subr.bf16.mxu0 0
  %8601 = vmatpush1.bf16.msra.mxu0 0
  %8602 = vmatprep.subr.bf16.mxu0 0
  %8603 = vmatpush1.bf16.msra.mxu0 0
  %8604 = vmatprep.subr.bf16.mxu0 0
  %8605 = vmatpush1.bf16.msra.mxu0 0
  %8606 = vmatprep.subr.bf16.mxu0 0
  %8607 = vmatpush1.bf16.msra.mxu0 0
  %8608 = vmatprep.subr.bf16.mxu0 0
  %8609 = vmatpush1.bf16.msra.mxu0 0
  %8610 = vmatprep.subr.bf16.mxu0 0
  %8611 = vmatpush1.bf16.msra.mxu0 0
  %8612 = vmatprep.mubr.bf16.mxu0 0
  %8613 = vmatmul.mubr.bf16.gmra.mrb[0].mxu0 %v8525
  %v8614 = vpop.f32.mrb[0].mxu0
  %v8615 = vadd.f32 0.0, %v8614
  %v8616 = vpop.f32.mrb[0].mxu0
  %v8617 = vadd.f32 0.0, %v8616
  %v8618 = vpop.f32.mrb[0].mxu0
  %v8619 = vpop.f32.mrb[0].mxu0
  %8620 = vdwg.mxu0
  %v8621 = vadd.f32 %v8498, %v8574
  %v8622 = vadd.f32 %v8499, %v8576
  %v8623 = vadd.f32 %v8500, %v8615
  %v8624 = vadd.f32 %v8501, %v8617
  %s8625 = scalar_lea.vmem %s45, 16
  %v8626 = vld [vmem:[%s8625] sm:$0x3]
  %8627 = vrot.lane.b32.xlu0 %v7619, 111
  %v8628 = vpop.permute.xlu0 %8627
  %8629 = vrot.lane.b32.xlu0 %v7621, 111
  %v8630 = vpop.permute.xlu0 %8629
  %8631 = vrot.lane.b32.xlu0 %v7660, 111
  %v8632 = vpop.permute.xlu0 %8631
  %8633 = vrot.lane.b32.xlu0 %v7662, 111
  %v8634 = vpop.permute.xlu0 %8633
  %v8635 = vsel %vm1346, %v8632, %v8634
  %v8636 = vsel %vm1346, %v8630, %v8632
  %v8637 = vsel %vm1346, %v8628, %v8630
  %v8638 = vsel %vm1346, %v8634, %v8628
  %v8639 = vmul.f32 %v8637, %v1357
  %v8640 = vmul.f32 %v8636, %v1361
  %v8641 = vmul.f32 %v8635, %v1365
  %v8642 = vmul.f32 %v8638, %v1369
  %v8643 = vpack.c.bf16 %v8639, %v8639
  %v8644 = vpack.c.bf16 %v8640, %v8640
  %v8645 = vpack.c.bf16 %v8641, %v8641
  %v8646 = vpack.c.bf16 %v8642, %v8642
  %v8648 = vsel %vm1877, %v8626, 0
  %v8651 = vsel %vm1881, %v8643, 0
  %v8654 = vsel %vm1881, %v8644, 0
  %v8657 = vsel %vm1881, %v8645, 0
  %v8660 = vsel %vm1881, %v8646, 0
  %8662 = vmatprep.subr.bf16.mxu0 %v8654
  %8663 = vmatpush1.bf16.msra.mxu0 %v8651
  %8664 = vmatprep.subr.bf16.mxu0 0
  %8665 = vmatpush1.bf16.msra.mxu0 0
  %8666 = vmatprep.subr.bf16.mxu0 0
  %8667 = vmatpush1.bf16.msra.mxu0 0
  %8668 = vmatprep.subr.bf16.mxu0 0
  %8669 = vmatpush1.bf16.msra.mxu0 0
  %8670 = vmatprep.subr.bf16.mxu0 0
  %8671 = vmatpush1.bf16.msra.mxu0 0
  %8672 = vmatprep.subr.bf16.mxu0 0
  %8673 = vmatpush1.bf16.msra.mxu0 0
  %8674 = vmatprep.subr.bf16.mxu0 0
  %8675 = vmatpush1.bf16.msra.mxu0 0
  %8676 = vmatprep.subr.bf16.mxu0 0
  %8677 = vmatpush1.bf16.msra.mxu0 0
  %8678 = vmatprep.subr.bf16.mxu0 0
  %8679 = vmatpush1.bf16.msra.mxu0 0
  %8680 = vmatprep.subr.bf16.mxu0 0
  %8681 = vmatpush1.bf16.msra.mxu0 0
  %8682 = vmatprep.subr.bf16.mxu0 0
  %8683 = vmatpush1.bf16.msra.mxu0 0
  %8684 = vmatprep.subr.bf16.mxu0 0
  %8685 = vmatpush1.bf16.msra.mxu0 0
  %8686 = vmatprep.subr.bf16.mxu0 0
  %8687 = vmatpush1.bf16.msra.mxu0 0
  %8688 = vmatprep.subr.bf16.mxu0 0
  %8689 = vmatpush1.bf16.msra.mxu0 0
  %8690 = vmatprep.subr.bf16.mxu0 0
  %8691 = vmatpush1.bf16.msra.mxu0 0
  %8692 = vmatprep.subr.bf16.mxu0 0
  %8693 = vmatpush1.bf16.msra.mxu0 0
  %8694 = vmatprep.mubr.bf16.mxu0 0
  %8695 = vmatmul.mubr.bf16.gmra.mrb[0].mxu0 %v8648
  %v8696 = vpop.f32.mrb[0].mxu0
  %v8697 = vadd.f32 0.0, %v8696
  %v8698 = vpop.f32.mrb[0].mxu0
  %v8699 = vadd.f32 0.0, %v8698
  %v8700 = vpop.f32.mrb[0].mxu0
  %v8701 = vpop.f32.mrb[0].mxu0
  %8702 = vdwg.mxu0
  %8703 = vmatprep.subr.bf16.mxu0 %v8660
  %8704 = vmatpush1.bf16.msra.mxu0 %v8657
  %8705 = vmatprep.subr.bf16.mxu0 0
  %8706 = vmatpush1.bf16.msra.mxu0 0
  %8707 = vmatprep.subr.bf16.mxu0 0
  %8708 = vmatpush1.bf16.msra.mxu0 0
  %8709 = vmatprep.subr.bf16.mxu0 0
  %8710 = vmatpush1.bf16.msra.mxu0 0
  %8711 = vmatprep.subr.bf16.mxu0 0
  %8712 = vmatpush1.bf16.msra.mxu0 0
  %8713 = vmatprep.subr.bf16.mxu0 0
  %8714 = vmatpush1.bf16.msra.mxu0 0
  %8715 = vmatprep.subr.bf16.mxu0 0
  %8716 = vmatpush1.bf16.msra.mxu0 0
  %8717 = vmatprep.subr.bf16.mxu0 0
  %8718 = vmatpush1.bf16.msra.mxu0 0
  %8719 = vmatprep.subr.bf16.mxu0 0
  %8720 = vmatpush1.bf16.msra.mxu0 0
  %8721 = vmatprep.subr.bf16.mxu0 0
  %8722 = vmatpush1.bf16.msra.mxu0 0
  %8723 = vmatprep.subr.bf16.mxu0 0
  %8724 = vmatpush1.bf16.msra.mxu0 0
  %8725 = vmatprep.subr.bf16.mxu0 0
  %8726 = vmatpush1.bf16.msra.mxu0 0
  %8727 = vmatprep.subr.bf16.mxu0 0
  %8728 = vmatpush1.bf16.msra.mxu0 0
  %8729 = vmatprep.subr.bf16.mxu0 0
  %8730 = vmatpush1.bf16.msra.mxu0 0
  %8731 = vmatprep.subr.bf16.mxu0 0
  %8732 = vmatpush1.bf16.msra.mxu0 0
  %8733 = vmatprep.subr.bf16.mxu0 0
  %8734 = vmatpush1.bf16.msra.mxu0 0
  %8735 = vmatprep.mubr.bf16.mxu0 0
  %8736 = vmatmul.mubr.bf16.gmra.mrb[0].mxu0 %v8648
  %v8737 = vpop.f32.mrb[0].mxu0
  %v8738 = vadd.f32 0.0, %v8737
  %v8739 = vpop.f32.mrb[0].mxu0
  %v8740 = vadd.f32 0.0, %v8739
  %v8741 = vpop.f32.mrb[0].mxu0
  %v8742 = vpop.f32.mrb[0].mxu0
  %8743 = vdwg.mxu0
  %v8744 = vadd.f32 %v8621, %v8697
  %v8745 = vadd.f32 %v8622, %v8699
  %v8746 = vadd.f32 %v8623, %v8738
  %v8747 = vadd.f32 %v8624, %v8740
  %v8748 = vld [vmem:[%s43] sm:$0x7]
  %v8749 = vld [vmem:[%s41] sm:$0x7]
  %vm8750 = vcmask 1042432
  %v8751 = vsel %vm8750, %v8744, 0.0
  %v8752 = vsel %vm8750, %v8745, 0.0
  %v8753 = vadd.f32 %v8751, %v8752
  %v8754 = vsel %vm8750, %v8746, 0.0
  %v8755 = vadd.f32 %v8753, %v8754
  %v8756 = vsel %vm8750, %v8747, 0.0
  %v8757 = vadd.f32 %v8755, %v8756
  %8758 = vadd.xlane.f32.xlu0 %v8757
  %v8759 = vpop.xlane.xlu0 %8758
  %v8760 = vmul.f32 %v8759, 0.001953125
  %v8761 = vsub.f32 %v8744, %v8760
  %v8762 = vsub.f32 %v8745, %v8760
  %v8763 = vsub.f32 %v8746, %v8760
  %v8764 = vsub.f32 %v8747, %v8760
  %v8765 = vmul.f32 %v8761, %v8761
  %v8766 = vmul.f32 %v8762, %v8762
  %v8767 = vmul.f32 %v8763, %v8763
  %v8768 = vmul.f32 %v8764, %v8764
  %v8769 = vsel %vm8750, %v8765, 0.0
  %v8770 = vsel %vm8750, %v8766, 0.0
  %v8771 = vadd.f32 %v8769, %v8770
  %v8772 = vsel %vm8750, %v8767, 0.0
  %v8773 = vadd.f32 %v8771, %v8772
  %v8774 = vsel %vm8750, %v8768, 0.0
  %v8775 = vadd.f32 %v8773, %v8774
  %8776 = vadd.xlane.f32.xlu0 %v8775
  %v8777 = vpop.xlane.xlu0 %8776
  %v8778 = vmul.f32 %v8777, 0.001953125
  %v8779 = vadd.f32 %v8778, 1e-05
  %v8780 = vrsqrt.pop %v8779
  %v8781 = vmul.f32 %v8761, %v8780
  %v8782 = vmul.f32 %v8762, %v8780
  %v8783 = vmul.f32 %v8763, %v8780
  %v8784 = vmul.f32 %v8764, %v8780
  %8786 = vset.pattern.permute.xlu0 0
  %8787 = vperm.xlu0 %8786, %v8748
  %v8788 = vpop.permute.xlu0 %8787
  %v8790 = vmul.f32 %v8781, %v8788
  %v8791 = vmul.f32 %v8782, %v8788
  %v8792 = vmul.f32 %v8783, %v8788
  %v8793 = vmul.f32 %v8784, %v8788
  %8795 = vset.pattern.permute.xlu0 0
  %8796 = vperm.xlu0 %8795, %v8749
  %v8797 = vpop.permute.xlu0 %8796
  %v8799 = vadd.f32 %v8790, %v8797
  %v8800 = vadd.f32 %v8791, %v8797
  %v8801 = vadd.f32 %v8792, %v8797
  %v8802 = vadd.f32 %v8793, %v8797
  %v8803 = vsub.f32 0.0, %v8799
  %v8804 = vsub.f32 0.0, %v8800
  %v8805 = vsub.f32 0.0, %v8801
  %v8806 = vsub.f32 0.0, %v8802
  %v8807 = vmul.f32 %v8803, 1.442695
  %v8808 = vpow.pop %v8807
  %v8809 = vmul.f32 %v8804, 1.442695
  %v8810 = vpow.pop %v8809
  %v8811 = vmul.f32 %v8805, 1.442695
  %v8812 = vpow.pop %v8811
  %v8813 = vmul.f32 %v8806, 1.442695
  %v8814 = vpow.pop %v8813
  %v8815 = vadd.f32 %v8808, 1.0
  %v8816 = vadd.f32 %v8810, 1.0
  %v8817 = vadd.f32 %v8812, 1.0
  %v8818 = vadd.f32 %v8814, 1.0
  %v8819 = vrcp.pop %v8815
  %v8820 = vrcp.pop %v8816
  %v8821 = vrcp.pop %v8817
  %v8822 = vrcp.pop %v8818
  %v8827 = vcombine.low %v8819, %v8820
  %v8828 = vcombine.low %v8821, %v8822
  %8831 = vst [vmem:[%s95] sm:$0x77] %v8827
  %8832 = vst [vmem:[%s95 + $0x8] sm:$0x77] %v8828
  // Predicated region
  $region190: #{hourglass_forward.1} parent=0 // pred_check
    _
  $region191: #{hourglass_forward.1} parent=0 // pred_check_branch
    %8834 = sbr.rel (0) target = $region193
  $region192: #{hourglass_forward.1} parent=0 // pred_region
    _
  $region193: #{hourglass_forward.1} parent=0 // pred_fallthru
    _
  // Predicated region
  $region194: #{hourglass_forward.1} parent=0 // pred_check
    _
  $region195: #{hourglass_forward.1} parent=0 // pred_check_branch
    %8836 = sbr.rel (0) target = $region197
  $region196: #{hourglass_forward.1} parent=0 // pred_region
    _
  $region197: #{hourglass_forward.1} parent=0 // pred_fallthru
    _

</llo_original>
